<compile_context>
chip_gen: v7x
topology: tpu7x:2x2x1
jax: 0.10.0
libtpu: 0.0.40
codegen_flags: <defaults>
</compile_context>

<pallas_src>
import jax
import jax.numpy as jnp
from jax import lax
from jax.experimental import pallas as pl
from jax.experimental.pallas import tpu as pltpu

NUM_CLASSES = 10
IN_CHANNELS = 8
H = W = 14            # 14x14 -> AvgPool2d(5, stride=3) -> 4x4; 128*4*4 = 2048 = fc1 in_features
POOL_OUT = 4
P2 = POOL_OUT * POOL_OUT   # 16 pooling windows
BN_EPS = 1e-5


def _round_up(x, m):
    return ((x + m - 1) // m) * m


def _cdiv(a, b):
    return (a + b - 1) // b


def _default_batch_tile():
    # v6e (128 MiB VMEM) benefits from a longer M run per weight residency; v5e/v7x keep 256.
    try:
        kind = jax.devices()[0].device_kind.lower()
    except Exception:
        return 256
    return 512 if "v6" in kind else 256


def _auxiliary_kernel(x_ref, wpool_ref, wconv_ref, bias_ref,
                      wfc1_ref, bfc1_ref, wfc2_ref, bfc2_ref, out_ref):
    # 1) AvgPool2d(5,3) as one dense matmul: (TB, C*HW) @ (C*HW, 16*C), layout p*C + c.
    #    Wpool holds exact 0/1 entries (the 1/25 is folded into the conv weight below).
    pooled = jnp.dot(x_ref[...], wpool_ref[...], preferred_element_type=jnp.float32)
    # 2) 1x1 conv expanded block-diagonally over the 16 windows (BN scale and 1/25 folded
    #    into the columns): (TB, 16*C) @ (16*C, 16*128) -> layout p*128 + oc.
    pc = jnp.dot(pooled.astype(jnp.bfloat16), wconv_ref[...],
                 preferred_element_type=jnp.float32)
    # Folded BatchNorm bias (eval mode) + ReLU.
    act = jnp.maximum(pc + bias_ref[...], 0.0)
    # 3) fc1 (weight pre-permuted to the p*128+oc flatten order) + ReLU.
    h = jnp.dot(act.astype(jnp.bfloat16), wfc1_ref[...],
                preferred_element_type=jnp.float32) + bfc1_ref[...]
    h = jnp.maximum(h, 0.0)
    # TODO(synk): Dropout(p=0.7) is identity in eval mode; training-mode RNG mask not implemented.
    # 4) fc2 (output padded to 128 lanes -> unmasked, lane-dense stores).
    out_ref[...] = jnp.dot(h.astype(jnp.bfloat16), wfc2_ref[...],
                           preferred_element_type=jnp.float32) + bfc2_ref[...]


def _pool_window_mask(h=H, w=W, k=5, s=3):
    """(16, HW) 0/1 matrix: M[p, hw] = 1 iff pixel hw lies in pooling window p."""
    hw = jnp.arange(h * w)
    hh, ww = hw // w, hw % w
    p = jnp.arange(P2)
    oh, ow = p // POOL_OUT, p % POOL_OUT
    in_h = (hh[None, :] >= s * oh[:, None]) & (hh[None, :] <= s * oh[:, None] + k - 1)
    in_w = (ww[None, :] >= s * ow[:, None]) & (ww[None, :] <= s * ow[:, None] + k - 1)
    return (in_h & in_w).astype(jnp.float32)


def auxiliary_forward(x, params, batch_tile=None):
    """x: (N, C, 14, 14) float32 (NCHW, like the PyTorch module). Returns (N, num_classes)."""
    n, c, h, w = x.shape
    assert (h, w) == (H, W)
    s = h * w
    num_classes = params["b_fc2"].shape[0]
    conv_out = P2 * 128    # 2048

    if batch_tile is None:
        batch_tile = _default_batch_tile()

    # ---- batch tiling: TB rows per grid step (real MXU M dim) ----
    n8 = _round_up(n, 8)
    num_tiles = max(1, _cdiv(n8, batch_tile))
    if n8 >= 256:
        num_tiles = max(num_tiles, 2)    # >=2 parallel grid steps -> both v7x TensorCores busy
    tb = _round_up(_cdiv(n8, num_tiles), 8)
    n_pad = tb * num_tiles

    # ---- input prep: free channel-major reshape (row index c*HW + hw), bf16, minimal pad ----
    x_flat = x.reshape(n, c * s).astype(jnp.bfloat16)
    if n_pad != n:
        # num_tiles above is chosen so this pads < 8..tb rows (cheap); zero only for ragged N.
        x_flat = jnp.pad(x_flat, ((0, n_pad - n), (0, 0)))

    # ---- parameter prep (plain JAX, outside the kernel) ----
    # BatchNorm (eval) folded to a per-output-channel affine transform.
    inv_std = 1.0 / jnp.sqrt(params["bn_var"] + BN_EPS)
    bn_scale = params["bn_gamma"] * inv_std                                   # (128,)
    bn_bias = params["bn_beta"] + bn_scale * (params["b_conv"] - params["bn_mean"])

    # Pooling weight: Wpool[ci*HW + hw, p*C + ci] = 1 iff hw in window p (exact in bf16).
    pool01 = _pool_window_mask()                                              # (16, HW)
    eye_c = jnp.eye(c, dtype=jnp.float32)
    wpool = jnp.einsum("ps,ij->ispj", pool01, eye_c).reshape(c * s, P2 * c)
    wpool = wpool.astype(jnp.bfloat16)

    # 1x1 conv expanded block-diagonally over the 16 windows, with the 1/25 average and the
    # BN scale folded in: Wconv_exp[p*C + ci, p*128 + oc] = Wconv[oc, ci] * scale[oc] / 25.
    w_scaled = params["w_conv"].reshape(128, c).T * bn_scale[None, :] / 25.0  # (C, 128)
    eye_p = jnp.eye(P2, dtype=jnp.float32)
    wconv = jnp.einsum("pq,co->pcqo", eye_p, w_scaled).reshape(P2 * c, conv_out)
    wconv = wconv.astype(jnp.bfloat16)

    bias_flat = jnp.tile(bn_bias, P2).reshape(1, conv_out)                    # f32, p*128+oc layout

    # fc1 weight permuted so the kernel's (p, oc) layout matches PyTorch's channel-major
    # flatten (index oc*16 + p): W1p[p*128+oc, k] = W1[k, oc*16+p].
    wfc1 = (params["w_fc1"].reshape(1024, 128, P2)
            .transpose(2, 1, 0).reshape(conv_out, 1024).astype(jnp.bfloat16))
    bfc1 = params["b_fc1"].reshape(1, 1024)

    # fc2 padded to 128 output lanes; sliced back after the call. Biases stay f32.
    nc_pad = max(128, _round_up(num_classes, 128))
    wfc2 = jnp.zeros((1024, nc_pad), jnp.float32).at[:, :num_classes].set(params["w_fc2"].T)
    wfc2 = wfc2.astype(jnp.bfloat16)
    bfc2 = jnp.zeros((1, nc_pad), jnp.float32).at[:, :num_classes].set(params["b_fc2"])

    single = pl.Buffered(1)   # grid-invariant operands: no double-buffering needed
    out = pl.pallas_call(
        _auxiliary_kernel,
        out_shape=jax.ShapeDtypeStruct((n_pad, nc_pad), jnp.float32),
        grid=(n_pad // tb,),
        in_specs=[
            pl.BlockSpec((tb, c * s), lambda b: (b, 0)),                             # x tile (bf16)
            pl.BlockSpec((c * s, P2 * c), lambda b: (0, 0), pipeline_mode=single),   # pool weight
            pl.BlockSpec((P2 * c, conv_out), lambda b: (0, 0), pipeline_mode=single),  # conv weight
            pl.BlockSpec((1, conv_out), lambda b: (0, 0), pipeline_mode=single),     # folded BN bias
            pl.BlockSpec((conv_out, 1024), lambda b: (0, 0), pipeline_mode=single),  # fc1 weight
            pl.BlockSpec((1, 1024), lambda b: (0, 0), pipeline_mode=single),         # fc1 bias
            pl.BlockSpec((1024, nc_pad), lambda b: (0, 0), pipeline_mode=single),    # fc2 weight
            pl.BlockSpec((1, nc_pad), lambda b: (0, 0), pipeline_mode=single),       # fc2 bias
        ],
        out_specs=pl.BlockSpec((tb, nc_pad), lambda b: (b, 0)),
        compiler_params=pltpu.CompilerParams(
            dimension_semantics=("parallel",),
            # Post-optimization footprint ~8-20 MiB (weights single-buffered): comfortably
            # under the 64 MiB physical VMEM per v7x TensorCore.
            vmem_limit_bytes=32 * 1024 * 1024,
        ),
    )(x_flat, wpool, wconv, bias_flat, wfc1, bfc1, wfc2, bfc2)
    return out[:n, :num_classes]


def reference_forward(x, params):
    """Pure-JAX f32 reference matching the PyTorch module in eval mode."""
    n, c, _, _ = x.shape
    pooled = lax.reduce_window(x, 0.0, lax.add, (1, 1, 5, 5), (1, 1, 3, 3),
                               "VALID") / 25.0                                   # (N, C, 4, 4)
    conv = jnp.einsum("nchw,oc->nohw", pooled,
                      params["w_conv"].reshape(128, c)) + params["b_conv"][None, :, None, None]
    bn = ((conv - params["bn_mean"][None, :, None, None]) /
          jnp.sqrt(params["bn_var"] + BN_EPS)[None, :, None, None] *
          params["bn_gamma"][None, :, None, None] + params["bn_beta"][None, :, None, None])
    act = jnp.maximum(bn, 0.0)
    flat = act.reshape(n, -1)                                                    # (N, 2048)
    h1 = jnp.maximum(flat @ params["w_fc1"].T + params["b_fc1"], 0.0)
    return h1 @ params["w_fc2"].T + params["b_fc2"]


def init_params(key, in_channels=IN_CHANNELS, num_classes=NUM_CLASSES):
    ks = jax.random.split(key, 10)
    return {
        "w_conv": 0.05 * jax.random.normal(ks[0], (128, in_channels, 1, 1), jnp.float32),
        "b_conv": 0.05 * jax.random.normal(ks[1], (128,), jnp.float32),
        "bn_gamma": 1.0 + 0.1 * jax.random.normal(ks[2], (128,), jnp.float32),
        "bn_beta": 0.1 * jax.random.normal(ks[3], (128,), jnp.float32),
        "bn_mean": 0.1 * jax.random.normal(ks[4], (128,), jnp.float32),
        "bn_var": 0.9 + 0.1 * jnp.abs(jax.random.normal(ks[5], (128,), jnp.float32)),
        "w_fc1": 0.05 * jax.random.normal(ks[6], (1024, 2048), jnp.float32),
        "b_fc1": 0.05 * jax.random.normal(ks[7], (1024,), jnp.float32),
        "w_fc2": 0.05 * jax.random.normal(ks[8], (num_classes, 1024), jnp.float32),
        "b_fc2": 0.05 * jax.random.normal(ks[9], (num_classes,), jnp.float32),
    }


if __name__ == "__main__":
    key = jax.random.PRNGKey(0)
    kx, kp = jax.random.split(key)
    x = jax.random.normal(kx, (2, IN_CHANNELS, H, W), jnp.float32)
    params = init_params(kp)

    out = jax.block_until_ready(auxiliary_forward(x, params))
    ref = jax.block_until_ready(reference_forward(x, params))

    assert out.shape == (2, NUM_CLASSES), out.shape
    max_err = float(jnp.max(jnp.abs(out - ref)))
    assert max_err < 1e-2, f"mismatch vs reference: max abs err = {max_err}"
    print("KERNEL_OK")
</pallas_src>

<mosaic_0001>
module attributes {stable_mosaic.version = 11 : i64} {
  func.func @_auxiliary_kernel(%arg0: i32, %arg1: memref<8x1568xbf16, #tpu.memory_space<vmem>>, %arg2: memref<1568x128xbf16, #tpu.memory_space<vmem>>, %arg3: memref<128x2048xbf16, #tpu.memory_space<vmem>>, %arg4: memref<1x2048xf32, #tpu.memory_space<vmem>>, %arg5: memref<2048x1024xbf16, #tpu.memory_space<vmem>>, %arg6: memref<1x1024xf32, #tpu.memory_space<vmem>>, %arg7: memref<1024x128xbf16, #tpu.memory_space<vmem>>, %arg8: memref<1x128xf32, #tpu.memory_space<vmem>>, %arg9: memref<8x128xf32, #tpu.memory_space<vmem>>) attributes {dimension_semantics = [#tpu.dimension_semantics<parallel>], iteration_bounds = array<i64: 1>, scalar_prefetch = 0 : i64, scratch_operands = 0 : i64, tpu.core_type = #tpu.core_type<tc>, window_params = [{transform_indices = @transform_0, window_bounds = array<i64: 8, 1568>}, {pipeline_mode = #tpu.pipeline_mode<synchronous>, transform_indices = @transform_1, window_bounds = array<i64: 1568, 128>}, {pipeline_mode = #tpu.pipeline_mode<synchronous>, transform_indices = @transform_2, window_bounds = array<i64: 128, 2048>}, {pipeline_mode = #tpu.pipeline_mode<synchronous>, transform_indices = @transform_3, window_bounds = array<i64: 1, 2048>}, {pipeline_mode = #tpu.pipeline_mode<synchronous>, transform_indices = @transform_4, window_bounds = array<i64: 2048, 1024>}, {pipeline_mode = #tpu.pipeline_mode<synchronous>, transform_indices = @transform_5, window_bounds = array<i64: 1, 1024>}, {pipeline_mode = #tpu.pipeline_mode<synchronous>, transform_indices = @transform_6, window_bounds = array<i64: 1024, 128>}, {pipeline_mode = #tpu.pipeline_mode<synchronous>, transform_indices = @transform_7, window_bounds = array<i64: 1, 128>}, {transform_indices = @transform_8, window_bounds = array<i64: 8, 128>}]} {
    %c0 = arith.constant 0 : index
    %c0_0 = arith.constant 0 : index
    %0 = vector.load %arg1[%c0, %c0_0] : memref<8x1568xbf16, #tpu.memory_space<vmem>>, vector<8x1568xbf16>
    %c0_1 = arith.constant 0 : index
    %c0_2 = arith.constant 0 : index
    %1 = vector.load %arg2[%c0_1, %c0_2] : memref<1568x128xbf16, #tpu.memory_space<vmem>>, vector<1568x128xbf16>
    %cst = arith.constant dense<0.000000e+00> : vector<8x128xf32>
    %2 = tpu.matmul %0, %1, %cst {dimension_numbers = #tpu.dot_dimension_numbers<[1], [0], [0], [1], [0, 0, 1, 1], [], []>} : vector<8x1568xbf16>, vector<1568x128xbf16>, vector<8x128xf32> -> vector<8x128xf32>
    %3 = arith.truncf %2 : vector<8x128xf32> to vector<8x128xbf16>
    %c0_3 = arith.constant 0 : index
    %c0_4 = arith.constant 0 : index
    %4 = vector.load %arg3[%c0_3, %c0_4] : memref<128x2048xbf16, #tpu.memory_space<vmem>>, vector<128x2048xbf16>
    %cst_5 = arith.constant dense<0.000000e+00> : vector<8x2048xf32>
    %5 = tpu.matmul %3, %4, %cst_5 {dimension_numbers = #tpu.dot_dimension_numbers<[1], [0], [0], [1], [0, 0, 1, 1], [], []>} : vector<8x128xbf16>, vector<128x2048xbf16>, vector<8x2048xf32> -> vector<8x2048xf32>
    %c0_6 = arith.constant 0 : index
    %c0_7 = arith.constant 0 : index
    %6 = vector.load %arg4[%c0_6, %c0_7] : memref<1x2048xf32, #tpu.memory_space<vmem>>, vector<1x2048xf32>
    %7 = vector.broadcast %6 : vector<1x2048xf32> to vector<8x2048xf32>
    %8 = arith.addf %5, %7 : vector<8x2048xf32>
    %cst_8 = arith.constant 0.000000e+00 : f32
    %9 = vector.broadcast %cst_8 : f32 to vector<8x2048xf32>
    %10 = arith.maximumf %8, %9 : vector<8x2048xf32>
    %11 = arith.truncf %10 : vector<8x2048xf32> to vector<8x2048xbf16>
    %c0_9 = arith.constant 0 : index
    %c0_10 = arith.constant 0 : index
    %12 = vector.load %arg5[%c0_9, %c0_10] : memref<2048x1024xbf16, #tpu.memory_space<vmem>>, vector<2048x1024xbf16>
    %cst_11 = arith.constant dense<0.000000e+00> : vector<8x1024xf32>
    %13 = tpu.matmul %11, %12, %cst_11 {dimension_numbers = #tpu.dot_dimension_numbers<[1], [0], [0], [1], [0, 0, 1, 1], [], []>} : vector<8x2048xbf16>, vector<2048x1024xbf16>, vector<8x1024xf32> -> vector<8x1024xf32>
    %c0_12 = arith.constant 0 : index
    %c0_13 = arith.constant 0 : index
    %14 = vector.load %arg6[%c0_12, %c0_13] : memref<1x1024xf32, #tpu.memory_space<vmem>>, vector<1x1024xf32>
    %15 = vector.broadcast %14 : vector<1x1024xf32> to vector<8x1024xf32>
    %16 = arith.addf %13, %15 : vector<8x1024xf32>
    %cst_14 = arith.constant 0.000000e+00 : f32
    %17 = vector.broadcast %cst_14 : f32 to vector<8x1024xf32>
    %18 = arith.maximumf %16, %17 : vector<8x1024xf32>
    %19 = arith.truncf %18 : vector<8x1024xf32> to vector<8x1024xbf16>
    %c0_15 = arith.constant 0 : index
    %c0_16 = arith.constant 0 : index
    %20 = vector.load %arg7[%c0_15, %c0_16] : memref<1024x128xbf16, #tpu.memory_space<vmem>>, vector<1024x128xbf16>
    %cst_17 = arith.constant dense<0.000000e+00> : vector<8x128xf32>
    %21 = tpu.matmul %19, %20, %cst_17 {dimension_numbers = #tpu.dot_dimension_numbers<[1], [0], [0], [1], [0, 0, 1, 1], [], []>} : vector<8x1024xbf16>, vector<1024x128xbf16>, vector<8x128xf32> -> vector<8x128xf32>
    %c0_18 = arith.constant 0 : index
    %c0_19 = arith.constant 0 : index
    %22 = vector.load %arg8[%c0_18, %c0_19] : memref<1x128xf32, #tpu.memory_space<vmem>>, vector<1x128xf32>
    %23 = vector.broadcast %22 : vector<1x128xf32> to vector<8x128xf32>
    %24 = arith.addf %21, %23 : vector<8x128xf32>
    %c0_20 = arith.constant 0 : index
    %c0_21 = arith.constant 0 : index
    %25 = vector.load %arg9[%c0_20, %c0_21] : memref<8x128xf32, #tpu.memory_space<vmem>>, vector<8x128xf32>
    tpu.vector_store %arg9[%c0_20, %c0_21], %24 {strides = array<i32>} : memref<8x128xf32, #tpu.memory_space<vmem>>, vector<8x128xf32>,
    return
  }
  func.func @transform_0(%arg0: i32) -> (i32, i32) {
    %c0_i32 = arith.constant 0 : i32
    %c0_i32_0 = arith.constant 0 : i32
    return %arg0, %c0_i32 : i32, i32
  }
  func.func @transform_1(%arg0: i32) -> (i32, i32) {
    %c0_i32 = arith.constant 0 : i32
    %c0_i32_0 = arith.constant 0 : i32
    %c0_i32_1 = arith.constant 0 : i32
    return %c0_i32, %c0_i32_0 : i32, i32
  }
  func.func @transform_2(%arg0: i32) -> (i32, i32) {
    %c0_i32 = arith.constant 0 : i32
    %c0_i32_0 = arith.constant 0 : i32
    %c0_i32_1 = arith.constant 0 : i32
    return %c0_i32, %c0_i32_0 : i32, i32
  }
  func.func @transform_3(%arg0: i32) -> (i32, i32) {
    %c0_i32 = arith.constant 0 : i32
    %c0_i32_0 = arith.constant 0 : i32
    %c0_i32_1 = arith.constant 0 : i32
    return %c0_i32, %c0_i32_0 : i32, i32
  }
  func.func @transform_4(%arg0: i32) -> (i32, i32) {
    %c0_i32 = arith.constant 0 : i32
    %c0_i32_0 = arith.constant 0 : i32
    %c0_i32_1 = arith.constant 0 : i32
    return %c0_i32, %c0_i32_0 : i32, i32
  }
  func.func @transform_5(%arg0: i32) -> (i32, i32) {
    %c0_i32 = arith.constant 0 : i32
    %c0_i32_0 = arith.constant 0 : i32
    %c0_i32_1 = arith.constant 0 : i32
    return %c0_i32, %c0_i32_0 : i32, i32
  }
  func.func @transform_6(%arg0: i32) -> (i32, i32) {
    %c0_i32 = arith.constant 0 : i32
    %c0_i32_0 = arith.constant 0 : i32
    %c0_i32_1 = arith.constant 0 : i32
    return %c0_i32, %c0_i32_0 : i32, i32
  }
  func.func @transform_7(%arg0: i32) -> (i32, i32) {
    %c0_i32 = arith.constant 0 : i32
    %c0_i32_0 = arith.constant 0 : i32
    %c0_i32_1 = arith.constant 0 : i32
    return %c0_i32, %c0_i32_0 : i32, i32
  }
  func.func @transform_8(%arg0: i32) -> (i32, i32) {
    %c0_i32 = arith.constant 0 : i32
    %c0_i32_0 = arith.constant 0 : i32
    return %arg0, %c0_i32 : i32, i32
  }
}

</mosaic_0001>

<llo_original>
// kernel: tpu_custom_call.1
$region0: #{tpu_custom_call.1}
  #allocation0 [shape = 'u32[]', space=smem, size = 0x4, offset = 0x4, fixed_abs, tag = 'smem constant byte address 0x4 - core index']
  #allocation1 [shape = 'u32[144,128]{1,0:T(1,128)}', space=vmem, size = 0x12000, scoped, tag = 'internal scratch']
  %s0 = inlined_call_operand.hbm [shape: bf16[8,1568], index: 0, kind: input, shape index: {}]
  %s1 = inlined_call_operand.hbm [shape: bf16[1568,128], index: 1, kind: input, shape index: {}]
  %s2 = inlined_call_operand.hbm [shape: bf16[128,2048], index: 2, kind: input, shape index: {}]
  %s3 = inlined_call_operand.hbm [shape: f32[1,2048], index: 3, kind: input, shape index: {}]
  %s4 = inlined_call_operand.hbm [shape: bf16[2048,1024], index: 4, kind: input, shape index: {}]
  %s5 = inlined_call_operand.hbm [shape: f32[1,1024], index: 5, kind: input, shape index: {}]
  %s6 = inlined_call_operand.hbm [shape: bf16[1024,128], index: 6, kind: input, shape index: {}]
  %s7 = inlined_call_operand.hbm [shape: f32[1,128], index: 7, kind: input, shape index: {}]
  %s8 = inlined_call_operand.hbm [shape: f32[8,128], index: 8, kind: output, shape index: {}]
  %s9 = sld [smem:[#allocation0]]
  $region74: #{tpu_custom_call.1} parent=0
    _
  %s11 = ssub.s32 1, %s9
  %s12 = scalar_select 0, %s11, %s9
  $region1: #{tpu_custom_call.1} parent=0
    #allocation2 [shape = 'u8[26624]{0}', space=vmem, size = 0x6800, scoped, tag = 'input window, operand 0, single buffered']
    #allocation3 [shape = 's32[1]{0}', space=sflag, size = 0x4, scoped, tag = 'scoped memory for tpu_custom_call.1']
    #allocation4 [shape = 's32[1]{0}', space=sflag, size = 0x4, scoped, tag = 'scoped memory for tpu_custom_call.1']
    #allocation5 [shape = 'u8[401408]{0}', space=vmem, size = 0x62000, scoped, tag = 'input window, operand 1, single buffered']
    #allocation6 [shape = 's32[1]{0}', space=sflag, size = 0x4, scoped, tag = 'scoped memory for tpu_custom_call.1']
    #allocation7 [shape = 'u8[524288]{0}', space=vmem, size = 0x80000, scoped, tag = 'input window, operand 2, single buffered']
    #allocation8 [shape = 'u8[8192]{0}', space=vmem, size = 0x2000, scoped, tag = 'input window, operand 3, single buffered']
    #allocation9 [shape = 's32[1]{0}', space=sflag, size = 0x4, scoped, tag = 'scoped memory for tpu_custom_call.1']
    #allocation10 [shape = 'u8[4194304]{0}', space=vmem, size = 0x400000, scoped, tag = 'input window, operand 4, single buffered']
    #allocation11 [shape = 'u8[4096]{0}', space=vmem, size = 0x1000, scoped, tag = 'input window, operand 5, single buffered']
    #allocation12 [shape = 's32[1]{0}', space=sflag, size = 0x4, scoped, tag = 'scoped memory for tpu_custom_call.1']
    #allocation13 [shape = 'u8[262144]{0}', space=vmem, size = 0x40000, scoped, tag = 'input window, operand 6, single buffered']
    #allocation14 [shape = 'u8[512]{0}', space=vmem, size = 0x400, scoped, tag = 'input window, operand 7, single buffered']
    #allocation15 [shape = 's32[1]{0}', space=sflag, size = 0x4, scoped, tag = 'scoped memory for tpu_custom_call.1']
    #allocation16 [shape = 'u8[4096]{0}', space=vmem, size = 0x1000, scoped, tag = 'output window, operand 0, single buffered']
    %13 = vsyncpa [#allocation3], 0
    %14 = vsyncpa [#allocation6], 0
    %15 = vsyncpa [#allocation9], 0
    %16 = vsyncpa [#allocation12], 0
    %17 = vsyncpa [#allocation15], 0
    %18 = vsyncpa [#allocation4], 0
    // Predicated region
    $region2: #{tpu_custom_call.1} parent=1 // pred_check
      _
    $region3: #{tpu_custom_call.1} parent=1 // pred_check_branch
      %20 = sbr.rel (0) target = $region5
    $region4: #{tpu_custom_call.1} parent=1 // pred_region
      %s22 = ssub.s32 832, 832
      %23 = vsyncadd [#allocation3], %s22
      %s25 = sshll.u32 [#allocation2], 4
      %s26 = int_to_ptr.vmem [resolvable:$true] %s25
      %28 = dma.hbm_to_vmem [thread:$0]  %s0, 832, %s26, [#allocation3]
    $region5: #{tpu_custom_call.1} parent=1 // pred_fallthru
      _
    // Predicated region
    $region6: #{tpu_custom_call.1} parent=1 // pred_check
      _
    $region7: #{tpu_custom_call.1} parent=1 // pred_check_branch
      %30 = sbr.rel (0) target = $region9
    $region8: #{tpu_custom_call.1} parent=1 // pred_region
      %s32 = ssub.s32 12544, 12544
      %33 = vsyncadd [#allocation6], %s32
      %s34 = sshll.u32 [#allocation5], 4
      %s35 = int_to_ptr.vmem [resolvable:$true] %s34
      %40 = dma.hbm_to_vmem [thread:$0]  %s1, 12544, %s35, [#allocation6], 64, 64, 4
    $region9: #{tpu_custom_call.1} parent=1 // pred_fallthru
      _
    // Predicated region
    $region10: #{tpu_custom_call.1} parent=1 // pred_check
      _
    $region11: #{tpu_custom_call.1} parent=1 // pred_check_branch
      %42 = sbr.rel (0) target = $region13
    $region12: #{tpu_custom_call.1} parent=1 // pred_region
      %s44 = ssub.s32 16384, 16384
      %45 = vsyncadd [#allocation6], %s44
      %s46 = sshll.u32 [#allocation7], 4
      %s47 = int_to_ptr.vmem [resolvable:$true] %s46
      %52 = dma.hbm_to_vmem [thread:$0]  %s2, 16384, %s47, [#allocation6], 1024, 1024, 64
    $region13: #{tpu_custom_call.1} parent=1 // pred_fallthru
      _
    // Predicated region
    $region14: #{tpu_custom_call.1} parent=1 // pred_check
      _
    $region15: #{tpu_custom_call.1} parent=1 // pred_check_branch
      %54 = sbr.rel (0) target = $region17
    $region16: #{tpu_custom_call.1} parent=1 // pred_region
      %s56 = ssub.s32 256, 256
      %57 = vsyncadd [#allocation9], %s56
      %s59 = sshll.u32 [#allocation8], 4
      %s60 = int_to_ptr.vmem [resolvable:$true] %s59
      %62 = dma.hbm_to_vmem [thread:$0]  %s3, 256, %s60, [#allocation9]
    $region17: #{tpu_custom_call.1} parent=1 // pred_fallthru
      _
    // Predicated region
    $region18: #{tpu_custom_call.1} parent=1 // pred_check
      _
    $region19: #{tpu_custom_call.1} parent=1 // pred_check_branch
      %64 = sbr.rel (0) target = $region21
    $region20: #{tpu_custom_call.1} parent=1 // pred_region
      %s66 = ssub.s32 131072, 131072
      %67 = vsyncadd [#allocation9], %s66
      %s68 = sshll.u32 [#allocation10], 4
      %s69 = int_to_ptr.vmem [resolvable:$true] %s68
      %74 = dma.hbm_to_vmem [thread:$0]  %s4, 131072, %s69, [#allocation9], 512, 512, 32
    $region21: #{tpu_custom_call.1} parent=1 // pred_fallthru
      _
    // Predicated region
    $region22: #{tpu_custom_call.1} parent=1 // pred_check
      _
    $region23: #{tpu_custom_call.1} parent=1 // pred_check_branch
      %76 = sbr.rel (0) target = $region25
    $region24: #{tpu_custom_call.1} parent=1 // pred_region
      %s78 = ssub.s32 128, 128
      %79 = vsyncadd [#allocation12], %s78
      %s81 = sshll.u32 [#allocation11], 4
      %s82 = int_to_ptr.vmem [resolvable:$true] %s81
      %84 = dma.hbm_to_vmem [thread:$0]  %s5, 128, %s82, [#allocation12]
    $region25: #{tpu_custom_call.1} parent=1 // pred_fallthru
      _
    // Predicated region
    $region26: #{tpu_custom_call.1} parent=1 // pred_check
      _
    $region27: #{tpu_custom_call.1} parent=1 // pred_check_branch
      %86 = sbr.rel (0) target = $region29
    $region28: #{tpu_custom_call.1} parent=1 // pred_region
      %s88 = ssub.s32 8192, 8192
      %89 = vsyncadd [#allocation12], %s88
      %s90 = sshll.u32 [#allocation13], 4
      %s91 = int_to_ptr.vmem [resolvable:$true] %s90
      %96 = dma.hbm_to_vmem [thread:$0]  %s6, 8192, %s91, [#allocation12], 64, 64, 4
    $region29: #{tpu_custom_call.1} parent=1 // pred_fallthru
      _
    // Predicated region
    $region30: #{tpu_custom_call.1} parent=1 // pred_check
      _
    $region31: #{tpu_custom_call.1} parent=1 // pred_check_branch
      %98 = sbr.rel (0) target = $region33
    $region32: #{tpu_custom_call.1} parent=1 // pred_region
      %s100 = ssub.s32 16, 16
      %101 = vsyncadd [#allocation15], %s100
      %s103 = sshll.u32 [#allocation14], 4
      %s104 = int_to_ptr.vmem [resolvable:$true] %s103
      %106 = dma.hbm_to_vmem [thread:$0]  %s7, 16, %s104, [#allocation15]
    $region33: #{tpu_custom_call.1} parent=1 // pred_fallthru
      _
    // Predicated region
    $region34: #{tpu_custom_call.1} parent=1 // pred_check
      _
    $region35: #{tpu_custom_call.1} parent=1 // pred_check_branch
      %108 = sbr.rel (0) target = $region37
    $region36: #{tpu_custom_call.1} parent=1 // pred_region
      %109 = dma.done [#allocation3], 832
    $region37: #{tpu_custom_call.1} parent=1 // pred_fallthru
      _
    // Predicated region
    $region38: #{tpu_custom_call.1} parent=1 // pred_check
      _
    $region39: #{tpu_custom_call.1} parent=1 // pred_check_branch
      %111 = sbr.rel (0) target = $region41
    $region40: #{tpu_custom_call.1} parent=1 // pred_region
      %112 = dma.done [#allocation6], 12544
    $region41: #{tpu_custom_call.1} parent=1 // pred_fallthru
      _
    // Predicated region
    $region42: #{tpu_custom_call.1} parent=1 // pred_check
      _
    $region43: #{tpu_custom_call.1} parent=1 // pred_check_branch
      %114 = sbr.rel (0) target = $region45
    $region44: #{tpu_custom_call.1} parent=1 // pred_region
      %115 = dma.done [#allocation6], 16384
    $region45: #{tpu_custom_call.1} parent=1 // pred_fallthru
      _
    // Predicated region
    $region46: #{tpu_custom_call.1} parent=1 // pred_check
      _
    $region47: #{tpu_custom_call.1} parent=1 // pred_check_branch
      %117 = sbr.rel (0) target = $region49
    $region48: #{tpu_custom_call.1} parent=1 // pred_region
      %118 = dma.done [#allocation9], 256
    $region49: #{tpu_custom_call.1} parent=1 // pred_fallthru
      _
    // Predicated region
    $region50: #{tpu_custom_call.1} parent=1 // pred_check
      _
    $region51: #{tpu_custom_call.1} parent=1 // pred_check_branch
      %120 = sbr.rel (0) target = $region53
    $region52: #{tpu_custom_call.1} parent=1 // pred_region
      %121 = dma.done [#allocation9], 131072
    $region53: #{tpu_custom_call.1} parent=1 // pred_fallthru
      _
    // Predicated region
    $region54: #{tpu_custom_call.1} parent=1 // pred_check
      _
    $region55: #{tpu_custom_call.1} parent=1 // pred_check_branch
      %123 = sbr.rel (0) target = $region57
    $region56: #{tpu_custom_call.1} parent=1 // pred_region
      %124 = dma.done [#allocation12], 128
    $region57: #{tpu_custom_call.1} parent=1 // pred_fallthru
      _
    // Predicated region
    $region58: #{tpu_custom_call.1} parent=1 // pred_check
      _
    $region59: #{tpu_custom_call.1} parent=1 // pred_check_branch
      %126 = sbr.rel (0) target = $region61
    $region60: #{tpu_custom_call.1} parent=1 // pred_region
      %127 = dma.done [#allocation12], 8192
    $region61: #{tpu_custom_call.1} parent=1 // pred_fallthru
      _
    // Predicated region
    $region62: #{tpu_custom_call.1} parent=1 // pred_check
      _
    $region63: #{tpu_custom_call.1} parent=1 // pred_check_branch
      %129 = sbr.rel (0) target = $region65
    $region64: #{tpu_custom_call.1} parent=1 // pred_region
      %130 = dma.done [#allocation15], 16
    $region65: #{tpu_custom_call.1} parent=1 // pred_fallthru
      _
    %v132 = vld [vmem:[#allocation2] sm:$0xff]
    %v133 = vld [vmem:[#allocation2 + $0x8] sm:$0xff]
    %v134 = vld [vmem:[#allocation2 + $0x10] sm:$0xff]
    %v135 = vld [vmem:[#allocation2 + $0x18] sm:$0xff]
    %v136 = vld [vmem:[#allocation2 + $0x20] sm:$0xff]
    %v137 = vld [vmem:[#allocation2 + $0x28] sm:$0xff]
    %v138 = vld [vmem:[#allocation2 + $0x30] sm:$0xf]
    %v139 = vld [vmem:[#allocation5] sm:$0xf]
    %v140 = vld [vmem:[#allocation5 + $0x4] sm:$0xf]
    %v141 = vld [vmem:[#allocation5 + $0x8] sm:$0xf]
    %v142 = vld [vmem:[#allocation5 + $0xc] sm:$0xf]
    %v143 = vld [vmem:[#allocation5 + $0x10] sm:$0xf]
    %v144 = vld [vmem:[#allocation5 + $0x14] sm:$0xf]
    %v145 = vld [vmem:[#allocation5 + $0x18] sm:$0xf]
    %v146 = vld [vmem:[#allocation5 + $0x1c] sm:$0xf]
    %v147 = vld [vmem:[#allocation5 + $0x20] sm:$0xf]
    %v148 = vld [vmem:[#allocation5 + $0x24] sm:$0xf]
    %v149 = vld [vmem:[#allocation5 + $0x28] sm:$0xf]
    %v150 = vld [vmem:[#allocation5 + $0x2c] sm:$0xf]
    %v151 = vld [vmem:[#allocation5 + $0x30] sm:$0xf]
    %v152 = vld [vmem:[#allocation5 + $0x34] sm:$0xf]
    %v153 = vld [vmem:[#allocation5 + $0x38] sm:$0xf]
    %v154 = vld [vmem:[#allocation5 + $0x3c] sm:$0xf]
    %v155 = vld [vmem:[#allocation5 + $0x40] sm:$0xf]
    %v156 = vld [vmem:[#allocation5 + $0x44] sm:$0xf]
    %v157 = vld [vmem:[#allocation5 + $0x48] sm:$0xf]
    %v158 = vld [vmem:[#allocation5 + $0x4c] sm:$0xf]
    %v159 = vld [vmem:[#allocation5 + $0x50] sm:$0xf]
    %v160 = vld [vmem:[#allocation5 + $0x54] sm:$0xf]
    %v161 = vld [vmem:[#allocation5 + $0x58] sm:$0xf]
    %v162 = vld [vmem:[#allocation5 + $0x5c] sm:$0xf]
    %v163 = vld [vmem:[#allocation5 + $0x60] sm:$0xf]
    %v164 = vld [vmem:[#allocation5 + $0x64] sm:$0xf]
    %v165 = vld [vmem:[#allocation5 + $0x68] sm:$0xf]
    %v166 = vld [vmem:[#allocation5 + $0x6c] sm:$0xf]
    %v167 = vld [vmem:[#allocation5 + $0x70] sm:$0xf]
    %v168 = vld [vmem:[#allocation5 + $0x74] sm:$0xf]
    %v169 = vld [vmem:[#allocation5 + $0x78] sm:$0xf]
    %v170 = vld [vmem:[#allocation5 + $0x7c] sm:$0xf]
    %v171 = vld [vmem:[#allocation5 + $0x80] sm:$0xf]
    %v172 = vld [vmem:[#allocation5 + $0x84] sm:$0xf]
    %v173 = vld [vmem:[#allocation5 + $0x88] sm:$0xf]
    %v174 = vld [vmem:[#allocation5 + $0x8c] sm:$0xf]
    %v175 = vld [vmem:[#allocation5 + $0x90] sm:$0xf]
    %v176 = vld [vmem:[#allocation5 + $0x94] sm:$0xf]
    %v177 = vld [vmem:[#allocation5 + $0x98] sm:$0xf]
    %v178 = vld [vmem:[#allocation5 + $0x9c] sm:$0xf]
    %v179 = vld [vmem:[#allocation5 + $0xa0] sm:$0xf]
    %v180 = vld [vmem:[#allocation5 + $0xa4] sm:$0xf]
    %v181 = vld [vmem:[#allocation5 + $0xa8] sm:$0xf]
    %v182 = vld [vmem:[#allocation5 + $0xac] sm:$0xf]
    %v183 = vld [vmem:[#allocation5 + $0xb0] sm:$0xf]
    %v184 = vld [vmem:[#allocation5 + $0xb4] sm:$0xf]
    %v185 = vld [vmem:[#allocation5 + $0xb8] sm:$0xf]
    %v186 = vld [vmem:[#allocation5 + $0xbc] sm:$0xf]
    %v187 = vld [vmem:[#allocation5 + $0xc0] sm:$0xf]
    %v188 = vld [vmem:[#allocation5 + $0xc4] sm:$0xf]
    %v189 = vld [vmem:[#allocation5 + $0xc8] sm:$0xf]
    %v190 = vld [vmem:[#allocation5 + $0xcc] sm:$0xf]
    %v191 = vld [vmem:[#allocation5 + $0xd0] sm:$0xf]
    %v192 = vld [vmem:[#allocation5 + $0xd4] sm:$0xf]
    %v193 = vld [vmem:[#allocation5 + $0xd8] sm:$0xf]
    %v194 = vld [vmem:[#allocation5 + $0xdc] sm:$0xf]
    %v195 = vld [vmem:[#allocation5 + $0xe0] sm:$0xf]
    %v196 = vld [vmem:[#allocation5 + $0xe4] sm:$0xf]
    %v197 = vld [vmem:[#allocation5 + $0xe8] sm:$0xf]
    %v198 = vld [vmem:[#allocation5 + $0xec] sm:$0xf]
    %v199 = vld [vmem:[#allocation5 + $0xf0] sm:$0xf]
    %v200 = vld [vmem:[#allocation5 + $0xf4] sm:$0xf]
    %v201 = vld [vmem:[#allocation5 + $0xf8] sm:$0xf]
    %v202 = vld [vmem:[#allocation5 + $0xfc] sm:$0xf]
    %v203 = vld [vmem:[#allocation5 + $0x100] sm:$0xf]
    %v204 = vld [vmem:[#allocation5 + $0x104] sm:$0xf]
    %v205 = vld [vmem:[#allocation5 + $0x108] sm:$0xf]
    %v206 = vld [vmem:[#allocation5 + $0x10c] sm:$0xf]
    %v207 = vld [vmem:[#allocation5 + $0x110] sm:$0xf]
    %v208 = vld [vmem:[#allocation5 + $0x114] sm:$0xf]
    %v209 = vld [vmem:[#allocation5 + $0x118] sm:$0xf]
    %v210 = vld [vmem:[#allocation5 + $0x11c] sm:$0xf]
    %v211 = vld [vmem:[#allocation5 + $0x120] sm:$0xf]
    %v212 = vld [vmem:[#allocation5 + $0x124] sm:$0xf]
    %v213 = vld [vmem:[#allocation5 + $0x128] sm:$0xf]
    %v214 = vld [vmem:[#allocation5 + $0x12c] sm:$0xf]
    %v215 = vld [vmem:[#allocation5 + $0x130] sm:$0xf]
    %v216 = vld [vmem:[#allocation5 + $0x134] sm:$0xf]
    %v217 = vld [vmem:[#allocation5 + $0x138] sm:$0xf]
    %v218 = vld [vmem:[#allocation5 + $0x13c] sm:$0xf]
    %v219 = vld [vmem:[#allocation5 + $0x140] sm:$0xf]
    %v220 = vld [vmem:[#allocation5 + $0x144] sm:$0xf]
    %v221 = vld [vmem:[#allocation5 + $0x148] sm:$0xf]
    %v222 = vld [vmem:[#allocation5 + $0x14c] sm:$0xf]
    %v223 = vld [vmem:[#allocation5 + $0x150] sm:$0xf]
    %v224 = vld [vmem:[#allocation5 + $0x154] sm:$0xf]
    %v225 = vld [vmem:[#allocation5 + $0x158] sm:$0xf]
    %v226 = vld [vmem:[#allocation5 + $0x15c] sm:$0xf]
    %v227 = vld [vmem:[#allocation5 + $0x160] sm:$0xf]
    %v228 = vld [vmem:[#allocation5 + $0x164] sm:$0xf]
    %v229 = vld [vmem:[#allocation5 + $0x168] sm:$0xf]
    %v230 = vld [vmem:[#allocation5 + $0x16c] sm:$0xf]
    %v231 = vld [vmem:[#allocation5 + $0x170] sm:$0xf]
    %v232 = vld [vmem:[#allocation5 + $0x174] sm:$0xf]
    %v233 = vld [vmem:[#allocation5 + $0x178] sm:$0xf]
    %v234 = vld [vmem:[#allocation5 + $0x17c] sm:$0xf]
    %v235 = vld [vmem:[#allocation5 + $0x180] sm:$0xf]
    %v236 = vld [vmem:[#allocation5 + $0x184] sm:$0xf]
    %v237 = vld [vmem:[#allocation5 + $0x188] sm:$0xf]
    %v238 = vld [vmem:[#allocation5 + $0x18c] sm:$0xf]
    %v239 = vld [vmem:[#allocation5 + $0x190] sm:$0xf]
    %v240 = vld [vmem:[#allocation5 + $0x194] sm:$0xf]
    %v241 = vld [vmem:[#allocation5 + $0x198] sm:$0xf]
    %v242 = vld [vmem:[#allocation5 + $0x19c] sm:$0xf]
    %v243 = vld [vmem:[#allocation5 + $0x1a0] sm:$0xf]
    %v244 = vld [vmem:[#allocation5 + $0x1a4] sm:$0xf]
    %v245 = vld [vmem:[#allocation5 + $0x1a8] sm:$0xf]
    %v246 = vld [vmem:[#allocation5 + $0x1ac] sm:$0xf]
    %v247 = vld [vmem:[#allocation5 + $0x1b0] sm:$0xf]
    %v248 = vld [vmem:[#allocation5 + $0x1b4] sm:$0xf]
    %v249 = vld [vmem:[#allocation5 + $0x1b8] sm:$0xf]
    %v250 = vld [vmem:[#allocation5 + $0x1bc] sm:$0xf]
    %v251 = vld [vmem:[#allocation5 + $0x1c0] sm:$0xf]
    %v252 = vld [vmem:[#allocation5 + $0x1c4] sm:$0xf]
    %v253 = vld [vmem:[#allocation5 + $0x1c8] sm:$0xf]
    %v254 = vld [vmem:[#allocation5 + $0x1cc] sm:$0xf]
    %v255 = vld [vmem:[#allocation5 + $0x1d0] sm:$0xf]
    %v256 = vld [vmem:[#allocation5 + $0x1d4] sm:$0xf]
    %v257 = vld [vmem:[#allocation5 + $0x1d8] sm:$0xf]
    %v258 = vld [vmem:[#allocation5 + $0x1dc] sm:$0xf]
    %v259 = vld [vmem:[#allocation5 + $0x1e0] sm:$0xf]
    %v260 = vld [vmem:[#allocation5 + $0x1e4] sm:$0xf]
    %v261 = vld [vmem:[#allocation5 + $0x1e8] sm:$0xf]
    %v262 = vld [vmem:[#allocation5 + $0x1ec] sm:$0xf]
    %v263 = vld [vmem:[#allocation5 + $0x1f0] sm:$0xf]
    %v264 = vld [vmem:[#allocation5 + $0x1f4] sm:$0xf]
    %v265 = vld [vmem:[#allocation5 + $0x1f8] sm:$0xf]
    %v266 = vld [vmem:[#allocation5 + $0x1fc] sm:$0xf]
    %v267 = vld [vmem:[#allocation5 + $0x200] sm:$0xf]
    %v268 = vld [vmem:[#allocation5 + $0x204] sm:$0xf]
    %v269 = vld [vmem:[#allocation5 + $0x208] sm:$0xf]
    %v270 = vld [vmem:[#allocation5 + $0x20c] sm:$0xf]
    %v271 = vld [vmem:[#allocation5 + $0x210] sm:$0xf]
    %v272 = vld [vmem:[#allocation5 + $0x214] sm:$0xf]
    %v273 = vld [vmem:[#allocation5 + $0x218] sm:$0xf]
    %v274 = vld [vmem:[#allocation5 + $0x21c] sm:$0xf]
    %v275 = vld [vmem:[#allocation5 + $0x220] sm:$0xf]
    %v276 = vld [vmem:[#allocation5 + $0x224] sm:$0xf]
    %v277 = vld [vmem:[#allocation5 + $0x228] sm:$0xf]
    %v278 = vld [vmem:[#allocation5 + $0x22c] sm:$0xf]
    %v279 = vld [vmem:[#allocation5 + $0x230] sm:$0xf]
    %v280 = vld [vmem:[#allocation5 + $0x234] sm:$0xf]
    %v281 = vld [vmem:[#allocation5 + $0x238] sm:$0xf]
    %v282 = vld [vmem:[#allocation5 + $0x23c] sm:$0xf]
    %v283 = vld [vmem:[#allocation5 + $0x240] sm:$0xf]
    %v284 = vld [vmem:[#allocation5 + $0x244] sm:$0xf]
    %v285 = vld [vmem:[#allocation5 + $0x248] sm:$0xf]
    %v286 = vld [vmem:[#allocation5 + $0x24c] sm:$0xf]
    %v287 = vld [vmem:[#allocation5 + $0x250] sm:$0xf]
    %v288 = vld [vmem:[#allocation5 + $0x254] sm:$0xf]
    %v289 = vld [vmem:[#allocation5 + $0x258] sm:$0xf]
    %v290 = vld [vmem:[#allocation5 + $0x25c] sm:$0xf]
    %v291 = vld [vmem:[#allocation5 + $0x260] sm:$0xf]
    %v292 = vld [vmem:[#allocation5 + $0x264] sm:$0xf]
    %v293 = vld [vmem:[#allocation5 + $0x268] sm:$0xf]
    %v294 = vld [vmem:[#allocation5 + $0x26c] sm:$0xf]
    %v295 = vld [vmem:[#allocation5 + $0x270] sm:$0xf]
    %v296 = vld [vmem:[#allocation5 + $0x274] sm:$0xf]
    %v297 = vld [vmem:[#allocation5 + $0x278] sm:$0xf]
    %v298 = vld [vmem:[#allocation5 + $0x27c] sm:$0xf]
    %v299 = vld [vmem:[#allocation5 + $0x280] sm:$0xf]
    %v300 = vld [vmem:[#allocation5 + $0x284] sm:$0xf]
    %v301 = vld [vmem:[#allocation5 + $0x288] sm:$0xf]
    %v302 = vld [vmem:[#allocation5 + $0x28c] sm:$0xf]
    %v303 = vld [vmem:[#allocation5 + $0x290] sm:$0xf]
    %v304 = vld [vmem:[#allocation5 + $0x294] sm:$0xf]
    %v305 = vld [vmem:[#allocation5 + $0x298] sm:$0xf]
    %v306 = vld [vmem:[#allocation5 + $0x29c] sm:$0xf]
    %v307 = vld [vmem:[#allocation5 + $0x2a0] sm:$0xf]
    %v308 = vld [vmem:[#allocation5 + $0x2a4] sm:$0xf]
    %v309 = vld [vmem:[#allocation5 + $0x2a8] sm:$0xf]
    %v310 = vld [vmem:[#allocation5 + $0x2ac] sm:$0xf]
    %v311 = vld [vmem:[#allocation5 + $0x2b0] sm:$0xf]
    %v312 = vld [vmem:[#allocation5 + $0x2b4] sm:$0xf]
    %v313 = vld [vmem:[#allocation5 + $0x2b8] sm:$0xf]
    %v314 = vld [vmem:[#allocation5 + $0x2bc] sm:$0xf]
    %v315 = vld [vmem:[#allocation5 + $0x2c0] sm:$0xf]
    %v316 = vld [vmem:[#allocation5 + $0x2c4] sm:$0xf]
    %v317 = vld [vmem:[#allocation5 + $0x2c8] sm:$0xf]
    %v318 = vld [vmem:[#allocation5 + $0x2cc] sm:$0xf]
    %v319 = vld [vmem:[#allocation5 + $0x2d0] sm:$0xf]
    %v320 = vld [vmem:[#allocation5 + $0x2d4] sm:$0xf]
    %v321 = vld [vmem:[#allocation5 + $0x2d8] sm:$0xf]
    %v322 = vld [vmem:[#allocation5 + $0x2dc] sm:$0xf]
    %v323 = vld [vmem:[#allocation5 + $0x2e0] sm:$0xf]
    %v324 = vld [vmem:[#allocation5 + $0x2e4] sm:$0xf]
    %v325 = vld [vmem:[#allocation5 + $0x2e8] sm:$0xf]
    %v326 = vld [vmem:[#allocation5 + $0x2ec] sm:$0xf]
    %v327 = vld [vmem:[#allocation5 + $0x2f0] sm:$0xf]
    %v328 = vld [vmem:[#allocation5 + $0x2f4] sm:$0xf]
    %v329 = vld [vmem:[#allocation5 + $0x2f8] sm:$0xf]
    %v330 = vld [vmem:[#allocation5 + $0x2fc] sm:$0xf]
    %v331 = vld [vmem:[#allocation5 + $0x300] sm:$0xf]
    %v332 = vld [vmem:[#allocation5 + $0x304] sm:$0xf]
    %v333 = vld [vmem:[#allocation5 + $0x308] sm:$0xf]
    %v334 = vld [vmem:[#allocation5 + $0x30c] sm:$0xf]
    %v342 = vunpack.c.l.b16 %v132
    %v343 = vunpack.c.h.b16 %v132
    %v344 = vunpack.c.l.b16 %v133
    %v345 = vunpack.c.h.b16 %v133
    %v346 = vunpack.c.l.b16 %v134
    %v347 = vunpack.c.h.b16 %v134
    %v348 = vunpack.c.l.b16 %v135
    %v349 = vunpack.c.h.b16 %v135
    %v350 = vunpack.c.l.b16 %v136
    %v351 = vunpack.c.h.b16 %v136
    %v352 = vunpack.c.l.b16 %v137
    %v353 = vunpack.c.h.b16 %v137
    %v354 = vunpack.c.l.b16 %v138
    %v355 = vpack.c.b16 %v342, %v342
    %v356 = vpack.c.b16 %v343, %v343
    %v357 = vpack.c.b16 %v344, %v344
    %v358 = vpack.c.b16 %v345, %v345
    %v359 = vpack.c.b16 %v346, %v346
    %v360 = vpack.c.b16 %v347, %v347
    %v361 = vpack.c.b16 %v348, %v348
    %v362 = vpack.c.b16 %v349, %v349
    %v363 = vpack.c.b16 %v350, %v350
    %v364 = vpack.c.b16 %v351, %v351
    %v365 = vpack.c.b16 %v352, %v352
    %v366 = vpack.c.b16 %v353, %v353
    %v367 = vpack.c.b16 %v354, %v354
    %v576 = vunpack.c.l.b16 %v139
    %v577 = vunpack.c.l.b16 %v140
    %v578 = vunpack.c.l.b16 %v141
    %v579 = vunpack.c.l.b16 %v142
    %v580 = vunpack.c.l.b16 %v143
    %v581 = vunpack.c.l.b16 %v144
    %v582 = vunpack.c.l.b16 %v145
    %v583 = vunpack.c.l.b16 %v146
    %v584 = vunpack.c.l.b16 %v147
    %v585 = vunpack.c.l.b16 %v148
    %v586 = vunpack.c.l.b16 %v149
    %v587 = vunpack.c.l.b16 %v150
    %v588 = vunpack.c.l.b16 %v151
    %v589 = vunpack.c.l.b16 %v152
    %v590 = vunpack.c.l.b16 %v153
    %v591 = vunpack.c.l.b16 %v154
    %v592 = vunpack.c.l.b16 %v155
    %v593 = vunpack.c.l.b16 %v156
    %v594 = vunpack.c.l.b16 %v157
    %v595 = vunpack.c.l.b16 %v158
    %v596 = vunpack.c.l.b16 %v159
    %v597 = vunpack.c.l.b16 %v160
    %v598 = vunpack.c.l.b16 %v161
    %v599 = vunpack.c.l.b16 %v162
    %v600 = vunpack.c.l.b16 %v163
    %v601 = vunpack.c.l.b16 %v164
    %v602 = vunpack.c.l.b16 %v165
    %v603 = vunpack.c.l.b16 %v166
    %v604 = vunpack.c.l.b16 %v167
    %v605 = vunpack.c.l.b16 %v168
    %v606 = vunpack.c.l.b16 %v169
    %v607 = vunpack.c.l.b16 %v170
    %v608 = vunpack.c.l.b16 %v171
    %v609 = vunpack.c.l.b16 %v172
    %v610 = vunpack.c.l.b16 %v173
    %v611 = vunpack.c.l.b16 %v174
    %v612 = vunpack.c.l.b16 %v175
    %v613 = vunpack.c.l.b16 %v176
    %v614 = vunpack.c.l.b16 %v177
    %v615 = vunpack.c.l.b16 %v178
    %v616 = vunpack.c.l.b16 %v179
    %v617 = vunpack.c.l.b16 %v180
    %v618 = vunpack.c.l.b16 %v181
    %v619 = vunpack.c.l.b16 %v182
    %v620 = vunpack.c.l.b16 %v183
    %v621 = vunpack.c.l.b16 %v184
    %v622 = vunpack.c.l.b16 %v185
    %v623 = vunpack.c.l.b16 %v186
    %v624 = vunpack.c.l.b16 %v187
    %v625 = vunpack.c.l.b16 %v188
    %v626 = vunpack.c.l.b16 %v189
    %v627 = vunpack.c.l.b16 %v190
    %v628 = vunpack.c.l.b16 %v191
    %v629 = vunpack.c.l.b16 %v192
    %v630 = vunpack.c.l.b16 %v193
    %v631 = vunpack.c.l.b16 %v194
    %v632 = vunpack.c.l.b16 %v195
    %v633 = vunpack.c.l.b16 %v196
    %v634 = vunpack.c.l.b16 %v197
    %v635 = vunpack.c.l.b16 %v198
    %v636 = vunpack.c.l.b16 %v199
    %v637 = vunpack.c.l.b16 %v200
    %v638 = vunpack.c.l.b16 %v201
    %v639 = vunpack.c.l.b16 %v202
    %v640 = vunpack.c.l.b16 %v203
    %v641 = vunpack.c.l.b16 %v204
    %v642 = vunpack.c.l.b16 %v205
    %v643 = vunpack.c.l.b16 %v206
    %v644 = vunpack.c.l.b16 %v207
    %v645 = vunpack.c.l.b16 %v208
    %v646 = vunpack.c.l.b16 %v209
    %v647 = vunpack.c.l.b16 %v210
    %v648 = vunpack.c.l.b16 %v211
    %v649 = vunpack.c.l.b16 %v212
    %v650 = vunpack.c.l.b16 %v213
    %v651 = vunpack.c.l.b16 %v214
    %v652 = vunpack.c.l.b16 %v215
    %v653 = vunpack.c.l.b16 %v216
    %v654 = vunpack.c.l.b16 %v217
    %v655 = vunpack.c.l.b16 %v218
    %v656 = vunpack.c.l.b16 %v219
    %v657 = vunpack.c.l.b16 %v220
    %v658 = vunpack.c.l.b16 %v221
    %v659 = vunpack.c.l.b16 %v222
    %v660 = vunpack.c.l.b16 %v223
    %v661 = vunpack.c.l.b16 %v224
    %v662 = vunpack.c.l.b16 %v225
    %v663 = vunpack.c.l.b16 %v226
    %v664 = vunpack.c.l.b16 %v227
    %v665 = vunpack.c.l.b16 %v228
    %v666 = vunpack.c.l.b16 %v229
    %v667 = vunpack.c.l.b16 %v230
    %v668 = vunpack.c.l.b16 %v231
    %v669 = vunpack.c.l.b16 %v232
    %v670 = vunpack.c.l.b16 %v233
    %v671 = vunpack.c.l.b16 %v234
    %v672 = vunpack.c.l.b16 %v235
    %v673 = vunpack.c.l.b16 %v236
    %v674 = vunpack.c.l.b16 %v237
    %v675 = vunpack.c.l.b16 %v238
    %v676 = vunpack.c.l.b16 %v239
    %v677 = vunpack.c.l.b16 %v240
    %v678 = vunpack.c.l.b16 %v241
    %v679 = vunpack.c.l.b16 %v242
    %v680 = vunpack.c.l.b16 %v243
    %v681 = vunpack.c.l.b16 %v244
    %v682 = vunpack.c.l.b16 %v245
    %v683 = vunpack.c.l.b16 %v246
    %v684 = vunpack.c.l.b16 %v247
    %v685 = vunpack.c.l.b16 %v248
    %v686 = vunpack.c.l.b16 %v249
    %v687 = vunpack.c.l.b16 %v250
    %v688 = vunpack.c.l.b16 %v251
    %v689 = vunpack.c.l.b16 %v252
    %v690 = vunpack.c.l.b16 %v253
    %v691 = vunpack.c.l.b16 %v254
    %v692 = vunpack.c.l.b16 %v255
    %v693 = vunpack.c.l.b16 %v256
    %v694 = vunpack.c.l.b16 %v257
    %v695 = vunpack.c.l.b16 %v258
    %v696 = vunpack.c.l.b16 %v259
    %v697 = vunpack.c.l.b16 %v260
    %v698 = vunpack.c.l.b16 %v261
    %v699 = vunpack.c.l.b16 %v262
    %v700 = vunpack.c.l.b16 %v263
    %v701 = vunpack.c.l.b16 %v264
    %v702 = vunpack.c.l.b16 %v265
    %v703 = vunpack.c.l.b16 %v266
    %v704 = vunpack.c.l.b16 %v267
    %v705 = vunpack.c.l.b16 %v268
    %v706 = vunpack.c.l.b16 %v269
    %v707 = vunpack.c.l.b16 %v270
    %v708 = vunpack.c.l.b16 %v271
    %v709 = vunpack.c.l.b16 %v272
    %v710 = vunpack.c.l.b16 %v273
    %v711 = vunpack.c.l.b16 %v274
    %v712 = vunpack.c.l.b16 %v275
    %v713 = vunpack.c.l.b16 %v276
    %v714 = vunpack.c.l.b16 %v277
    %v715 = vunpack.c.l.b16 %v278
    %v716 = vunpack.c.l.b16 %v279
    %v717 = vunpack.c.l.b16 %v280
    %v718 = vunpack.c.l.b16 %v281
    %v719 = vunpack.c.l.b16 %v282
    %v720 = vunpack.c.l.b16 %v283
    %v721 = vunpack.c.l.b16 %v284
    %v722 = vunpack.c.l.b16 %v285
    %v723 = vunpack.c.l.b16 %v286
    %v724 = vunpack.c.l.b16 %v287
    %v725 = vunpack.c.l.b16 %v288
    %v726 = vunpack.c.l.b16 %v289
    %v727 = vunpack.c.l.b16 %v290
    %v728 = vunpack.c.l.b16 %v291
    %v729 = vunpack.c.l.b16 %v292
    %v730 = vunpack.c.l.b16 %v293
    %v731 = vunpack.c.l.b16 %v294
    %v732 = vunpack.c.l.b16 %v295
    %v733 = vunpack.c.l.b16 %v296
    %v734 = vunpack.c.l.b16 %v297
    %v735 = vunpack.c.l.b16 %v298
    %v736 = vunpack.c.l.b16 %v299
    %v737 = vunpack.c.l.b16 %v300
    %v738 = vunpack.c.l.b16 %v301
    %v739 = vunpack.c.l.b16 %v302
    %v740 = vunpack.c.l.b16 %v303
    %v741 = vunpack.c.l.b16 %v304
    %v742 = vunpack.c.l.b16 %v305
    %v743 = vunpack.c.l.b16 %v306
    %v744 = vunpack.c.l.b16 %v307
    %v745 = vunpack.c.l.b16 %v308
    %v746 = vunpack.c.l.b16 %v309
    %v747 = vunpack.c.l.b16 %v310
    %v748 = vunpack.c.l.b16 %v311
    %v749 = vunpack.c.l.b16 %v312
    %v750 = vunpack.c.l.b16 %v313
    %v751 = vunpack.c.l.b16 %v314
    %v752 = vunpack.c.l.b16 %v315
    %v753 = vunpack.c.l.b16 %v316
    %v754 = vunpack.c.l.b16 %v317
    %v755 = vunpack.c.l.b16 %v318
    %v756 = vunpack.c.l.b16 %v319
    %v757 = vunpack.c.l.b16 %v320
    %v758 = vunpack.c.l.b16 %v321
    %v759 = vunpack.c.l.b16 %v322
    %v760 = vunpack.c.l.b16 %v323
    %v761 = vunpack.c.l.b16 %v324
    %v762 = vunpack.c.l.b16 %v325
    %v763 = vunpack.c.l.b16 %v326
    %v764 = vunpack.c.l.b16 %v327
    %v765 = vunpack.c.l.b16 %v328
    %v766 = vunpack.c.l.b16 %v329
    %v767 = vunpack.c.l.b16 %v330
    %v768 = vunpack.c.l.b16 %v331
    %v769 = vunpack.c.l.b16 %v332
    %v770 = vunpack.c.l.b16 %v333
    %v771 = vunpack.c.l.b16 %v334
    %v772 = vpack.c.b16 %v577, %v576
    %v773 = vpack.c.b16 %v579, %v578
    %v774 = vpack.c.b16 %v581, %v580
    %v775 = vpack.c.b16 %v583, %v582
    %v776 = vpack.c.b16 %v585, %v584
    %v777 = vpack.c.b16 %v587, %v586
    %v778 = vpack.c.b16 %v589, %v588
    %v779 = vpack.c.b16 %v591, %v590
    %v780 = vpack.c.b16 %v593, %v592
    %v781 = vpack.c.b16 %v595, %v594
    %v782 = vpack.c.b16 %v597, %v596
    %v783 = vpack.c.b16 %v599, %v598
    %v784 = vpack.c.b16 %v601, %v600
    %v785 = vpack.c.b16 %v603, %v602
    %v786 = vpack.c.b16 %v605, %v604
    %v787 = vpack.c.b16 %v607, %v606
    %v788 = vpack.c.b16 %v609, %v608
    %v789 = vpack.c.b16 %v611, %v610
    %v790 = vpack.c.b16 %v613, %v612
    %v791 = vpack.c.b16 %v615, %v614
    %v792 = vpack.c.b16 %v617, %v616
    %v793 = vpack.c.b16 %v619, %v618
    %v794 = vpack.c.b16 %v621, %v620
    %v795 = vpack.c.b16 %v623, %v622
    %v796 = vpack.c.b16 %v625, %v624
    %v797 = vpack.c.b16 %v627, %v626
    %v798 = vpack.c.b16 %v629, %v628
    %v799 = vpack.c.b16 %v631, %v630
    %v800 = vpack.c.b16 %v633, %v632
    %v801 = vpack.c.b16 %v635, %v634
    %v802 = vpack.c.b16 %v637, %v636
    %v803 = vpack.c.b16 %v639, %v638
    %v804 = vpack.c.b16 %v641, %v640
    %v805 = vpack.c.b16 %v643, %v642
    %v806 = vpack.c.b16 %v645, %v644
    %v807 = vpack.c.b16 %v647, %v646
    %v808 = vpack.c.b16 %v649, %v648
    %v809 = vpack.c.b16 %v651, %v650
    %v810 = vpack.c.b16 %v653, %v652
    %v811 = vpack.c.b16 %v655, %v654
    %v812 = vpack.c.b16 %v657, %v656
    %v813 = vpack.c.b16 %v659, %v658
    %v814 = vpack.c.b16 %v661, %v660
    %v815 = vpack.c.b16 %v663, %v662
    %v816 = vpack.c.b16 %v665, %v664
    %v817 = vpack.c.b16 %v667, %v666
    %v818 = vpack.c.b16 %v669, %v668
    %v819 = vpack.c.b16 %v671, %v670
    %v820 = vpack.c.b16 %v673, %v672
    %v821 = vpack.c.b16 %v675, %v674
    %v822 = vpack.c.b16 %v677, %v676
    %v823 = vpack.c.b16 %v679, %v678
    %v824 = vpack.c.b16 %v681, %v680
    %v825 = vpack.c.b16 %v683, %v682
    %v826 = vpack.c.b16 %v685, %v684
    %v827 = vpack.c.b16 %v687, %v686
    %v828 = vpack.c.b16 %v689, %v688
    %v829 = vpack.c.b16 %v691, %v690
    %v830 = vpack.c.b16 %v693, %v692
    %v831 = vpack.c.b16 %v695, %v694
    %v832 = vpack.c.b16 %v697, %v696
    %v833 = vpack.c.b16 %v699, %v698
    %v834 = vpack.c.b16 %v701, %v700
    %v835 = vpack.c.b16 %v703, %v702
    %v836 = vpack.c.b16 %v705, %v704
    %v837 = vpack.c.b16 %v707, %v706
    %v838 = vpack.c.b16 %v709, %v708
    %v839 = vpack.c.b16 %v711, %v710
    %v840 = vpack.c.b16 %v713, %v712
    %v841 = vpack.c.b16 %v715, %v714
    %v842 = vpack.c.b16 %v717, %v716
    %v843 = vpack.c.b16 %v719, %v718
    %v844 = vpack.c.b16 %v721, %v720
    %v845 = vpack.c.b16 %v723, %v722
    %v846 = vpack.c.b16 %v725, %v724
    %v847 = vpack.c.b16 %v727, %v726
    %v848 = vpack.c.b16 %v729, %v728
    %v849 = vpack.c.b16 %v731, %v730
    %v850 = vpack.c.b16 %v733, %v732
    %v851 = vpack.c.b16 %v735, %v734
    %v852 = vpack.c.b16 %v737, %v736
    %v853 = vpack.c.b16 %v739, %v738
    %v854 = vpack.c.b16 %v741, %v740
    %v855 = vpack.c.b16 %v743, %v742
    %v856 = vpack.c.b16 %v745, %v744
    %v857 = vpack.c.b16 %v747, %v746
    %v858 = vpack.c.b16 %v749, %v748
    %v859 = vpack.c.b16 %v751, %v750
    %v860 = vpack.c.b16 %v753, %v752
    %v861 = vpack.c.b16 %v755, %v754
    %v862 = vpack.c.b16 %v757, %v756
    %v863 = vpack.c.b16 %v759, %v758
    %v864 = vpack.c.b16 %v761, %v760
    %v865 = vpack.c.b16 %v763, %v762
    %v866 = vpack.c.b16 %v765, %v764
    %v867 = vpack.c.b16 %v767, %v766
    %v868 = vpack.c.b16 %v769, %v768
    %v869 = vpack.c.b16 %v771, %v770
    %vm968 = vcmask 261120
    %v970 = vsel %vm968, %v367, 0
    %972 = vmatprep.subr.bf16.mxu0 0
    %973 = vmatpush1.bf16.msra.mxu0 %v772
    %974 = vmatprep.subr.bf16.mxu0 0
    %975 = vmatpush1.bf16.msra.mxu0 %v773
    %976 = vmatprep.subr.bf16.mxu0 0
    %977 = vmatpush1.bf16.msra.mxu0 %v774
    %978 = vmatprep.subr.bf16.mxu0 0
    %979 = vmatpush1.bf16.msra.mxu0 %v775
    %980 = vmatprep.subr.bf16.mxu0 0
    %981 = vmatpush1.bf16.msra.mxu0 %v776
    %982 = vmatprep.subr.bf16.mxu0 0
    %983 = vmatpush1.bf16.msra.mxu0 %v777
    %984 = vmatprep.subr.bf16.mxu0 0
    %985 = vmatpush1.bf16.msra.mxu0 %v778
    %986 = vmatprep.subr.bf16.mxu0 0
    %987 = vmatpush1.bf16.msra.mxu0 %v779
    %988 = vmatprep.subr.bf16.mxu0 0
    %989 = vmatpush1.bf16.msra.mxu0 %v780
    %990 = vmatprep.subr.bf16.mxu0 0
    %991 = vmatpush1.bf16.msra.mxu0 %v781
    %992 = vmatprep.subr.bf16.mxu0 0
    %993 = vmatpush1.bf16.msra.mxu0 %v782
    %994 = vmatprep.subr.bf16.mxu0 0
    %995 = vmatpush1.bf16.msra.mxu0 %v783
    %996 = vmatprep.subr.bf16.mxu0 0
    %997 = vmatpush1.bf16.msra.mxu0 %v784
    %998 = vmatprep.subr.bf16.mxu0 0
    %999 = vmatpush1.bf16.msra.mxu0 %v785
    %1000 = vmatprep.subr.bf16.mxu0 0
    %1001 = vmatpush1.bf16.msra.mxu0 %v786
    %1002 = vmatprep.subr.bf16.mxu0 0
    %1003 = vmatpush1.bf16.msra.mxu0 %v787
    %1004 = vmatprep.mubr.bf16.mxu0 %v356
    %1005 = vmatmul.mubr.bf16.gmra.mrb[0].mxu0 %v355
    %v1006 = vpop.f32.mrb[0].mxu0
    %v1007 = vadd.f32 0.0, %v1006
    %v1008 = vpop.f32.mrb[0].mxu0
    %v1009 = vpop.f32.mrb[0].mxu0
    %v1010 = vpop.f32.mrb[0].mxu0
    %1011 = vdwg.mxu0
    %1012 = vmatprep.subr.bf16.mxu0 0
    %1013 = vmatpush1.bf16.msra.mxu0 %v788
    %1014 = vmatprep.subr.bf16.mxu0 0
    %1015 = vmatpush1.bf16.msra.mxu0 %v789
    %1016 = vmatprep.subr.bf16.mxu0 0
    %1017 = vmatpush1.bf16.msra.mxu0 %v790
    %1018 = vmatprep.subr.bf16.mxu0 0
    %1019 = vmatpush1.bf16.msra.mxu0 %v791
    %1020 = vmatprep.subr.bf16.mxu0 0
    %1021 = vmatpush1.bf16.msra.mxu0 %v792
    %1022 = vmatprep.subr.bf16.mxu0 0
    %1023 = vmatpush1.bf16.msra.mxu0 %v793
    %1024 = vmatprep.subr.bf16.mxu0 0
    %1025 = vmatpush1.bf16.msra.mxu0 %v794
    %1026 = vmatprep.subr.bf16.mxu0 0
    %1027 = vmatpush1.bf16.msra.mxu0 %v795
    %1028 = vmatprep.subr.bf16.mxu0 0
    %1029 = vmatpush1.bf16.msra.mxu0 %v796
    %1030 = vmatprep.subr.bf16.mxu0 0
    %1031 = vmatpush1.bf16.msra.mxu0 %v797
    %1032 = vmatprep.subr.bf16.mxu0 0
    %1033 = vmatpush1.bf16.msra.mxu0 %v798
    %1034 = vmatprep.subr.bf16.mxu0 0
    %1035 = vmatpush1.bf16.msra.mxu0 %v799
    %1036 = vmatprep.subr.bf16.mxu0 0
    %1037 = vmatpush1.bf16.msra.mxu0 %v800
    %1038 = vmatprep.subr.bf16.mxu0 0
    %1039 = vmatpush1.bf16.msra.mxu0 %v801
    %1040 = vmatprep.subr.bf16.mxu0 0
    %1041 = vmatpush1.bf16.msra.mxu0 %v802
    %1042 = vmatprep.subr.bf16.mxu0 0
    %1043 = vmatpush1.bf16.msra.mxu0 %v803
    %1044 = vmatprep.mubr.bf16.mxu0 %v358
    %1045 = vmatmul.mubr.bf16.gmra.mrb[0].mxu0 %v357
    %v1046 = vpop.f32.mrb[0].mxu0
    %v1047 = vadd.f32 %v1007, %v1046
    %v1048 = vpop.f32.mrb[0].mxu0
    %v1049 = vpop.f32.mrb[0].mxu0
    %v1050 = vpop.f32.mrb[0].mxu0
    %1051 = vdwg.mxu0
    %1052 = vmatprep.subr.bf16.mxu0 0
    %1053 = vmatpush1.bf16.msra.mxu0 %v804
    %1054 = vmatprep.subr.bf16.mxu0 0
    %1055 = vmatpush1.bf16.msra.mxu0 %v805
    %1056 = vmatprep.subr.bf16.mxu0 0
    %1057 = vmatpush1.bf16.msra.mxu0 %v806
    %1058 = vmatprep.subr.bf16.mxu0 0
    %1059 = vmatpush1.bf16.msra.mxu0 %v807
    %1060 = vmatprep.subr.bf16.mxu0 0
    %1061 = vmatpush1.bf16.msra.mxu0 %v808
    %1062 = vmatprep.subr.bf16.mxu0 0
    %1063 = vmatpush1.bf16.msra.mxu0 %v809
    %1064 = vmatprep.subr.bf16.mxu0 0
    %1065 = vmatpush1.bf16.msra.mxu0 %v810
    %1066 = vmatprep.subr.bf16.mxu0 0
    %1067 = vmatpush1.bf16.msra.mxu0 %v811
    %1068 = vmatprep.subr.bf16.mxu0 0
    %1069 = vmatpush1.bf16.msra.mxu0 %v812
    %1070 = vmatprep.subr.bf16.mxu0 0
    %1071 = vmatpush1.bf16.msra.mxu0 %v813
    %1072 = vmatprep.subr.bf16.mxu0 0
    %1073 = vmatpush1.bf16.msra.mxu0 %v814
    %1074 = vmatprep.subr.bf16.mxu0 0
    %1075 = vmatpush1.bf16.msra.mxu0 %v815
    %1076 = vmatprep.subr.bf16.mxu0 0
    %1077 = vmatpush1.bf16.msra.mxu0 %v816
    %1078 = vmatprep.subr.bf16.mxu0 0
    %1079 = vmatpush1.bf16.msra.mxu0 %v817
    %1080 = vmatprep.subr.bf16.mxu0 0
    %1081 = vmatpush1.bf16.msra.mxu0 %v818
    %1082 = vmatprep.subr.bf16.mxu0 0
    %1083 = vmatpush1.bf16.msra.mxu0 %v819
    %1084 = vmatprep.mubr.bf16.mxu0 %v360
    %1085 = vmatmul.mubr.bf16.gmra.mrb[0].mxu0 %v359
    %v1086 = vpop.f32.mrb[0].mxu0
    %v1087 = vadd.f32 %v1047, %v1086
    %v1088 = vpop.f32.mrb[0].mxu0
    %v1089 = vpop.f32.mrb[0].mxu0
    %v1090 = vpop.f32.mrb[0].mxu0
    %1091 = vdwg.mxu0
    %1092 = vmatprep.subr.bf16.mxu0 0
    %1093 = vmatpush1.bf16.msra.mxu0 %v820
    %1094 = vmatprep.subr.bf16.mxu0 0
    %1095 = vmatpush1.bf16.msra.mxu0 %v821
    %1096 = vmatprep.subr.bf16.mxu0 0
    %1097 = vmatpush1.bf16.msra.mxu0 %v822
    %1098 = vmatprep.subr.bf16.mxu0 0
    %1099 = vmatpush1.bf16.msra.mxu0 %v823
    %1100 = vmatprep.subr.bf16.mxu0 0
    %1101 = vmatpush1.bf16.msra.mxu0 %v824
    %1102 = vmatprep.subr.bf16.mxu0 0
    %1103 = vmatpush1.bf16.msra.mxu0 %v825
    %1104 = vmatprep.subr.bf16.mxu0 0
    %1105 = vmatpush1.bf16.msra.mxu0 %v826
    %1106 = vmatprep.subr.bf16.mxu0 0
    %1107 = vmatpush1.bf16.msra.mxu0 %v827
    %1108 = vmatprep.subr.bf16.mxu0 0
    %1109 = vmatpush1.bf16.msra.mxu0 %v828
    %1110 = vmatprep.subr.bf16.mxu0 0
    %1111 = vmatpush1.bf16.msra.mxu0 %v829
    %1112 = vmatprep.subr.bf16.mxu0 0
    %1113 = vmatpush1.bf16.msra.mxu0 %v830
    %1114 = vmatprep.subr.bf16.mxu0 0
    %1115 = vmatpush1.bf16.msra.mxu0 %v831
    %1116 = vmatprep.subr.bf16.mxu0 0
    %1117 = vmatpush1.bf16.msra.mxu0 %v832
    %1118 = vmatprep.subr.bf16.mxu0 0
    %1119 = vmatpush1.bf16.msra.mxu0 %v833
    %1120 = vmatprep.subr.bf16.mxu0 0
    %1121 = vmatpush1.bf16.msra.mxu0 %v834
    %1122 = vmatprep.subr.bf16.mxu0 0
    %1123 = vmatpush1.bf16.msra.mxu0 %v835
    %1124 = vmatprep.mubr.bf16.mxu0 %v362
    %1125 = vmatmul.mubr.bf16.gmra.mrb[0].mxu0 %v361
    %v1126 = vpop.f32.mrb[0].mxu0
    %v1127 = vadd.f32 %v1087, %v1126
    %v1128 = vpop.f32.mrb[0].mxu0
    %v1129 = vpop.f32.mrb[0].mxu0
    %v1130 = vpop.f32.mrb[0].mxu0
    %1131 = vdwg.mxu0
    %1132 = vmatprep.subr.bf16.mxu0 0
    %1133 = vmatpush1.bf16.msra.mxu0 %v836
    %1134 = vmatprep.subr.bf16.mxu0 0
    %1135 = vmatpush1.bf16.msra.mxu0 %v837
    %1136 = vmatprep.subr.bf16.mxu0 0
    %1137 = vmatpush1.bf16.msra.mxu0 %v838
    %1138 = vmatprep.subr.bf16.mxu0 0
    %1139 = vmatpush1.bf16.msra.mxu0 %v839
    %1140 = vmatprep.subr.bf16.mxu0 0
    %1141 = vmatpush1.bf16.msra.mxu0 %v840
    %1142 = vmatprep.subr.bf16.mxu0 0
    %1143 = vmatpush1.bf16.msra.mxu0 %v841
    %1144 = vmatprep.subr.bf16.mxu0 0
    %1145 = vmatpush1.bf16.msra.mxu0 %v842
    %1146 = vmatprep.subr.bf16.mxu0 0
    %1147 = vmatpush1.bf16.msra.mxu0 %v843
    %1148 = vmatprep.subr.bf16.mxu0 0
    %1149 = vmatpush1.bf16.msra.mxu0 %v844
    %1150 = vmatprep.subr.bf16.mxu0 0
    %1151 = vmatpush1.bf16.msra.mxu0 %v845
    %1152 = vmatprep.subr.bf16.mxu0 0
    %1153 = vmatpush1.bf16.msra.mxu0 %v846
    %1154 = vmatprep.subr.bf16.mxu0 0
    %1155 = vmatpush1.bf16.msra.mxu0 %v847
    %1156 = vmatprep.subr.bf16.mxu0 0
    %1157 = vmatpush1.bf16.msra.mxu0 %v848
    %1158 = vmatprep.subr.bf16.mxu0 0
    %1159 = vmatpush1.bf16.msra.mxu0 %v849
    %1160 = vmatprep.subr.bf16.mxu0 0
    %1161 = vmatpush1.bf16.msra.mxu0 %v850
    %1162 = vmatprep.subr.bf16.mxu0 0
    %1163 = vmatpush1.bf16.msra.mxu0 %v851
    %1164 = vmatprep.mubr.bf16.mxu0 %v364
    %1165 = vmatmul.mubr.bf16.gmra.mrb[0].mxu0 %v363
    %v1166 = vpop.f32.mrb[0].mxu0
    %v1167 = vadd.f32 %v1127, %v1166
    %v1168 = vpop.f32.mrb[0].mxu0
    %v1169 = vpop.f32.mrb[0].mxu0
    %v1170 = vpop.f32.mrb[0].mxu0
    %1171 = vdwg.mxu0
    %1172 = vmatprep.subr.bf16.mxu0 0
    %1173 = vmatpush1.bf16.msra.mxu0 %v852
    %1174 = vmatprep.subr.bf16.mxu0 0
    %1175 = vmatpush1.bf16.msra.mxu0 %v853
    %1176 = vmatprep.subr.bf16.mxu0 0
    %1177 = vmatpush1.bf16.msra.mxu0 %v854
    %1178 = vmatprep.subr.bf16.mxu0 0
    %1179 = vmatpush1.bf16.msra.mxu0 %v855
    %1180 = vmatprep.subr.bf16.mxu0 0
    %1181 = vmatpush1.bf16.msra.mxu0 %v856
    %1182 = vmatprep.subr.bf16.mxu0 0
    %1183 = vmatpush1.bf16.msra.mxu0 %v857
    %1184 = vmatprep.subr.bf16.mxu0 0
    %1185 = vmatpush1.bf16.msra.mxu0 %v858
    %1186 = vmatprep.subr.bf16.mxu0 0
    %1187 = vmatpush1.bf16.msra.mxu0 %v859
    %1188 = vmatprep.subr.bf16.mxu0 0
    %1189 = vmatpush1.bf16.msra.mxu0 %v860
    %1190 = vmatprep.subr.bf16.mxu0 0
    %1191 = vmatpush1.bf16.msra.mxu0 %v861
    %1192 = vmatprep.subr.bf16.mxu0 0
    %1193 = vmatpush1.bf16.msra.mxu0 %v862
    %1194 = vmatprep.subr.bf16.mxu0 0
    %1195 = vmatpush1.bf16.msra.mxu0 %v863
    %1196 = vmatprep.subr.bf16.mxu0 0
    %1197 = vmatpush1.bf16.msra.mxu0 %v864
    %1198 = vmatprep.subr.bf16.mxu0 0
    %1199 = vmatpush1.bf16.msra.mxu0 %v865
    %1200 = vmatprep.subr.bf16.mxu0 0
    %1201 = vmatpush1.bf16.msra.mxu0 %v866
    %1202 = vmatprep.subr.bf16.mxu0 0
    %1203 = vmatpush1.bf16.msra.mxu0 %v867
    %1204 = vmatprep.mubr.bf16.mxu0 %v366
    %1205 = vmatmul.mubr.bf16.gmra.mrb[0].mxu0 %v365
    %v1206 = vpop.f32.mrb[0].mxu0
    %v1207 = vadd.f32 %v1167, %v1206
    %v1208 = vpop.f32.mrb[0].mxu0
    %v1209 = vpop.f32.mrb[0].mxu0
    %v1210 = vpop.f32.mrb[0].mxu0
    %1211 = vdwg.mxu0
    %1212 = vmatprep.subr.bf16.mxu0 0
    %1213 = vmatpush1.bf16.msra.mxu0 %v868
    %1214 = vmatprep.subr.bf16.mxu0 0
    %1215 = vmatpush1.bf16.msra.mxu0 %v869
    %1216 = vmatprep.subr.bf16.mxu0 0
    %1217 = vmatpush1.bf16.msra.mxu0 0
    %1218 = vmatprep.subr.bf16.mxu0 0
    %1219 = vmatpush1.bf16.msra.mxu0 0
    %1220 = vmatprep.subr.bf16.mxu0 0
    %1221 = vmatpush1.bf16.msra.mxu0 0
    %1222 = vmatprep.subr.bf16.mxu0 0
    %1223 = vmatpush1.bf16.msra.mxu0 0
    %1224 = vmatprep.subr.bf16.mxu0 0
    %1225 = vmatpush1.bf16.msra.mxu0 0
    %1226 = vmatprep.subr.bf16.mxu0 0
    %1227 = vmatpush1.bf16.msra.mxu0 0
    %1228 = vmatprep.subr.bf16.mxu0 0
    %1229 = vmatpush1.bf16.msra.mxu0 0
    %1230 = vmatprep.subr.bf16.mxu0 0
    %1231 = vmatpush1.bf16.msra.mxu0 0
    %1232 = vmatprep.subr.bf16.mxu0 0
    %1233 = vmatpush1.bf16.msra.mxu0 0
    %1234 = vmatprep.subr.bf16.mxu0 0
    %1235 = vmatpush1.bf16.msra.mxu0 0
    %1236 = vmatprep.subr.bf16.mxu0 0
    %1237 = vmatpush1.bf16.msra.mxu0 0
    %1238 = vmatprep.subr.bf16.mxu0 0
    %1239 = vmatpush1.bf16.msra.mxu0 0
    %1240 = vmatprep.subr.bf16.mxu0 0
    %1241 = vmatpush1.bf16.msra.mxu0 0
    %1242 = vmatprep.subr.bf16.mxu0 0
    %1243 = vmatpush1.bf16.msra.mxu0 0
    %1244 = vmatprep.mubr.bf16.mxu0 0
    %1245 = vmatmul.mubr.bf16.gmra.mrb[0].mxu0 %v970
    %v1246 = vpop.f32.mrb[0].mxu0
    %v1247 = vadd.f32 %v1207, %v1246
    %v1248 = vpop.f32.mrb[0].mxu0
    %v1249 = vpop.f32.mrb[0].mxu0
    %v1250 = vpop.f32.mrb[0].mxu0
    %1251 = vdwg.mxu0
    %v1252 = vpack.c.bf16 %v1247, %v1247
    %v1253 = vld [vmem:[#allocation7] sm:$0xff]
    %v1254 = vld [vmem:[#allocation7 + $0x8] sm:$0xff]
    %v1255 = vld [vmem:[#allocation7 + $0x10] sm:$0xff]
    %v1256 = vld [vmem:[#allocation7 + $0x18] sm:$0xff]
    %v1257 = vld [vmem:[#allocation7 + $0x20] sm:$0xff]
    %v1258 = vld [vmem:[#allocation7 + $0x28] sm:$0xff]
    %v1259 = vld [vmem:[#allocation7 + $0x30] sm:$0xff]
    %v1260 = vld [vmem:[#allocation7 + $0x38] sm:$0xff]
    %v1261 = vld [vmem:[#allocation7 + $0x40] sm:$0xff]
    %v1262 = vld [vmem:[#allocation7 + $0x48] sm:$0xff]
    %v1263 = vld [vmem:[#allocation7 + $0x50] sm:$0xff]
    %v1264 = vld [vmem:[#allocation7 + $0x58] sm:$0xff]
    %v1265 = vld [vmem:[#allocation7 + $0x60] sm:$0xff]
    %v1266 = vld [vmem:[#allocation7 + $0x68] sm:$0xff]
    %v1267 = vld [vmem:[#allocation7 + $0x70] sm:$0xff]
    %v1268 = vld [vmem:[#allocation7 + $0x78] sm:$0xff]
    %v1269 = vld [vmem:[#allocation7 + $0x80] sm:$0xff]
    %v1270 = vld [vmem:[#allocation7 + $0x88] sm:$0xff]
    %v1271 = vld [vmem:[#allocation7 + $0x90] sm:$0xff]
    %v1272 = vld [vmem:[#allocation7 + $0x98] sm:$0xff]
    %v1273 = vld [vmem:[#allocation7 + $0xa0] sm:$0xff]
    %v1274 = vld [vmem:[#allocation7 + $0xa8] sm:$0xff]
    %v1275 = vld [vmem:[#allocation7 + $0xb0] sm:$0xff]
    %v1276 = vld [vmem:[#allocation7 + $0xb8] sm:$0xff]
    %v1277 = vld [vmem:[#allocation7 + $0xc0] sm:$0xff]
    %v1278 = vld [vmem:[#allocation7 + $0xc8] sm:$0xff]
    %v1279 = vld [vmem:[#allocation7 + $0xd0] sm:$0xff]
    %v1280 = vld [vmem:[#allocation7 + $0xd8] sm:$0xff]
    %v1281 = vld [vmem:[#allocation7 + $0xe0] sm:$0xff]
    %v1282 = vld [vmem:[#allocation7 + $0xe8] sm:$0xff]
    %v1283 = vld [vmem:[#allocation7 + $0xf0] sm:$0xff]
    %v1284 = vld [vmem:[#allocation7 + $0xf8] sm:$0xff]
    %v1285 = vld [vmem:[#allocation7 + $0x100] sm:$0xff]
    %v1286 = vld [vmem:[#allocation7 + $0x108] sm:$0xff]
    %v1287 = vld [vmem:[#allocation7 + $0x110] sm:$0xff]
    %v1288 = vld [vmem:[#allocation7 + $0x118] sm:$0xff]
    %v1289 = vld [vmem:[#allocation7 + $0x120] sm:$0xff]
    %v1290 = vld [vmem:[#allocation7 + $0x128] sm:$0xff]
    %v1291 = vld [vmem:[#allocation7 + $0x130] sm:$0xff]
    %v1292 = vld [vmem:[#allocation7 + $0x138] sm:$0xff]
    %v1293 = vld [vmem:[#allocation7 + $0x140] sm:$0xff]
    %v1294 = vld [vmem:[#allocation7 + $0x148] sm:$0xff]
    %v1295 = vld [vmem:[#allocation7 + $0x150] sm:$0xff]
    %v1296 = vld [vmem:[#allocation7 + $0x158] sm:$0xff]
    %v1297 = vld [vmem:[#allocation7 + $0x160] sm:$0xff]
    %v1298 = vld [vmem:[#allocation7 + $0x168] sm:$0xff]
    %v1299 = vld [vmem:[#allocation7 + $0x170] sm:$0xff]
    %v1300 = vld [vmem:[#allocation7 + $0x178] sm:$0xff]
    %v1301 = vld [vmem:[#allocation7 + $0x180] sm:$0xff]
    %v1302 = vld [vmem:[#allocation7 + $0x188] sm:$0xff]
    %v1303 = vld [vmem:[#allocation7 + $0x190] sm:$0xff]
    %v1304 = vld [vmem:[#allocation7 + $0x198] sm:$0xff]
    %v1305 = vld [vmem:[#allocation7 + $0x1a0] sm:$0xff]
    %v1306 = vld [vmem:[#allocation7 + $0x1a8] sm:$0xff]
    %v1307 = vld [vmem:[#allocation7 + $0x1b0] sm:$0xff]
    %v1308 = vld [vmem:[#allocation7 + $0x1b8] sm:$0xff]
    %v1309 = vld [vmem:[#allocation7 + $0x1c0] sm:$0xff]
    %v1310 = vld [vmem:[#allocation7 + $0x1c8] sm:$0xff]
    %v1311 = vld [vmem:[#allocation7 + $0x1d0] sm:$0xff]
    %v1312 = vld [vmem:[#allocation7 + $0x1d8] sm:$0xff]
    %v1313 = vld [vmem:[#allocation7 + $0x1e0] sm:$0xff]
    %v1314 = vld [vmem:[#allocation7 + $0x1e8] sm:$0xff]
    %v1315 = vld [vmem:[#allocation7 + $0x1f0] sm:$0xff]
    %v1316 = vld [vmem:[#allocation7 + $0x1f8] sm:$0xff]
    %v1317 = vld [vmem:[#allocation7 + $0x200] sm:$0xff]
    %v1318 = vld [vmem:[#allocation7 + $0x208] sm:$0xff]
    %v1319 = vld [vmem:[#allocation7 + $0x210] sm:$0xff]
    %v1320 = vld [vmem:[#allocation7 + $0x218] sm:$0xff]
    %v1321 = vld [vmem:[#allocation7 + $0x220] sm:$0xff]
    %v1322 = vld [vmem:[#allocation7 + $0x228] sm:$0xff]
    %v1323 = vld [vmem:[#allocation7 + $0x230] sm:$0xff]
    %v1324 = vld [vmem:[#allocation7 + $0x238] sm:$0xff]
    %v1325 = vld [vmem:[#allocation7 + $0x240] sm:$0xff]
    %v1326 = vld [vmem:[#allocation7 + $0x248] sm:$0xff]
    %v1327 = vld [vmem:[#allocation7 + $0x250] sm:$0xff]
    %v1328 = vld [vmem:[#allocation7 + $0x258] sm:$0xff]
    %v1329 = vld [vmem:[#allocation7 + $0x260] sm:$0xff]
    %v1330 = vld [vmem:[#allocation7 + $0x268] sm:$0xff]
    %v1331 = vld [vmem:[#allocation7 + $0x270] sm:$0xff]
    %v1332 = vld [vmem:[#allocation7 + $0x278] sm:$0xff]
    %v1333 = vld [vmem:[#allocation7 + $0x280] sm:$0xff]
    %v1334 = vld [vmem:[#allocation7 + $0x288] sm:$0xff]
    %v1335 = vld [vmem:[#allocation7 + $0x290] sm:$0xff]
    %v1336 = vld [vmem:[#allocation7 + $0x298] sm:$0xff]
    %v1337 = vld [vmem:[#allocation7 + $0x2a0] sm:$0xff]
    %v1338 = vld [vmem:[#allocation7 + $0x2a8] sm:$0xff]
    %v1339 = vld [vmem:[#allocation7 + $0x2b0] sm:$0xff]
    %v1340 = vld [vmem:[#allocation7 + $0x2b8] sm:$0xff]
    %v1341 = vld [vmem:[#allocation7 + $0x2c0] sm:$0xff]
    %v1342 = vld [vmem:[#allocation7 + $0x2c8] sm:$0xff]
    %v1343 = vld [vmem:[#allocation7 + $0x2d0] sm:$0xff]
    %v1344 = vld [vmem:[#allocation7 + $0x2d8] sm:$0xff]
    %v1345 = vld [vmem:[#allocation7 + $0x2e0] sm:$0xff]
    %v1346 = vld [vmem:[#allocation7 + $0x2e8] sm:$0xff]
    %v1347 = vld [vmem:[#allocation7 + $0x2f0] sm:$0xff]
    %v1348 = vld [vmem:[#allocation7 + $0x2f8] sm:$0xff]
    %v1349 = vld [vmem:[#allocation7 + $0x300] sm:$0xff]
    %v1350 = vld [vmem:[#allocation7 + $0x308] sm:$0xff]
    %v1351 = vld [vmem:[#allocation7 + $0x310] sm:$0xff]
    %v1352 = vld [vmem:[#allocation7 + $0x318] sm:$0xff]
    %v1353 = vld [vmem:[#allocation7 + $0x320] sm:$0xff]
    %v1354 = vld [vmem:[#allocation7 + $0x328] sm:$0xff]
    %v1355 = vld [vmem:[#allocation7 + $0x330] sm:$0xff]
    %v1356 = vld [vmem:[#allocation7 + $0x338] sm:$0xff]
    %v1357 = vld [vmem:[#allocation7 + $0x340] sm:$0xff]
    %v1358 = vld [vmem:[#allocation7 + $0x348] sm:$0xff]
    %v1359 = vld [vmem:[#allocation7 + $0x350] sm:$0xff]
    %v1360 = vld [vmem:[#allocation7 + $0x358] sm:$0xff]
    %v1361 = vld [vmem:[#allocation7 + $0x360] sm:$0xff]
    %v1362 = vld [vmem:[#allocation7 + $0x368] sm:$0xff]
    %v1363 = vld [vmem:[#allocation7 + $0x370] sm:$0xff]
    %v1364 = vld [vmem:[#allocation7 + $0x378] sm:$0xff]
    %v1365 = vld [vmem:[#allocation7 + $0x380] sm:$0xff]
    %v1366 = vld [vmem:[#allocation7 + $0x388] sm:$0xff]
    %v1367 = vld [vmem:[#allocation7 + $0x390] sm:$0xff]
    %v1368 = vld [vmem:[#allocation7 + $0x398] sm:$0xff]
    %v1369 = vld [vmem:[#allocation7 + $0x3a0] sm:$0xff]
    %v1370 = vld [vmem:[#allocation7 + $0x3a8] sm:$0xff]
    %v1371 = vld [vmem:[#allocation7 + $0x3b0] sm:$0xff]
    %v1372 = vld [vmem:[#allocation7 + $0x3b8] sm:$0xff]
    %v1373 = vld [vmem:[#allocation7 + $0x3c0] sm:$0xff]
    %v1374 = vld [vmem:[#allocation7 + $0x3c8] sm:$0xff]
    %v1375 = vld [vmem:[#allocation7 + $0x3d0] sm:$0xff]
    %v1376 = vld [vmem:[#allocation7 + $0x3d8] sm:$0xff]
    %v1377 = vld [vmem:[#allocation7 + $0x3e0] sm:$0xff]
    %v1378 = vld [vmem:[#allocation7 + $0x3e8] sm:$0xff]
    %v1379 = vld [vmem:[#allocation7 + $0x3f0] sm:$0xff]
    %v1380 = vld [vmem:[#allocation7 + $0x3f8] sm:$0xff]
    %v1381 = vld [vmem:[#allocation8] sm:$0xff]
    %v1382 = vld [vmem:[#allocation8 + $0x8] sm:$0xff]
    %v1385 = vlaneseq
    %v1386 = vshrl.u32 %v1385, 7
    %v1387 = vsub.s32 0, %v1386
    %v1388 = vrot.slane %v1381, %v1387
    %v1389 = vlaneseq
    %v1390 = vshrl.u32 %v1389, 7
    %v1391 = vsub.s32 1, %v1390
    %v1392 = vrot.slane %v1381, %v1391
    %v1393 = vlaneseq
    %v1394 = vshrl.u32 %v1393, 7
    %v1395 = vsub.s32 2, %v1394
    %v1396 = vrot.slane %v1381, %v1395
    %v1397 = vlaneseq
    %v1398 = vshrl.u32 %v1397, 7
    %v1399 = vsub.s32 3, %v1398
    %v1400 = vrot.slane %v1381, %v1399
    %v1401 = vlaneseq
    %v1402 = vshrl.u32 %v1401, 7
    %v1403 = vsub.s32 4, %v1402
    %v1404 = vrot.slane %v1381, %v1403
    %v1405 = vlaneseq
    %v1406 = vshrl.u32 %v1405, 7
    %v1407 = vsub.s32 5, %v1406
    %v1408 = vrot.slane %v1381, %v1407
    %v1409 = vlaneseq
    %v1410 = vshrl.u32 %v1409, 7
    %v1411 = vsub.s32 6, %v1410
    %v1412 = vrot.slane %v1381, %v1411
    %v1413 = vlaneseq
    %v1414 = vshrl.u32 %v1413, 7
    %v1415 = vsub.s32 7, %v1414
    %v1416 = vrot.slane %v1381, %v1415
    %v1417 = vlaneseq
    %v1418 = vshrl.u32 %v1417, 7
    %v1419 = vsub.s32 0, %v1418
    %v1420 = vrot.slane %v1382, %v1419
    %v1421 = vlaneseq
    %v1422 = vshrl.u32 %v1421, 7
    %v1423 = vsub.s32 1, %v1422
    %v1424 = vrot.slane %v1382, %v1423
    %v1425 = vlaneseq
    %v1426 = vshrl.u32 %v1425, 7
    %v1427 = vsub.s32 2, %v1426
    %v1428 = vrot.slane %v1382, %v1427
    %v1429 = vlaneseq
    %v1430 = vshrl.u32 %v1429, 7
    %v1431 = vsub.s32 3, %v1430
    %v1432 = vrot.slane %v1382, %v1431
    %v1433 = vlaneseq
    %v1434 = vshrl.u32 %v1433, 7
    %v1435 = vsub.s32 4, %v1434
    %v1436 = vrot.slane %v1382, %v1435
    %v1437 = vlaneseq
    %v1438 = vshrl.u32 %v1437, 7
    %v1439 = vsub.s32 5, %v1438
    %v1440 = vrot.slane %v1382, %v1439
    %v1441 = vlaneseq
    %v1442 = vshrl.u32 %v1441, 7
    %v1443 = vsub.s32 6, %v1442
    %v1444 = vrot.slane %v1382, %v1443
    %v1445 = vlaneseq
    %v1446 = vshrl.u32 %v1445, 7
    %v1447 = vsub.s32 7, %v1446
    %v1448 = vrot.slane %v1382, %v1447
    %v1593 = vunpack.c.l.b16 %v1253
    %v1594 = vunpack.c.h.b16 %v1253
    %v1595 = vunpack.c.l.b16 %v1254
    %v1596 = vunpack.c.h.b16 %v1254
    %v1597 = vunpack.c.l.b16 %v1255
    %v1598 = vunpack.c.h.b16 %v1255
    %v1599 = vunpack.c.l.b16 %v1256
    %v1600 = vunpack.c.h.b16 %v1256
    %v1601 = vunpack.c.l.b16 %v1257
    %v1602 = vunpack.c.h.b16 %v1257
    %v1603 = vunpack.c.l.b16 %v1258
    %v1604 = vunpack.c.h.b16 %v1258
    %v1605 = vunpack.c.l.b16 %v1259
    %v1606 = vunpack.c.h.b16 %v1259
    %v1607 = vunpack.c.l.b16 %v1260
    %v1608 = vunpack.c.h.b16 %v1260
    %v1609 = vunpack.c.l.b16 %v1261
    %v1610 = vunpack.c.h.b16 %v1261
    %v1611 = vunpack.c.l.b16 %v1262
    %v1612 = vunpack.c.h.b16 %v1262
    %v1613 = vunpack.c.l.b16 %v1263
    %v1614 = vunpack.c.h.b16 %v1263
    %v1615 = vunpack.c.l.b16 %v1264
    %v1616 = vunpack.c.h.b16 %v1264
    %v1617 = vunpack.c.l.b16 %v1265
    %v1618 = vunpack.c.h.b16 %v1265
    %v1619 = vunpack.c.l.b16 %v1266
    %v1620 = vunpack.c.h.b16 %v1266
    %v1621 = vunpack.c.l.b16 %v1267
    %v1622 = vunpack.c.h.b16 %v1267
    %v1623 = vunpack.c.l.b16 %v1268
    %v1624 = vunpack.c.h.b16 %v1268
    %v1625 = vunpack.c.l.b16 %v1269
    %v1626 = vunpack.c.h.b16 %v1269
    %v1627 = vunpack.c.l.b16 %v1270
    %v1628 = vunpack.c.h.b16 %v1270
    %v1629 = vunpack.c.l.b16 %v1271
    %v1630 = vunpack.c.h.b16 %v1271
    %v1631 = vunpack.c.l.b16 %v1272
    %v1632 = vunpack.c.h.b16 %v1272
    %v1633 = vunpack.c.l.b16 %v1273
    %v1634 = vunpack.c.h.b16 %v1273
    %v1635 = vunpack.c.l.b16 %v1274
    %v1636 = vunpack.c.h.b16 %v1274
    %v1637 = vunpack.c.l.b16 %v1275
    %v1638 = vunpack.c.h.b16 %v1275
    %v1639 = vunpack.c.l.b16 %v1276
    %v1640 = vunpack.c.h.b16 %v1276
    %v1641 = vunpack.c.l.b16 %v1277
    %v1642 = vunpack.c.h.b16 %v1277
    %v1643 = vunpack.c.l.b16 %v1278
    %v1644 = vunpack.c.h.b16 %v1278
    %v1645 = vunpack.c.l.b16 %v1279
    %v1646 = vunpack.c.h.b16 %v1279
    %v1647 = vunpack.c.l.b16 %v1280
    %v1648 = vunpack.c.h.b16 %v1280
    %v1649 = vunpack.c.l.b16 %v1281
    %v1650 = vunpack.c.h.b16 %v1281
    %v1651 = vunpack.c.l.b16 %v1282
    %v1652 = vunpack.c.h.b16 %v1282
    %v1653 = vunpack.c.l.b16 %v1283
    %v1654 = vunpack.c.h.b16 %v1283
    %v1655 = vunpack.c.l.b16 %v1284
    %v1656 = vunpack.c.h.b16 %v1284
    %v1657 = vunpack.c.l.b16 %v1285
    %v1658 = vunpack.c.h.b16 %v1285
    %v1659 = vunpack.c.l.b16 %v1286
    %v1660 = vunpack.c.h.b16 %v1286
    %v1661 = vunpack.c.l.b16 %v1287
    %v1662 = vunpack.c.h.b16 %v1287
    %v1663 = vunpack.c.l.b16 %v1288
    %v1664 = vunpack.c.h.b16 %v1288
    %v1665 = vunpack.c.l.b16 %v1289
    %v1666 = vunpack.c.h.b16 %v1289
    %v1667 = vunpack.c.l.b16 %v1290
    %v1668 = vunpack.c.h.b16 %v1290
    %v1669 = vunpack.c.l.b16 %v1291
    %v1670 = vunpack.c.h.b16 %v1291
    %v1671 = vunpack.c.l.b16 %v1292
    %v1672 = vunpack.c.h.b16 %v1292
    %v1673 = vunpack.c.l.b16 %v1293
    %v1674 = vunpack.c.h.b16 %v1293
    %v1675 = vunpack.c.l.b16 %v1294
    %v1676 = vunpack.c.h.b16 %v1294
    %v1677 = vunpack.c.l.b16 %v1295
    %v1678 = vunpack.c.h.b16 %v1295
    %v1679 = vunpack.c.l.b16 %v1296
    %v1680 = vunpack.c.h.b16 %v1296
    %v1681 = vunpack.c.l.b16 %v1297
    %v1682 = vunpack.c.h.b16 %v1297
    %v1683 = vunpack.c.l.b16 %v1298
    %v1684 = vunpack.c.h.b16 %v1298
    %v1685 = vunpack.c.l.b16 %v1299
    %v1686 = vunpack.c.h.b16 %v1299
    %v1687 = vunpack.c.l.b16 %v1300
    %v1688 = vunpack.c.h.b16 %v1300
    %v1689 = vunpack.c.l.b16 %v1301
    %v1690 = vunpack.c.h.b16 %v1301
    %v1691 = vunpack.c.l.b16 %v1302
    %v1692 = vunpack.c.h.b16 %v1302
    %v1693 = vunpack.c.l.b16 %v1303
    %v1694 = vunpack.c.h.b16 %v1303
    %v1695 = vunpack.c.l.b16 %v1304
    %v1696 = vunpack.c.h.b16 %v1304
    %v1697 = vunpack.c.l.b16 %v1305
    %v1698 = vunpack.c.h.b16 %v1305
    %v1699 = vunpack.c.l.b16 %v1306
    %v1700 = vunpack.c.h.b16 %v1306
    %v1701 = vunpack.c.l.b16 %v1307
    %v1702 = vunpack.c.h.b16 %v1307
    %v1703 = vunpack.c.l.b16 %v1308
    %v1704 = vunpack.c.h.b16 %v1308
    %v1705 = vunpack.c.l.b16 %v1309
    %v1706 = vunpack.c.h.b16 %v1309
    %v1707 = vunpack.c.l.b16 %v1310
    %v1708 = vunpack.c.h.b16 %v1310
    %v1709 = vunpack.c.l.b16 %v1311
    %v1710 = vunpack.c.h.b16 %v1311
    %v1711 = vunpack.c.l.b16 %v1312
    %v1712 = vunpack.c.h.b16 %v1312
    %v1713 = vunpack.c.l.b16 %v1313
    %v1714 = vunpack.c.h.b16 %v1313
    %v1715 = vunpack.c.l.b16 %v1314
    %v1716 = vunpack.c.h.b16 %v1314
    %v1717 = vunpack.c.l.b16 %v1315
    %v1718 = vunpack.c.h.b16 %v1315
    %v1719 = vunpack.c.l.b16 %v1316
    %v1720 = vunpack.c.h.b16 %v1316
    %v1721 = vunpack.c.l.b16 %v1317
    %v1722 = vunpack.c.h.b16 %v1317
    %v1723 = vunpack.c.l.b16 %v1318
    %v1724 = vunpack.c.h.b16 %v1318
    %v1725 = vunpack.c.l.b16 %v1319
    %v1726 = vunpack.c.h.b16 %v1319
    %v1727 = vunpack.c.l.b16 %v1320
    %v1728 = vunpack.c.h.b16 %v1320
    %v1729 = vunpack.c.l.b16 %v1321
    %v1730 = vunpack.c.h.b16 %v1321
    %v1731 = vunpack.c.l.b16 %v1322
    %v1732 = vunpack.c.h.b16 %v1322
    %v1733 = vunpack.c.l.b16 %v1323
    %v1734 = vunpack.c.h.b16 %v1323
    %v1735 = vunpack.c.l.b16 %v1324
    %v1736 = vunpack.c.h.b16 %v1324
    %v1737 = vunpack.c.l.b16 %v1325
    %v1738 = vunpack.c.h.b16 %v1325
    %v1739 = vunpack.c.l.b16 %v1326
    %v1740 = vunpack.c.h.b16 %v1326
    %v1741 = vunpack.c.l.b16 %v1327
    %v1742 = vunpack.c.h.b16 %v1327
    %v1743 = vunpack.c.l.b16 %v1328
    %v1744 = vunpack.c.h.b16 %v1328
    %v1745 = vunpack.c.l.b16 %v1329
    %v1746 = vunpack.c.h.b16 %v1329
    %v1747 = vunpack.c.l.b16 %v1330
    %v1748 = vunpack.c.h.b16 %v1330
    %v1749 = vunpack.c.l.b16 %v1331
    %v1750 = vunpack.c.h.b16 %v1331
    %v1751 = vunpack.c.l.b16 %v1332
    %v1752 = vunpack.c.h.b16 %v1332
    %v1753 = vunpack.c.l.b16 %v1333
    %v1754 = vunpack.c.h.b16 %v1333
    %v1755 = vunpack.c.l.b16 %v1334
    %v1756 = vunpack.c.h.b16 %v1334
    %v1757 = vunpack.c.l.b16 %v1335
    %v1758 = vunpack.c.h.b16 %v1335
    %v1759 = vunpack.c.l.b16 %v1336
    %v1760 = vunpack.c.h.b16 %v1336
    %v1761 = vunpack.c.l.b16 %v1337
    %v1762 = vunpack.c.h.b16 %v1337
    %v1763 = vunpack.c.l.b16 %v1338
    %v1764 = vunpack.c.h.b16 %v1338
    %v1765 = vunpack.c.l.b16 %v1339
    %v1766 = vunpack.c.h.b16 %v1339
    %v1767 = vunpack.c.l.b16 %v1340
    %v1768 = vunpack.c.h.b16 %v1340
    %v1769 = vunpack.c.l.b16 %v1341
    %v1770 = vunpack.c.h.b16 %v1341
    %v1771 = vunpack.c.l.b16 %v1342
    %v1772 = vunpack.c.h.b16 %v1342
    %v1773 = vunpack.c.l.b16 %v1343
    %v1774 = vunpack.c.h.b16 %v1343
    %v1775 = vunpack.c.l.b16 %v1344
    %v1776 = vunpack.c.h.b16 %v1344
    %v1777 = vunpack.c.l.b16 %v1345
    %v1778 = vunpack.c.h.b16 %v1345
    %v1779 = vunpack.c.l.b16 %v1346
    %v1780 = vunpack.c.h.b16 %v1346
    %v1781 = vunpack.c.l.b16 %v1347
    %v1782 = vunpack.c.h.b16 %v1347
    %v1783 = vunpack.c.l.b16 %v1348
    %v1784 = vunpack.c.h.b16 %v1348
    %v1785 = vunpack.c.l.b16 %v1349
    %v1786 = vunpack.c.h.b16 %v1349
    %v1787 = vunpack.c.l.b16 %v1350
    %v1788 = vunpack.c.h.b16 %v1350
    %v1789 = vunpack.c.l.b16 %v1351
    %v1790 = vunpack.c.h.b16 %v1351
    %v1791 = vunpack.c.l.b16 %v1352
    %v1792 = vunpack.c.h.b16 %v1352
    %v1793 = vunpack.c.l.b16 %v1353
    %v1794 = vunpack.c.h.b16 %v1353
    %v1795 = vunpack.c.l.b16 %v1354
    %v1796 = vunpack.c.h.b16 %v1354
    %v1797 = vunpack.c.l.b16 %v1355
    %v1798 = vunpack.c.h.b16 %v1355
    %v1799 = vunpack.c.l.b16 %v1356
    %v1800 = vunpack.c.h.b16 %v1356
    %v1801 = vunpack.c.l.b16 %v1357
    %v1802 = vunpack.c.h.b16 %v1357
    %v1803 = vunpack.c.l.b16 %v1358
    %v1804 = vunpack.c.h.b16 %v1358
    %v1805 = vunpack.c.l.b16 %v1359
    %v1806 = vunpack.c.h.b16 %v1359
    %v1807 = vunpack.c.l.b16 %v1360
    %v1808 = vunpack.c.h.b16 %v1360
    %v1809 = vunpack.c.l.b16 %v1361
    %v1810 = vunpack.c.h.b16 %v1361
    %v1811 = vunpack.c.l.b16 %v1362
    %v1812 = vunpack.c.h.b16 %v1362
    %v1813 = vunpack.c.l.b16 %v1363
    %v1814 = vunpack.c.h.b16 %v1363
    %v1815 = vunpack.c.l.b16 %v1364
    %v1816 = vunpack.c.h.b16 %v1364
    %v1817 = vunpack.c.l.b16 %v1365
    %v1818 = vunpack.c.h.b16 %v1365
    %v1819 = vunpack.c.l.b16 %v1366
    %v1820 = vunpack.c.h.b16 %v1366
    %v1821 = vunpack.c.l.b16 %v1367
    %v1822 = vunpack.c.h.b16 %v1367
    %v1823 = vunpack.c.l.b16 %v1368
    %v1824 = vunpack.c.h.b16 %v1368
    %v1825 = vunpack.c.l.b16 %v1369
    %v1826 = vunpack.c.h.b16 %v1369
    %v1827 = vunpack.c.l.b16 %v1370
    %v1828 = vunpack.c.h.b16 %v1370
    %v1829 = vunpack.c.l.b16 %v1371
    %v1830 = vunpack.c.h.b16 %v1371
    %v1831 = vunpack.c.l.b16 %v1372
    %v1832 = vunpack.c.h.b16 %v1372
    %v1833 = vunpack.c.l.b16 %v1373
    %v1834 = vunpack.c.h.b16 %v1373
    %v1835 = vunpack.c.l.b16 %v1374
    %v1836 = vunpack.c.h.b16 %v1374
    %v1837 = vunpack.c.l.b16 %v1375
    %v1838 = vunpack.c.h.b16 %v1375
    %v1839 = vunpack.c.l.b16 %v1376
    %v1840 = vunpack.c.h.b16 %v1376
    %v1841 = vunpack.c.l.b16 %v1377
    %v1842 = vunpack.c.h.b16 %v1377
    %v1843 = vunpack.c.l.b16 %v1378
    %v1844 = vunpack.c.h.b16 %v1378
    %v1845 = vunpack.c.l.b16 %v1379
    %v1846 = vunpack.c.h.b16 %v1379
    %v1847 = vunpack.c.l.b16 %v1380
    %v1848 = vunpack.c.h.b16 %v1380
    %v1849 = vpack.c.b16 %v1609, %v1593
    %v1850 = vpack.c.b16 %v1610, %v1594
    %v1851 = vpack.c.b16 %v1611, %v1595
    %v1852 = vpack.c.b16 %v1612, %v1596
    %v1853 = vpack.c.b16 %v1613, %v1597
    %v1854 = vpack.c.b16 %v1614, %v1598
    %v1855 = vpack.c.b16 %v1615, %v1599
    %v1856 = vpack.c.b16 %v1616, %v1600
    %v1857 = vpack.c.b16 %v1617, %v1601
    %v1858 = vpack.c.b16 %v1618, %v1602
    %v1859 = vpack.c.b16 %v1619, %v1603
    %v1860 = vpack.c.b16 %v1620, %v1604
    %v1861 = vpack.c.b16 %v1621, %v1605
    %v1862 = vpack.c.b16 %v1622, %v1606
    %v1863 = vpack.c.b16 %v1623, %v1607
    %v1864 = vpack.c.b16 %v1624, %v1608
    %v1865 = vpack.c.b16 %v1641, %v1625
    %v1866 = vpack.c.b16 %v1642, %v1626
    %v1867 = vpack.c.b16 %v1643, %v1627
    %v1868 = vpack.c.b16 %v1644, %v1628
    %v1869 = vpack.c.b16 %v1645, %v1629
    %v1870 = vpack.c.b16 %v1646, %v1630
    %v1871 = vpack.c.b16 %v1647, %v1631
    %v1872 = vpack.c.b16 %v1648, %v1632
    %v1873 = vpack.c.b16 %v1649, %v1633
    %v1874 = vpack.c.b16 %v1650, %v1634
    %v1875 = vpack.c.b16 %v1651, %v1635
    %v1876 = vpack.c.b16 %v1652, %v1636
    %v1877 = vpack.c.b16 %v1653, %v1637
    %v1878 = vpack.c.b16 %v1654, %v1638
    %v1879 = vpack.c.b16 %v1655, %v1639
    %v1880 = vpack.c.b16 %v1656, %v1640
    %v1881 = vpack.c.b16 %v1673, %v1657
    %v1882 = vpack.c.b16 %v1674, %v1658
    %v1883 = vpack.c.b16 %v1675, %v1659
    %v1884 = vpack.c.b16 %v1676, %v1660
    %v1885 = vpack.c.b16 %v1677, %v1661
    %v1886 = vpack.c.b16 %v1678, %v1662
    %v1887 = vpack.c.b16 %v1679, %v1663
    %v1888 = vpack.c.b16 %v1680, %v1664
    %v1889 = vpack.c.b16 %v1681, %v1665
    %v1890 = vpack.c.b16 %v1682, %v1666
    %v1891 = vpack.c.b16 %v1683, %v1667
    %v1892 = vpack.c.b16 %v1684, %v1668
    %v1893 = vpack.c.b16 %v1685, %v1669
    %v1894 = vpack.c.b16 %v1686, %v1670
    %v1895 = vpack.c.b16 %v1687, %v1671
    %v1896 = vpack.c.b16 %v1688, %v1672
    %v1897 = vpack.c.b16 %v1705, %v1689
    %v1898 = vpack.c.b16 %v1706, %v1690
    %v1899 = vpack.c.b16 %v1707, %v1691
    %v1900 = vpack.c.b16 %v1708, %v1692
    %v1901 = vpack.c.b16 %v1709, %v1693
    %v1902 = vpack.c.b16 %v1710, %v1694
    %v1903 = vpack.c.b16 %v1711, %v1695
    %v1904 = vpack.c.b16 %v1712, %v1696
    %v1905 = vpack.c.b16 %v1713, %v1697
    %v1906 = vpack.c.b16 %v1714, %v1698
    %v1907 = vpack.c.b16 %v1715, %v1699
    %v1908 = vpack.c.b16 %v1716, %v1700
    %v1909 = vpack.c.b16 %v1717, %v1701
    %v1910 = vpack.c.b16 %v1718, %v1702
    %v1911 = vpack.c.b16 %v1719, %v1703
    %v1912 = vpack.c.b16 %v1720, %v1704
    %v1913 = vpack.c.b16 %v1737, %v1721
    %v1914 = vpack.c.b16 %v1738, %v1722
    %v1915 = vpack.c.b16 %v1739, %v1723
    %v1916 = vpack.c.b16 %v1740, %v1724
    %v1917 = vpack.c.b16 %v1741, %v1725
    %v1918 = vpack.c.b16 %v1742, %v1726
    %v1919 = vpack.c.b16 %v1743, %v1727
    %v1920 = vpack.c.b16 %v1744, %v1728
    %v1921 = vpack.c.b16 %v1745, %v1729
    %v1922 = vpack.c.b16 %v1746, %v1730
    %v1923 = vpack.c.b16 %v1747, %v1731
    %v1924 = vpack.c.b16 %v1748, %v1732
    %v1925 = vpack.c.b16 %v1749, %v1733
    %v1926 = vpack.c.b16 %v1750, %v1734
    %v1927 = vpack.c.b16 %v1751, %v1735
    %v1928 = vpack.c.b16 %v1752, %v1736
    %v1929 = vpack.c.b16 %v1769, %v1753
    %v1930 = vpack.c.b16 %v1770, %v1754
    %v1931 = vpack.c.b16 %v1771, %v1755
    %v1932 = vpack.c.b16 %v1772, %v1756
    %v1933 = vpack.c.b16 %v1773, %v1757
    %v1934 = vpack.c.b16 %v1774, %v1758
    %v1935 = vpack.c.b16 %v1775, %v1759
    %v1936 = vpack.c.b16 %v1776, %v1760
    %v1937 = vpack.c.b16 %v1777, %v1761
    %v1938 = vpack.c.b16 %v1778, %v1762
    %v1939 = vpack.c.b16 %v1779, %v1763
    %v1940 = vpack.c.b16 %v1780, %v1764
    %v1941 = vpack.c.b16 %v1781, %v1765
    %v1942 = vpack.c.b16 %v1782, %v1766
    %v1943 = vpack.c.b16 %v1783, %v1767
    %v1944 = vpack.c.b16 %v1784, %v1768
    %v1945 = vpack.c.b16 %v1801, %v1785
    %v1946 = vpack.c.b16 %v1802, %v1786
    %v1947 = vpack.c.b16 %v1803, %v1787
    %v1948 = vpack.c.b16 %v1804, %v1788
    %v1949 = vpack.c.b16 %v1805, %v1789
    %v1950 = vpack.c.b16 %v1806, %v1790
    %v1951 = vpack.c.b16 %v1807, %v1791
    %v1952 = vpack.c.b16 %v1808, %v1792
    %v1953 = vpack.c.b16 %v1809, %v1793
    %v1954 = vpack.c.b16 %v1810, %v1794
    %v1955 = vpack.c.b16 %v1811, %v1795
    %v1956 = vpack.c.b16 %v1812, %v1796
    %v1957 = vpack.c.b16 %v1813, %v1797
    %v1958 = vpack.c.b16 %v1814, %v1798
    %v1959 = vpack.c.b16 %v1815, %v1799
    %v1960 = vpack.c.b16 %v1816, %v1800
    %v1961 = vpack.c.b16 %v1833, %v1817
    %v1962 = vpack.c.b16 %v1834, %v1818
    %v1963 = vpack.c.b16 %v1835, %v1819
    %v1964 = vpack.c.b16 %v1836, %v1820
    %v1965 = vpack.c.b16 %v1837, %v1821
    %v1966 = vpack.c.b16 %v1838, %v1822
    %v1967 = vpack.c.b16 %v1839, %v1823
    %v1968 = vpack.c.b16 %v1840, %v1824
    %v1969 = vpack.c.b16 %v1841, %v1825
    %v1970 = vpack.c.b16 %v1842, %v1826
    %v1971 = vpack.c.b16 %v1843, %v1827
    %v1972 = vpack.c.b16 %v1844, %v1828
    %v1973 = vpack.c.b16 %v1845, %v1829
    %v1974 = vpack.c.b16 %v1846, %v1830
    %v1975 = vpack.c.b16 %v1847, %v1831
    %v1976 = vpack.c.b16 %v1848, %v1832
    %2105 = vmatprep.subr.bf16.mxu0 %v1850
    %2106 = vmatpush1.bf16.msra.mxu0 %v1849
    %2107 = vmatprep.subr.bf16.mxu0 %v1866
    %2108 = vmatpush1.bf16.msra.mxu0 %v1865
    %2109 = vmatprep.subr.bf16.mxu0 %v1882
    %2110 = vmatpush1.bf16.msra.mxu0 %v1881
    %2111 = vmatprep.subr.bf16.mxu0 %v1898
    %2112 = vmatpush1.bf16.msra.mxu0 %v1897
    %2113 = vmatprep.subr.bf16.mxu0 %v1914
    %2114 = vmatpush1.bf16.msra.mxu0 %v1913
    %2115 = vmatprep.subr.bf16.mxu0 %v1930
    %2116 = vmatpush1.bf16.msra.mxu0 %v1929
    %2117 = vmatprep.subr.bf16.mxu0 %v1946
    %2118 = vmatpush1.bf16.msra.mxu0 %v1945
    %2119 = vmatprep.subr.bf16.mxu0 %v1962
    %2120 = vmatpush1.bf16.msra.mxu0 %v1961
    %2121 = vmatprep.subr.bf16.mxu0 0
    %2122 = vmatpush1.bf16.msra.mxu0 0
    %2123 = vmatprep.subr.bf16.mxu0 0
    %2124 = vmatpush1.bf16.msra.mxu0 0
    %2125 = vmatprep.subr.bf16.mxu0 0
    %2126 = vmatpush1.bf16.msra.mxu0 0
    %2127 = vmatprep.subr.bf16.mxu0 0
    %2128 = vmatpush1.bf16.msra.mxu0 0
    %2129 = vmatprep.subr.bf16.mxu0 0
    %2130 = vmatpush1.bf16.msra.mxu0 0
    %2131 = vmatprep.subr.bf16.mxu0 0
    %2132 = vmatpush1.bf16.msra.mxu0 0
    %2133 = vmatprep.subr.bf16.mxu0 0
    %2134 = vmatpush1.bf16.msra.mxu0 0
    %2135 = vmatprep.subr.bf16.mxu0 0
    %2136 = vmatpush1.bf16.msra.mxu0 0
    %2137 = vmatprep.mubr.bf16.mxu0 0
    %2138 = vmatmul.mubr.bf16.gmra.mrb[0].mxu0 %v1252
    %v2139 = vpop.f32.mrb[0].mxu0
    %v2140 = vadd.f32 %v1388, %v2139
    %v2141 = vpop.f32.mrb[0].mxu0
    %v2142 = vadd.f32 %v1392, %v2141
    %v2143 = vpop.f32.mrb[0].mxu0
    %v2144 = vpop.f32.mrb[0].mxu0
    %2145 = vdwg.mxu0
    %2146 = vmatprep.subr.bf16.mxu0 %v1852
    %2147 = vmatpush1.bf16.msra.mxu0 %v1851
    %2148 = vmatprep.subr.bf16.mxu0 %v1868
    %2149 = vmatpush1.bf16.msra.mxu0 %v1867
    %2150 = vmatprep.subr.bf16.mxu0 %v1884
    %2151 = vmatpush1.bf16.msra.mxu0 %v1883
    %2152 = vmatprep.subr.bf16.mxu0 %v1900
    %2153 = vmatpush1.bf16.msra.mxu0 %v1899
    %2154 = vmatprep.subr.bf16.mxu0 %v1916
    %2155 = vmatpush1.bf16.msra.mxu0 %v1915
    %2156 = vmatprep.subr.bf16.mxu0 %v1932
    %2157 = vmatpush1.bf16.msra.mxu0 %v1931
    %2158 = vmatprep.subr.bf16.mxu0 %v1948
    %2159 = vmatpush1.bf16.msra.mxu0 %v1947
    %2160 = vmatprep.subr.bf16.mxu0 %v1964
    %2161 = vmatpush1.bf16.msra.mxu0 %v1963
    %2162 = vmatprep.subr.bf16.mxu0 0
    %2163 = vmatpush1.bf16.msra.mxu0 0
    %2164 = vmatprep.subr.bf16.mxu0 0
    %2165 = vmatpush1.bf16.msra.mxu0 0
    %2166 = vmatprep.subr.bf16.mxu0 0
    %2167 = vmatpush1.bf16.msra.mxu0 0
    %2168 = vmatprep.subr.bf16.mxu0 0
    %2169 = vmatpush1.bf16.msra.mxu0 0
    %2170 = vmatprep.subr.bf16.mxu0 0
    %2171 = vmatpush1.bf16.msra.mxu0 0
    %2172 = vmatprep.subr.bf16.mxu0 0
    %2173 = vmatpush1.bf16.msra.mxu0 0
    %2174 = vmatprep.subr.bf16.mxu0 0
    %2175 = vmatpush1.bf16.msra.mxu0 0
    %2176 = vmatprep.subr.bf16.mxu0 0
    %2177 = vmatpush1.bf16.msra.mxu0 0
    %2178 = vmatprep.mubr.bf16.mxu0 0
    %2179 = vmatmul.mubr.bf16.gmra.mrb[0].mxu0 %v1252
    %v2180 = vpop.f32.mrb[0].mxu0
    %v2181 = vadd.f32 %v1396, %v2180
    %v2182 = vpop.f32.mrb[0].mxu0
    %v2183 = vadd.f32 %v1400, %v2182
    %v2184 = vpop.f32.mrb[0].mxu0
    %v2185 = vpop.f32.mrb[0].mxu0
    %2186 = vdwg.mxu0
    %2187 = vmatprep.subr.bf16.mxu0 %v1854
    %2188 = vmatpush1.bf16.msra.mxu0 %v1853
    %2189 = vmatprep.subr.bf16.mxu0 %v1870
    %2190 = vmatpush1.bf16.msra.mxu0 %v1869
    %2191 = vmatprep.subr.bf16.mxu0 %v1886
    %2192 = vmatpush1.bf16.msra.mxu0 %v1885
    %2193 = vmatprep.subr.bf16.mxu0 %v1902
    %2194 = vmatpush1.bf16.msra.mxu0 %v1901
    %2195 = vmatprep.subr.bf16.mxu0 %v1918
    %2196 = vmatpush1.bf16.msra.mxu0 %v1917
    %2197 = vmatprep.subr.bf16.mxu0 %v1934
    %2198 = vmatpush1.bf16.msra.mxu0 %v1933
    %2199 = vmatprep.subr.bf16.mxu0 %v1950
    %2200 = vmatpush1.bf16.msra.mxu0 %v1949
    %2201 = vmatprep.subr.bf16.mxu0 %v1966
    %2202 = vmatpush1.bf16.msra.mxu0 %v1965
    %2203 = vmatprep.subr.bf16.mxu0 0
    %2204 = vmatpush1.bf16.msra.mxu0 0
    %2205 = vmatprep.subr.bf16.mxu0 0
    %2206 = vmatpush1.bf16.msra.mxu0 0
    %2207 = vmatprep.subr.bf16.mxu0 0
    %2208 = vmatpush1.bf16.msra.mxu0 0
    %2209 = vmatprep.subr.bf16.mxu0 0
    %2210 = vmatpush1.bf16.msra.mxu0 0
    %2211 = vmatprep.subr.bf16.mxu0 0
    %2212 = vmatpush1.bf16.msra.mxu0 0
    %2213 = vmatprep.subr.bf16.mxu0 0
    %2214 = vmatpush1.bf16.msra.mxu0 0
    %2215 = vmatprep.subr.bf16.mxu0 0
    %2216 = vmatpush1.bf16.msra.mxu0 0
    %2217 = vmatprep.subr.bf16.mxu0 0
    %2218 = vmatpush1.bf16.msra.mxu0 0
    %2219 = vmatprep.mubr.bf16.mxu0 0
    %2220 = vmatmul.mubr.bf16.gmra.mrb[0].mxu0 %v1252
    %v2221 = vpop.f32.mrb[0].mxu0
    %v2222 = vadd.f32 %v1404, %v2221
    %v2223 = vpop.f32.mrb[0].mxu0
    %v2224 = vadd.f32 %v1408, %v2223
    %v2225 = vpop.f32.mrb[0].mxu0
    %v2226 = vpop.f32.mrb[0].mxu0
    %2227 = vdwg.mxu0
    %2228 = vmatprep.subr.bf16.mxu0 %v1856
    %2229 = vmatpush1.bf16.msra.mxu0 %v1855
    %2230 = vmatprep.subr.bf16.mxu0 %v1872
    %2231 = vmatpush1.bf16.msra.mxu0 %v1871
    %2232 = vmatprep.subr.bf16.mxu0 %v1888
    %2233 = vmatpush1.bf16.msra.mxu0 %v1887
    %2234 = vmatprep.subr.bf16.mxu0 %v1904
    %2235 = vmatpush1.bf16.msra.mxu0 %v1903
    %2236 = vmatprep.subr.bf16.mxu0 %v1920
    %2237 = vmatpush1.bf16.msra.mxu0 %v1919
    %2238 = vmatprep.subr.bf16.mxu0 %v1936
    %2239 = vmatpush1.bf16.msra.mxu0 %v1935
    %2240 = vmatprep.subr.bf16.mxu0 %v1952
    %2241 = vmatpush1.bf16.msra.mxu0 %v1951
    %2242 = vmatprep.subr.bf16.mxu0 %v1968
    %2243 = vmatpush1.bf16.msra.mxu0 %v1967
    %2244 = vmatprep.subr.bf16.mxu0 0
    %2245 = vmatpush1.bf16.msra.mxu0 0
    %2246 = vmatprep.subr.bf16.mxu0 0
    %2247 = vmatpush1.bf16.msra.mxu0 0
    %2248 = vmatprep.subr.bf16.mxu0 0
    %2249 = vmatpush1.bf16.msra.mxu0 0
    %2250 = vmatprep.subr.bf16.mxu0 0
    %2251 = vmatpush1.bf16.msra.mxu0 0
    %2252 = vmatprep.subr.bf16.mxu0 0
    %2253 = vmatpush1.bf16.msra.mxu0 0
    %2254 = vmatprep.subr.bf16.mxu0 0
    %2255 = vmatpush1.bf16.msra.mxu0 0
    %2256 = vmatprep.subr.bf16.mxu0 0
    %2257 = vmatpush1.bf16.msra.mxu0 0
    %2258 = vmatprep.subr.bf16.mxu0 0
    %2259 = vmatpush1.bf16.msra.mxu0 0
    %2260 = vmatprep.mubr.bf16.mxu0 0
    %2261 = vmatmul.mubr.bf16.gmra.mrb[0].mxu0 %v1252
    %v2262 = vpop.f32.mrb[0].mxu0
    %v2263 = vadd.f32 %v1412, %v2262
    %v2264 = vpop.f32.mrb[0].mxu0
    %v2265 = vadd.f32 %v1416, %v2264
    %v2266 = vpop.f32.mrb[0].mxu0
    %v2267 = vpop.f32.mrb[0].mxu0
    %2268 = vdwg.mxu0
    %2269 = vmatprep.subr.bf16.mxu0 %v1858
    %2270 = vmatpush1.bf16.msra.mxu0 %v1857
    %2271 = vmatprep.subr.bf16.mxu0 %v1874
    %2272 = vmatpush1.bf16.msra.mxu0 %v1873
    %2273 = vmatprep.subr.bf16.mxu0 %v1890
    %2274 = vmatpush1.bf16.msra.mxu0 %v1889
    %2275 = vmatprep.subr.bf16.mxu0 %v1906
    %2276 = vmatpush1.bf16.msra.mxu0 %v1905
    %2277 = vmatprep.subr.bf16.mxu0 %v1922
    %2278 = vmatpush1.bf16.msra.mxu0 %v1921
    %2279 = vmatprep.subr.bf16.mxu0 %v1938
    %2280 = vmatpush1.bf16.msra.mxu0 %v1937
    %2281 = vmatprep.subr.bf16.mxu0 %v1954
    %2282 = vmatpush1.bf16.msra.mxu0 %v1953
    %2283 = vmatprep.subr.bf16.mxu0 %v1970
    %2284 = vmatpush1.bf16.msra.mxu0 %v1969
    %2285 = vmatprep.subr.bf16.mxu0 0
    %2286 = vmatpush1.bf16.msra.mxu0 0
    %2287 = vmatprep.subr.bf16.mxu0 0
    %2288 = vmatpush1.bf16.msra.mxu0 0
    %2289 = vmatprep.subr.bf16.mxu0 0
    %2290 = vmatpush1.bf16.msra.mxu0 0
    %2291 = vmatprep.subr.bf16.mxu0 0
    %2292 = vmatpush1.bf16.msra.mxu0 0
    %2293 = vmatprep.subr.bf16.mxu0 0
    %2294 = vmatpush1.bf16.msra.mxu0 0
    %2295 = vmatprep.subr.bf16.mxu0 0
    %2296 = vmatpush1.bf16.msra.mxu0 0
    %2297 = vmatprep.subr.bf16.mxu0 0
    %2298 = vmatpush1.bf16.msra.mxu0 0
    %2299 = vmatprep.subr.bf16.mxu0 0
    %2300 = vmatpush1.bf16.msra.mxu0 0
    %2301 = vmatprep.mubr.bf16.mxu0 0
    %2302 = vmatmul.mubr.bf16.gmra.mrb[0].mxu0 %v1252
    %v2303 = vpop.f32.mrb[0].mxu0
    %v2304 = vadd.f32 %v1420, %v2303
    %v2305 = vpop.f32.mrb[0].mxu0
    %v2306 = vadd.f32 %v1424, %v2305
    %v2307 = vpop.f32.mrb[0].mxu0
    %v2308 = vpop.f32.mrb[0].mxu0
    %2309 = vdwg.mxu0
    %2310 = vmatprep.subr.bf16.mxu0 %v1860
    %2311 = vmatpush1.bf16.msra.mxu0 %v1859
    %2312 = vmatprep.subr.bf16.mxu0 %v1876
    %2313 = vmatpush1.bf16.msra.mxu0 %v1875
    %2314 = vmatprep.subr.bf16.mxu0 %v1892
    %2315 = vmatpush1.bf16.msra.mxu0 %v1891
    %2316 = vmatprep.subr.bf16.mxu0 %v1908
    %2317 = vmatpush1.bf16.msra.mxu0 %v1907
    %2318 = vmatprep.subr.bf16.mxu0 %v1924
    %2319 = vmatpush1.bf16.msra.mxu0 %v1923
    %2320 = vmatprep.subr.bf16.mxu0 %v1940
    %2321 = vmatpush1.bf16.msra.mxu0 %v1939
    %2322 = vmatprep.subr.bf16.mxu0 %v1956
    %2323 = vmatpush1.bf16.msra.mxu0 %v1955
    %2324 = vmatprep.subr.bf16.mxu0 %v1972
    %2325 = vmatpush1.bf16.msra.mxu0 %v1971
    %2326 = vmatprep.subr.bf16.mxu0 0
    %2327 = vmatpush1.bf16.msra.mxu0 0
    %2328 = vmatprep.subr.bf16.mxu0 0
    %2329 = vmatpush1.bf16.msra.mxu0 0
    %2330 = vmatprep.subr.bf16.mxu0 0
    %2331 = vmatpush1.bf16.msra.mxu0 0
    %2332 = vmatprep.subr.bf16.mxu0 0
    %2333 = vmatpush1.bf16.msra.mxu0 0
    %2334 = vmatprep.subr.bf16.mxu0 0
    %2335 = vmatpush1.bf16.msra.mxu0 0
    %2336 = vmatprep.subr.bf16.mxu0 0
    %2337 = vmatpush1.bf16.msra.mxu0 0
    %2338 = vmatprep.subr.bf16.mxu0 0
    %2339 = vmatpush1.bf16.msra.mxu0 0
    %2340 = vmatprep.subr.bf16.mxu0 0
    %2341 = vmatpush1.bf16.msra.mxu0 0
    %2342 = vmatprep.mubr.bf16.mxu0 0
    %2343 = vmatmul.mubr.bf16.gmra.mrb[0].mxu0 %v1252
    %v2344 = vpop.f32.mrb[0].mxu0
    %v2345 = vadd.f32 %v1428, %v2344
    %v2346 = vpop.f32.mrb[0].mxu0
    %v2347 = vadd.f32 %v1432, %v2346
    %v2348 = vpop.f32.mrb[0].mxu0
    %v2349 = vpop.f32.mrb[0].mxu0
    %2350 = vdwg.mxu0
    %2351 = vmatprep.subr.bf16.mxu0 %v1862
    %2352 = vmatpush1.bf16.msra.mxu0 %v1861
    %2353 = vmatprep.subr.bf16.mxu0 %v1878
    %2354 = vmatpush1.bf16.msra.mxu0 %v1877
    %2355 = vmatprep.subr.bf16.mxu0 %v1894
    %2356 = vmatpush1.bf16.msra.mxu0 %v1893
    %2357 = vmatprep.subr.bf16.mxu0 %v1910
    %2358 = vmatpush1.bf16.msra.mxu0 %v1909
    %2359 = vmatprep.subr.bf16.mxu0 %v1926
    %2360 = vmatpush1.bf16.msra.mxu0 %v1925
    %2361 = vmatprep.subr.bf16.mxu0 %v1942
    %2362 = vmatpush1.bf16.msra.mxu0 %v1941
    %2363 = vmatprep.subr.bf16.mxu0 %v1958
    %2364 = vmatpush1.bf16.msra.mxu0 %v1957
    %2365 = vmatprep.subr.bf16.mxu0 %v1974
    %2366 = vmatpush1.bf16.msra.mxu0 %v1973
    %2367 = vmatprep.subr.bf16.mxu0 0
    %2368 = vmatpush1.bf16.msra.mxu0 0
    %2369 = vmatprep.subr.bf16.mxu0 0
    %2370 = vmatpush1.bf16.msra.mxu0 0
    %2371 = vmatprep.subr.bf16.mxu0 0
    %2372 = vmatpush1.bf16.msra.mxu0 0
    %2373 = vmatprep.subr.bf16.mxu0 0
    %2374 = vmatpush1.bf16.msra.mxu0 0
    %2375 = vmatprep.subr.bf16.mxu0 0
    %2376 = vmatpush1.bf16.msra.mxu0 0
    %2377 = vmatprep.subr.bf16.mxu0 0
    %2378 = vmatpush1.bf16.msra.mxu0 0
    %2379 = vmatprep.subr.bf16.mxu0 0
    %2380 = vmatpush1.bf16.msra.mxu0 0
    %2381 = vmatprep.subr.bf16.mxu0 0
    %2382 = vmatpush1.bf16.msra.mxu0 0
    %2383 = vmatprep.mubr.bf16.mxu0 0
    %2384 = vmatmul.mubr.bf16.gmra.mrb[0].mxu0 %v1252
    %v2385 = vpop.f32.mrb[0].mxu0
    %v2386 = vadd.f32 %v1436, %v2385
    %v2387 = vpop.f32.mrb[0].mxu0
    %v2388 = vadd.f32 %v1440, %v2387
    %v2389 = vpop.f32.mrb[0].mxu0
    %v2390 = vpop.f32.mrb[0].mxu0
    %2391 = vdwg.mxu0
    %2392 = vmatprep.subr.bf16.mxu0 %v1864
    %2393 = vmatpush1.bf16.msra.mxu0 %v1863
    %2394 = vmatprep.subr.bf16.mxu0 %v1880
    %2395 = vmatpush1.bf16.msra.mxu0 %v1879
    %2396 = vmatprep.subr.bf16.mxu0 %v1896
    %2397 = vmatpush1.bf16.msra.mxu0 %v1895
    %2398 = vmatprep.subr.bf16.mxu0 %v1912
    %2399 = vmatpush1.bf16.msra.mxu0 %v1911
    %2400 = vmatprep.subr.bf16.mxu0 %v1928
    %2401 = vmatpush1.bf16.msra.mxu0 %v1927
    %2402 = vmatprep.subr.bf16.mxu0 %v1944
    %2403 = vmatpush1.bf16.msra.mxu0 %v1943
    %2404 = vmatprep.subr.bf16.mxu0 %v1960
    %2405 = vmatpush1.bf16.msra.mxu0 %v1959
    %2406 = vmatprep.subr.bf16.mxu0 %v1976
    %2407 = vmatpush1.bf16.msra.mxu0 %v1975
    %2408 = vmatprep.subr.bf16.mxu0 0
    %2409 = vmatpush1.bf16.msra.mxu0 0
    %2410 = vmatprep.subr.bf16.mxu0 0
    %2411 = vmatpush1.bf16.msra.mxu0 0
    %2412 = vmatprep.subr.bf16.mxu0 0
    %2413 = vmatpush1.bf16.msra.mxu0 0
    %2414 = vmatprep.subr.bf16.mxu0 0
    %2415 = vmatpush1.bf16.msra.mxu0 0
    %2416 = vmatprep.subr.bf16.mxu0 0
    %2417 = vmatpush1.bf16.msra.mxu0 0
    %2418 = vmatprep.subr.bf16.mxu0 0
    %2419 = vmatpush1.bf16.msra.mxu0 0
    %2420 = vmatprep.subr.bf16.mxu0 0
    %2421 = vmatpush1.bf16.msra.mxu0 0
    %2422 = vmatprep.subr.bf16.mxu0 0
    %2423 = vmatpush1.bf16.msra.mxu0 0
    %2424 = vmatprep.mubr.bf16.mxu0 0
    %2425 = vmatmul.mubr.bf16.gmra.mrb[0].mxu0 %v1252
    %v2426 = vpop.f32.mrb[0].mxu0
    %v2427 = vadd.f32 %v1444, %v2426
    %v2428 = vpop.f32.mrb[0].mxu0
    %v2429 = vadd.f32 %v1448, %v2428
    %v2430 = vpop.f32.mrb[0].mxu0
    %v2431 = vpop.f32.mrb[0].mxu0
    %2432 = vdwg.mxu0
    %v2433 = vmax.f32 %v2140, 0.0
    %v2434 = vmax.f32 %v2142, 0.0
    %v2435 = vmax.f32 %v2181, 0.0
    %v2436 = vmax.f32 %v2183, 0.0
    %v2437 = vmax.f32 %v2222, 0.0
    %v2438 = vmax.f32 %v2224, 0.0
    %v2439 = vmax.f32 %v2263, 0.0
    %v2440 = vmax.f32 %v2265, 0.0
    %v2441 = vmax.f32 %v2304, 0.0
    %v2442 = vmax.f32 %v2306, 0.0
    %v2443 = vmax.f32 %v2345, 0.0
    %v2444 = vmax.f32 %v2347, 0.0
    %v2445 = vmax.f32 %v2386, 0.0
    %v2446 = vmax.f32 %v2388, 0.0
    %v2447 = vmax.f32 %v2427, 0.0
    %v2448 = vmax.f32 %v2429, 0.0
    %v2449 = vpack.c.bf16 %v2433, %v2433
    %v2450 = vpack.c.bf16 %v2434, %v2434
    %v2451 = vpack.c.bf16 %v2435, %v2435
    %v2452 = vpack.c.bf16 %v2436, %v2436
    %v2453 = vpack.c.bf16 %v2437, %v2437
    %v2454 = vpack.c.bf16 %v2438, %v2438
    %v2455 = vpack.c.bf16 %v2439, %v2439
    %v2456 = vpack.c.bf16 %v2440, %v2440
    %v2457 = vpack.c.bf16 %v2441, %v2441
    %v2458 = vpack.c.bf16 %v2442, %v2442
    %v2459 = vpack.c.bf16 %v2443, %v2443
    %v2460 = vpack.c.bf16 %v2444, %v2444
    %v2461 = vpack.c.bf16 %v2445, %v2445
    %v2462 = vpack.c.bf16 %v2446, %v2446
    %v2463 = vpack.c.bf16 %v2447, %v2447
    %v2464 = vpack.c.bf16 %v2448, %v2448
    %v2465 = vld [vmem:[#allocation10] sm:$0xff]
    %v2466 = vld [vmem:[#allocation10 + $0x8] sm:$0xff]
    %v2467 = vld [vmem:[#allocation10 + $0x10] sm:$0xff]
    %v2468 = vld [vmem:[#allocation10 + $0x18] sm:$0xff]
    %v2469 = vld [vmem:[#allocation10 + $0x20] sm:$0xff]
    %v2470 = vld [vmem:[#allocation10 + $0x28] sm:$0xff]
    %v2471 = vld [vmem:[#allocation10 + $0x30] sm:$0xff]
    %v2472 = vld [vmem:[#allocation10 + $0x38] sm:$0xff]
    %v2473 = vld [vmem:[#allocation10 + $0x40] sm:$0xff]
    %v2474 = vld [vmem:[#allocation10 + $0x48] sm:$0xff]
    %v2475 = vld [vmem:[#allocation10 + $0x50] sm:$0xff]
    %v2476 = vld [vmem:[#allocation10 + $0x58] sm:$0xff]
    %v2477 = vld [vmem:[#allocation10 + $0x60] sm:$0xff]
    %v2478 = vld [vmem:[#allocation10 + $0x68] sm:$0xff]
    %v2479 = vld [vmem:[#allocation10 + $0x70] sm:$0xff]
    %v2480 = vld [vmem:[#allocation10 + $0x78] sm:$0xff]
    %v2481 = vld [vmem:[#allocation10 + $0x80] sm:$0xff]
    %v2482 = vld [vmem:[#allocation10 + $0x88] sm:$0xff]
    %v2483 = vld [vmem:[#allocation10 + $0x90] sm:$0xff]
    %v2484 = vld [vmem:[#allocation10 + $0x98] sm:$0xff]
    %v2485 = vld [vmem:[#allocation10 + $0xa0] sm:$0xff]
    %v2486 = vld [vmem:[#allocation10 + $0xa8] sm:$0xff]
    %v2487 = vld [vmem:[#allocation10 + $0xb0] sm:$0xff]
    %v2488 = vld [vmem:[#allocation10 + $0xb8] sm:$0xff]
    %v2489 = vld [vmem:[#allocation10 + $0xc0] sm:$0xff]
    %v2490 = vld [vmem:[#allocation10 + $0xc8] sm:$0xff]
    %v2491 = vld [vmem:[#allocation10 + $0xd0] sm:$0xff]
    %v2492 = vld [vmem:[#allocation10 + $0xd8] sm:$0xff]
    %v2493 = vld [vmem:[#allocation10 + $0xe0] sm:$0xff]
    %v2494 = vld [vmem:[#allocation10 + $0xe8] sm:$0xff]
    %v2495 = vld [vmem:[#allocation10 + $0xf0] sm:$0xff]
    %v2496 = vld [vmem:[#allocation10 + $0xf8] sm:$0xff]
    %v2497 = vld [vmem:[#allocation10 + $0x100] sm:$0xff]
    %v2498 = vld [vmem:[#allocation10 + $0x108] sm:$0xff]
    %v2499 = vld [vmem:[#allocation10 + $0x110] sm:$0xff]
    %v2500 = vld [vmem:[#allocation10 + $0x118] sm:$0xff]
    %v2501 = vld [vmem:[#allocation10 + $0x120] sm:$0xff]
    %v2502 = vld [vmem:[#allocation10 + $0x128] sm:$0xff]
    %v2503 = vld [vmem:[#allocation10 + $0x130] sm:$0xff]
    %v2504 = vld [vmem:[#allocation10 + $0x138] sm:$0xff]
    %v2505 = vld [vmem:[#allocation10 + $0x140] sm:$0xff]
    %v2506 = vld [vmem:[#allocation10 + $0x148] sm:$0xff]
    %v2507 = vld [vmem:[#allocation10 + $0x150] sm:$0xff]
    %v2508 = vld [vmem:[#allocation10 + $0x158] sm:$0xff]
    %v2509 = vld [vmem:[#allocation10 + $0x160] sm:$0xff]
    %v2510 = vld [vmem:[#allocation10 + $0x168] sm:$0xff]
    %v2511 = vld [vmem:[#allocation10 + $0x170] sm:$0xff]
    %v2512 = vld [vmem:[#allocation10 + $0x178] sm:$0xff]
    %v2513 = vld [vmem:[#allocation10 + $0x180] sm:$0xff]
    %v2514 = vld [vmem:[#allocation10 + $0x188] sm:$0xff]
    %v2515 = vld [vmem:[#allocation10 + $0x190] sm:$0xff]
    %v2516 = vld [vmem:[#allocation10 + $0x198] sm:$0xff]
    %v2517 = vld [vmem:[#allocation10 + $0x1a0] sm:$0xff]
    %v2518 = vld [vmem:[#allocation10 + $0x1a8] sm:$0xff]
    %v2519 = vld [vmem:[#allocation10 + $0x1b0] sm:$0xff]
    %v2520 = vld [vmem:[#allocation10 + $0x1b8] sm:$0xff]
    %v2521 = vld [vmem:[#allocation10 + $0x1c0] sm:$0xff]
    %v2522 = vld [vmem:[#allocation10 + $0x1c8] sm:$0xff]
    %v2523 = vld [vmem:[#allocation10 + $0x1d0] sm:$0xff]
    %v2524 = vld [vmem:[#allocation10 + $0x1d8] sm:$0xff]
    %v2525 = vld [vmem:[#allocation10 + $0x1e0] sm:$0xff]
    %v2526 = vld [vmem:[#allocation10 + $0x1e8] sm:$0xff]
    %v2527 = vld [vmem:[#allocation10 + $0x1f0] sm:$0xff]
    %v2528 = vld [vmem:[#allocation10 + $0x1f8] sm:$0xff]
    %v2529 = vld [vmem:[#allocation10 + $0x200] sm:$0xff]
    %v2530 = vld [vmem:[#allocation10 + $0x208] sm:$0xff]
    %v2531 = vld [vmem:[#allocation10 + $0x210] sm:$0xff]
    %v2532 = vld [vmem:[#allocation10 + $0x218] sm:$0xff]
    %v2533 = vld [vmem:[#allocation10 + $0x220] sm:$0xff]
    %v2534 = vld [vmem:[#allocation10 + $0x228] sm:$0xff]
    %v2535 = vld [vmem:[#allocation10 + $0x230] sm:$0xff]
    %v2536 = vld [vmem:[#allocation10 + $0x238] sm:$0xff]
    %v2537 = vld [vmem:[#allocation10 + $0x240] sm:$0xff]
    %v2538 = vld [vmem:[#allocation10 + $0x248] sm:$0xff]
    %v2539 = vld [vmem:[#allocation10 + $0x250] sm:$0xff]
    %v2540 = vld [vmem:[#allocation10 + $0x258] sm:$0xff]
    %v2541 = vld [vmem:[#allocation10 + $0x260] sm:$0xff]
    %v2542 = vld [vmem:[#allocation10 + $0x268] sm:$0xff]
    %v2543 = vld [vmem:[#allocation10 + $0x270] sm:$0xff]
    %v2544 = vld [vmem:[#allocation10 + $0x278] sm:$0xff]
    %v2545 = vld [vmem:[#allocation10 + $0x280] sm:$0xff]
    %v2546 = vld [vmem:[#allocation10 + $0x288] sm:$0xff]
    %v2547 = vld [vmem:[#allocation10 + $0x290] sm:$0xff]
    %v2548 = vld [vmem:[#allocation10 + $0x298] sm:$0xff]
    %v2549 = vld [vmem:[#allocation10 + $0x2a0] sm:$0xff]
    %v2550 = vld [vmem:[#allocation10 + $0x2a8] sm:$0xff]
    %v2551 = vld [vmem:[#allocation10 + $0x2b0] sm:$0xff]
    %v2552 = vld [vmem:[#allocation10 + $0x2b8] sm:$0xff]
    %v2553 = vld [vmem:[#allocation10 + $0x2c0] sm:$0xff]
    %v2554 = vld [vmem:[#allocation10 + $0x2c8] sm:$0xff]
    %v2555 = vld [vmem:[#allocation10 + $0x2d0] sm:$0xff]
    %v2556 = vld [vmem:[#allocation10 + $0x2d8] sm:$0xff]
    %v2557 = vld [vmem:[#allocation10 + $0x2e0] sm:$0xff]
    %v2558 = vld [vmem:[#allocation10 + $0x2e8] sm:$0xff]
    %v2559 = vld [vmem:[#allocation10 + $0x2f0] sm:$0xff]
    %v2560 = vld [vmem:[#allocation10 + $0x2f8] sm:$0xff]
    %v2561 = vld [vmem:[#allocation10 + $0x300] sm:$0xff]
    %v2562 = vld [vmem:[#allocation10 + $0x308] sm:$0xff]
    %v2563 = vld [vmem:[#allocation10 + $0x310] sm:$0xff]
    %v2564 = vld [vmem:[#allocation10 + $0x318] sm:$0xff]
    %v2565 = vld [vmem:[#allocation10 + $0x320] sm:$0xff]
    %v2566 = vld [vmem:[#allocation10 + $0x328] sm:$0xff]
    %v2567 = vld [vmem:[#allocation10 + $0x330] sm:$0xff]
    %v2568 = vld [vmem:[#allocation10 + $0x338] sm:$0xff]
    %v2569 = vld [vmem:[#allocation10 + $0x340] sm:$0xff]
    %v2570 = vld [vmem:[#allocation10 + $0x348] sm:$0xff]
    %v2571 = vld [vmem:[#allocation10 + $0x350] sm:$0xff]
    %v2572 = vld [vmem:[#allocation10 + $0x358] sm:$0xff]
    %v2573 = vld [vmem:[#allocation10 + $0x360] sm:$0xff]
    %v2574 = vld [vmem:[#allocation10 + $0x368] sm:$0xff]
    %v2575 = vld [vmem:[#allocation10 + $0x370] sm:$0xff]
    %v2576 = vld [vmem:[#allocation10 + $0x378] sm:$0xff]
    %v2577 = vld [vmem:[#allocation10 + $0x380] sm:$0xff]
    %v2578 = vld [vmem:[#allocation10 + $0x388] sm:$0xff]
    %v2579 = vld [vmem:[#allocation10 + $0x390] sm:$0xff]
    %v2580 = vld [vmem:[#allocation10 + $0x398] sm:$0xff]
    %v2581 = vld [vmem:[#allocation10 + $0x3a0] sm:$0xff]
    %v2582 = vld [vmem:[#allocation10 + $0x3a8] sm:$0xff]
    %v2583 = vld [vmem:[#allocation10 + $0x3b0] sm:$0xff]
    %v2584 = vld [vmem:[#allocation10 + $0x3b8] sm:$0xff]
    %v2585 = vld [vmem:[#allocation10 + $0x3c0] sm:$0xff]
    %v2586 = vld [vmem:[#allocation10 + $0x3c8] sm:$0xff]
    %v2587 = vld [vmem:[#allocation10 + $0x3d0] sm:$0xff]
    %v2588 = vld [vmem:[#allocation10 + $0x3d8] sm:$0xff]
    %v2589 = vld [vmem:[#allocation10 + $0x3e0] sm:$0xff]
    %v2590 = vld [vmem:[#allocation10 + $0x3e8] sm:$0xff]
    %v2591 = vld [vmem:[#allocation10 + $0x3f0] sm:$0xff]
    %v2592 = vld [vmem:[#allocation10 + $0x3f8] sm:$0xff]
    %v2593 = vld [vmem:[#allocation10 + $0x400] sm:$0xff]
    %v2594 = vld [vmem:[#allocation10 + $0x408] sm:$0xff]
    %v2595 = vld [vmem:[#allocation10 + $0x410] sm:$0xff]
    %v2596 = vld [vmem:[#allocation10 + $0x418] sm:$0xff]
    %v2597 = vld [vmem:[#allocation10 + $0x420] sm:$0xff]
    %v2598 = vld [vmem:[#allocation10 + $0x428] sm:$0xff]
    %v2599 = vld [vmem:[#allocation10 + $0x430] sm:$0xff]
    %v2600 = vld [vmem:[#allocation10 + $0x438] sm:$0xff]
    %v2601 = vld [vmem:[#allocation10 + $0x440] sm:$0xff]
    %v2602 = vld [vmem:[#allocation10 + $0x448] sm:$0xff]
    %v2603 = vld [vmem:[#allocation10 + $0x450] sm:$0xff]
    %v2604 = vld [vmem:[#allocation10 + $0x458] sm:$0xff]
    %v2605 = vld [vmem:[#allocation10 + $0x460] sm:$0xff]
    %v2606 = vld [vmem:[#allocation10 + $0x468] sm:$0xff]
    %v2607 = vld [vmem:[#allocation10 + $0x470] sm:$0xff]
    %v2608 = vld [vmem:[#allocation10 + $0x478] sm:$0xff]
    %v2609 = vld [vmem:[#allocation10 + $0x480] sm:$0xff]
    %v2610 = vld [vmem:[#allocation10 + $0x488] sm:$0xff]
    %v2611 = vld [vmem:[#allocation10 + $0x490] sm:$0xff]
    %v2612 = vld [vmem:[#allocation10 + $0x498] sm:$0xff]
    %v2613 = vld [vmem:[#allocation10 + $0x4a0] sm:$0xff]
    %v2614 = vld [vmem:[#allocation10 + $0x4a8] sm:$0xff]
    %v2615 = vld [vmem:[#allocation10 + $0x4b0] sm:$0xff]
    %v2616 = vld [vmem:[#allocation10 + $0x4b8] sm:$0xff]
    %v2617 = vld [vmem:[#allocation10 + $0x4c0] sm:$0xff]
    %v2618 = vld [vmem:[#allocation10 + $0x4c8] sm:$0xff]
    %v2619 = vld [vmem:[#allocation10 + $0x4d0] sm:$0xff]
    %v2620 = vld [vmem:[#allocation10 + $0x4d8] sm:$0xff]
    %v2621 = vld [vmem:[#allocation10 + $0x4e0] sm:$0xff]
    %v2622 = vld [vmem:[#allocation10 + $0x4e8] sm:$0xff]
    %v2623 = vld [vmem:[#allocation10 + $0x4f0] sm:$0xff]
    %v2624 = vld [vmem:[#allocation10 + $0x4f8] sm:$0xff]
    %v2625 = vld [vmem:[#allocation10 + $0x500] sm:$0xff]
    %v2626 = vld [vmem:[#allocation10 + $0x508] sm:$0xff]
    %v2627 = vld [vmem:[#allocation10 + $0x510] sm:$0xff]
    %v2628 = vld [vmem:[#allocation10 + $0x518] sm:$0xff]
    %v2629 = vld [vmem:[#allocation10 + $0x520] sm:$0xff]
    %v2630 = vld [vmem:[#allocation10 + $0x528] sm:$0xff]
    %v2631 = vld [vmem:[#allocation10 + $0x530] sm:$0xff]
    %v2632 = vld [vmem:[#allocation10 + $0x538] sm:$0xff]
    %v2633 = vld [vmem:[#allocation10 + $0x540] sm:$0xff]
    %v2634 = vld [vmem:[#allocation10 + $0x548] sm:$0xff]
    %v2635 = vld [vmem:[#allocation10 + $0x550] sm:$0xff]
    %v2636 = vld [vmem:[#allocation10 + $0x558] sm:$0xff]
    %v2637 = vld [vmem:[#allocation10 + $0x560] sm:$0xff]
    %v2638 = vld [vmem:[#allocation10 + $0x568] sm:$0xff]
    %v2639 = vld [vmem:[#allocation10 + $0x570] sm:$0xff]
    %v2640 = vld [vmem:[#allocation10 + $0x578] sm:$0xff]
    %v2641 = vld [vmem:[#allocation10 + $0x580] sm:$0xff]
    %v2642 = vld [vmem:[#allocation10 + $0x588] sm:$0xff]
    %v2643 = vld [vmem:[#allocation10 + $0x590] sm:$0xff]
    %v2644 = vld [vmem:[#allocation10 + $0x598] sm:$0xff]
    %v2645 = vld [vmem:[#allocation10 + $0x5a0] sm:$0xff]
    %v2646 = vld [vmem:[#allocation10 + $0x5a8] sm:$0xff]
    %v2647 = vld [vmem:[#allocation10 + $0x5b0] sm:$0xff]
    %v2648 = vld [vmem:[#allocation10 + $0x5b8] sm:$0xff]
    %v2649 = vld [vmem:[#allocation10 + $0x5c0] sm:$0xff]
    %v2650 = vld [vmem:[#allocation10 + $0x5c8] sm:$0xff]
    %v2651 = vld [vmem:[#allocation10 + $0x5d0] sm:$0xff]
    %v2652 = vld [vmem:[#allocation10 + $0x5d8] sm:$0xff]
    %v2653 = vld [vmem:[#allocation10 + $0x5e0] sm:$0xff]
    %v2654 = vld [vmem:[#allocation10 + $0x5e8] sm:$0xff]
    %v2655 = vld [vmem:[#allocation10 + $0x5f0] sm:$0xff]
    %v2656 = vld [vmem:[#allocation10 + $0x5f8] sm:$0xff]
    %v2657 = vld [vmem:[#allocation10 + $0x600] sm:$0xff]
    %v2658 = vld [vmem:[#allocation10 + $0x608] sm:$0xff]
    %v2659 = vld [vmem:[#allocation10 + $0x610] sm:$0xff]
    %v2660 = vld [vmem:[#allocation10 + $0x618] sm:$0xff]
    %v2661 = vld [vmem:[#allocation10 + $0x620] sm:$0xff]
    %v2662 = vld [vmem:[#allocation10 + $0x628] sm:$0xff]
    %v2663 = vld [vmem:[#allocation10 + $0x630] sm:$0xff]
    %v2664 = vld [vmem:[#allocation10 + $0x638] sm:$0xff]
    %v2665 = vld [vmem:[#allocation10 + $0x640] sm:$0xff]
    %v2666 = vld [vmem:[#allocation10 + $0x648] sm:$0xff]
    %v2667 = vld [vmem:[#allocation10 + $0x650] sm:$0xff]
    %v2668 = vld [vmem:[#allocation10 + $0x658] sm:$0xff]
    %v2669 = vld [vmem:[#allocation10 + $0x660] sm:$0xff]
    %v2670 = vld [vmem:[#allocation10 + $0x668] sm:$0xff]
    %v2671 = vld [vmem:[#allocation10 + $0x670] sm:$0xff]
    %v2672 = vld [vmem:[#allocation10 + $0x678] sm:$0xff]
    %v2673 = vld [vmem:[#allocation10 + $0x680] sm:$0xff]
    %v2674 = vld [vmem:[#allocation10 + $0x688] sm:$0xff]
    %v2675 = vld [vmem:[#allocation10 + $0x690] sm:$0xff]
    %v2676 = vld [vmem:[#allocation10 + $0x698] sm:$0xff]
    %v2677 = vld [vmem:[#allocation10 + $0x6a0] sm:$0xff]
    %v2678 = vld [vmem:[#allocation10 + $0x6a8] sm:$0xff]
    %v2679 = vld [vmem:[#allocation10 + $0x6b0] sm:$0xff]
    %v2680 = vld [vmem:[#allocation10 + $0x6b8] sm:$0xff]
    %v2681 = vld [vmem:[#allocation10 + $0x6c0] sm:$0xff]
    %v2682 = vld [vmem:[#allocation10 + $0x6c8] sm:$0xff]
    %v2683 = vld [vmem:[#allocation10 + $0x6d0] sm:$0xff]
    %v2684 = vld [vmem:[#allocation10 + $0x6d8] sm:$0xff]
    %v2685 = vld [vmem:[#allocation10 + $0x6e0] sm:$0xff]
    %v2686 = vld [vmem:[#allocation10 + $0x6e8] sm:$0xff]
    %v2687 = vld [vmem:[#allocation10 + $0x6f0] sm:$0xff]
    %v2688 = vld [vmem:[#allocation10 + $0x6f8] sm:$0xff]
    %v2689 = vld [vmem:[#allocation10 + $0x700] sm:$0xff]
    %v2690 = vld [vmem:[#allocation10 + $0x708] sm:$0xff]
    %v2691 = vld [vmem:[#allocation10 + $0x710] sm:$0xff]
    %v2692 = vld [vmem:[#allocation10 + $0x718] sm:$0xff]
    %v2693 = vld [vmem:[#allocation10 + $0x720] sm:$0xff]
    %v2694 = vld [vmem:[#allocation10 + $0x728] sm:$0xff]
    %v2695 = vld [vmem:[#allocation10 + $0x730] sm:$0xff]
    %v2696 = vld [vmem:[#allocation10 + $0x738] sm:$0xff]
    %v2697 = vld [vmem:[#allocation10 + $0x740] sm:$0xff]
    %v2698 = vld [vmem:[#allocation10 + $0x748] sm:$0xff]
    %v2699 = vld [vmem:[#allocation10 + $0x750] sm:$0xff]
    %v2700 = vld [vmem:[#allocation10 + $0x758] sm:$0xff]
    %v2701 = vld [vmem:[#allocation10 + $0x760] sm:$0xff]
    %v2702 = vld [vmem:[#allocation10 + $0x768] sm:$0xff]
    %v2703 = vld [vmem:[#allocation10 + $0x770] sm:$0xff]
    %v2704 = vld [vmem:[#allocation10 + $0x778] sm:$0xff]
    %v2705 = vld [vmem:[#allocation10 + $0x780] sm:$0xff]
    %v2706 = vld [vmem:[#allocation10 + $0x788] sm:$0xff]
    %v2707 = vld [vmem:[#allocation10 + $0x790] sm:$0xff]
    %v2708 = vld [vmem:[#allocation10 + $0x798] sm:$0xff]
    %v2709 = vld [vmem:[#allocation10 + $0x7a0] sm:$0xff]
    %v2710 = vld [vmem:[#allocation10 + $0x7a8] sm:$0xff]
    %v2711 = vld [vmem:[#allocation10 + $0x7b0] sm:$0xff]
    %v2712 = vld [vmem:[#allocation10 + $0x7b8] sm:$0xff]
    %v2713 = vld [vmem:[#allocation10 + $0x7c0] sm:$0xff]
    %v2714 = vld [vmem:[#allocation10 + $0x7c8] sm:$0xff]
    %v2715 = vld [vmem:[#allocation10 + $0x7d0] sm:$0xff]
    %v2716 = vld [vmem:[#allocation10 + $0x7d8] sm:$0xff]
    %v2717 = vld [vmem:[#allocation10 + $0x7e0] sm:$0xff]
    %v2718 = vld [vmem:[#allocation10 + $0x7e8] sm:$0xff]
    %v2719 = vld [vmem:[#allocation10 + $0x7f0] sm:$0xff]
    %v2720 = vld [vmem:[#allocation10 + $0x7f8] sm:$0xff]
    %v2721 = vld [vmem:[#allocation10 + $0x800] sm:$0xff]
    %v2722 = vld [vmem:[#allocation10 + $0x808] sm:$0xff]
    %v2723 = vld [vmem:[#allocation10 + $0x810] sm:$0xff]
    %v2724 = vld [vmem:[#allocation10 + $0x818] sm:$0xff]
    %v2725 = vld [vmem:[#allocation10 + $0x820] sm:$0xff]
    %v2726 = vld [vmem:[#allocation10 + $0x828] sm:$0xff]
    %v2727 = vld [vmem:[#allocation10 + $0x830] sm:$0xff]
    %v2728 = vld [vmem:[#allocation10 + $0x838] sm:$0xff]
    %v2729 = vld [vmem:[#allocation10 + $0x840] sm:$0xff]
    %v2730 = vld [vmem:[#allocation10 + $0x848] sm:$0xff]
    %v2731 = vld [vmem:[#allocation10 + $0x850] sm:$0xff]
    %v2732 = vld [vmem:[#allocation10 + $0x858] sm:$0xff]
    %v2733 = vld [vmem:[#allocation10 + $0x860] sm:$0xff]
    %v2734 = vld [vmem:[#allocation10 + $0x868] sm:$0xff]
    %v2735 = vld [vmem:[#allocation10 + $0x870] sm:$0xff]
    %v2736 = vld [vmem:[#allocation10 + $0x878] sm:$0xff]
    %v2737 = vld [vmem:[#allocation10 + $0x880] sm:$0xff]
    %v2738 = vld [vmem:[#allocation10 + $0x888] sm:$0xff]
    %v2739 = vld [vmem:[#allocation10 + $0x890] sm:$0xff]
    %v2740 = vld [vmem:[#allocation10 + $0x898] sm:$0xff]
    %v2741 = vld [vmem:[#allocation10 + $0x8a0] sm:$0xff]
    %v2742 = vld [vmem:[#allocation10 + $0x8a8] sm:$0xff]
    %v2743 = vld [vmem:[#allocation10 + $0x8b0] sm:$0xff]
    %v2744 = vld [vmem:[#allocation10 + $0x8b8] sm:$0xff]
    %v2745 = vld [vmem:[#allocation10 + $0x8c0] sm:$0xff]
    %v2746 = vld [vmem:[#allocation10 + $0x8c8] sm:$0xff]
    %v2747 = vld [vmem:[#allocation10 + $0x8d0] sm:$0xff]
    %v2748 = vld [vmem:[#allocation10 + $0x8d8] sm:$0xff]
    %v2749 = vld [vmem:[#allocation10 + $0x8e0] sm:$0xff]
    %v2750 = vld [vmem:[#allocation10 + $0x8e8] sm:$0xff]
    %v2751 = vld [vmem:[#allocation10 + $0x8f0] sm:$0xff]
    %v2752 = vld [vmem:[#allocation10 + $0x8f8] sm:$0xff]
    %v2753 = vld [vmem:[#allocation10 + $0x900] sm:$0xff]
    %v2754 = vld [vmem:[#allocation10 + $0x908] sm:$0xff]
    %v2755 = vld [vmem:[#allocation10 + $0x910] sm:$0xff]
    %v2756 = vld [vmem:[#allocation10 + $0x918] sm:$0xff]
    %v2757 = vld [vmem:[#allocation10 + $0x920] sm:$0xff]
    %v2758 = vld [vmem:[#allocation10 + $0x928] sm:$0xff]
    %v2759 = vld [vmem:[#allocation10 + $0x930] sm:$0xff]
    %v2760 = vld [vmem:[#allocation10 + $0x938] sm:$0xff]
    %v2761 = vld [vmem:[#allocation10 + $0x940] sm:$0xff]
    %v2762 = vld [vmem:[#allocation10 + $0x948] sm:$0xff]
    %v2763 = vld [vmem:[#allocation10 + $0x950] sm:$0xff]
    %v2764 = vld [vmem:[#allocation10 + $0x958] sm:$0xff]
    %v2765 = vld [vmem:[#allocation10 + $0x960] sm:$0xff]
    %v2766 = vld [vmem:[#allocation10 + $0x968] sm:$0xff]
    %v2767 = vld [vmem:[#allocation10 + $0x970] sm:$0xff]
    %v2768 = vld [vmem:[#allocation10 + $0x978] sm:$0xff]
    %v2769 = vld [vmem:[#allocation10 + $0x980] sm:$0xff]
    %v2770 = vld [vmem:[#allocation10 + $0x988] sm:$0xff]
    %v2771 = vld [vmem:[#allocation10 + $0x990] sm:$0xff]
    %v2772 = vld [vmem:[#allocation10 + $0x998] sm:$0xff]
    %v2773 = vld [vmem:[#allocation10 + $0x9a0] sm:$0xff]
    %v2774 = vld [vmem:[#allocation10 + $0x9a8] sm:$0xff]
    %v2775 = vld [vmem:[#allocation10 + $0x9b0] sm:$0xff]
    %v2776 = vld [vmem:[#allocation10 + $0x9b8] sm:$0xff]
    %v2777 = vld [vmem:[#allocation10 + $0x9c0] sm:$0xff]
    %v2778 = vld [vmem:[#allocation10 + $0x9c8] sm:$0xff]
    %v2779 = vld [vmem:[#allocation10 + $0x9d0] sm:$0xff]
    %v2780 = vld [vmem:[#allocation10 + $0x9d8] sm:$0xff]
    %v2781 = vld [vmem:[#allocation10 + $0x9e0] sm:$0xff]
    %v2782 = vld [vmem:[#allocation10 + $0x9e8] sm:$0xff]
    %v2783 = vld [vmem:[#allocation10 + $0x9f0] sm:$0xff]
    %v2784 = vld [vmem:[#allocation10 + $0x9f8] sm:$0xff]
    %v2785 = vld [vmem:[#allocation10 + $0xa00] sm:$0xff]
    %v2786 = vld [vmem:[#allocation10 + $0xa08] sm:$0xff]
    %v2787 = vld [vmem:[#allocation10 + $0xa10] sm:$0xff]
    %v2788 = vld [vmem:[#allocation10 + $0xa18] sm:$0xff]
    %v2789 = vld [vmem:[#allocation10 + $0xa20] sm:$0xff]
    %v2790 = vld [vmem:[#allocation10 + $0xa28] sm:$0xff]
    %v2791 = vld [vmem:[#allocation10 + $0xa30] sm:$0xff]
    %v2792 = vld [vmem:[#allocation10 + $0xa38] sm:$0xff]
    %v2793 = vld [vmem:[#allocation10 + $0xa40] sm:$0xff]
    %v2794 = vld [vmem:[#allocation10 + $0xa48] sm:$0xff]
    %v2795 = vld [vmem:[#allocation10 + $0xa50] sm:$0xff]
    %v2796 = vld [vmem:[#allocation10 + $0xa58] sm:$0xff]
    %v2797 = vld [vmem:[#allocation10 + $0xa60] sm:$0xff]
    %v2798 = vld [vmem:[#allocation10 + $0xa68] sm:$0xff]
    %v2799 = vld [vmem:[#allocation10 + $0xa70] sm:$0xff]
    %v2800 = vld [vmem:[#allocation10 + $0xa78] sm:$0xff]
    %v2801 = vld [vmem:[#allocation10 + $0xa80] sm:$0xff]
    %v2802 = vld [vmem:[#allocation10 + $0xa88] sm:$0xff]
    %v2803 = vld [vmem:[#allocation10 + $0xa90] sm:$0xff]
    %v2804 = vld [vmem:[#allocation10 + $0xa98] sm:$0xff]
    %v2805 = vld [vmem:[#allocation10 + $0xaa0] sm:$0xff]
    %v2806 = vld [vmem:[#allocation10 + $0xaa8] sm:$0xff]
    %v2807 = vld [vmem:[#allocation10 + $0xab0] sm:$0xff]
    %v2808 = vld [vmem:[#allocation10 + $0xab8] sm:$0xff]
    %v2809 = vld [vmem:[#allocation10 + $0xac0] sm:$0xff]
    %v2810 = vld [vmem:[#allocation10 + $0xac8] sm:$0xff]
    %v2811 = vld [vmem:[#allocation10 + $0xad0] sm:$0xff]
    %v2812 = vld [vmem:[#allocation10 + $0xad8] sm:$0xff]
    %v2813 = vld [vmem:[#allocation10 + $0xae0] sm:$0xff]
    %v2814 = vld [vmem:[#allocation10 + $0xae8] sm:$0xff]
    %v2815 = vld [vmem:[#allocation10 + $0xaf0] sm:$0xff]
    %v2816 = vld [vmem:[#allocation10 + $0xaf8] sm:$0xff]
    %v2817 = vld [vmem:[#allocation10 + $0xb00] sm:$0xff]
    %v2818 = vld [vmem:[#allocation10 + $0xb08] sm:$0xff]
    %v2819 = vld [vmem:[#allocation10 + $0xb10] sm:$0xff]
    %v2820 = vld [vmem:[#allocation10 + $0xb18] sm:$0xff]
    %v2821 = vld [vmem:[#allocation10 + $0xb20] sm:$0xff]
    %v2822 = vld [vmem:[#allocation10 + $0xb28] sm:$0xff]
    %v2823 = vld [vmem:[#allocation10 + $0xb30] sm:$0xff]
    %v2824 = vld [vmem:[#allocation10 + $0xb38] sm:$0xff]
    %v2825 = vld [vmem:[#allocation10 + $0xb40] sm:$0xff]
    %v2826 = vld [vmem:[#allocation10 + $0xb48] sm:$0xff]
    %v2827 = vld [vmem:[#allocation10 + $0xb50] sm:$0xff]
    %v2828 = vld [vmem:[#allocation10 + $0xb58] sm:$0xff]
    %v2829 = vld [vmem:[#allocation10 + $0xb60] sm:$0xff]
    %v2830 = vld [vmem:[#allocation10 + $0xb68] sm:$0xff]
    %v2831 = vld [vmem:[#allocation10 + $0xb70] sm:$0xff]
    %v2832 = vld [vmem:[#allocation10 + $0xb78] sm:$0xff]
    %v2833 = vld [vmem:[#allocation10 + $0xb80] sm:$0xff]
    %v2834 = vld [vmem:[#allocation10 + $0xb88] sm:$0xff]
    %v2835 = vld [vmem:[#allocation10 + $0xb90] sm:$0xff]
    %v2836 = vld [vmem:[#allocation10 + $0xb98] sm:$0xff]
    %v2837 = vld [vmem:[#allocation10 + $0xba0] sm:$0xff]
    %v2838 = vld [vmem:[#allocation10 + $0xba8] sm:$0xff]
    %v2839 = vld [vmem:[#allocation10 + $0xbb0] sm:$0xff]
    %v2840 = vld [vmem:[#allocation10 + $0xbb8] sm:$0xff]
    %v2841 = vld [vmem:[#allocation10 + $0xbc0] sm:$0xff]
    %v2842 = vld [vmem:[#allocation10 + $0xbc8] sm:$0xff]
    %v2843 = vld [vmem:[#allocation10 + $0xbd0] sm:$0xff]
    %v2844 = vld [vmem:[#allocation10 + $0xbd8] sm:$0xff]
    %v2845 = vld [vmem:[#allocation10 + $0xbe0] sm:$0xff]
    %v2846 = vld [vmem:[#allocation10 + $0xbe8] sm:$0xff]
    %v2847 = vld [vmem:[#allocation10 + $0xbf0] sm:$0xff]
    %v2848 = vld [vmem:[#allocation10 + $0xbf8] sm:$0xff]
    %v2849 = vld [vmem:[#allocation10 + $0xc00] sm:$0xff]
    %v2850 = vld [vmem:[#allocation10 + $0xc08] sm:$0xff]
    %v2851 = vld [vmem:[#allocation10 + $0xc10] sm:$0xff]
    %v2852 = vld [vmem:[#allocation10 + $0xc18] sm:$0xff]
    %v2853 = vld [vmem:[#allocation10 + $0xc20] sm:$0xff]
    %v2854 = vld [vmem:[#allocation10 + $0xc28] sm:$0xff]
    %v2855 = vld [vmem:[#allocation10 + $0xc30] sm:$0xff]
    %v2856 = vld [vmem:[#allocation10 + $0xc38] sm:$0xff]
    %v2857 = vld [vmem:[#allocation10 + $0xc40] sm:$0xff]
    %v2858 = vld [vmem:[#allocation10 + $0xc48] sm:$0xff]
    %v2859 = vld [vmem:[#allocation10 + $0xc50] sm:$0xff]
    %v2860 = vld [vmem:[#allocation10 + $0xc58] sm:$0xff]
    %v2861 = vld [vmem:[#allocation10 + $0xc60] sm:$0xff]
    %v2862 = vld [vmem:[#allocation10 + $0xc68] sm:$0xff]
    %v2863 = vld [vmem:[#allocation10 + $0xc70] sm:$0xff]
    %v2864 = vld [vmem:[#allocation10 + $0xc78] sm:$0xff]
    %v2865 = vld [vmem:[#allocation10 + $0xc80] sm:$0xff]
    %v2866 = vld [vmem:[#allocation10 + $0xc88] sm:$0xff]
    %v2867 = vld [vmem:[#allocation10 + $0xc90] sm:$0xff]
    %v2868 = vld [vmem:[#allocation10 + $0xc98] sm:$0xff]
    %v2869 = vld [vmem:[#allocation10 + $0xca0] sm:$0xff]
    %v2870 = vld [vmem:[#allocation10 + $0xca8] sm:$0xff]
    %v2871 = vld [vmem:[#allocation10 + $0xcb0] sm:$0xff]
    %v2872 = vld [vmem:[#allocation10 + $0xcb8] sm:$0xff]
    %v2873 = vld [vmem:[#allocation10 + $0xcc0] sm:$0xff]
    %v2874 = vld [vmem:[#allocation10 + $0xcc8] sm:$0xff]
    %v2875 = vld [vmem:[#allocation10 + $0xcd0] sm:$0xff]
    %v2876 = vld [vmem:[#allocation10 + $0xcd8] sm:$0xff]
    %v2877 = vld [vmem:[#allocation10 + $0xce0] sm:$0xff]
    %v2878 = vld [vmem:[#allocation10 + $0xce8] sm:$0xff]
    %v2879 = vld [vmem:[#allocation10 + $0xcf0] sm:$0xff]
    %v2880 = vld [vmem:[#allocation10 + $0xcf8] sm:$0xff]
    %v2881 = vld [vmem:[#allocation10 + $0xd00] sm:$0xff]
    %v2882 = vld [vmem:[#allocation10 + $0xd08] sm:$0xff]
    %v2883 = vld [vmem:[#allocation10 + $0xd10] sm:$0xff]
    %v2884 = vld [vmem:[#allocation10 + $0xd18] sm:$0xff]
    %v2885 = vld [vmem:[#allocation10 + $0xd20] sm:$0xff]
    %v2886 = vld [vmem:[#allocation10 + $0xd28] sm:$0xff]
    %v2887 = vld [vmem:[#allocation10 + $0xd30] sm:$0xff]
    %v2888 = vld [vmem:[#allocation10 + $0xd38] sm:$0xff]
    %v2889 = vld [vmem:[#allocation10 + $0xd40] sm:$0xff]
    %v2890 = vld [vmem:[#allocation10 + $0xd48] sm:$0xff]
    %v2891 = vld [vmem:[#allocation10 + $0xd50] sm:$0xff]
    %v2892 = vld [vmem:[#allocation10 + $0xd58] sm:$0xff]
    %v2893 = vld [vmem:[#allocation10 + $0xd60] sm:$0xff]
    %v2894 = vld [vmem:[#allocation10 + $0xd68] sm:$0xff]
    %v2895 = vld [vmem:[#allocation10 + $0xd70] sm:$0xff]
    %v2896 = vld [vmem:[#allocation10 + $0xd78] sm:$0xff]
    %v2897 = vld [vmem:[#allocation10 + $0xd80] sm:$0xff]
    %v2898 = vld [vmem:[#allocation10 + $0xd88] sm:$0xff]
    %v2899 = vld [vmem:[#allocation10 + $0xd90] sm:$0xff]
    %v2900 = vld [vmem:[#allocation10 + $0xd98] sm:$0xff]
    %v2901 = vld [vmem:[#allocation10 + $0xda0] sm:$0xff]
    %v2902 = vld [vmem:[#allocation10 + $0xda8] sm:$0xff]
    %v2903 = vld [vmem:[#allocation10 + $0xdb0] sm:$0xff]
    %v2904 = vld [vmem:[#allocation10 + $0xdb8] sm:$0xff]
    %v2905 = vld [vmem:[#allocation10 + $0xdc0] sm:$0xff]
    %v2906 = vld [vmem:[#allocation10 + $0xdc8] sm:$0xff]
    %v2907 = vld [vmem:[#allocation10 + $0xdd0] sm:$0xff]
    %v2908 = vld [vmem:[#allocation10 + $0xdd8] sm:$0xff]
    %v2909 = vld [vmem:[#allocation10 + $0xde0] sm:$0xff]
    %v2910 = vld [vmem:[#allocation10 + $0xde8] sm:$0xff]
    %v2911 = vld [vmem:[#allocation10 + $0xdf0] sm:$0xff]
    %v2912 = vld [vmem:[#allocation10 + $0xdf8] sm:$0xff]
    %v2913 = vld [vmem:[#allocation10 + $0xe00] sm:$0xff]
    %v2914 = vld [vmem:[#allocation10 + $0xe08] sm:$0xff]
    %v2915 = vld [vmem:[#allocation10 + $0xe10] sm:$0xff]
    %v2916 = vld [vmem:[#allocation10 + $0xe18] sm:$0xff]
    %v2917 = vld [vmem:[#allocation10 + $0xe20] sm:$0xff]
    %v2918 = vld [vmem:[#allocation10 + $0xe28] sm:$0xff]
    %v2919 = vld [vmem:[#allocation10 + $0xe30] sm:$0xff]
    %v2920 = vld [vmem:[#allocation10 + $0xe38] sm:$0xff]
    %v2921 = vld [vmem:[#allocation10 + $0xe40] sm:$0xff]
    %v2922 = vld [vmem:[#allocation10 + $0xe48] sm:$0xff]
    %v2923 = vld [vmem:[#allocation10 + $0xe50] sm:$0xff]
    %v2924 = vld [vmem:[#allocation10 + $0xe58] sm:$0xff]
    %v2925 = vld [vmem:[#allocation10 + $0xe60] sm:$0xff]
    %v2926 = vld [vmem:[#allocation10 + $0xe68] sm:$0xff]
    %v2927 = vld [vmem:[#allocation10 + $0xe70] sm:$0xff]
    %v2928 = vld [vmem:[#allocation10 + $0xe78] sm:$0xff]
    %v2929 = vld [vmem:[#allocation10 + $0xe80] sm:$0xff]
    %v2930 = vld [vmem:[#allocation10 + $0xe88] sm:$0xff]
    %v2931 = vld [vmem:[#allocation10 + $0xe90] sm:$0xff]
    %v2932 = vld [vmem:[#allocation10 + $0xe98] sm:$0xff]
    %v2933 = vld [vmem:[#allocation10 + $0xea0] sm:$0xff]
    %v2934 = vld [vmem:[#allocation10 + $0xea8] sm:$0xff]
    %v2935 = vld [vmem:[#allocation10 + $0xeb0] sm:$0xff]
    %v2936 = vld [vmem:[#allocation10 + $0xeb8] sm:$0xff]
    %v2937 = vld [vmem:[#allocation10 + $0xec0] sm:$0xff]
    %v2938 = vld [vmem:[#allocation10 + $0xec8] sm:$0xff]
    %v2939 = vld [vmem:[#allocation10 + $0xed0] sm:$0xff]
    %v2940 = vld [vmem:[#allocation10 + $0xed8] sm:$0xff]
    %v2941 = vld [vmem:[#allocation10 + $0xee0] sm:$0xff]
    %v2942 = vld [vmem:[#allocation10 + $0xee8] sm:$0xff]
    %v2943 = vld [vmem:[#allocation10 + $0xef0] sm:$0xff]
    %v2944 = vld [vmem:[#allocation10 + $0xef8] sm:$0xff]
    %v2945 = vld [vmem:[#allocation10 + $0xf00] sm:$0xff]
    %v2946 = vld [vmem:[#allocation10 + $0xf08] sm:$0xff]
    %v2947 = vld [vmem:[#allocation10 + $0xf10] sm:$0xff]
    %v2948 = vld [vmem:[#allocation10 + $0xf18] sm:$0xff]
    %v2949 = vld [vmem:[#allocation10 + $0xf20] sm:$0xff]
    %v2950 = vld [vmem:[#allocation10 + $0xf28] sm:$0xff]
    %v2951 = vld [vmem:[#allocation10 + $0xf30] sm:$0xff]
    %v2952 = vld [vmem:[#allocation10 + $0xf38] sm:$0xff]
    %v2953 = vld [vmem:[#allocation10 + $0xf40] sm:$0xff]
    %v2954 = vld [vmem:[#allocation10 + $0xf48] sm:$0xff]
    %v2955 = vld [vmem:[#allocation10 + $0xf50] sm:$0xff]
    %v2956 = vld [vmem:[#allocation10 + $0xf58] sm:$0xff]
    %v2957 = vld [vmem:[#allocation10 + $0xf60] sm:$0xff]
    %v2958 = vld [vmem:[#allocation10 + $0xf68] sm:$0xff]
    %v2959 = vld [vmem:[#allocation10 + $0xf70] sm:$0xff]
    %v2960 = vld [vmem:[#allocation10 + $0xf78] sm:$0xff]
    %v2961 = vld [vmem:[#allocation10 + $0xf80] sm:$0xff]
    %v2962 = vld [vmem:[#allocation10 + $0xf88] sm:$0xff]
    %v2963 = vld [vmem:[#allocation10 + $0xf90] sm:$0xff]
    %v2964 = vld [vmem:[#allocation10 + $0xf98] sm:$0xff]
    %v2965 = vld [vmem:[#allocation10 + $0xfa0] sm:$0xff]
    %v2966 = vld [vmem:[#allocation10 + $0xfa8] sm:$0xff]
    %v2967 = vld [vmem:[#allocation10 + $0xfb0] sm:$0xff]
    %v2968 = vld [vmem:[#allocation10 + $0xfb8] sm:$0xff]
    %v2969 = vld [vmem:[#allocation10 + $0xfc0] sm:$0xff]
    %v2970 = vld [vmem:[#allocation10 + $0xfc8] sm:$0xff]
    %v2971 = vld [vmem:[#allocation10 + $0xfd0] sm:$0xff]
    %v2972 = vld [vmem:[#allocation10 + $0xfd8] sm:$0xff]
    %v2973 = vld [vmem:[#allocation10 + $0xfe0] sm:$0xff]
    %v2974 = vld [vmem:[#allocation10 + $0xfe8] sm:$0xff]
    %v2975 = vld [vmem:[#allocation10 + $0xff0] sm:$0xff]
    %v2976 = vld [vmem:[#allocation10 + $0xff8] sm:$0xff]
    %v2977 = vld [vmem:[#allocation10 + $0x1000] sm:$0xff]
    %v2978 = vld [vmem:[#allocation10 + $0x1008] sm:$0xff]
    %v2979 = vld [vmem:[#allocation10 + $0x1010] sm:$0xff]
    %v2980 = vld [vmem:[#allocation10 + $0x1018] sm:$0xff]
    %v2981 = vld [vmem:[#allocation10 + $0x1020] sm:$0xff]
    %v2982 = vld [vmem:[#allocation10 + $0x1028] sm:$0xff]
    %v2983 = vld [vmem:[#allocation10 + $0x1030] sm:$0xff]
    %v2984 = vld [vmem:[#allocation10 + $0x1038] sm:$0xff]
    %v2985 = vld [vmem:[#allocation10 + $0x1040] sm:$0xff]
    %v2986 = vld [vmem:[#allocation10 + $0x1048] sm:$0xff]
    %v2987 = vld [vmem:[#allocation10 + $0x1050] sm:$0xff]
    %v2988 = vld [vmem:[#allocation10 + $0x1058] sm:$0xff]
    %v2989 = vld [vmem:[#allocation10 + $0x1060] sm:$0xff]
    %v2990 = vld [vmem:[#allocation10 + $0x1068] sm:$0xff]
    %v2991 = vld [vmem:[#allocation10 + $0x1070] sm:$0xff]
    %v2992 = vld [vmem:[#allocation10 + $0x1078] sm:$0xff]
    %v2993 = vld [vmem:[#allocation10 + $0x1080] sm:$0xff]
    %v2994 = vld [vmem:[#allocation10 + $0x1088] sm:$0xff]
    %v2995 = vld [vmem:[#allocation10 + $0x1090] sm:$0xff]
    %v2996 = vld [vmem:[#allocation10 + $0x1098] sm:$0xff]
    %v2997 = vld [vmem:[#allocation10 + $0x10a0] sm:$0xff]
    %v2998 = vld [vmem:[#allocation10 + $0x10a8] sm:$0xff]
    %v2999 = vld [vmem:[#allocation10 + $0x10b0] sm:$0xff]
    %v3000 = vld [vmem:[#allocation10 + $0x10b8] sm:$0xff]
    %v3001 = vld [vmem:[#allocation10 + $0x10c0] sm:$0xff]
    %v3002 = vld [vmem:[#allocation10 + $0x10c8] sm:$0xff]
    %v3003 = vld [vmem:[#allocation10 + $0x10d0] sm:$0xff]
    %v3004 = vld [vmem:[#allocation10 + $0x10d8] sm:$0xff]
    %v3005 = vld [vmem:[#allocation10 + $0x10e0] sm:$0xff]
    %v3006 = vld [vmem:[#allocation10 + $0x10e8] sm:$0xff]
    %v3007 = vld [vmem:[#allocation10 + $0x10f0] sm:$0xff]
    %v3008 = vld [vmem:[#allocation10 + $0x10f8] sm:$0xff]
    %v3009 = vld [vmem:[#allocation10 + $0x1100] sm:$0xff]
    %v3010 = vld [vmem:[#allocation10 + $0x1108] sm:$0xff]
    %v3011 = vld [vmem:[#allocation10 + $0x1110] sm:$0xff]
    %v3012 = vld [vmem:[#allocation10 + $0x1118] sm:$0xff]
    %v3013 = vld [vmem:[#allocation10 + $0x1120] sm:$0xff]
    %v3014 = vld [vmem:[#allocation10 + $0x1128] sm:$0xff]
    %v3015 = vld [vmem:[#allocation10 + $0x1130] sm:$0xff]
    %v3016 = vld [vmem:[#allocation10 + $0x1138] sm:$0xff]
    %v3017 = vld [vmem:[#allocation10 + $0x1140] sm:$0xff]
    %v3018 = vld [vmem:[#allocation10 + $0x1148] sm:$0xff]
    %v3019 = vld [vmem:[#allocation10 + $0x1150] sm:$0xff]
    %v3020 = vld [vmem:[#allocation10 + $0x1158] sm:$0xff]
    %v3021 = vld [vmem:[#allocation10 + $0x1160] sm:$0xff]
    %v3022 = vld [vmem:[#allocation10 + $0x1168] sm:$0xff]
    %v3023 = vld [vmem:[#allocation10 + $0x1170] sm:$0xff]
    %v3024 = vld [vmem:[#allocation10 + $0x1178] sm:$0xff]
    %v3025 = vld [vmem:[#allocation10 + $0x1180] sm:$0xff]
    %v3026 = vld [vmem:[#allocation10 + $0x1188] sm:$0xff]
    %v3027 = vld [vmem:[#allocation10 + $0x1190] sm:$0xff]
    %v3028 = vld [vmem:[#allocation10 + $0x1198] sm:$0xff]
    %v3029 = vld [vmem:[#allocation10 + $0x11a0] sm:$0xff]
    %v3030 = vld [vmem:[#allocation10 + $0x11a8] sm:$0xff]
    %v3031 = vld [vmem:[#allocation10 + $0x11b0] sm:$0xff]
    %v3032 = vld [vmem:[#allocation10 + $0x11b8] sm:$0xff]
    %v3033 = vld [vmem:[#allocation10 + $0x11c0] sm:$0xff]
    %v3034 = vld [vmem:[#allocation10 + $0x11c8] sm:$0xff]
    %v3035 = vld [vmem:[#allocation10 + $0x11d0] sm:$0xff]
    %v3036 = vld [vmem:[#allocation10 + $0x11d8] sm:$0xff]
    %v3037 = vld [vmem:[#allocation10 + $0x11e0] sm:$0xff]
    %v3038 = vld [vmem:[#allocation10 + $0x11e8] sm:$0xff]
    %v3039 = vld [vmem:[#allocation10 + $0x11f0] sm:$0xff]
    %v3040 = vld [vmem:[#allocation10 + $0x11f8] sm:$0xff]
    %v3041 = vld [vmem:[#allocation10 + $0x1200] sm:$0xff]
    %v3042 = vld [vmem:[#allocation10 + $0x1208] sm:$0xff]
    %v3043 = vld [vmem:[#allocation10 + $0x1210] sm:$0xff]
    %v3044 = vld [vmem:[#allocation10 + $0x1218] sm:$0xff]
    %v3045 = vld [vmem:[#allocation10 + $0x1220] sm:$0xff]
    %v3046 = vld [vmem:[#allocation10 + $0x1228] sm:$0xff]
    %v3047 = vld [vmem:[#allocation10 + $0x1230] sm:$0xff]
    %v3048 = vld [vmem:[#allocation10 + $0x1238] sm:$0xff]
    %v3049 = vld [vmem:[#allocation10 + $0x1240] sm:$0xff]
    %v3050 = vld [vmem:[#allocation10 + $0x1248] sm:$0xff]
    %v3051 = vld [vmem:[#allocation10 + $0x1250] sm:$0xff]
    %v3052 = vld [vmem:[#allocation10 + $0x1258] sm:$0xff]
    %v3053 = vld [vmem:[#allocation10 + $0x1260] sm:$0xff]
    %v3054 = vld [vmem:[#allocation10 + $0x1268] sm:$0xff]
    %v3055 = vld [vmem:[#allocation10 + $0x1270] sm:$0xff]
    %v3056 = vld [vmem:[#allocation10 + $0x1278] sm:$0xff]
    %v3057 = vld [vmem:[#allocation10 + $0x1280] sm:$0xff]
    %v3058 = vld [vmem:[#allocation10 + $0x1288] sm:$0xff]
    %v3059 = vld [vmem:[#allocation10 + $0x1290] sm:$0xff]
    %v3060 = vld [vmem:[#allocation10 + $0x1298] sm:$0xff]
    %v3061 = vld [vmem:[#allocation10 + $0x12a0] sm:$0xff]
    %v3062 = vld [vmem:[#allocation10 + $0x12a8] sm:$0xff]
    %v3063 = vld [vmem:[#allocation10 + $0x12b0] sm:$0xff]
    %v3064 = vld [vmem:[#allocation10 + $0x12b8] sm:$0xff]
    %v3065 = vld [vmem:[#allocation10 + $0x12c0] sm:$0xff]
    %v3066 = vld [vmem:[#allocation10 + $0x12c8] sm:$0xff]
    %v3067 = vld [vmem:[#allocation10 + $0x12d0] sm:$0xff]
    %v3068 = vld [vmem:[#allocation10 + $0x12d8] sm:$0xff]
    %v3069 = vld [vmem:[#allocation10 + $0x12e0] sm:$0xff]
    %v3070 = vld [vmem:[#allocation10 + $0x12e8] sm:$0xff]
    %v3071 = vld [vmem:[#allocation10 + $0x12f0] sm:$0xff]
    %v3072 = vld [vmem:[#allocation10 + $0x12f8] sm:$0xff]
    %v3073 = vld [vmem:[#allocation10 + $0x1300] sm:$0xff]
    %v3074 = vld [vmem:[#allocation10 + $0x1308] sm:$0xff]
    %v3075 = vld [vmem:[#allocation10 + $0x1310] sm:$0xff]
    %v3076 = vld [vmem:[#allocation10 + $0x1318] sm:$0xff]
    %v3077 = vld [vmem:[#allocation10 + $0x1320] sm:$0xff]
    %v3078 = vld [vmem:[#allocation10 + $0x1328] sm:$0xff]
    %v3079 = vld [vmem:[#allocation10 + $0x1330] sm:$0xff]
    %v3080 = vld [vmem:[#allocation10 + $0x1338] sm:$0xff]
    %v3081 = vld [vmem:[#allocation10 + $0x1340] sm:$0xff]
    %v3082 = vld [vmem:[#allocation10 + $0x1348] sm:$0xff]
    %v3083 = vld [vmem:[#allocation10 + $0x1350] sm:$0xff]
    %v3084 = vld [vmem:[#allocation10 + $0x1358] sm:$0xff]
    %v3085 = vld [vmem:[#allocation10 + $0x1360] sm:$0xff]
    %v3086 = vld [vmem:[#allocation10 + $0x1368] sm:$0xff]
    %v3087 = vld [vmem:[#allocation10 + $0x1370] sm:$0xff]
    %v3088 = vld [vmem:[#allocation10 + $0x1378] sm:$0xff]
    %v3089 = vld [vmem:[#allocation10 + $0x1380] sm:$0xff]
    %v3090 = vld [vmem:[#allocation10 + $0x1388] sm:$0xff]
    %v3091 = vld [vmem:[#allocation10 + $0x1390] sm:$0xff]
    %v3092 = vld [vmem:[#allocation10 + $0x1398] sm:$0xff]
    %v3093 = vld [vmem:[#allocation10 + $0x13a0] sm:$0xff]
    %v3094 = vld [vmem:[#allocation10 + $0x13a8] sm:$0xff]
    %v3095 = vld [vmem:[#allocation10 + $0x13b0] sm:$0xff]
    %v3096 = vld [vmem:[#allocation10 + $0x13b8] sm:$0xff]
    %v3097 = vld [vmem:[#allocation10 + $0x13c0] sm:$0xff]
    %v3098 = vld [vmem:[#allocation10 + $0x13c8] sm:$0xff]
    %v3099 = vld [vmem:[#allocation10 + $0x13d0] sm:$0xff]
    %v3100 = vld [vmem:[#allocation10 + $0x13d8] sm:$0xff]
    %v3101 = vld [vmem:[#allocation10 + $0x13e0] sm:$0xff]
    %v3102 = vld [vmem:[#allocation10 + $0x13e8] sm:$0xff]
    %v3103 = vld [vmem:[#allocation10 + $0x13f0] sm:$0xff]
    %v3104 = vld [vmem:[#allocation10 + $0x13f8] sm:$0xff]
    %v3105 = vld [vmem:[#allocation10 + $0x1400] sm:$0xff]
    %v3106 = vld [vmem:[#allocation10 + $0x1408] sm:$0xff]
    %v3107 = vld [vmem:[#allocation10 + $0x1410] sm:$0xff]
    %v3108 = vld [vmem:[#allocation10 + $0x1418] sm:$0xff]
    %v3109 = vld [vmem:[#allocation10 + $0x1420] sm:$0xff]
    %v3110 = vld [vmem:[#allocation10 + $0x1428] sm:$0xff]
    %v3111 = vld [vmem:[#allocation10 + $0x1430] sm:$0xff]
    %v3112 = vld [vmem:[#allocation10 + $0x1438] sm:$0xff]
    %v3113 = vld [vmem:[#allocation10 + $0x1440] sm:$0xff]
    %v3114 = vld [vmem:[#allocation10 + $0x1448] sm:$0xff]
    %v3115 = vld [vmem:[#allocation10 + $0x1450] sm:$0xff]
    %v3116 = vld [vmem:[#allocation10 + $0x1458] sm:$0xff]
    %v3117 = vld [vmem:[#allocation10 + $0x1460] sm:$0xff]
    %v3118 = vld [vmem:[#allocation10 + $0x1468] sm:$0xff]
    %v3119 = vld [vmem:[#allocation10 + $0x1470] sm:$0xff]
    %v3120 = vld [vmem:[#allocation10 + $0x1478] sm:$0xff]
    %v3121 = vld [vmem:[#allocation10 + $0x1480] sm:$0xff]
    %v3122 = vld [vmem:[#allocation10 + $0x1488] sm:$0xff]
    %v3123 = vld [vmem:[#allocation10 + $0x1490] sm:$0xff]
    %v3124 = vld [vmem:[#allocation10 + $0x1498] sm:$0xff]
    %v3125 = vld [vmem:[#allocation10 + $0x14a0] sm:$0xff]
    %v3126 = vld [vmem:[#allocation10 + $0x14a8] sm:$0xff]
    %v3127 = vld [vmem:[#allocation10 + $0x14b0] sm:$0xff]
    %v3128 = vld [vmem:[#allocation10 + $0x14b8] sm:$0xff]
    %v3129 = vld [vmem:[#allocation10 + $0x14c0] sm:$0xff]
    %v3130 = vld [vmem:[#allocation10 + $0x14c8] sm:$0xff]
    %v3131 = vld [vmem:[#allocation10 + $0x14d0] sm:$0xff]
    %v3132 = vld [vmem:[#allocation10 + $0x14d8] sm:$0xff]
    %v3133 = vld [vmem:[#allocation10 + $0x14e0] sm:$0xff]
    %v3134 = vld [vmem:[#allocation10 + $0x14e8] sm:$0xff]
    %v3135 = vld [vmem:[#allocation10 + $0x14f0] sm:$0xff]
    %v3136 = vld [vmem:[#allocation10 + $0x14f8] sm:$0xff]
    %v3137 = vld [vmem:[#allocation10 + $0x1500] sm:$0xff]
    %v3138 = vld [vmem:[#allocation10 + $0x1508] sm:$0xff]
    %v3139 = vld [vmem:[#allocation10 + $0x1510] sm:$0xff]
    %v3140 = vld [vmem:[#allocation10 + $0x1518] sm:$0xff]
    %v3141 = vld [vmem:[#allocation10 + $0x1520] sm:$0xff]
    %v3142 = vld [vmem:[#allocation10 + $0x1528] sm:$0xff]
    %v3143 = vld [vmem:[#allocation10 + $0x1530] sm:$0xff]
    %v3144 = vld [vmem:[#allocation10 + $0x1538] sm:$0xff]
    %v3145 = vld [vmem:[#allocation10 + $0x1540] sm:$0xff]
    %v3146 = vld [vmem:[#allocation10 + $0x1548] sm:$0xff]
    %v3147 = vld [vmem:[#allocation10 + $0x1550] sm:$0xff]
    %v3148 = vld [vmem:[#allocation10 + $0x1558] sm:$0xff]
    %v3149 = vld [vmem:[#allocation10 + $0x1560] sm:$0xff]
    %v3150 = vld [vmem:[#allocation10 + $0x1568] sm:$0xff]
    %v3151 = vld [vmem:[#allocation10 + $0x1570] sm:$0xff]
    %v3152 = vld [vmem:[#allocation10 + $0x1578] sm:$0xff]
    %v3153 = vld [vmem:[#allocation10 + $0x1580] sm:$0xff]
    %v3154 = vld [vmem:[#allocation10 + $0x1588] sm:$0xff]
    %v3155 = vld [vmem:[#allocation10 + $0x1590] sm:$0xff]
    %v3156 = vld [vmem:[#allocation10 + $0x1598] sm:$0xff]
    %v3157 = vld [vmem:[#allocation10 + $0x15a0] sm:$0xff]
    %v3158 = vld [vmem:[#allocation10 + $0x15a8] sm:$0xff]
    %v3159 = vld [vmem:[#allocation10 + $0x15b0] sm:$0xff]
    %v3160 = vld [vmem:[#allocation10 + $0x15b8] sm:$0xff]
    %v3161 = vld [vmem:[#allocation10 + $0x15c0] sm:$0xff]
    %v3162 = vld [vmem:[#allocation10 + $0x15c8] sm:$0xff]
    %v3163 = vld [vmem:[#allocation10 + $0x15d0] sm:$0xff]
    %v3164 = vld [vmem:[#allocation10 + $0x15d8] sm:$0xff]
    %v3165 = vld [vmem:[#allocation10 + $0x15e0] sm:$0xff]
    %v3166 = vld [vmem:[#allocation10 + $0x15e8] sm:$0xff]
    %v3167 = vld [vmem:[#allocation10 + $0x15f0] sm:$0xff]
    %v3168 = vld [vmem:[#allocation10 + $0x15f8] sm:$0xff]
    %v3169 = vld [vmem:[#allocation10 + $0x1600] sm:$0xff]
    %v3170 = vld [vmem:[#allocation10 + $0x1608] sm:$0xff]
    %v3171 = vld [vmem:[#allocation10 + $0x1610] sm:$0xff]
    %v3172 = vld [vmem:[#allocation10 + $0x1618] sm:$0xff]
    %v3173 = vld [vmem:[#allocation10 + $0x1620] sm:$0xff]
    %v3174 = vld [vmem:[#allocation10 + $0x1628] sm:$0xff]
    %v3175 = vld [vmem:[#allocation10 + $0x1630] sm:$0xff]
    %v3176 = vld [vmem:[#allocation10 + $0x1638] sm:$0xff]
    %v3177 = vld [vmem:[#allocation10 + $0x1640] sm:$0xff]
    %v3178 = vld [vmem:[#allocation10 + $0x1648] sm:$0xff]
    %v3179 = vld [vmem:[#allocation10 + $0x1650] sm:$0xff]
    %v3180 = vld [vmem:[#allocation10 + $0x1658] sm:$0xff]
    %v3181 = vld [vmem:[#allocation10 + $0x1660] sm:$0xff]
    %v3182 = vld [vmem:[#allocation10 + $0x1668] sm:$0xff]
    %v3183 = vld [vmem:[#allocation10 + $0x1670] sm:$0xff]
    %v3184 = vld [vmem:[#allocation10 + $0x1678] sm:$0xff]
    %v3185 = vld [vmem:[#allocation10 + $0x1680] sm:$0xff]
    %v3186 = vld [vmem:[#allocation10 + $0x1688] sm:$0xff]
    %v3187 = vld [vmem:[#allocation10 + $0x1690] sm:$0xff]
    %v3188 = vld [vmem:[#allocation10 + $0x1698] sm:$0xff]
    %v3189 = vld [vmem:[#allocation10 + $0x16a0] sm:$0xff]
    %v3190 = vld [vmem:[#allocation10 + $0x16a8] sm:$0xff]
    %v3191 = vld [vmem:[#allocation10 + $0x16b0] sm:$0xff]
    %v3192 = vld [vmem:[#allocation10 + $0x16b8] sm:$0xff]
    %v3193 = vld [vmem:[#allocation10 + $0x16c0] sm:$0xff]
    %v3194 = vld [vmem:[#allocation10 + $0x16c8] sm:$0xff]
    %v3195 = vld [vmem:[#allocation10 + $0x16d0] sm:$0xff]
    %v3196 = vld [vmem:[#allocation10 + $0x16d8] sm:$0xff]
    %v3197 = vld [vmem:[#allocation10 + $0x16e0] sm:$0xff]
    %v3198 = vld [vmem:[#allocation10 + $0x16e8] sm:$0xff]
    %v3199 = vld [vmem:[#allocation10 + $0x16f0] sm:$0xff]
    %v3200 = vld [vmem:[#allocation10 + $0x16f8] sm:$0xff]
    %v3201 = vld [vmem:[#allocation10 + $0x1700] sm:$0xff]
    %v3202 = vld [vmem:[#allocation10 + $0x1708] sm:$0xff]
    %v3203 = vld [vmem:[#allocation10 + $0x1710] sm:$0xff]
    %v3204 = vld [vmem:[#allocation10 + $0x1718] sm:$0xff]
    %v3205 = vld [vmem:[#allocation10 + $0x1720] sm:$0xff]
    %v3206 = vld [vmem:[#allocation10 + $0x1728] sm:$0xff]
    %v3207 = vld [vmem:[#allocation10 + $0x1730] sm:$0xff]
    %v3208 = vld [vmem:[#allocation10 + $0x1738] sm:$0xff]
    %v3209 = vld [vmem:[#allocation10 + $0x1740] sm:$0xff]
    %v3210 = vld [vmem:[#allocation10 + $0x1748] sm:$0xff]
    %v3211 = vld [vmem:[#allocation10 + $0x1750] sm:$0xff]
    %v3212 = vld [vmem:[#allocation10 + $0x1758] sm:$0xff]
    %v3213 = vld [vmem:[#allocation10 + $0x1760] sm:$0xff]
    %v3214 = vld [vmem:[#allocation10 + $0x1768] sm:$0xff]
    %v3215 = vld [vmem:[#allocation10 + $0x1770] sm:$0xff]
    %v3216 = vld [vmem:[#allocation10 + $0x1778] sm:$0xff]
    %v3217 = vld [vmem:[#allocation10 + $0x1780] sm:$0xff]
    %v3218 = vld [vmem:[#allocation10 + $0x1788] sm:$0xff]
    %v3219 = vld [vmem:[#allocation10 + $0x1790] sm:$0xff]
    %v3220 = vld [vmem:[#allocation10 + $0x1798] sm:$0xff]
    %v3221 = vld [vmem:[#allocation10 + $0x17a0] sm:$0xff]
    %v3222 = vld [vmem:[#allocation10 + $0x17a8] sm:$0xff]
    %v3223 = vld [vmem:[#allocation10 + $0x17b0] sm:$0xff]
    %v3224 = vld [vmem:[#allocation10 + $0x17b8] sm:$0xff]
    %v3225 = vld [vmem:[#allocation10 + $0x17c0] sm:$0xff]
    %v3226 = vld [vmem:[#allocation10 + $0x17c8] sm:$0xff]
    %v3227 = vld [vmem:[#allocation10 + $0x17d0] sm:$0xff]
    %v3228 = vld [vmem:[#allocation10 + $0x17d8] sm:$0xff]
    %v3229 = vld [vmem:[#allocation10 + $0x17e0] sm:$0xff]
    %v3230 = vld [vmem:[#allocation10 + $0x17e8] sm:$0xff]
    %v3231 = vld [vmem:[#allocation10 + $0x17f0] sm:$0xff]
    %v3232 = vld [vmem:[#allocation10 + $0x17f8] sm:$0xff]
    %v3233 = vld [vmem:[#allocation10 + $0x1800] sm:$0xff]
    %v3234 = vld [vmem:[#allocation10 + $0x1808] sm:$0xff]
    %v3235 = vld [vmem:[#allocation10 + $0x1810] sm:$0xff]
    %v3236 = vld [vmem:[#allocation10 + $0x1818] sm:$0xff]
    %v3237 = vld [vmem:[#allocation10 + $0x1820] sm:$0xff]
    %v3238 = vld [vmem:[#allocation10 + $0x1828] sm:$0xff]
    %v3239 = vld [vmem:[#allocation10 + $0x1830] sm:$0xff]
    %v3240 = vld [vmem:[#allocation10 + $0x1838] sm:$0xff]
    %v3241 = vld [vmem:[#allocation10 + $0x1840] sm:$0xff]
    %v3242 = vld [vmem:[#allocation10 + $0x1848] sm:$0xff]
    %v3243 = vld [vmem:[#allocation10 + $0x1850] sm:$0xff]
    %v3244 = vld [vmem:[#allocation10 + $0x1858] sm:$0xff]
    %v3245 = vld [vmem:[#allocation10 + $0x1860] sm:$0xff]
    %v3246 = vld [vmem:[#allocation10 + $0x1868] sm:$0xff]
    %v3247 = vld [vmem:[#allocation10 + $0x1870] sm:$0xff]
    %v3248 = vld [vmem:[#allocation10 + $0x1878] sm:$0xff]
    %v3249 = vld [vmem:[#allocation10 + $0x1880] sm:$0xff]
    %v3250 = vld [vmem:[#allocation10 + $0x1888] sm:$0xff]
    %v3251 = vld [vmem:[#allocation10 + $0x1890] sm:$0xff]
    %v3252 = vld [vmem:[#allocation10 + $0x1898] sm:$0xff]
    %v3253 = vld [vmem:[#allocation10 + $0x18a0] sm:$0xff]
    %v3254 = vld [vmem:[#allocation10 + $0x18a8] sm:$0xff]
    %v3255 = vld [vmem:[#allocation10 + $0x18b0] sm:$0xff]
    %v3256 = vld [vmem:[#allocation10 + $0x18b8] sm:$0xff]
    %v3257 = vld [vmem:[#allocation10 + $0x18c0] sm:$0xff]
    %v3258 = vld [vmem:[#allocation10 + $0x18c8] sm:$0xff]
    %v3259 = vld [vmem:[#allocation10 + $0x18d0] sm:$0xff]
    %v3260 = vld [vmem:[#allocation10 + $0x18d8] sm:$0xff]
    %v3261 = vld [vmem:[#allocation10 + $0x18e0] sm:$0xff]
    %v3262 = vld [vmem:[#allocation10 + $0x18e8] sm:$0xff]
    %v3263 = vld [vmem:[#allocation10 + $0x18f0] sm:$0xff]
    %v3264 = vld [vmem:[#allocation10 + $0x18f8] sm:$0xff]
    %v3265 = vld [vmem:[#allocation10 + $0x1900] sm:$0xff]
    %v3266 = vld [vmem:[#allocation10 + $0x1908] sm:$0xff]
    %v3267 = vld [vmem:[#allocation10 + $0x1910] sm:$0xff]
    %v3268 = vld [vmem:[#allocation10 + $0x1918] sm:$0xff]
    %v3269 = vld [vmem:[#allocation10 + $0x1920] sm:$0xff]
    %v3270 = vld [vmem:[#allocation10 + $0x1928] sm:$0xff]
    %v3271 = vld [vmem:[#allocation10 + $0x1930] sm:$0xff]
    %v3272 = vld [vmem:[#allocation10 + $0x1938] sm:$0xff]
    %v3273 = vld [vmem:[#allocation10 + $0x1940] sm:$0xff]
    %v3274 = vld [vmem:[#allocation10 + $0x1948] sm:$0xff]
    %v3275 = vld [vmem:[#allocation10 + $0x1950] sm:$0xff]
    %v3276 = vld [vmem:[#allocation10 + $0x1958] sm:$0xff]
    %v3277 = vld [vmem:[#allocation10 + $0x1960] sm:$0xff]
    %v3278 = vld [vmem:[#allocation10 + $0x1968] sm:$0xff]
    %v3279 = vld [vmem:[#allocation10 + $0x1970] sm:$0xff]
    %v3280 = vld [vmem:[#allocation10 + $0x1978] sm:$0xff]
    %v3281 = vld [vmem:[#allocation10 + $0x1980] sm:$0xff]
    %v3282 = vld [vmem:[#allocation10 + $0x1988] sm:$0xff]
    %v3283 = vld [vmem:[#allocation10 + $0x1990] sm:$0xff]
    %v3284 = vld [vmem:[#allocation10 + $0x1998] sm:$0xff]
    %v3285 = vld [vmem:[#allocation10 + $0x19a0] sm:$0xff]
    %v3286 = vld [vmem:[#allocation10 + $0x19a8] sm:$0xff]
    %v3287 = vld [vmem:[#allocation10 + $0x19b0] sm:$0xff]
    %v3288 = vld [vmem:[#allocation10 + $0x19b8] sm:$0xff]
    %v3289 = vld [vmem:[#allocation10 + $0x19c0] sm:$0xff]
    %v3290 = vld [vmem:[#allocation10 + $0x19c8] sm:$0xff]
    %v3291 = vld [vmem:[#allocation10 + $0x19d0] sm:$0xff]
    %v3292 = vld [vmem:[#allocation10 + $0x19d8] sm:$0xff]
    %v3293 = vld [vmem:[#allocation10 + $0x19e0] sm:$0xff]
    %v3294 = vld [vmem:[#allocation10 + $0x19e8] sm:$0xff]
    %v3295 = vld [vmem:[#allocation10 + $0x19f0] sm:$0xff]
    %v3296 = vld [vmem:[#allocation10 + $0x19f8] sm:$0xff]
    %v3297 = vld [vmem:[#allocation10 + $0x1a00] sm:$0xff]
    %v3298 = vld [vmem:[#allocation10 + $0x1a08] sm:$0xff]
    %v3299 = vld [vmem:[#allocation10 + $0x1a10] sm:$0xff]
    %v3300 = vld [vmem:[#allocation10 + $0x1a18] sm:$0xff]
    %v3301 = vld [vmem:[#allocation10 + $0x1a20] sm:$0xff]
    %v3302 = vld [vmem:[#allocation10 + $0x1a28] sm:$0xff]
    %v3303 = vld [vmem:[#allocation10 + $0x1a30] sm:$0xff]
    %v3304 = vld [vmem:[#allocation10 + $0x1a38] sm:$0xff]
    %v3305 = vld [vmem:[#allocation10 + $0x1a40] sm:$0xff]
    %v3306 = vld [vmem:[#allocation10 + $0x1a48] sm:$0xff]
    %v3307 = vld [vmem:[#allocation10 + $0x1a50] sm:$0xff]
    %v3308 = vld [vmem:[#allocation10 + $0x1a58] sm:$0xff]
    %v3309 = vld [vmem:[#allocation10 + $0x1a60] sm:$0xff]
    %v3310 = vld [vmem:[#allocation10 + $0x1a68] sm:$0xff]
    %v3311 = vld [vmem:[#allocation10 + $0x1a70] sm:$0xff]
    %v3312 = vld [vmem:[#allocation10 + $0x1a78] sm:$0xff]
    %v3313 = vld [vmem:[#allocation10 + $0x1a80] sm:$0xff]
    %v3314 = vld [vmem:[#allocation10 + $0x1a88] sm:$0xff]
    %v3315 = vld [vmem:[#allocation10 + $0x1a90] sm:$0xff]
    %v3316 = vld [vmem:[#allocation10 + $0x1a98] sm:$0xff]
    %v3317 = vld [vmem:[#allocation10 + $0x1aa0] sm:$0xff]
    %v3318 = vld [vmem:[#allocation10 + $0x1aa8] sm:$0xff]
    %v3319 = vld [vmem:[#allocation10 + $0x1ab0] sm:$0xff]
    %v3320 = vld [vmem:[#allocation10 + $0x1ab8] sm:$0xff]
    %v3321 = vld [vmem:[#allocation10 + $0x1ac0] sm:$0xff]
    %v3322 = vld [vmem:[#allocation10 + $0x1ac8] sm:$0xff]
    %v3323 = vld [vmem:[#allocation10 + $0x1ad0] sm:$0xff]
    %v3324 = vld [vmem:[#allocation10 + $0x1ad8] sm:$0xff]
    %v3325 = vld [vmem:[#allocation10 + $0x1ae0] sm:$0xff]
    %v3326 = vld [vmem:[#allocation10 + $0x1ae8] sm:$0xff]
    %v3327 = vld [vmem:[#allocation10 + $0x1af0] sm:$0xff]
    %v3328 = vld [vmem:[#allocation10 + $0x1af8] sm:$0xff]
    %v3329 = vld [vmem:[#allocation10 + $0x1b00] sm:$0xff]
    %v3330 = vld [vmem:[#allocation10 + $0x1b08] sm:$0xff]
    %v3331 = vld [vmem:[#allocation10 + $0x1b10] sm:$0xff]
    %v3332 = vld [vmem:[#allocation10 + $0x1b18] sm:$0xff]
    %v3333 = vld [vmem:[#allocation10 + $0x1b20] sm:$0xff]
    %v3334 = vld [vmem:[#allocation10 + $0x1b28] sm:$0xff]
    %v3335 = vld [vmem:[#allocation10 + $0x1b30] sm:$0xff]
    %v3336 = vld [vmem:[#allocation10 + $0x1b38] sm:$0xff]
    %v3337 = vld [vmem:[#allocation10 + $0x1b40] sm:$0xff]
    %v3338 = vld [vmem:[#allocation10 + $0x1b48] sm:$0xff]
    %v3339 = vld [vmem:[#allocation10 + $0x1b50] sm:$0xff]
    %v3340 = vld [vmem:[#allocation10 + $0x1b58] sm:$0xff]
    %v3341 = vld [vmem:[#allocation10 + $0x1b60] sm:$0xff]
    %v3342 = vld [vmem:[#allocation10 + $0x1b68] sm:$0xff]
    %v3343 = vld [vmem:[#allocation10 + $0x1b70] sm:$0xff]
    %v3344 = vld [vmem:[#allocation10 + $0x1b78] sm:$0xff]
    %v3345 = vld [vmem:[#allocation10 + $0x1b80] sm:$0xff]
    %v3346 = vld [vmem:[#allocation10 + $0x1b88] sm:$0xff]
    %v3347 = vld [vmem:[#allocation10 + $0x1b90] sm:$0xff]
    %v3348 = vld [vmem:[#allocation10 + $0x1b98] sm:$0xff]
    %v3349 = vld [vmem:[#allocation10 + $0x1ba0] sm:$0xff]
    %v3350 = vld [vmem:[#allocation10 + $0x1ba8] sm:$0xff]
    %v3351 = vld [vmem:[#allocation10 + $0x1bb0] sm:$0xff]
    %v3352 = vld [vmem:[#allocation10 + $0x1bb8] sm:$0xff]
    %v3353 = vld [vmem:[#allocation10 + $0x1bc0] sm:$0xff]
    %v3354 = vld [vmem:[#allocation10 + $0x1bc8] sm:$0xff]
    %v3355 = vld [vmem:[#allocation10 + $0x1bd0] sm:$0xff]
    %v3356 = vld [vmem:[#allocation10 + $0x1bd8] sm:$0xff]
    %v3357 = vld [vmem:[#allocation10 + $0x1be0] sm:$0xff]
    %v3358 = vld [vmem:[#allocation10 + $0x1be8] sm:$0xff]
    %v3359 = vld [vmem:[#allocation10 + $0x1bf0] sm:$0xff]
    %v3360 = vld [vmem:[#allocation10 + $0x1bf8] sm:$0xff]
    %v3361 = vld [vmem:[#allocation10 + $0x1c00] sm:$0xff]
    %v3362 = vld [vmem:[#allocation10 + $0x1c08] sm:$0xff]
    %v3363 = vld [vmem:[#allocation10 + $0x1c10] sm:$0xff]
    %v3364 = vld [vmem:[#allocation10 + $0x1c18] sm:$0xff]
    %v3365 = vld [vmem:[#allocation10 + $0x1c20] sm:$0xff]
    %v3366 = vld [vmem:[#allocation10 + $0x1c28] sm:$0xff]
    %v3367 = vld [vmem:[#allocation10 + $0x1c30] sm:$0xff]
    %v3368 = vld [vmem:[#allocation10 + $0x1c38] sm:$0xff]
    %v3369 = vld [vmem:[#allocation10 + $0x1c40] sm:$0xff]
    %v3370 = vld [vmem:[#allocation10 + $0x1c48] sm:$0xff]
    %v3371 = vld [vmem:[#allocation10 + $0x1c50] sm:$0xff]
    %v3372 = vld [vmem:[#allocation10 + $0x1c58] sm:$0xff]
    %v3373 = vld [vmem:[#allocation10 + $0x1c60] sm:$0xff]
    %v3374 = vld [vmem:[#allocation10 + $0x1c68] sm:$0xff]
    %v3375 = vld [vmem:[#allocation10 + $0x1c70] sm:$0xff]
    %v3376 = vld [vmem:[#allocation10 + $0x1c78] sm:$0xff]
    %v3377 = vld [vmem:[#allocation10 + $0x1c80] sm:$0xff]
    %v3378 = vld [vmem:[#allocation10 + $0x1c88] sm:$0xff]
    %v3379 = vld [vmem:[#allocation10 + $0x1c90] sm:$0xff]
    %v3380 = vld [vmem:[#allocation10 + $0x1c98] sm:$0xff]
    %v3381 = vld [vmem:[#allocation10 + $0x1ca0] sm:$0xff]
    %v3382 = vld [vmem:[#allocation10 + $0x1ca8] sm:$0xff]
    %v3383 = vld [vmem:[#allocation10 + $0x1cb0] sm:$0xff]
    %v3384 = vld [vmem:[#allocation10 + $0x1cb8] sm:$0xff]
    %v3385 = vld [vmem:[#allocation10 + $0x1cc0] sm:$0xff]
    %v3386 = vld [vmem:[#allocation10 + $0x1cc8] sm:$0xff]
    %v3387 = vld [vmem:[#allocation10 + $0x1cd0] sm:$0xff]
    %v3388 = vld [vmem:[#allocation10 + $0x1cd8] sm:$0xff]
    %v3389 = vld [vmem:[#allocation10 + $0x1ce0] sm:$0xff]
    %v3390 = vld [vmem:[#allocation10 + $0x1ce8] sm:$0xff]
    %v3391 = vld [vmem:[#allocation10 + $0x1cf0] sm:$0xff]
    %v3392 = vld [vmem:[#allocation10 + $0x1cf8] sm:$0xff]
    %v3393 = vld [vmem:[#allocation10 + $0x1d00] sm:$0xff]
    %v3394 = vld [vmem:[#allocation10 + $0x1d08] sm:$0xff]
    %v3395 = vld [vmem:[#allocation10 + $0x1d10] sm:$0xff]
    %v3396 = vld [vmem:[#allocation10 + $0x1d18] sm:$0xff]
    %v3397 = vld [vmem:[#allocation10 + $0x1d20] sm:$0xff]
    %v3398 = vld [vmem:[#allocation10 + $0x1d28] sm:$0xff]
    %v3399 = vld [vmem:[#allocation10 + $0x1d30] sm:$0xff]
    %v3400 = vld [vmem:[#allocation10 + $0x1d38] sm:$0xff]
    %v3401 = vld [vmem:[#allocation10 + $0x1d40] sm:$0xff]
    %v3402 = vld [vmem:[#allocation10 + $0x1d48] sm:$0xff]
    %v3403 = vld [vmem:[#allocation10 + $0x1d50] sm:$0xff]
    %v3404 = vld [vmem:[#allocation10 + $0x1d58] sm:$0xff]
    %v3405 = vld [vmem:[#allocation10 + $0x1d60] sm:$0xff]
    %v3406 = vld [vmem:[#allocation10 + $0x1d68] sm:$0xff]
    %v3407 = vld [vmem:[#allocation10 + $0x1d70] sm:$0xff]
    %v3408 = vld [vmem:[#allocation10 + $0x1d78] sm:$0xff]
    %v3409 = vld [vmem:[#allocation10 + $0x1d80] sm:$0xff]
    %v3410 = vld [vmem:[#allocation10 + $0x1d88] sm:$0xff]
    %v3411 = vld [vmem:[#allocation10 + $0x1d90] sm:$0xff]
    %v3412 = vld [vmem:[#allocation10 + $0x1d98] sm:$0xff]
    %v3413 = vld [vmem:[#allocation10 + $0x1da0] sm:$0xff]
    %v3414 = vld [vmem:[#allocation10 + $0x1da8] sm:$0xff]
    %v3415 = vld [vmem:[#allocation10 + $0x1db0] sm:$0xff]
    %v3416 = vld [vmem:[#allocation10 + $0x1db8] sm:$0xff]
    %v3417 = vld [vmem:[#allocation10 + $0x1dc0] sm:$0xff]
    %v3418 = vld [vmem:[#allocation10 + $0x1dc8] sm:$0xff]
    %v3419 = vld [vmem:[#allocation10 + $0x1dd0] sm:$0xff]
    %v3420 = vld [vmem:[#allocation10 + $0x1dd8] sm:$0xff]
    %v3421 = vld [vmem:[#allocation10 + $0x1de0] sm:$0xff]
    %v3422 = vld [vmem:[#allocation10 + $0x1de8] sm:$0xff]
    %v3423 = vld [vmem:[#allocation10 + $0x1df0] sm:$0xff]
    %v3424 = vld [vmem:[#allocation10 + $0x1df8] sm:$0xff]
    %v3425 = vld [vmem:[#allocation10 + $0x1e00] sm:$0xff]
    %v3426 = vld [vmem:[#allocation10 + $0x1e08] sm:$0xff]
    %v3427 = vld [vmem:[#allocation10 + $0x1e10] sm:$0xff]
    %v3428 = vld [vmem:[#allocation10 + $0x1e18] sm:$0xff]
    %v3429 = vld [vmem:[#allocation10 + $0x1e20] sm:$0xff]
    %v3430 = vld [vmem:[#allocation10 + $0x1e28] sm:$0xff]
    %v3431 = vld [vmem:[#allocation10 + $0x1e30] sm:$0xff]
    %v3432 = vld [vmem:[#allocation10 + $0x1e38] sm:$0xff]
    %v3433 = vld [vmem:[#allocation10 + $0x1e40] sm:$0xff]
    %v3434 = vld [vmem:[#allocation10 + $0x1e48] sm:$0xff]
    %v3435 = vld [vmem:[#allocation10 + $0x1e50] sm:$0xff]
    %v3436 = vld [vmem:[#allocation10 + $0x1e58] sm:$0xff]
    %v3437 = vld [vmem:[#allocation10 + $0x1e60] sm:$0xff]
    %v3438 = vld [vmem:[#allocation10 + $0x1e68] sm:$0xff]
    %v3439 = vld [vmem:[#allocation10 + $0x1e70] sm:$0xff]
    %v3440 = vld [vmem:[#allocation10 + $0x1e78] sm:$0xff]
    %v3441 = vld [vmem:[#allocation10 + $0x1e80] sm:$0xff]
    %v3442 = vld [vmem:[#allocation10 + $0x1e88] sm:$0xff]
    %v3443 = vld [vmem:[#allocation10 + $0x1e90] sm:$0xff]
    %v3444 = vld [vmem:[#allocation10 + $0x1e98] sm:$0xff]
    %v3445 = vld [vmem:[#allocation10 + $0x1ea0] sm:$0xff]
    %v3446 = vld [vmem:[#allocation10 + $0x1ea8] sm:$0xff]
    %v3447 = vld [vmem:[#allocation10 + $0x1eb0] sm:$0xff]
    %v3448 = vld [vmem:[#allocation10 + $0x1eb8] sm:$0xff]
    %v3449 = vld [vmem:[#allocation10 + $0x1ec0] sm:$0xff]
    %v3450 = vld [vmem:[#allocation10 + $0x1ec8] sm:$0xff]
    %v3451 = vld [vmem:[#allocation10 + $0x1ed0] sm:$0xff]
    %v3452 = vld [vmem:[#allocation10 + $0x1ed8] sm:$0xff]
    %v3453 = vld [vmem:[#allocation10 + $0x1ee0] sm:$0xff]
    %v3454 = vld [vmem:[#allocation10 + $0x1ee8] sm:$0xff]
    %v3455 = vld [vmem:[#allocation10 + $0x1ef0] sm:$0xff]
    %v3456 = vld [vmem:[#allocation10 + $0x1ef8] sm:$0xff]
    %v3457 = vld [vmem:[#allocation10 + $0x1f00] sm:$0xff]
    %v3458 = vld [vmem:[#allocation10 + $0x1f08] sm:$0xff]
    %v3459 = vld [vmem:[#allocation10 + $0x1f10] sm:$0xff]
    %v3460 = vld [vmem:[#allocation10 + $0x1f18] sm:$0xff]
    %v3461 = vld [vmem:[#allocation10 + $0x1f20] sm:$0xff]
    %v3462 = vld [vmem:[#allocation10 + $0x1f28] sm:$0xff]
    %v3463 = vld [vmem:[#allocation10 + $0x1f30] sm:$0xff]
    %v3464 = vld [vmem:[#allocation10 + $0x1f38] sm:$0xff]
    %v3465 = vld [vmem:[#allocation10 + $0x1f40] sm:$0xff]
    %v3466 = vld [vmem:[#allocation10 + $0x1f48] sm:$0xff]
    %v3467 = vld [vmem:[#allocation10 + $0x1f50] sm:$0xff]
    %v3468 = vld [vmem:[#allocation10 + $0x1f58] sm:$0xff]
    %v3469 = vld [vmem:[#allocation10 + $0x1f60] sm:$0xff]
    %v3470 = vld [vmem:[#allocation10 + $0x1f68] sm:$0xff]
    %v3471 = vld [vmem:[#allocation10 + $0x1f70] sm:$0xff]
    %v3472 = vld [vmem:[#allocation10 + $0x1f78] sm:$0xff]
    %v3473 = vld [vmem:[#allocation10 + $0x1f80] sm:$0xff]
    %v3474 = vld [vmem:[#allocation10 + $0x1f88] sm:$0xff]
    %v3475 = vld [vmem:[#allocation10 + $0x1f90] sm:$0xff]
    %v3476 = vld [vmem:[#allocation10 + $0x1f98] sm:$0xff]
    %v3477 = vld [vmem:[#allocation10 + $0x1fa0] sm:$0xff]
    %v3478 = vld [vmem:[#allocation10 + $0x1fa8] sm:$0xff]
    %v3479 = vld [vmem:[#allocation10 + $0x1fb0] sm:$0xff]
    %v3480 = vld [vmem:[#allocation10 + $0x1fb8] sm:$0xff]
    %v3481 = vld [vmem:[#allocation10 + $0x1fc0] sm:$0xff]
    %v3482 = vld [vmem:[#allocation10 + $0x1fc8] sm:$0xff]
    %v3483 = vld [vmem:[#allocation10 + $0x1fd0] sm:$0xff]
    %v3484 = vld [vmem:[#allocation10 + $0x1fd8] sm:$0xff]
    %v3485 = vld [vmem:[#allocation10 + $0x1fe0] sm:$0xff]
    %v3486 = vld [vmem:[#allocation10 + $0x1fe8] sm:$0xff]
    %v3487 = vld [vmem:[#allocation10 + $0x1ff0] sm:$0xff]
    %v3488 = vld [vmem:[#allocation10 + $0x1ff8] sm:$0xff]
    %v3489 = vld [vmem:[#allocation11] sm:$0xff]
    %v3491 = vlaneseq
    %v3492 = vshrl.u32 %v3491, 7
    %v3493 = vsub.s32 0, %v3492
    %v3494 = vrot.slane %v3489, %v3493
    %v3495 = vlaneseq
    %v3496 = vshrl.u32 %v3495, 7
    %v3497 = vsub.s32 1, %v3496
    %v3498 = vrot.slane %v3489, %v3497
    %v3499 = vlaneseq
    %v3500 = vshrl.u32 %v3499, 7
    %v3501 = vsub.s32 2, %v3500
    %v3502 = vrot.slane %v3489, %v3501
    %v3503 = vlaneseq
    %v3504 = vshrl.u32 %v3503, 7
    %v3505 = vsub.s32 3, %v3504
    %v3506 = vrot.slane %v3489, %v3505
    %v3507 = vlaneseq
    %v3508 = vshrl.u32 %v3507, 7
    %v3509 = vsub.s32 4, %v3508
    %v3510 = vrot.slane %v3489, %v3509
    %v3511 = vlaneseq
    %v3512 = vshrl.u32 %v3511, 7
    %v3513 = vsub.s32 5, %v3512
    %v3514 = vrot.slane %v3489, %v3513
    %v3515 = vlaneseq
    %v3516 = vshrl.u32 %v3515, 7
    %v3517 = vsub.s32 6, %v3516
    %v3518 = vrot.slane %v3489, %v3517
    %v3519 = vlaneseq
    %v3520 = vshrl.u32 %v3519, 7
    %v3521 = vsub.s32 7, %v3520
    %v3522 = vrot.slane %v3489, %v3521
    %v4555 = vunpack.c.l.b16 %v2465
    %v4556 = vunpack.c.h.b16 %v2465
    %v4557 = vunpack.c.l.b16 %v2466
    %v4558 = vunpack.c.h.b16 %v2466
    %v4559 = vunpack.c.l.b16 %v2467
    %v4560 = vunpack.c.h.b16 %v2467
    %v4561 = vunpack.c.l.b16 %v2468
    %v4562 = vunpack.c.h.b16 %v2468
    %v4563 = vunpack.c.l.b16 %v2469
    %v4564 = vunpack.c.h.b16 %v2469
    %v4565 = vunpack.c.l.b16 %v2470
    %v4566 = vunpack.c.h.b16 %v2470
    %v4567 = vunpack.c.l.b16 %v2471
    %v4568 = vunpack.c.h.b16 %v2471
    %v4569 = vunpack.c.l.b16 %v2472
    %v4570 = vunpack.c.h.b16 %v2472
    %v4571 = vunpack.c.l.b16 %v2473
    %v4572 = vunpack.c.h.b16 %v2473
    %v4573 = vunpack.c.l.b16 %v2474
    %v4574 = vunpack.c.h.b16 %v2474
    %v4575 = vunpack.c.l.b16 %v2475
    %v4576 = vunpack.c.h.b16 %v2475
    %v4577 = vunpack.c.l.b16 %v2476
    %v4578 = vunpack.c.h.b16 %v2476
    %v4579 = vunpack.c.l.b16 %v2477
    %v4580 = vunpack.c.h.b16 %v2477
    %v4581 = vunpack.c.l.b16 %v2478
    %v4582 = vunpack.c.h.b16 %v2478
    %v4583 = vunpack.c.l.b16 %v2479
    %v4584 = vunpack.c.h.b16 %v2479
    %v4585 = vunpack.c.l.b16 %v2480
    %v4586 = vunpack.c.h.b16 %v2480
    %v4587 = vunpack.c.l.b16 %v2481
    %v4588 = vunpack.c.h.b16 %v2481
    %v4589 = vunpack.c.l.b16 %v2482
    %v4590 = vunpack.c.h.b16 %v2482
    %v4591 = vunpack.c.l.b16 %v2483
    %v4592 = vunpack.c.h.b16 %v2483
    %v4593 = vunpack.c.l.b16 %v2484
    %v4594 = vunpack.c.h.b16 %v2484
    %v4595 = vunpack.c.l.b16 %v2485
    %v4596 = vunpack.c.h.b16 %v2485
    %v4597 = vunpack.c.l.b16 %v2486
    %v4598 = vunpack.c.h.b16 %v2486
    %v4599 = vunpack.c.l.b16 %v2487
    %v4600 = vunpack.c.h.b16 %v2487
    %v4601 = vunpack.c.l.b16 %v2488
    %v4602 = vunpack.c.h.b16 %v2488
    %v4603 = vunpack.c.l.b16 %v2489
    %v4604 = vunpack.c.h.b16 %v2489
    %v4605 = vunpack.c.l.b16 %v2490
    %v4606 = vunpack.c.h.b16 %v2490
    %v4607 = vunpack.c.l.b16 %v2491
    %v4608 = vunpack.c.h.b16 %v2491
    %v4609 = vunpack.c.l.b16 %v2492
    %v4610 = vunpack.c.h.b16 %v2492
    %v4611 = vunpack.c.l.b16 %v2493
    %v4612 = vunpack.c.h.b16 %v2493
    %v4613 = vunpack.c.l.b16 %v2494
    %v4614 = vunpack.c.h.b16 %v2494
    %v4615 = vunpack.c.l.b16 %v2495
    %v4616 = vunpack.c.h.b16 %v2495
    %v4617 = vunpack.c.l.b16 %v2496
    %v4618 = vunpack.c.h.b16 %v2496
    %v4619 = vunpack.c.l.b16 %v2497
    %v4620 = vunpack.c.h.b16 %v2497
    %v4621 = vunpack.c.l.b16 %v2498
    %v4622 = vunpack.c.h.b16 %v2498
    %v4623 = vunpack.c.l.b16 %v2499
    %v4624 = vunpack.c.h.b16 %v2499
    %v4625 = vunpack.c.l.b16 %v2500
    %v4626 = vunpack.c.h.b16 %v2500
    %v4627 = vunpack.c.l.b16 %v2501
    %v4628 = vunpack.c.h.b16 %v2501
    %v4629 = vunpack.c.l.b16 %v2502
    %v4630 = vunpack.c.h.b16 %v2502
    %v4631 = vunpack.c.l.b16 %v2503
    %v4632 = vunpack.c.h.b16 %v2503
    %v4633 = vunpack.c.l.b16 %v2504
    %v4634 = vunpack.c.h.b16 %v2504
    %v4635 = vunpack.c.l.b16 %v2505
    %v4636 = vunpack.c.h.b16 %v2505
    %v4637 = vunpack.c.l.b16 %v2506
    %v4638 = vunpack.c.h.b16 %v2506
    %v4639 = vunpack.c.l.b16 %v2507
    %v4640 = vunpack.c.h.b16 %v2507
    %v4641 = vunpack.c.l.b16 %v2508
    %v4642 = vunpack.c.h.b16 %v2508
    %v4643 = vunpack.c.l.b16 %v2509
    %v4644 = vunpack.c.h.b16 %v2509
    %v4645 = vunpack.c.l.b16 %v2510
    %v4646 = vunpack.c.h.b16 %v2510
    %v4647 = vunpack.c.l.b16 %v2511
    %v4648 = vunpack.c.h.b16 %v2511
    %v4649 = vunpack.c.l.b16 %v2512
    %v4650 = vunpack.c.h.b16 %v2512
    %v4651 = vunpack.c.l.b16 %v2513
    %v4652 = vunpack.c.h.b16 %v2513
    %v4653 = vunpack.c.l.b16 %v2514
    %v4654 = vunpack.c.h.b16 %v2514
    %v4655 = vunpack.c.l.b16 %v2515
    %v4656 = vunpack.c.h.b16 %v2515
    %v4657 = vunpack.c.l.b16 %v2516
    %v4658 = vunpack.c.h.b16 %v2516
    %v4659 = vunpack.c.l.b16 %v2517
    %v4660 = vunpack.c.h.b16 %v2517
    %v4661 = vunpack.c.l.b16 %v2518
    %v4662 = vunpack.c.h.b16 %v2518
    %v4663 = vunpack.c.l.b16 %v2519
    %v4664 = vunpack.c.h.b16 %v2519
    %v4665 = vunpack.c.l.b16 %v2520
    %v4666 = vunpack.c.h.b16 %v2520
    %v4667 = vunpack.c.l.b16 %v2521
    %v4668 = vunpack.c.h.b16 %v2521
    %v4669 = vunpack.c.l.b16 %v2522
    %v4670 = vunpack.c.h.b16 %v2522
    %v4671 = vunpack.c.l.b16 %v2523
    %v4672 = vunpack.c.h.b16 %v2523
    %v4673 = vunpack.c.l.b16 %v2524
    %v4674 = vunpack.c.h.b16 %v2524
    %v4675 = vunpack.c.l.b16 %v2525
    %v4676 = vunpack.c.h.b16 %v2525
    %v4677 = vunpack.c.l.b16 %v2526
    %v4678 = vunpack.c.h.b16 %v2526
    %v4679 = vunpack.c.l.b16 %v2527
    %v4680 = vunpack.c.h.b16 %v2527
    %v4681 = vunpack.c.l.b16 %v2528
    %v4682 = vunpack.c.h.b16 %v2528
    %v4683 = vunpack.c.l.b16 %v2529
    %v4684 = vunpack.c.h.b16 %v2529
    %v4685 = vunpack.c.l.b16 %v2530
    %v4686 = vunpack.c.h.b16 %v2530
    %v4687 = vunpack.c.l.b16 %v2531
    %v4688 = vunpack.c.h.b16 %v2531
    %v4689 = vunpack.c.l.b16 %v2532
    %v4690 = vunpack.c.h.b16 %v2532
    %v4691 = vunpack.c.l.b16 %v2533
    %v4692 = vunpack.c.h.b16 %v2533
    %v4693 = vunpack.c.l.b16 %v2534
    %v4694 = vunpack.c.h.b16 %v2534
    %v4695 = vunpack.c.l.b16 %v2535
    %v4696 = vunpack.c.h.b16 %v2535
    %v4697 = vunpack.c.l.b16 %v2536
    %v4698 = vunpack.c.h.b16 %v2536
    %v4699 = vunpack.c.l.b16 %v2537
    %v4700 = vunpack.c.h.b16 %v2537
    %v4701 = vunpack.c.l.b16 %v2538
    %v4702 = vunpack.c.h.b16 %v2538
    %v4703 = vunpack.c.l.b16 %v2539
    %v4704 = vunpack.c.h.b16 %v2539
    %v4705 = vunpack.c.l.b16 %v2540
    %v4706 = vunpack.c.h.b16 %v2540
    %v4707 = vunpack.c.l.b16 %v2541
    %v4708 = vunpack.c.h.b16 %v2541
    %v4709 = vunpack.c.l.b16 %v2542
    %v4710 = vunpack.c.h.b16 %v2542
    %v4711 = vunpack.c.l.b16 %v2543
    %v4712 = vunpack.c.h.b16 %v2543
    %v4713 = vunpack.c.l.b16 %v2544
    %v4714 = vunpack.c.h.b16 %v2544
    %v4715 = vunpack.c.l.b16 %v2545
    %v4716 = vunpack.c.h.b16 %v2545
    %v4717 = vunpack.c.l.b16 %v2546
    %v4718 = vunpack.c.h.b16 %v2546
    %v4719 = vunpack.c.l.b16 %v2547
    %v4720 = vunpack.c.h.b16 %v2547
    %v4721 = vunpack.c.l.b16 %v2548
    %v4722 = vunpack.c.h.b16 %v2548
    %v4723 = vunpack.c.l.b16 %v2549
    %v4724 = vunpack.c.h.b16 %v2549
    %v4725 = vunpack.c.l.b16 %v2550
    %v4726 = vunpack.c.h.b16 %v2550
    %v4727 = vunpack.c.l.b16 %v2551
    %v4728 = vunpack.c.h.b16 %v2551
    %v4729 = vunpack.c.l.b16 %v2552
    %v4730 = vunpack.c.h.b16 %v2552
    %v4731 = vunpack.c.l.b16 %v2553
    %v4732 = vunpack.c.h.b16 %v2553
    %v4733 = vunpack.c.l.b16 %v2554
    %v4734 = vunpack.c.h.b16 %v2554
    %v4735 = vunpack.c.l.b16 %v2555
    %v4736 = vunpack.c.h.b16 %v2555
    %v4737 = vunpack.c.l.b16 %v2556
    %v4738 = vunpack.c.h.b16 %v2556
    %v4739 = vunpack.c.l.b16 %v2557
    %v4740 = vunpack.c.h.b16 %v2557
    %v4741 = vunpack.c.l.b16 %v2558
    %v4742 = vunpack.c.h.b16 %v2558
    %v4743 = vunpack.c.l.b16 %v2559
    %v4744 = vunpack.c.h.b16 %v2559
    %v4745 = vunpack.c.l.b16 %v2560
    %v4746 = vunpack.c.h.b16 %v2560
    %v4747 = vunpack.c.l.b16 %v2561
    %v4748 = vunpack.c.h.b16 %v2561
    %v4749 = vunpack.c.l.b16 %v2562
    %v4750 = vunpack.c.h.b16 %v2562
    %v4751 = vunpack.c.l.b16 %v2563
    %v4752 = vunpack.c.h.b16 %v2563
    %v4753 = vunpack.c.l.b16 %v2564
    %v4754 = vunpack.c.h.b16 %v2564
    %v4755 = vunpack.c.l.b16 %v2565
    %v4756 = vunpack.c.h.b16 %v2565
    %v4757 = vunpack.c.l.b16 %v2566
    %v4758 = vunpack.c.h.b16 %v2566
    %v4759 = vunpack.c.l.b16 %v2567
    %v4760 = vunpack.c.h.b16 %v2567
    %v4761 = vunpack.c.l.b16 %v2568
    %v4762 = vunpack.c.h.b16 %v2568
    %v4763 = vunpack.c.l.b16 %v2569
    %v4764 = vunpack.c.h.b16 %v2569
    %v4765 = vunpack.c.l.b16 %v2570
    %v4766 = vunpack.c.h.b16 %v2570
    %v4767 = vunpack.c.l.b16 %v2571
    %v4768 = vunpack.c.h.b16 %v2571
    %v4769 = vunpack.c.l.b16 %v2572
    %v4770 = vunpack.c.h.b16 %v2572
    %v4771 = vunpack.c.l.b16 %v2573
    %v4772 = vunpack.c.h.b16 %v2573
    %v4773 = vunpack.c.l.b16 %v2574
    %v4774 = vunpack.c.h.b16 %v2574
    %v4775 = vunpack.c.l.b16 %v2575
    %v4776 = vunpack.c.h.b16 %v2575
    %v4777 = vunpack.c.l.b16 %v2576
    %v4778 = vunpack.c.h.b16 %v2576
    %v4779 = vunpack.c.l.b16 %v2577
    %v4780 = vunpack.c.h.b16 %v2577
    %v4781 = vunpack.c.l.b16 %v2578
    %v4782 = vunpack.c.h.b16 %v2578
    %v4783 = vunpack.c.l.b16 %v2579
    %v4784 = vunpack.c.h.b16 %v2579
    %v4785 = vunpack.c.l.b16 %v2580
    %v4786 = vunpack.c.h.b16 %v2580
    %v4787 = vunpack.c.l.b16 %v2581
    %v4788 = vunpack.c.h.b16 %v2581
    %v4789 = vunpack.c.l.b16 %v2582
    %v4790 = vunpack.c.h.b16 %v2582
    %v4791 = vunpack.c.l.b16 %v2583
    %v4792 = vunpack.c.h.b16 %v2583
    %v4793 = vunpack.c.l.b16 %v2584
    %v4794 = vunpack.c.h.b16 %v2584
    %v4795 = vunpack.c.l.b16 %v2585
    %v4796 = vunpack.c.h.b16 %v2585
    %v4797 = vunpack.c.l.b16 %v2586
    %v4798 = vunpack.c.h.b16 %v2586
    %v4799 = vunpack.c.l.b16 %v2587
    %v4800 = vunpack.c.h.b16 %v2587
    %v4801 = vunpack.c.l.b16 %v2588
    %v4802 = vunpack.c.h.b16 %v2588
    %v4803 = vunpack.c.l.b16 %v2589
    %v4804 = vunpack.c.h.b16 %v2589
    %v4805 = vunpack.c.l.b16 %v2590
    %v4806 = vunpack.c.h.b16 %v2590
    %v4807 = vunpack.c.l.b16 %v2591
    %v4808 = vunpack.c.h.b16 %v2591
    %v4809 = vunpack.c.l.b16 %v2592
    %v4810 = vunpack.c.h.b16 %v2592
    %v4811 = vunpack.c.l.b16 %v2593
    %v4812 = vunpack.c.h.b16 %v2593
    %v4813 = vunpack.c.l.b16 %v2594
    %v4814 = vunpack.c.h.b16 %v2594
    %v4815 = vunpack.c.l.b16 %v2595
    %v4816 = vunpack.c.h.b16 %v2595
    %v4817 = vunpack.c.l.b16 %v2596
    %v4818 = vunpack.c.h.b16 %v2596
    %v4819 = vunpack.c.l.b16 %v2597
    %v4820 = vunpack.c.h.b16 %v2597
    %v4821 = vunpack.c.l.b16 %v2598
    %v4822 = vunpack.c.h.b16 %v2598
    %v4823 = vunpack.c.l.b16 %v2599
    %v4824 = vunpack.c.h.b16 %v2599
    %v4825 = vunpack.c.l.b16 %v2600
    %v4826 = vunpack.c.h.b16 %v2600
    %v4827 = vunpack.c.l.b16 %v2601
    %v4828 = vunpack.c.h.b16 %v2601
    %v4829 = vunpack.c.l.b16 %v2602
    %v4830 = vunpack.c.h.b16 %v2602
    %v4831 = vunpack.c.l.b16 %v2603
    %v4832 = vunpack.c.h.b16 %v2603
    %v4833 = vunpack.c.l.b16 %v2604
    %v4834 = vunpack.c.h.b16 %v2604
    %v4835 = vunpack.c.l.b16 %v2605
    %v4836 = vunpack.c.h.b16 %v2605
    %v4837 = vunpack.c.l.b16 %v2606
    %v4838 = vunpack.c.h.b16 %v2606
    %v4839 = vunpack.c.l.b16 %v2607
    %v4840 = vunpack.c.h.b16 %v2607
    %v4841 = vunpack.c.l.b16 %v2608
    %v4842 = vunpack.c.h.b16 %v2608
    %v4843 = vunpack.c.l.b16 %v2609
    %v4844 = vunpack.c.h.b16 %v2609
    %v4845 = vunpack.c.l.b16 %v2610
    %v4846 = vunpack.c.h.b16 %v2610
    %v4847 = vunpack.c.l.b16 %v2611
    %v4848 = vunpack.c.h.b16 %v2611
    %v4849 = vunpack.c.l.b16 %v2612
    %v4850 = vunpack.c.h.b16 %v2612
    %v4851 = vunpack.c.l.b16 %v2613
    %v4852 = vunpack.c.h.b16 %v2613
    %v4853 = vunpack.c.l.b16 %v2614
    %v4854 = vunpack.c.h.b16 %v2614
    %v4855 = vunpack.c.l.b16 %v2615
    %v4856 = vunpack.c.h.b16 %v2615
    %v4857 = vunpack.c.l.b16 %v2616
    %v4858 = vunpack.c.h.b16 %v2616
    %v4859 = vunpack.c.l.b16 %v2617
    %v4860 = vunpack.c.h.b16 %v2617
    %v4861 = vunpack.c.l.b16 %v2618
    %v4862 = vunpack.c.h.b16 %v2618
    %v4863 = vunpack.c.l.b16 %v2619
    %v4864 = vunpack.c.h.b16 %v2619
    %v4865 = vunpack.c.l.b16 %v2620
    %v4866 = vunpack.c.h.b16 %v2620
    %v4867 = vunpack.c.l.b16 %v2621
    %v4868 = vunpack.c.h.b16 %v2621
    %v4869 = vunpack.c.l.b16 %v2622
    %v4870 = vunpack.c.h.b16 %v2622
    %v4871 = vunpack.c.l.b16 %v2623
    %v4872 = vunpack.c.h.b16 %v2623
    %v4873 = vunpack.c.l.b16 %v2624
    %v4874 = vunpack.c.h.b16 %v2624
    %v4875 = vunpack.c.l.b16 %v2625
    %v4876 = vunpack.c.h.b16 %v2625
    %v4877 = vunpack.c.l.b16 %v2626
    %v4878 = vunpack.c.h.b16 %v2626
    %v4879 = vunpack.c.l.b16 %v2627
    %v4880 = vunpack.c.h.b16 %v2627
    %v4881 = vunpack.c.l.b16 %v2628
    %v4882 = vunpack.c.h.b16 %v2628
    %v4883 = vunpack.c.l.b16 %v2629
    %v4884 = vunpack.c.h.b16 %v2629
    %v4885 = vunpack.c.l.b16 %v2630
    %v4886 = vunpack.c.h.b16 %v2630
    %v4887 = vunpack.c.l.b16 %v2631
    %v4888 = vunpack.c.h.b16 %v2631
    %v4889 = vunpack.c.l.b16 %v2632
    %v4890 = vunpack.c.h.b16 %v2632
    %v4891 = vunpack.c.l.b16 %v2633
    %v4892 = vunpack.c.h.b16 %v2633
    %v4893 = vunpack.c.l.b16 %v2634
    %v4894 = vunpack.c.h.b16 %v2634
    %v4895 = vunpack.c.l.b16 %v2635
    %v4896 = vunpack.c.h.b16 %v2635
    %v4897 = vunpack.c.l.b16 %v2636
    %v4898 = vunpack.c.h.b16 %v2636
    %v4899 = vunpack.c.l.b16 %v2637
    %v4900 = vunpack.c.h.b16 %v2637
    %v4901 = vunpack.c.l.b16 %v2638
    %v4902 = vunpack.c.h.b16 %v2638
    %v4903 = vunpack.c.l.b16 %v2639
    %v4904 = vunpack.c.h.b16 %v2639
    %v4905 = vunpack.c.l.b16 %v2640
    %v4906 = vunpack.c.h.b16 %v2640
    %v4907 = vunpack.c.l.b16 %v2641
    %v4908 = vunpack.c.h.b16 %v2641
    %v4909 = vunpack.c.l.b16 %v2642
    %v4910 = vunpack.c.h.b16 %v2642
    %v4911 = vunpack.c.l.b16 %v2643
    %v4912 = vunpack.c.h.b16 %v2643
    %v4913 = vunpack.c.l.b16 %v2644
    %v4914 = vunpack.c.h.b16 %v2644
    %v4915 = vunpack.c.l.b16 %v2645
    %v4916 = vunpack.c.h.b16 %v2645
    %v4917 = vunpack.c.l.b16 %v2646
    %v4918 = vunpack.c.h.b16 %v2646
    %v4919 = vunpack.c.l.b16 %v2647
    %v4920 = vunpack.c.h.b16 %v2647
    %v4921 = vunpack.c.l.b16 %v2648
    %v4922 = vunpack.c.h.b16 %v2648
    %v4923 = vunpack.c.l.b16 %v2649
    %v4924 = vunpack.c.h.b16 %v2649
    %v4925 = vunpack.c.l.b16 %v2650
    %v4926 = vunpack.c.h.b16 %v2650
    %v4927 = vunpack.c.l.b16 %v2651
    %v4928 = vunpack.c.h.b16 %v2651
    %v4929 = vunpack.c.l.b16 %v2652
    %v4930 = vunpack.c.h.b16 %v2652
    %v4931 = vunpack.c.l.b16 %v2653
    %v4932 = vunpack.c.h.b16 %v2653
    %v4933 = vunpack.c.l.b16 %v2654
    %v4934 = vunpack.c.h.b16 %v2654
    %v4935 = vunpack.c.l.b16 %v2655
    %v4936 = vunpack.c.h.b16 %v2655
    %v4937 = vunpack.c.l.b16 %v2656
    %v4938 = vunpack.c.h.b16 %v2656
    %v4939 = vunpack.c.l.b16 %v2657
    %v4940 = vunpack.c.h.b16 %v2657
    %v4941 = vunpack.c.l.b16 %v2658
    %v4942 = vunpack.c.h.b16 %v2658
    %v4943 = vunpack.c.l.b16 %v2659
    %v4944 = vunpack.c.h.b16 %v2659
    %v4945 = vunpack.c.l.b16 %v2660
    %v4946 = vunpack.c.h.b16 %v2660
    %v4947 = vunpack.c.l.b16 %v2661
    %v4948 = vunpack.c.h.b16 %v2661
    %v4949 = vunpack.c.l.b16 %v2662
    %v4950 = vunpack.c.h.b16 %v2662
    %v4951 = vunpack.c.l.b16 %v2663
    %v4952 = vunpack.c.h.b16 %v2663
    %v4953 = vunpack.c.l.b16 %v2664
    %v4954 = vunpack.c.h.b16 %v2664
    %v4955 = vunpack.c.l.b16 %v2665
    %v4956 = vunpack.c.h.b16 %v2665
    %v4957 = vunpack.c.l.b16 %v2666
    %v4958 = vunpack.c.h.b16 %v2666
    %v4959 = vunpack.c.l.b16 %v2667
    %v4960 = vunpack.c.h.b16 %v2667
    %v4961 = vunpack.c.l.b16 %v2668
    %v4962 = vunpack.c.h.b16 %v2668
    %v4963 = vunpack.c.l.b16 %v2669
    %v4964 = vunpack.c.h.b16 %v2669
    %v4965 = vunpack.c.l.b16 %v2670
    %v4966 = vunpack.c.h.b16 %v2670
    %v4967 = vunpack.c.l.b16 %v2671
    %v4968 = vunpack.c.h.b16 %v2671
    %v4969 = vunpack.c.l.b16 %v2672
    %v4970 = vunpack.c.h.b16 %v2672
    %v4971 = vunpack.c.l.b16 %v2673
    %v4972 = vunpack.c.h.b16 %v2673
    %v4973 = vunpack.c.l.b16 %v2674
    %v4974 = vunpack.c.h.b16 %v2674
    %v4975 = vunpack.c.l.b16 %v2675
    %v4976 = vunpack.c.h.b16 %v2675
    %v4977 = vunpack.c.l.b16 %v2676
    %v4978 = vunpack.c.h.b16 %v2676
    %v4979 = vunpack.c.l.b16 %v2677
    %v4980 = vunpack.c.h.b16 %v2677
    %v4981 = vunpack.c.l.b16 %v2678
    %v4982 = vunpack.c.h.b16 %v2678
    %v4983 = vunpack.c.l.b16 %v2679
    %v4984 = vunpack.c.h.b16 %v2679
    %v4985 = vunpack.c.l.b16 %v2680
    %v4986 = vunpack.c.h.b16 %v2680
    %v4987 = vunpack.c.l.b16 %v2681
    %v4988 = vunpack.c.h.b16 %v2681
    %v4989 = vunpack.c.l.b16 %v2682
    %v4990 = vunpack.c.h.b16 %v2682
    %v4991 = vunpack.c.l.b16 %v2683
    %v4992 = vunpack.c.h.b16 %v2683
    %v4993 = vunpack.c.l.b16 %v2684
    %v4994 = vunpack.c.h.b16 %v2684
    %v4995 = vunpack.c.l.b16 %v2685
    %v4996 = vunpack.c.h.b16 %v2685
    %v4997 = vunpack.c.l.b16 %v2686
    %v4998 = vunpack.c.h.b16 %v2686
    %v4999 = vunpack.c.l.b16 %v2687
    %v5000 = vunpack.c.h.b16 %v2687
    %v5001 = vunpack.c.l.b16 %v2688
    %v5002 = vunpack.c.h.b16 %v2688
    %v5003 = vunpack.c.l.b16 %v2689
    %v5004 = vunpack.c.h.b16 %v2689
    %v5005 = vunpack.c.l.b16 %v2690
    %v5006 = vunpack.c.h.b16 %v2690
    %v5007 = vunpack.c.l.b16 %v2691
    %v5008 = vunpack.c.h.b16 %v2691
    %v5009 = vunpack.c.l.b16 %v2692
    %v5010 = vunpack.c.h.b16 %v2692
    %v5011 = vunpack.c.l.b16 %v2693
    %v5012 = vunpack.c.h.b16 %v2693
    %v5013 = vunpack.c.l.b16 %v2694
    %v5014 = vunpack.c.h.b16 %v2694
    %v5015 = vunpack.c.l.b16 %v2695
    %v5016 = vunpack.c.h.b16 %v2695
    %v5017 = vunpack.c.l.b16 %v2696
    %v5018 = vunpack.c.h.b16 %v2696
    %v5019 = vunpack.c.l.b16 %v2697
    %v5020 = vunpack.c.h.b16 %v2697
    %v5021 = vunpack.c.l.b16 %v2698
    %v5022 = vunpack.c.h.b16 %v2698
    %v5023 = vunpack.c.l.b16 %v2699
    %v5024 = vunpack.c.h.b16 %v2699
    %v5025 = vunpack.c.l.b16 %v2700
    %v5026 = vunpack.c.h.b16 %v2700
    %v5027 = vunpack.c.l.b16 %v2701
    %v5028 = vunpack.c.h.b16 %v2701
    %v5029 = vunpack.c.l.b16 %v2702
    %v5030 = vunpack.c.h.b16 %v2702
    %v5031 = vunpack.c.l.b16 %v2703
    %v5032 = vunpack.c.h.b16 %v2703
    %v5033 = vunpack.c.l.b16 %v2704
    %v5034 = vunpack.c.h.b16 %v2704
    %v5035 = vunpack.c.l.b16 %v2705
    %v5036 = vunpack.c.h.b16 %v2705
    %v5037 = vunpack.c.l.b16 %v2706
    %v5038 = vunpack.c.h.b16 %v2706
    %v5039 = vunpack.c.l.b16 %v2707
    %v5040 = vunpack.c.h.b16 %v2707
    %v5041 = vunpack.c.l.b16 %v2708
    %v5042 = vunpack.c.h.b16 %v2708
    %v5043 = vunpack.c.l.b16 %v2709
    %v5044 = vunpack.c.h.b16 %v2709
    %v5045 = vunpack.c.l.b16 %v2710
    %v5046 = vunpack.c.h.b16 %v2710
    %v5047 = vunpack.c.l.b16 %v2711
    %v5048 = vunpack.c.h.b16 %v2711
    %v5049 = vunpack.c.l.b16 %v2712
    %v5050 = vunpack.c.h.b16 %v2712
    %v5051 = vunpack.c.l.b16 %v2713
    %v5052 = vunpack.c.h.b16 %v2713
    %v5053 = vunpack.c.l.b16 %v2714
    %v5054 = vunpack.c.h.b16 %v2714
    %v5055 = vunpack.c.l.b16 %v2715
    %v5056 = vunpack.c.h.b16 %v2715
    %v5057 = vunpack.c.l.b16 %v2716
    %v5058 = vunpack.c.h.b16 %v2716
    %v5059 = vunpack.c.l.b16 %v2717
    %v5060 = vunpack.c.h.b16 %v2717
    %v5061 = vunpack.c.l.b16 %v2718
    %v5062 = vunpack.c.h.b16 %v2718
    %v5063 = vunpack.c.l.b16 %v2719
    %v5064 = vunpack.c.h.b16 %v2719
    %v5065 = vunpack.c.l.b16 %v2720
    %v5066 = vunpack.c.h.b16 %v2720
    %v5067 = vunpack.c.l.b16 %v2721
    %v5068 = vunpack.c.h.b16 %v2721
    %v5069 = vunpack.c.l.b16 %v2722
    %v5070 = vunpack.c.h.b16 %v2722
    %v5071 = vunpack.c.l.b16 %v2723
    %v5072 = vunpack.c.h.b16 %v2723
    %v5073 = vunpack.c.l.b16 %v2724
    %v5074 = vunpack.c.h.b16 %v2724
    %v5075 = vunpack.c.l.b16 %v2725
    %v5076 = vunpack.c.h.b16 %v2725
    %v5077 = vunpack.c.l.b16 %v2726
    %v5078 = vunpack.c.h.b16 %v2726
    %v5079 = vunpack.c.l.b16 %v2727
    %v5080 = vunpack.c.h.b16 %v2727
    %v5081 = vunpack.c.l.b16 %v2728
    %v5082 = vunpack.c.h.b16 %v2728
    %v5083 = vunpack.c.l.b16 %v2729
    %v5084 = vunpack.c.h.b16 %v2729
    %v5085 = vunpack.c.l.b16 %v2730
    %v5086 = vunpack.c.h.b16 %v2730
    %v5087 = vunpack.c.l.b16 %v2731
    %v5088 = vunpack.c.h.b16 %v2731
    %v5089 = vunpack.c.l.b16 %v2732
    %v5090 = vunpack.c.h.b16 %v2732
    %v5091 = vunpack.c.l.b16 %v2733
    %v5092 = vunpack.c.h.b16 %v2733
    %v5093 = vunpack.c.l.b16 %v2734
    %v5094 = vunpack.c.h.b16 %v2734
    %v5095 = vunpack.c.l.b16 %v2735
    %v5096 = vunpack.c.h.b16 %v2735
    %v5097 = vunpack.c.l.b16 %v2736
    %v5098 = vunpack.c.h.b16 %v2736
    %v5099 = vunpack.c.l.b16 %v2737
    %v5100 = vunpack.c.h.b16 %v2737
    %v5101 = vunpack.c.l.b16 %v2738
    %v5102 = vunpack.c.h.b16 %v2738
    %v5103 = vunpack.c.l.b16 %v2739
    %v5104 = vunpack.c.h.b16 %v2739
    %v5105 = vunpack.c.l.b16 %v2740
    %v5106 = vunpack.c.h.b16 %v2740
    %v5107 = vunpack.c.l.b16 %v2741
    %v5108 = vunpack.c.h.b16 %v2741
    %v5109 = vunpack.c.l.b16 %v2742
    %v5110 = vunpack.c.h.b16 %v2742
    %v5111 = vunpack.c.l.b16 %v2743
    %v5112 = vunpack.c.h.b16 %v2743
    %v5113 = vunpack.c.l.b16 %v2744
    %v5114 = vunpack.c.h.b16 %v2744
    %v5115 = vunpack.c.l.b16 %v2745
    %v5116 = vunpack.c.h.b16 %v2745
    %v5117 = vunpack.c.l.b16 %v2746
    %v5118 = vunpack.c.h.b16 %v2746
    %v5119 = vunpack.c.l.b16 %v2747
    %v5120 = vunpack.c.h.b16 %v2747
    %v5121 = vunpack.c.l.b16 %v2748
    %v5122 = vunpack.c.h.b16 %v2748
    %v5123 = vunpack.c.l.b16 %v2749
    %v5124 = vunpack.c.h.b16 %v2749
    %v5125 = vunpack.c.l.b16 %v2750
    %v5126 = vunpack.c.h.b16 %v2750
    %v5127 = vunpack.c.l.b16 %v2751
    %v5128 = vunpack.c.h.b16 %v2751
    %v5129 = vunpack.c.l.b16 %v2752
    %v5130 = vunpack.c.h.b16 %v2752
    %v5131 = vunpack.c.l.b16 %v2753
    %v5132 = vunpack.c.h.b16 %v2753
    %v5133 = vunpack.c.l.b16 %v2754
    %v5134 = vunpack.c.h.b16 %v2754
    %v5135 = vunpack.c.l.b16 %v2755
    %v5136 = vunpack.c.h.b16 %v2755
    %v5137 = vunpack.c.l.b16 %v2756
    %v5138 = vunpack.c.h.b16 %v2756
    %v5139 = vunpack.c.l.b16 %v2757
    %v5140 = vunpack.c.h.b16 %v2757
    %v5141 = vunpack.c.l.b16 %v2758
    %v5142 = vunpack.c.h.b16 %v2758
    %v5143 = vunpack.c.l.b16 %v2759
    %v5144 = vunpack.c.h.b16 %v2759
    %v5145 = vunpack.c.l.b16 %v2760
    %v5146 = vunpack.c.h.b16 %v2760
    %v5147 = vunpack.c.l.b16 %v2761
    %v5148 = vunpack.c.h.b16 %v2761
    %v5149 = vunpack.c.l.b16 %v2762
    %v5150 = vunpack.c.h.b16 %v2762
    %v5151 = vunpack.c.l.b16 %v2763
    %v5152 = vunpack.c.h.b16 %v2763
    %v5153 = vunpack.c.l.b16 %v2764
    %v5154 = vunpack.c.h.b16 %v2764
    %v5155 = vunpack.c.l.b16 %v2765
    %v5156 = vunpack.c.h.b16 %v2765
    %v5157 = vunpack.c.l.b16 %v2766
    %v5158 = vunpack.c.h.b16 %v2766
    %v5159 = vunpack.c.l.b16 %v2767
    %v5160 = vunpack.c.h.b16 %v2767
    %v5161 = vunpack.c.l.b16 %v2768
    %v5162 = vunpack.c.h.b16 %v2768
    %v5163 = vunpack.c.l.b16 %v2769
    %v5164 = vunpack.c.h.b16 %v2769
    %v5165 = vunpack.c.l.b16 %v2770
    %v5166 = vunpack.c.h.b16 %v2770
    %v5167 = vunpack.c.l.b16 %v2771
    %v5168 = vunpack.c.h.b16 %v2771
    %v5169 = vunpack.c.l.b16 %v2772
    %v5170 = vunpack.c.h.b16 %v2772
    %v5171 = vunpack.c.l.b16 %v2773
    %v5172 = vunpack.c.h.b16 %v2773
    %v5173 = vunpack.c.l.b16 %v2774
    %v5174 = vunpack.c.h.b16 %v2774
    %v5175 = vunpack.c.l.b16 %v2775
    %v5176 = vunpack.c.h.b16 %v2775
    %v5177 = vunpack.c.l.b16 %v2776
    %v5178 = vunpack.c.h.b16 %v2776
    %v5179 = vunpack.c.l.b16 %v2777
    %v5180 = vunpack.c.h.b16 %v2777
    %v5181 = vunpack.c.l.b16 %v2778
    %v5182 = vunpack.c.h.b16 %v2778
    %v5183 = vunpack.c.l.b16 %v2779
    %v5184 = vunpack.c.h.b16 %v2779
    %v5185 = vunpack.c.l.b16 %v2780
    %v5186 = vunpack.c.h.b16 %v2780
    %v5187 = vunpack.c.l.b16 %v2781
    %v5188 = vunpack.c.h.b16 %v2781
    %v5189 = vunpack.c.l.b16 %v2782
    %v5190 = vunpack.c.h.b16 %v2782
    %v5191 = vunpack.c.l.b16 %v2783
    %v5192 = vunpack.c.h.b16 %v2783
    %v5193 = vunpack.c.l.b16 %v2784
    %v5194 = vunpack.c.h.b16 %v2784
    %v5195 = vunpack.c.l.b16 %v2785
    %v5196 = vunpack.c.h.b16 %v2785
    %v5197 = vunpack.c.l.b16 %v2786
    %v5198 = vunpack.c.h.b16 %v2786
    %v5199 = vunpack.c.l.b16 %v2787
    %v5200 = vunpack.c.h.b16 %v2787
    %v5201 = vunpack.c.l.b16 %v2788
    %v5202 = vunpack.c.h.b16 %v2788
    %v5203 = vunpack.c.l.b16 %v2789
    %v5204 = vunpack.c.h.b16 %v2789
    %v5205 = vunpack.c.l.b16 %v2790
    %v5206 = vunpack.c.h.b16 %v2790
    %v5207 = vunpack.c.l.b16 %v2791
    %v5208 = vunpack.c.h.b16 %v2791
    %v5209 = vunpack.c.l.b16 %v2792
    %v5210 = vunpack.c.h.b16 %v2792
    %v5211 = vunpack.c.l.b16 %v2793
    %v5212 = vunpack.c.h.b16 %v2793
    %v5213 = vunpack.c.l.b16 %v2794
    %v5214 = vunpack.c.h.b16 %v2794
    %v5215 = vunpack.c.l.b16 %v2795
    %v5216 = vunpack.c.h.b16 %v2795
    %v5217 = vunpack.c.l.b16 %v2796
    %v5218 = vunpack.c.h.b16 %v2796
    %v5219 = vunpack.c.l.b16 %v2797
    %v5220 = vunpack.c.h.b16 %v2797
    %v5221 = vunpack.c.l.b16 %v2798
    %v5222 = vunpack.c.h.b16 %v2798
    %v5223 = vunpack.c.l.b16 %v2799
    %v5224 = vunpack.c.h.b16 %v2799
    %v5225 = vunpack.c.l.b16 %v2800
    %v5226 = vunpack.c.h.b16 %v2800
    %v5227 = vunpack.c.l.b16 %v2801
    %v5228 = vunpack.c.h.b16 %v2801
    %v5229 = vunpack.c.l.b16 %v2802
    %v5230 = vunpack.c.h.b16 %v2802
    %v5231 = vunpack.c.l.b16 %v2803
    %v5232 = vunpack.c.h.b16 %v2803
    %v5233 = vunpack.c.l.b16 %v2804
    %v5234 = vunpack.c.h.b16 %v2804
    %v5235 = vunpack.c.l.b16 %v2805
    %v5236 = vunpack.c.h.b16 %v2805
    %v5237 = vunpack.c.l.b16 %v2806
    %v5238 = vunpack.c.h.b16 %v2806
    %v5239 = vunpack.c.l.b16 %v2807
    %v5240 = vunpack.c.h.b16 %v2807
    %v5241 = vunpack.c.l.b16 %v2808
    %v5242 = vunpack.c.h.b16 %v2808
    %v5243 = vunpack.c.l.b16 %v2809
    %v5244 = vunpack.c.h.b16 %v2809
    %v5245 = vunpack.c.l.b16 %v2810
    %v5246 = vunpack.c.h.b16 %v2810
    %v5247 = vunpack.c.l.b16 %v2811
    %v5248 = vunpack.c.h.b16 %v2811
    %v5249 = vunpack.c.l.b16 %v2812
    %v5250 = vunpack.c.h.b16 %v2812
    %v5251 = vunpack.c.l.b16 %v2813
    %v5252 = vunpack.c.h.b16 %v2813
    %v5253 = vunpack.c.l.b16 %v2814
    %v5254 = vunpack.c.h.b16 %v2814
    %v5255 = vunpack.c.l.b16 %v2815
    %v5256 = vunpack.c.h.b16 %v2815
    %v5257 = vunpack.c.l.b16 %v2816
    %v5258 = vunpack.c.h.b16 %v2816
    %v5259 = vunpack.c.l.b16 %v2817
    %v5260 = vunpack.c.h.b16 %v2817
    %v5261 = vunpack.c.l.b16 %v2818
    %v5262 = vunpack.c.h.b16 %v2818
    %v5263 = vunpack.c.l.b16 %v2819
    %v5264 = vunpack.c.h.b16 %v2819
    %v5265 = vunpack.c.l.b16 %v2820
    %v5266 = vunpack.c.h.b16 %v2820
    %v5267 = vunpack.c.l.b16 %v2821
    %v5268 = vunpack.c.h.b16 %v2821
    %v5269 = vunpack.c.l.b16 %v2822
    %v5270 = vunpack.c.h.b16 %v2822
    %v5271 = vunpack.c.l.b16 %v2823
    %v5272 = vunpack.c.h.b16 %v2823
    %v5273 = vunpack.c.l.b16 %v2824
    %v5274 = vunpack.c.h.b16 %v2824
    %v5275 = vunpack.c.l.b16 %v2825
    %v5276 = vunpack.c.h.b16 %v2825
    %v5277 = vunpack.c.l.b16 %v2826
    %v5278 = vunpack.c.h.b16 %v2826
    %v5279 = vunpack.c.l.b16 %v2827
    %v5280 = vunpack.c.h.b16 %v2827
    %v5281 = vunpack.c.l.b16 %v2828
    %v5282 = vunpack.c.h.b16 %v2828
    %v5283 = vunpack.c.l.b16 %v2829
    %v5284 = vunpack.c.h.b16 %v2829
    %v5285 = vunpack.c.l.b16 %v2830
    %v5286 = vunpack.c.h.b16 %v2830
    %v5287 = vunpack.c.l.b16 %v2831
    %v5288 = vunpack.c.h.b16 %v2831
    %v5289 = vunpack.c.l.b16 %v2832
    %v5290 = vunpack.c.h.b16 %v2832
    %v5291 = vunpack.c.l.b16 %v2833
    %v5292 = vunpack.c.h.b16 %v2833
    %v5293 = vunpack.c.l.b16 %v2834
    %v5294 = vunpack.c.h.b16 %v2834
    %v5295 = vunpack.c.l.b16 %v2835
    %v5296 = vunpack.c.h.b16 %v2835
    %v5297 = vunpack.c.l.b16 %v2836
    %v5298 = vunpack.c.h.b16 %v2836
    %v5299 = vunpack.c.l.b16 %v2837
    %v5300 = vunpack.c.h.b16 %v2837
    %v5301 = vunpack.c.l.b16 %v2838
    %v5302 = vunpack.c.h.b16 %v2838
    %v5303 = vunpack.c.l.b16 %v2839
    %v5304 = vunpack.c.h.b16 %v2839
    %v5305 = vunpack.c.l.b16 %v2840
    %v5306 = vunpack.c.h.b16 %v2840
    %v5307 = vunpack.c.l.b16 %v2841
    %v5308 = vunpack.c.h.b16 %v2841
    %v5309 = vunpack.c.l.b16 %v2842
    %v5310 = vunpack.c.h.b16 %v2842
    %v5311 = vunpack.c.l.b16 %v2843
    %v5312 = vunpack.c.h.b16 %v2843
    %v5313 = vunpack.c.l.b16 %v2844
    %v5314 = vunpack.c.h.b16 %v2844
    %v5315 = vunpack.c.l.b16 %v2845
    %v5316 = vunpack.c.h.b16 %v2845
    %v5317 = vunpack.c.l.b16 %v2846
    %v5318 = vunpack.c.h.b16 %v2846
    %v5319 = vunpack.c.l.b16 %v2847
    %v5320 = vunpack.c.h.b16 %v2847
    %v5321 = vunpack.c.l.b16 %v2848
    %v5322 = vunpack.c.h.b16 %v2848
    %v5323 = vunpack.c.l.b16 %v2849
    %v5324 = vunpack.c.h.b16 %v2849
    %v5325 = vunpack.c.l.b16 %v2850
    %v5326 = vunpack.c.h.b16 %v2850
    %v5327 = vunpack.c.l.b16 %v2851
    %v5328 = vunpack.c.h.b16 %v2851
    %v5329 = vunpack.c.l.b16 %v2852
    %v5330 = vunpack.c.h.b16 %v2852
    %v5331 = vunpack.c.l.b16 %v2853
    %v5332 = vunpack.c.h.b16 %v2853
    %v5333 = vunpack.c.l.b16 %v2854
    %v5334 = vunpack.c.h.b16 %v2854
    %v5335 = vunpack.c.l.b16 %v2855
    %v5336 = vunpack.c.h.b16 %v2855
    %v5337 = vunpack.c.l.b16 %v2856
    %v5338 = vunpack.c.h.b16 %v2856
    %v5339 = vunpack.c.l.b16 %v2857
    %v5340 = vunpack.c.h.b16 %v2857
    %v5341 = vunpack.c.l.b16 %v2858
    %v5342 = vunpack.c.h.b16 %v2858
    %v5343 = vunpack.c.l.b16 %v2859
    %v5344 = vunpack.c.h.b16 %v2859
    %v5345 = vunpack.c.l.b16 %v2860
    %v5346 = vunpack.c.h.b16 %v2860
    %v5347 = vunpack.c.l.b16 %v2861
    %v5348 = vunpack.c.h.b16 %v2861
    %v5349 = vunpack.c.l.b16 %v2862
    %v5350 = vunpack.c.h.b16 %v2862
    %v5351 = vunpack.c.l.b16 %v2863
    %v5352 = vunpack.c.h.b16 %v2863
    %v5353 = vunpack.c.l.b16 %v2864
    %v5354 = vunpack.c.h.b16 %v2864
    %v5355 = vunpack.c.l.b16 %v2865
    %v5356 = vunpack.c.h.b16 %v2865
    %v5357 = vunpack.c.l.b16 %v2866
    %v5358 = vunpack.c.h.b16 %v2866
    %v5359 = vunpack.c.l.b16 %v2867
    %v5360 = vunpack.c.h.b16 %v2867
    %v5361 = vunpack.c.l.b16 %v2868
    %v5362 = vunpack.c.h.b16 %v2868
    %v5363 = vunpack.c.l.b16 %v2869
    %v5364 = vunpack.c.h.b16 %v2869
    %v5365 = vunpack.c.l.b16 %v2870
    %v5366 = vunpack.c.h.b16 %v2870
    %v5367 = vunpack.c.l.b16 %v2871
    %v5368 = vunpack.c.h.b16 %v2871
    %v5369 = vunpack.c.l.b16 %v2872
    %v5370 = vunpack.c.h.b16 %v2872
    %v5371 = vunpack.c.l.b16 %v2873
    %v5372 = vunpack.c.h.b16 %v2873
    %v5373 = vunpack.c.l.b16 %v2874
    %v5374 = vunpack.c.h.b16 %v2874
    %v5375 = vunpack.c.l.b16 %v2875
    %v5376 = vunpack.c.h.b16 %v2875
    %v5377 = vunpack.c.l.b16 %v2876
    %v5378 = vunpack.c.h.b16 %v2876
    %v5379 = vunpack.c.l.b16 %v2877
    %v5380 = vunpack.c.h.b16 %v2877
    %v5381 = vunpack.c.l.b16 %v2878
    %v5382 = vunpack.c.h.b16 %v2878
    %v5383 = vunpack.c.l.b16 %v2879
    %v5384 = vunpack.c.h.b16 %v2879
    %v5385 = vunpack.c.l.b16 %v2880
    %v5386 = vunpack.c.h.b16 %v2880
    %v5387 = vunpack.c.l.b16 %v2881
    %v5388 = vunpack.c.h.b16 %v2881
    %v5389 = vunpack.c.l.b16 %v2882
    %v5390 = vunpack.c.h.b16 %v2882
    %v5391 = vunpack.c.l.b16 %v2883
    %v5392 = vunpack.c.h.b16 %v2883
    %v5393 = vunpack.c.l.b16 %v2884
    %v5394 = vunpack.c.h.b16 %v2884
    %v5395 = vunpack.c.l.b16 %v2885
    %v5396 = vunpack.c.h.b16 %v2885
    %v5397 = vunpack.c.l.b16 %v2886
    %v5398 = vunpack.c.h.b16 %v2886
    %v5399 = vunpack.c.l.b16 %v2887
    %v5400 = vunpack.c.h.b16 %v2887
    %v5401 = vunpack.c.l.b16 %v2888
    %v5402 = vunpack.c.h.b16 %v2888
    %v5403 = vunpack.c.l.b16 %v2889
    %v5404 = vunpack.c.h.b16 %v2889
    %v5405 = vunpack.c.l.b16 %v2890
    %v5406 = vunpack.c.h.b16 %v2890
    %v5407 = vunpack.c.l.b16 %v2891
    %v5408 = vunpack.c.h.b16 %v2891
    %v5409 = vunpack.c.l.b16 %v2892
    %v5410 = vunpack.c.h.b16 %v2892
    %v5411 = vunpack.c.l.b16 %v2893
    %v5412 = vunpack.c.h.b16 %v2893
    %v5413 = vunpack.c.l.b16 %v2894
    %v5414 = vunpack.c.h.b16 %v2894
    %v5415 = vunpack.c.l.b16 %v2895
    %v5416 = vunpack.c.h.b16 %v2895
    %v5417 = vunpack.c.l.b16 %v2896
    %v5418 = vunpack.c.h.b16 %v2896
    %v5419 = vunpack.c.l.b16 %v2897
    %v5420 = vunpack.c.h.b16 %v2897
    %v5421 = vunpack.c.l.b16 %v2898
    %v5422 = vunpack.c.h.b16 %v2898
    %v5423 = vunpack.c.l.b16 %v2899
    %v5424 = vunpack.c.h.b16 %v2899
    %v5425 = vunpack.c.l.b16 %v2900
    %v5426 = vunpack.c.h.b16 %v2900
    %v5427 = vunpack.c.l.b16 %v2901
    %v5428 = vunpack.c.h.b16 %v2901
    %v5429 = vunpack.c.l.b16 %v2902
    %v5430 = vunpack.c.h.b16 %v2902
    %v5431 = vunpack.c.l.b16 %v2903
    %v5432 = vunpack.c.h.b16 %v2903
    %v5433 = vunpack.c.l.b16 %v2904
    %v5434 = vunpack.c.h.b16 %v2904
    %v5435 = vunpack.c.l.b16 %v2905
    %v5436 = vunpack.c.h.b16 %v2905
    %v5437 = vunpack.c.l.b16 %v2906
    %v5438 = vunpack.c.h.b16 %v2906
    %v5439 = vunpack.c.l.b16 %v2907
    %v5440 = vunpack.c.h.b16 %v2907
    %v5441 = vunpack.c.l.b16 %v2908
    %v5442 = vunpack.c.h.b16 %v2908
    %v5443 = vunpack.c.l.b16 %v2909
    %v5444 = vunpack.c.h.b16 %v2909
    %v5445 = vunpack.c.l.b16 %v2910
    %v5446 = vunpack.c.h.b16 %v2910
    %v5447 = vunpack.c.l.b16 %v2911
    %v5448 = vunpack.c.h.b16 %v2911
    %v5449 = vunpack.c.l.b16 %v2912
    %v5450 = vunpack.c.h.b16 %v2912
    %v5451 = vunpack.c.l.b16 %v2913
    %v5452 = vunpack.c.h.b16 %v2913
    %v5453 = vunpack.c.l.b16 %v2914
    %v5454 = vunpack.c.h.b16 %v2914
    %v5455 = vunpack.c.l.b16 %v2915
    %v5456 = vunpack.c.h.b16 %v2915
    %v5457 = vunpack.c.l.b16 %v2916
    %v5458 = vunpack.c.h.b16 %v2916
    %v5459 = vunpack.c.l.b16 %v2917
    %v5460 = vunpack.c.h.b16 %v2917
    %v5461 = vunpack.c.l.b16 %v2918
    %v5462 = vunpack.c.h.b16 %v2918
    %v5463 = vunpack.c.l.b16 %v2919
    %v5464 = vunpack.c.h.b16 %v2919
    %v5465 = vunpack.c.l.b16 %v2920
    %v5466 = vunpack.c.h.b16 %v2920
    %v5467 = vunpack.c.l.b16 %v2921
    %v5468 = vunpack.c.h.b16 %v2921
    %v5469 = vunpack.c.l.b16 %v2922
    %v5470 = vunpack.c.h.b16 %v2922
    %v5471 = vunpack.c.l.b16 %v2923
    %v5472 = vunpack.c.h.b16 %v2923
    %v5473 = vunpack.c.l.b16 %v2924
    %v5474 = vunpack.c.h.b16 %v2924
    %v5475 = vunpack.c.l.b16 %v2925
    %v5476 = vunpack.c.h.b16 %v2925
    %v5477 = vunpack.c.l.b16 %v2926
    %v5478 = vunpack.c.h.b16 %v2926
    %v5479 = vunpack.c.l.b16 %v2927
    %v5480 = vunpack.c.h.b16 %v2927
    %v5481 = vunpack.c.l.b16 %v2928
    %v5482 = vunpack.c.h.b16 %v2928
    %v5483 = vunpack.c.l.b16 %v2929
    %v5484 = vunpack.c.h.b16 %v2929
    %v5485 = vunpack.c.l.b16 %v2930
    %v5486 = vunpack.c.h.b16 %v2930
    %v5487 = vunpack.c.l.b16 %v2931
    %v5488 = vunpack.c.h.b16 %v2931
    %v5489 = vunpack.c.l.b16 %v2932
    %v5490 = vunpack.c.h.b16 %v2932
    %v5491 = vunpack.c.l.b16 %v2933
    %v5492 = vunpack.c.h.b16 %v2933
    %v5493 = vunpack.c.l.b16 %v2934
    %v5494 = vunpack.c.h.b16 %v2934
    %v5495 = vunpack.c.l.b16 %v2935
    %v5496 = vunpack.c.h.b16 %v2935
    %v5497 = vunpack.c.l.b16 %v2936
    %v5498 = vunpack.c.h.b16 %v2936
    %v5499 = vunpack.c.l.b16 %v2937
    %v5500 = vunpack.c.h.b16 %v2937
    %v5501 = vunpack.c.l.b16 %v2938
    %v5502 = vunpack.c.h.b16 %v2938
    %v5503 = vunpack.c.l.b16 %v2939
    %v5504 = vunpack.c.h.b16 %v2939
    %v5505 = vunpack.c.l.b16 %v2940
    %v5506 = vunpack.c.h.b16 %v2940
    %v5507 = vunpack.c.l.b16 %v2941
    %v5508 = vunpack.c.h.b16 %v2941
    %v5509 = vunpack.c.l.b16 %v2942
    %v5510 = vunpack.c.h.b16 %v2942
    %v5511 = vunpack.c.l.b16 %v2943
    %v5512 = vunpack.c.h.b16 %v2943
    %v5513 = vunpack.c.l.b16 %v2944
    %v5514 = vunpack.c.h.b16 %v2944
    %v5515 = vunpack.c.l.b16 %v2945
    %v5516 = vunpack.c.h.b16 %v2945
    %v5517 = vunpack.c.l.b16 %v2946
    %v5518 = vunpack.c.h.b16 %v2946
    %v5519 = vunpack.c.l.b16 %v2947
    %v5520 = vunpack.c.h.b16 %v2947
    %v5521 = vunpack.c.l.b16 %v2948
    %v5522 = vunpack.c.h.b16 %v2948
    %v5523 = vunpack.c.l.b16 %v2949
    %v5524 = vunpack.c.h.b16 %v2949
    %v5525 = vunpack.c.l.b16 %v2950
    %v5526 = vunpack.c.h.b16 %v2950
    %v5527 = vunpack.c.l.b16 %v2951
    %v5528 = vunpack.c.h.b16 %v2951
    %v5529 = vunpack.c.l.b16 %v2952
    %v5530 = vunpack.c.h.b16 %v2952
    %v5531 = vunpack.c.l.b16 %v2953
    %v5532 = vunpack.c.h.b16 %v2953
    %v5533 = vunpack.c.l.b16 %v2954
    %v5534 = vunpack.c.h.b16 %v2954
    %v5535 = vunpack.c.l.b16 %v2955
    %v5536 = vunpack.c.h.b16 %v2955
    %v5537 = vunpack.c.l.b16 %v2956
    %v5538 = vunpack.c.h.b16 %v2956
    %v5539 = vunpack.c.l.b16 %v2957
    %v5540 = vunpack.c.h.b16 %v2957
    %v5541 = vunpack.c.l.b16 %v2958
    %v5542 = vunpack.c.h.b16 %v2958
    %v5543 = vunpack.c.l.b16 %v2959
    %v5544 = vunpack.c.h.b16 %v2959
    %v5545 = vunpack.c.l.b16 %v2960
    %v5546 = vunpack.c.h.b16 %v2960
    %v5547 = vunpack.c.l.b16 %v2961
    %v5548 = vunpack.c.h.b16 %v2961
    %v5549 = vunpack.c.l.b16 %v2962
    %v5550 = vunpack.c.h.b16 %v2962
    %v5551 = vunpack.c.l.b16 %v2963
    %v5552 = vunpack.c.h.b16 %v2963
    %v5553 = vunpack.c.l.b16 %v2964
    %v5554 = vunpack.c.h.b16 %v2964
    %v5555 = vunpack.c.l.b16 %v2965
    %v5556 = vunpack.c.h.b16 %v2965
    %v5557 = vunpack.c.l.b16 %v2966
    %v5558 = vunpack.c.h.b16 %v2966
    %v5559 = vunpack.c.l.b16 %v2967
    %v5560 = vunpack.c.h.b16 %v2967
    %v5561 = vunpack.c.l.b16 %v2968
    %v5562 = vunpack.c.h.b16 %v2968
    %v5563 = vunpack.c.l.b16 %v2969
    %v5564 = vunpack.c.h.b16 %v2969
    %v5565 = vunpack.c.l.b16 %v2970
    %v5566 = vunpack.c.h.b16 %v2970
    %v5567 = vunpack.c.l.b16 %v2971
    %v5568 = vunpack.c.h.b16 %v2971
    %v5569 = vunpack.c.l.b16 %v2972
    %v5570 = vunpack.c.h.b16 %v2972
    %v5571 = vunpack.c.l.b16 %v2973
    %v5572 = vunpack.c.h.b16 %v2973
    %v5573 = vunpack.c.l.b16 %v2974
    %v5574 = vunpack.c.h.b16 %v2974
    %v5575 = vunpack.c.l.b16 %v2975
    %v5576 = vunpack.c.h.b16 %v2975
    %v5577 = vunpack.c.l.b16 %v2976
    %v5578 = vunpack.c.h.b16 %v2976
    %v5579 = vunpack.c.l.b16 %v2977
    %v5580 = vunpack.c.h.b16 %v2977
    %v5581 = vunpack.c.l.b16 %v2978
    %v5582 = vunpack.c.h.b16 %v2978
    %v5583 = vunpack.c.l.b16 %v2979
    %v5584 = vunpack.c.h.b16 %v2979
    %v5585 = vunpack.c.l.b16 %v2980
    %v5586 = vunpack.c.h.b16 %v2980
    %v5587 = vunpack.c.l.b16 %v2981
    %v5588 = vunpack.c.h.b16 %v2981
    %v5589 = vunpack.c.l.b16 %v2982
    %v5590 = vunpack.c.h.b16 %v2982
    %v5591 = vunpack.c.l.b16 %v2983
    %v5592 = vunpack.c.h.b16 %v2983
    %v5593 = vunpack.c.l.b16 %v2984
    %v5594 = vunpack.c.h.b16 %v2984
    %v5595 = vunpack.c.l.b16 %v2985
    %v5596 = vunpack.c.h.b16 %v2985
    %v5597 = vunpack.c.l.b16 %v2986
    %v5598 = vunpack.c.h.b16 %v2986
    %v5599 = vunpack.c.l.b16 %v2987
    %v5600 = vunpack.c.h.b16 %v2987
    %v5601 = vunpack.c.l.b16 %v2988
    %v5602 = vunpack.c.h.b16 %v2988
    %v5603 = vunpack.c.l.b16 %v2989
    %v5604 = vunpack.c.h.b16 %v2989
    %v5605 = vunpack.c.l.b16 %v2990
    %v5606 = vunpack.c.h.b16 %v2990
    %v5607 = vunpack.c.l.b16 %v2991
    %v5608 = vunpack.c.h.b16 %v2991
    %v5609 = vunpack.c.l.b16 %v2992
    %v5610 = vunpack.c.h.b16 %v2992
    %v5611 = vunpack.c.l.b16 %v2993
    %v5612 = vunpack.c.h.b16 %v2993
    %v5613 = vunpack.c.l.b16 %v2994
    %v5614 = vunpack.c.h.b16 %v2994
    %v5615 = vunpack.c.l.b16 %v2995
    %v5616 = vunpack.c.h.b16 %v2995
    %v5617 = vunpack.c.l.b16 %v2996
    %v5618 = vunpack.c.h.b16 %v2996
    %v5619 = vunpack.c.l.b16 %v2997
    %v5620 = vunpack.c.h.b16 %v2997
    %v5621 = vunpack.c.l.b16 %v2998
    %v5622 = vunpack.c.h.b16 %v2998
    %v5623 = vunpack.c.l.b16 %v2999
    %v5624 = vunpack.c.h.b16 %v2999
    %v5625 = vunpack.c.l.b16 %v3000
    %v5626 = vunpack.c.h.b16 %v3000
    %v5627 = vunpack.c.l.b16 %v3001
    %v5628 = vunpack.c.h.b16 %v3001
    %v5629 = vunpack.c.l.b16 %v3002
    %v5630 = vunpack.c.h.b16 %v3002
    %v5631 = vunpack.c.l.b16 %v3003
    %v5632 = vunpack.c.h.b16 %v3003
    %v5633 = vunpack.c.l.b16 %v3004
    %v5634 = vunpack.c.h.b16 %v3004
    %v5635 = vunpack.c.l.b16 %v3005
    %v5636 = vunpack.c.h.b16 %v3005
    %v5637 = vunpack.c.l.b16 %v3006
    %v5638 = vunpack.c.h.b16 %v3006
    %v5639 = vunpack.c.l.b16 %v3007
    %v5640 = vunpack.c.h.b16 %v3007
    %v5641 = vunpack.c.l.b16 %v3008
    %v5642 = vunpack.c.h.b16 %v3008
    %v5643 = vunpack.c.l.b16 %v3009
    %v5644 = vunpack.c.h.b16 %v3009
    %v5645 = vunpack.c.l.b16 %v3010
    %v5646 = vunpack.c.h.b16 %v3010
    %v5647 = vunpack.c.l.b16 %v3011
    %v5648 = vunpack.c.h.b16 %v3011
    %v5649 = vunpack.c.l.b16 %v3012
    %v5650 = vunpack.c.h.b16 %v3012
    %v5651 = vunpack.c.l.b16 %v3013
    %v5652 = vunpack.c.h.b16 %v3013
    %v5653 = vunpack.c.l.b16 %v3014
    %v5654 = vunpack.c.h.b16 %v3014
    %v5655 = vunpack.c.l.b16 %v3015
    %v5656 = vunpack.c.h.b16 %v3015
    %v5657 = vunpack.c.l.b16 %v3016
    %v5658 = vunpack.c.h.b16 %v3016
    %v5659 = vunpack.c.l.b16 %v3017
    %v5660 = vunpack.c.h.b16 %v3017
    %v5661 = vunpack.c.l.b16 %v3018
    %v5662 = vunpack.c.h.b16 %v3018
    %v5663 = vunpack.c.l.b16 %v3019
    %v5664 = vunpack.c.h.b16 %v3019
    %v5665 = vunpack.c.l.b16 %v3020
    %v5666 = vunpack.c.h.b16 %v3020
    %v5667 = vunpack.c.l.b16 %v3021
    %v5668 = vunpack.c.h.b16 %v3021
    %v5669 = vunpack.c.l.b16 %v3022
    %v5670 = vunpack.c.h.b16 %v3022
    %v5671 = vunpack.c.l.b16 %v3023
    %v5672 = vunpack.c.h.b16 %v3023
    %v5673 = vunpack.c.l.b16 %v3024
    %v5674 = vunpack.c.h.b16 %v3024
    %v5675 = vunpack.c.l.b16 %v3025
    %v5676 = vunpack.c.h.b16 %v3025
    %v5677 = vunpack.c.l.b16 %v3026
    %v5678 = vunpack.c.h.b16 %v3026
    %v5679 = vunpack.c.l.b16 %v3027
    %v5680 = vunpack.c.h.b16 %v3027
    %v5681 = vunpack.c.l.b16 %v3028
    %v5682 = vunpack.c.h.b16 %v3028
    %v5683 = vunpack.c.l.b16 %v3029
    %v5684 = vunpack.c.h.b16 %v3029
    %v5685 = vunpack.c.l.b16 %v3030
    %v5686 = vunpack.c.h.b16 %v3030
    %v5687 = vunpack.c.l.b16 %v3031
    %v5688 = vunpack.c.h.b16 %v3031
    %v5689 = vunpack.c.l.b16 %v3032
    %v5690 = vunpack.c.h.b16 %v3032
    %v5691 = vunpack.c.l.b16 %v3033
    %v5692 = vunpack.c.h.b16 %v3033
    %v5693 = vunpack.c.l.b16 %v3034
    %v5694 = vunpack.c.h.b16 %v3034
    %v5695 = vunpack.c.l.b16 %v3035
    %v5696 = vunpack.c.h.b16 %v3035
    %v5697 = vunpack.c.l.b16 %v3036
    %v5698 = vunpack.c.h.b16 %v3036
    %v5699 = vunpack.c.l.b16 %v3037
    %v5700 = vunpack.c.h.b16 %v3037
    %v5701 = vunpack.c.l.b16 %v3038
    %v5702 = vunpack.c.h.b16 %v3038
    %v5703 = vunpack.c.l.b16 %v3039
    %v5704 = vunpack.c.h.b16 %v3039
    %v5705 = vunpack.c.l.b16 %v3040
    %v5706 = vunpack.c.h.b16 %v3040
    %v5707 = vunpack.c.l.b16 %v3041
    %v5708 = vunpack.c.h.b16 %v3041
    %v5709 = vunpack.c.l.b16 %v3042
    %v5710 = vunpack.c.h.b16 %v3042
    %v5711 = vunpack.c.l.b16 %v3043
    %v5712 = vunpack.c.h.b16 %v3043
    %v5713 = vunpack.c.l.b16 %v3044
    %v5714 = vunpack.c.h.b16 %v3044
    %v5715 = vunpack.c.l.b16 %v3045
    %v5716 = vunpack.c.h.b16 %v3045
    %v5717 = vunpack.c.l.b16 %v3046
    %v5718 = vunpack.c.h.b16 %v3046
    %v5719 = vunpack.c.l.b16 %v3047
    %v5720 = vunpack.c.h.b16 %v3047
    %v5721 = vunpack.c.l.b16 %v3048
    %v5722 = vunpack.c.h.b16 %v3048
    %v5723 = vunpack.c.l.b16 %v3049
    %v5724 = vunpack.c.h.b16 %v3049
    %v5725 = vunpack.c.l.b16 %v3050
    %v5726 = vunpack.c.h.b16 %v3050
    %v5727 = vunpack.c.l.b16 %v3051
    %v5728 = vunpack.c.h.b16 %v3051
    %v5729 = vunpack.c.l.b16 %v3052
    %v5730 = vunpack.c.h.b16 %v3052
    %v5731 = vunpack.c.l.b16 %v3053
    %v5732 = vunpack.c.h.b16 %v3053
    %v5733 = vunpack.c.l.b16 %v3054
    %v5734 = vunpack.c.h.b16 %v3054
    %v5735 = vunpack.c.l.b16 %v3055
    %v5736 = vunpack.c.h.b16 %v3055
    %v5737 = vunpack.c.l.b16 %v3056
    %v5738 = vunpack.c.h.b16 %v3056
    %v5739 = vunpack.c.l.b16 %v3057
    %v5740 = vunpack.c.h.b16 %v3057
    %v5741 = vunpack.c.l.b16 %v3058
    %v5742 = vunpack.c.h.b16 %v3058
    %v5743 = vunpack.c.l.b16 %v3059
    %v5744 = vunpack.c.h.b16 %v3059
    %v5745 = vunpack.c.l.b16 %v3060
    %v5746 = vunpack.c.h.b16 %v3060
    %v5747 = vunpack.c.l.b16 %v3061
    %v5748 = vunpack.c.h.b16 %v3061
    %v5749 = vunpack.c.l.b16 %v3062
    %v5750 = vunpack.c.h.b16 %v3062
    %v5751 = vunpack.c.l.b16 %v3063
    %v5752 = vunpack.c.h.b16 %v3063
    %v5753 = vunpack.c.l.b16 %v3064
    %v5754 = vunpack.c.h.b16 %v3064
    %v5755 = vunpack.c.l.b16 %v3065
    %v5756 = vunpack.c.h.b16 %v3065
    %v5757 = vunpack.c.l.b16 %v3066
    %v5758 = vunpack.c.h.b16 %v3066
    %v5759 = vunpack.c.l.b16 %v3067
    %v5760 = vunpack.c.h.b16 %v3067
    %v5761 = vunpack.c.l.b16 %v3068
    %v5762 = vunpack.c.h.b16 %v3068
    %v5763 = vunpack.c.l.b16 %v3069
    %v5764 = vunpack.c.h.b16 %v3069
    %v5765 = vunpack.c.l.b16 %v3070
    %v5766 = vunpack.c.h.b16 %v3070
    %v5767 = vunpack.c.l.b16 %v3071
    %v5768 = vunpack.c.h.b16 %v3071
    %v5769 = vunpack.c.l.b16 %v3072
    %v5770 = vunpack.c.h.b16 %v3072
    %v5771 = vunpack.c.l.b16 %v3073
    %v5772 = vunpack.c.h.b16 %v3073
    %v5773 = vunpack.c.l.b16 %v3074
    %v5774 = vunpack.c.h.b16 %v3074
    %v5775 = vunpack.c.l.b16 %v3075
    %v5776 = vunpack.c.h.b16 %v3075
    %v5777 = vunpack.c.l.b16 %v3076
    %v5778 = vunpack.c.h.b16 %v3076
    %v5779 = vunpack.c.l.b16 %v3077
    %v5780 = vunpack.c.h.b16 %v3077
    %v5781 = vunpack.c.l.b16 %v3078
    %v5782 = vunpack.c.h.b16 %v3078
    %v5783 = vunpack.c.l.b16 %v3079
    %v5784 = vunpack.c.h.b16 %v3079
    %v5785 = vunpack.c.l.b16 %v3080
    %v5786 = vunpack.c.h.b16 %v3080
    %v5787 = vunpack.c.l.b16 %v3081
    %v5788 = vunpack.c.h.b16 %v3081
    %v5789 = vunpack.c.l.b16 %v3082
    %v5790 = vunpack.c.h.b16 %v3082
    %v5791 = vunpack.c.l.b16 %v3083
    %v5792 = vunpack.c.h.b16 %v3083
    %v5793 = vunpack.c.l.b16 %v3084
    %v5794 = vunpack.c.h.b16 %v3084
    %v5795 = vunpack.c.l.b16 %v3085
    %v5796 = vunpack.c.h.b16 %v3085
    %v5797 = vunpack.c.l.b16 %v3086
    %v5798 = vunpack.c.h.b16 %v3086
    %v5799 = vunpack.c.l.b16 %v3087
    %v5800 = vunpack.c.h.b16 %v3087
    %v5801 = vunpack.c.l.b16 %v3088
    %v5802 = vunpack.c.h.b16 %v3088
    %v5803 = vunpack.c.l.b16 %v3089
    %v5804 = vunpack.c.h.b16 %v3089
    %v5805 = vunpack.c.l.b16 %v3090
    %v5806 = vunpack.c.h.b16 %v3090
    %v5807 = vunpack.c.l.b16 %v3091
    %v5808 = vunpack.c.h.b16 %v3091
    %v5809 = vunpack.c.l.b16 %v3092
    %v5810 = vunpack.c.h.b16 %v3092
    %v5811 = vunpack.c.l.b16 %v3093
    %v5812 = vunpack.c.h.b16 %v3093
    %v5813 = vunpack.c.l.b16 %v3094
    %v5814 = vunpack.c.h.b16 %v3094
    %v5815 = vunpack.c.l.b16 %v3095
    %v5816 = vunpack.c.h.b16 %v3095
    %v5817 = vunpack.c.l.b16 %v3096
    %v5818 = vunpack.c.h.b16 %v3096
    %v5819 = vunpack.c.l.b16 %v3097
    %v5820 = vunpack.c.h.b16 %v3097
    %v5821 = vunpack.c.l.b16 %v3098
    %v5822 = vunpack.c.h.b16 %v3098
    %v5823 = vunpack.c.l.b16 %v3099
    %v5824 = vunpack.c.h.b16 %v3099
    %v5825 = vunpack.c.l.b16 %v3100
    %v5826 = vunpack.c.h.b16 %v3100
    %v5827 = vunpack.c.l.b16 %v3101
    %v5828 = vunpack.c.h.b16 %v3101
    %v5829 = vunpack.c.l.b16 %v3102
    %v5830 = vunpack.c.h.b16 %v3102
    %v5831 = vunpack.c.l.b16 %v3103
    %v5832 = vunpack.c.h.b16 %v3103
    %v5833 = vunpack.c.l.b16 %v3104
    %v5834 = vunpack.c.h.b16 %v3104
    %v5835 = vunpack.c.l.b16 %v3105
    %v5836 = vunpack.c.h.b16 %v3105
    %v5837 = vunpack.c.l.b16 %v3106
    %v5838 = vunpack.c.h.b16 %v3106
    %v5839 = vunpack.c.l.b16 %v3107
    %v5840 = vunpack.c.h.b16 %v3107
    %v5841 = vunpack.c.l.b16 %v3108
    %v5842 = vunpack.c.h.b16 %v3108
    %v5843 = vunpack.c.l.b16 %v3109
    %v5844 = vunpack.c.h.b16 %v3109
    %v5845 = vunpack.c.l.b16 %v3110
    %v5846 = vunpack.c.h.b16 %v3110
    %v5847 = vunpack.c.l.b16 %v3111
    %v5848 = vunpack.c.h.b16 %v3111
    %v5849 = vunpack.c.l.b16 %v3112
    %v5850 = vunpack.c.h.b16 %v3112
    %v5851 = vunpack.c.l.b16 %v3113
    %v5852 = vunpack.c.h.b16 %v3113
    %v5853 = vunpack.c.l.b16 %v3114
    %v5854 = vunpack.c.h.b16 %v3114
    %v5855 = vunpack.c.l.b16 %v3115
    %v5856 = vunpack.c.h.b16 %v3115
    %v5857 = vunpack.c.l.b16 %v3116
    %v5858 = vunpack.c.h.b16 %v3116
    %v5859 = vunpack.c.l.b16 %v3117
    %v5860 = vunpack.c.h.b16 %v3117
    %v5861 = vunpack.c.l.b16 %v3118
    %v5862 = vunpack.c.h.b16 %v3118
    %v5863 = vunpack.c.l.b16 %v3119
    %v5864 = vunpack.c.h.b16 %v3119
    %v5865 = vunpack.c.l.b16 %v3120
    %v5866 = vunpack.c.h.b16 %v3120
    %v5867 = vunpack.c.l.b16 %v3121
    %v5868 = vunpack.c.h.b16 %v3121
    %v5869 = vunpack.c.l.b16 %v3122
    %v5870 = vunpack.c.h.b16 %v3122
    %v5871 = vunpack.c.l.b16 %v3123
    %v5872 = vunpack.c.h.b16 %v3123
    %v5873 = vunpack.c.l.b16 %v3124
    %v5874 = vunpack.c.h.b16 %v3124
    %v5875 = vunpack.c.l.b16 %v3125
    %v5876 = vunpack.c.h.b16 %v3125
    %v5877 = vunpack.c.l.b16 %v3126
    %v5878 = vunpack.c.h.b16 %v3126
    %v5879 = vunpack.c.l.b16 %v3127
    %v5880 = vunpack.c.h.b16 %v3127
    %v5881 = vunpack.c.l.b16 %v3128
    %v5882 = vunpack.c.h.b16 %v3128
    %v5883 = vunpack.c.l.b16 %v3129
    %v5884 = vunpack.c.h.b16 %v3129
    %v5885 = vunpack.c.l.b16 %v3130
    %v5886 = vunpack.c.h.b16 %v3130
    %v5887 = vunpack.c.l.b16 %v3131
    %v5888 = vunpack.c.h.b16 %v3131
    %v5889 = vunpack.c.l.b16 %v3132
    %v5890 = vunpack.c.h.b16 %v3132
    %v5891 = vunpack.c.l.b16 %v3133
    %v5892 = vunpack.c.h.b16 %v3133
    %v5893 = vunpack.c.l.b16 %v3134
    %v5894 = vunpack.c.h.b16 %v3134
    %v5895 = vunpack.c.l.b16 %v3135
    %v5896 = vunpack.c.h.b16 %v3135
    %v5897 = vunpack.c.l.b16 %v3136
    %v5898 = vunpack.c.h.b16 %v3136
    %v5899 = vunpack.c.l.b16 %v3137
    %v5900 = vunpack.c.h.b16 %v3137
    %v5901 = vunpack.c.l.b16 %v3138
    %v5902 = vunpack.c.h.b16 %v3138
    %v5903 = vunpack.c.l.b16 %v3139
    %v5904 = vunpack.c.h.b16 %v3139
    %v5905 = vunpack.c.l.b16 %v3140
    %v5906 = vunpack.c.h.b16 %v3140
    %v5907 = vunpack.c.l.b16 %v3141
    %v5908 = vunpack.c.h.b16 %v3141
    %v5909 = vunpack.c.l.b16 %v3142
    %v5910 = vunpack.c.h.b16 %v3142
    %v5911 = vunpack.c.l.b16 %v3143
    %v5912 = vunpack.c.h.b16 %v3143
    %v5913 = vunpack.c.l.b16 %v3144
    %v5914 = vunpack.c.h.b16 %v3144
    %v5915 = vunpack.c.l.b16 %v3145
    %v5916 = vunpack.c.h.b16 %v3145
    %v5917 = vunpack.c.l.b16 %v3146
    %v5918 = vunpack.c.h.b16 %v3146
    %v5919 = vunpack.c.l.b16 %v3147
    %v5920 = vunpack.c.h.b16 %v3147
    %v5921 = vunpack.c.l.b16 %v3148
    %v5922 = vunpack.c.h.b16 %v3148
    %v5923 = vunpack.c.l.b16 %v3149
    %v5924 = vunpack.c.h.b16 %v3149
    %v5925 = vunpack.c.l.b16 %v3150
    %v5926 = vunpack.c.h.b16 %v3150
    %v5927 = vunpack.c.l.b16 %v3151
    %v5928 = vunpack.c.h.b16 %v3151
    %v5929 = vunpack.c.l.b16 %v3152
    %v5930 = vunpack.c.h.b16 %v3152
    %v5931 = vunpack.c.l.b16 %v3153
    %v5932 = vunpack.c.h.b16 %v3153
    %v5933 = vunpack.c.l.b16 %v3154
    %v5934 = vunpack.c.h.b16 %v3154
    %v5935 = vunpack.c.l.b16 %v3155
    %v5936 = vunpack.c.h.b16 %v3155
    %v5937 = vunpack.c.l.b16 %v3156
    %v5938 = vunpack.c.h.b16 %v3156
    %v5939 = vunpack.c.l.b16 %v3157
    %v5940 = vunpack.c.h.b16 %v3157
    %v5941 = vunpack.c.l.b16 %v3158
    %v5942 = vunpack.c.h.b16 %v3158
    %v5943 = vunpack.c.l.b16 %v3159
    %v5944 = vunpack.c.h.b16 %v3159
    %v5945 = vunpack.c.l.b16 %v3160
    %v5946 = vunpack.c.h.b16 %v3160
    %v5947 = vunpack.c.l.b16 %v3161
    %v5948 = vunpack.c.h.b16 %v3161
    %v5949 = vunpack.c.l.b16 %v3162
    %v5950 = vunpack.c.h.b16 %v3162
    %v5951 = vunpack.c.l.b16 %v3163
    %v5952 = vunpack.c.h.b16 %v3163
    %v5953 = vunpack.c.l.b16 %v3164
    %v5954 = vunpack.c.h.b16 %v3164
    %v5955 = vunpack.c.l.b16 %v3165
    %v5956 = vunpack.c.h.b16 %v3165
    %v5957 = vunpack.c.l.b16 %v3166
    %v5958 = vunpack.c.h.b16 %v3166
    %v5959 = vunpack.c.l.b16 %v3167
    %v5960 = vunpack.c.h.b16 %v3167
    %v5961 = vunpack.c.l.b16 %v3168
    %v5962 = vunpack.c.h.b16 %v3168
    %v5963 = vunpack.c.l.b16 %v3169
    %v5964 = vunpack.c.h.b16 %v3169
    %v5965 = vunpack.c.l.b16 %v3170
    %v5966 = vunpack.c.h.b16 %v3170
    %v5967 = vunpack.c.l.b16 %v3171
    %v5968 = vunpack.c.h.b16 %v3171
    %v5969 = vunpack.c.l.b16 %v3172
    %v5970 = vunpack.c.h.b16 %v3172
    %v5971 = vunpack.c.l.b16 %v3173
    %v5972 = vunpack.c.h.b16 %v3173
    %v5973 = vunpack.c.l.b16 %v3174
    %v5974 = vunpack.c.h.b16 %v3174
    %v5975 = vunpack.c.l.b16 %v3175
    %v5976 = vunpack.c.h.b16 %v3175
    %v5977 = vunpack.c.l.b16 %v3176
    %v5978 = vunpack.c.h.b16 %v3176
    %v5979 = vunpack.c.l.b16 %v3177
    %v5980 = vunpack.c.h.b16 %v3177
    %v5981 = vunpack.c.l.b16 %v3178
    %v5982 = vunpack.c.h.b16 %v3178
    %v5983 = vunpack.c.l.b16 %v3179
    %v5984 = vunpack.c.h.b16 %v3179
    %v5985 = vunpack.c.l.b16 %v3180
    %v5986 = vunpack.c.h.b16 %v3180
    %v5987 = vunpack.c.l.b16 %v3181
    %v5988 = vunpack.c.h.b16 %v3181
    %v5989 = vunpack.c.l.b16 %v3182
    %v5990 = vunpack.c.h.b16 %v3182
    %v5991 = vunpack.c.l.b16 %v3183
    %v5992 = vunpack.c.h.b16 %v3183
    %v5993 = vunpack.c.l.b16 %v3184
    %v5994 = vunpack.c.h.b16 %v3184
    %v5995 = vunpack.c.l.b16 %v3185
    %v5996 = vunpack.c.h.b16 %v3185
    %v5997 = vunpack.c.l.b16 %v3186
    %v5998 = vunpack.c.h.b16 %v3186
    %v5999 = vunpack.c.l.b16 %v3187
    %v6000 = vunpack.c.h.b16 %v3187
    %v6001 = vunpack.c.l.b16 %v3188
    %v6002 = vunpack.c.h.b16 %v3188
    %v6003 = vunpack.c.l.b16 %v3189
    %v6004 = vunpack.c.h.b16 %v3189
    %v6005 = vunpack.c.l.b16 %v3190
    %v6006 = vunpack.c.h.b16 %v3190
    %v6007 = vunpack.c.l.b16 %v3191
    %v6008 = vunpack.c.h.b16 %v3191
    %v6009 = vunpack.c.l.b16 %v3192
    %v6010 = vunpack.c.h.b16 %v3192
    %v6011 = vunpack.c.l.b16 %v3193
    %v6012 = vunpack.c.h.b16 %v3193
    %v6013 = vunpack.c.l.b16 %v3194
    %v6014 = vunpack.c.h.b16 %v3194
    %v6015 = vunpack.c.l.b16 %v3195
    %v6016 = vunpack.c.h.b16 %v3195
    %v6017 = vunpack.c.l.b16 %v3196
    %v6018 = vunpack.c.h.b16 %v3196
    %v6019 = vunpack.c.l.b16 %v3197
    %v6020 = vunpack.c.h.b16 %v3197
    %v6021 = vunpack.c.l.b16 %v3198
    %v6022 = vunpack.c.h.b16 %v3198
    %v6023 = vunpack.c.l.b16 %v3199
    %v6024 = vunpack.c.h.b16 %v3199
    %v6025 = vunpack.c.l.b16 %v3200
    %v6026 = vunpack.c.h.b16 %v3200
    %v6027 = vunpack.c.l.b16 %v3201
    %v6028 = vunpack.c.h.b16 %v3201
    %v6029 = vunpack.c.l.b16 %v3202
    %v6030 = vunpack.c.h.b16 %v3202
    %v6031 = vunpack.c.l.b16 %v3203
    %v6032 = vunpack.c.h.b16 %v3203
    %v6033 = vunpack.c.l.b16 %v3204
    %v6034 = vunpack.c.h.b16 %v3204
    %v6035 = vunpack.c.l.b16 %v3205
    %v6036 = vunpack.c.h.b16 %v3205
    %v6037 = vunpack.c.l.b16 %v3206
    %v6038 = vunpack.c.h.b16 %v3206
    %v6039 = vunpack.c.l.b16 %v3207
    %v6040 = vunpack.c.h.b16 %v3207
    %v6041 = vunpack.c.l.b16 %v3208
    %v6042 = vunpack.c.h.b16 %v3208
    %v6043 = vunpack.c.l.b16 %v3209
    %v6044 = vunpack.c.h.b16 %v3209
    %v6045 = vunpack.c.l.b16 %v3210
    %v6046 = vunpack.c.h.b16 %v3210
    %v6047 = vunpack.c.l.b16 %v3211
    %v6048 = vunpack.c.h.b16 %v3211
    %v6049 = vunpack.c.l.b16 %v3212
    %v6050 = vunpack.c.h.b16 %v3212
    %v6051 = vunpack.c.l.b16 %v3213
    %v6052 = vunpack.c.h.b16 %v3213
    %v6053 = vunpack.c.l.b16 %v3214
    %v6054 = vunpack.c.h.b16 %v3214
    %v6055 = vunpack.c.l.b16 %v3215
    %v6056 = vunpack.c.h.b16 %v3215
    %v6057 = vunpack.c.l.b16 %v3216
    %v6058 = vunpack.c.h.b16 %v3216
    %v6059 = vunpack.c.l.b16 %v3217
    %v6060 = vunpack.c.h.b16 %v3217
    %v6061 = vunpack.c.l.b16 %v3218
    %v6062 = vunpack.c.h.b16 %v3218
    %v6063 = vunpack.c.l.b16 %v3219
    %v6064 = vunpack.c.h.b16 %v3219
    %v6065 = vunpack.c.l.b16 %v3220
    %v6066 = vunpack.c.h.b16 %v3220
    %v6067 = vunpack.c.l.b16 %v3221
    %v6068 = vunpack.c.h.b16 %v3221
    %v6069 = vunpack.c.l.b16 %v3222
    %v6070 = vunpack.c.h.b16 %v3222
    %v6071 = vunpack.c.l.b16 %v3223
    %v6072 = vunpack.c.h.b16 %v3223
    %v6073 = vunpack.c.l.b16 %v3224
    %v6074 = vunpack.c.h.b16 %v3224
    %v6075 = vunpack.c.l.b16 %v3225
    %v6076 = vunpack.c.h.b16 %v3225
    %v6077 = vunpack.c.l.b16 %v3226
    %v6078 = vunpack.c.h.b16 %v3226
    %v6079 = vunpack.c.l.b16 %v3227
    %v6080 = vunpack.c.h.b16 %v3227
    %v6081 = vunpack.c.l.b16 %v3228
    %v6082 = vunpack.c.h.b16 %v3228
    %v6083 = vunpack.c.l.b16 %v3229
    %v6084 = vunpack.c.h.b16 %v3229
    %v6085 = vunpack.c.l.b16 %v3230
    %v6086 = vunpack.c.h.b16 %v3230
    %v6087 = vunpack.c.l.b16 %v3231
    %v6088 = vunpack.c.h.b16 %v3231
    %v6089 = vunpack.c.l.b16 %v3232
    %v6090 = vunpack.c.h.b16 %v3232
    %v6091 = vunpack.c.l.b16 %v3233
    %v6092 = vunpack.c.h.b16 %v3233
    %v6093 = vunpack.c.l.b16 %v3234
    %v6094 = vunpack.c.h.b16 %v3234
    %v6095 = vunpack.c.l.b16 %v3235
    %v6096 = vunpack.c.h.b16 %v3235
    %v6097 = vunpack.c.l.b16 %v3236
    %v6098 = vunpack.c.h.b16 %v3236
    %v6099 = vunpack.c.l.b16 %v3237
    %v6100 = vunpack.c.h.b16 %v3237
    %v6101 = vunpack.c.l.b16 %v3238
    %v6102 = vunpack.c.h.b16 %v3238
    %v6103 = vunpack.c.l.b16 %v3239
    %v6104 = vunpack.c.h.b16 %v3239
    %v6105 = vunpack.c.l.b16 %v3240
    %v6106 = vunpack.c.h.b16 %v3240
    %v6107 = vunpack.c.l.b16 %v3241
    %v6108 = vunpack.c.h.b16 %v3241
    %v6109 = vunpack.c.l.b16 %v3242
    %v6110 = vunpack.c.h.b16 %v3242
    %v6111 = vunpack.c.l.b16 %v3243
    %v6112 = vunpack.c.h.b16 %v3243
    %v6113 = vunpack.c.l.b16 %v3244
    %v6114 = vunpack.c.h.b16 %v3244
    %v6115 = vunpack.c.l.b16 %v3245
    %v6116 = vunpack.c.h.b16 %v3245
    %v6117 = vunpack.c.l.b16 %v3246
    %v6118 = vunpack.c.h.b16 %v3246
    %v6119 = vunpack.c.l.b16 %v3247
    %v6120 = vunpack.c.h.b16 %v3247
    %v6121 = vunpack.c.l.b16 %v3248
    %v6122 = vunpack.c.h.b16 %v3248
    %v6123 = vunpack.c.l.b16 %v3249
    %v6124 = vunpack.c.h.b16 %v3249
    %v6125 = vunpack.c.l.b16 %v3250
    %v6126 = vunpack.c.h.b16 %v3250
    %v6127 = vunpack.c.l.b16 %v3251
    %v6128 = vunpack.c.h.b16 %v3251
    %v6129 = vunpack.c.l.b16 %v3252
    %v6130 = vunpack.c.h.b16 %v3252
    %v6131 = vunpack.c.l.b16 %v3253
    %v6132 = vunpack.c.h.b16 %v3253
    %v6133 = vunpack.c.l.b16 %v3254
    %v6134 = vunpack.c.h.b16 %v3254
    %v6135 = vunpack.c.l.b16 %v3255
    %v6136 = vunpack.c.h.b16 %v3255
    %v6137 = vunpack.c.l.b16 %v3256
    %v6138 = vunpack.c.h.b16 %v3256
    %v6139 = vunpack.c.l.b16 %v3257
    %v6140 = vunpack.c.h.b16 %v3257
    %v6141 = vunpack.c.l.b16 %v3258
    %v6142 = vunpack.c.h.b16 %v3258
    %v6143 = vunpack.c.l.b16 %v3259
    %v6144 = vunpack.c.h.b16 %v3259
    %v6145 = vunpack.c.l.b16 %v3260
    %v6146 = vunpack.c.h.b16 %v3260
    %v6147 = vunpack.c.l.b16 %v3261
    %v6148 = vunpack.c.h.b16 %v3261
    %v6149 = vunpack.c.l.b16 %v3262
    %v6150 = vunpack.c.h.b16 %v3262
    %v6151 = vunpack.c.l.b16 %v3263
    %v6152 = vunpack.c.h.b16 %v3263
    %v6153 = vunpack.c.l.b16 %v3264
    %v6154 = vunpack.c.h.b16 %v3264
    %v6155 = vunpack.c.l.b16 %v3265
    %v6156 = vunpack.c.h.b16 %v3265
    %v6157 = vunpack.c.l.b16 %v3266
    %v6158 = vunpack.c.h.b16 %v3266
    %v6159 = vunpack.c.l.b16 %v3267
    %v6160 = vunpack.c.h.b16 %v3267
    %v6161 = vunpack.c.l.b16 %v3268
    %v6162 = vunpack.c.h.b16 %v3268
    %v6163 = vunpack.c.l.b16 %v3269
    %v6164 = vunpack.c.h.b16 %v3269
    %v6165 = vunpack.c.l.b16 %v3270
    %v6166 = vunpack.c.h.b16 %v3270
    %v6167 = vunpack.c.l.b16 %v3271
    %v6168 = vunpack.c.h.b16 %v3271
    %v6169 = vunpack.c.l.b16 %v3272
    %v6170 = vunpack.c.h.b16 %v3272
    %v6171 = vunpack.c.l.b16 %v3273
    %v6172 = vunpack.c.h.b16 %v3273
    %v6173 = vunpack.c.l.b16 %v3274
    %v6174 = vunpack.c.h.b16 %v3274
    %v6175 = vunpack.c.l.b16 %v3275
    %v6176 = vunpack.c.h.b16 %v3275
    %v6177 = vunpack.c.l.b16 %v3276
    %v6178 = vunpack.c.h.b16 %v3276
    %v6179 = vunpack.c.l.b16 %v3277
    %v6180 = vunpack.c.h.b16 %v3277
    %v6181 = vunpack.c.l.b16 %v3278
    %v6182 = vunpack.c.h.b16 %v3278
    %v6183 = vunpack.c.l.b16 %v3279
    %v6184 = vunpack.c.h.b16 %v3279
    %v6185 = vunpack.c.l.b16 %v3280
    %v6186 = vunpack.c.h.b16 %v3280
    %v6187 = vunpack.c.l.b16 %v3281
    %v6188 = vunpack.c.h.b16 %v3281
    %v6189 = vunpack.c.l.b16 %v3282
    %v6190 = vunpack.c.h.b16 %v3282
    %v6191 = vunpack.c.l.b16 %v3283
    %v6192 = vunpack.c.h.b16 %v3283
    %v6193 = vunpack.c.l.b16 %v3284
    %v6194 = vunpack.c.h.b16 %v3284
    %v6195 = vunpack.c.l.b16 %v3285
    %v6196 = vunpack.c.h.b16 %v3285
    %v6197 = vunpack.c.l.b16 %v3286
    %v6198 = vunpack.c.h.b16 %v3286
    %v6199 = vunpack.c.l.b16 %v3287
    %v6200 = vunpack.c.h.b16 %v3287
    %v6201 = vunpack.c.l.b16 %v3288
    %v6202 = vunpack.c.h.b16 %v3288
    %v6203 = vunpack.c.l.b16 %v3289
    %v6204 = vunpack.c.h.b16 %v3289
    %v6205 = vunpack.c.l.b16 %v3290
    %v6206 = vunpack.c.h.b16 %v3290
    %v6207 = vunpack.c.l.b16 %v3291
    %v6208 = vunpack.c.h.b16 %v3291
    %v6209 = vunpack.c.l.b16 %v3292
    %v6210 = vunpack.c.h.b16 %v3292
    %v6211 = vunpack.c.l.b16 %v3293
    %v6212 = vunpack.c.h.b16 %v3293
    %v6213 = vunpack.c.l.b16 %v3294
    %v6214 = vunpack.c.h.b16 %v3294
    %v6215 = vunpack.c.l.b16 %v3295
    %v6216 = vunpack.c.h.b16 %v3295
    %v6217 = vunpack.c.l.b16 %v3296
    %v6218 = vunpack.c.h.b16 %v3296
    %v6219 = vunpack.c.l.b16 %v3297
    %v6220 = vunpack.c.h.b16 %v3297
    %v6221 = vunpack.c.l.b16 %v3298
    %v6222 = vunpack.c.h.b16 %v3298
    %v6223 = vunpack.c.l.b16 %v3299
    %v6224 = vunpack.c.h.b16 %v3299
    %v6225 = vunpack.c.l.b16 %v3300
    %v6226 = vunpack.c.h.b16 %v3300
    %v6227 = vunpack.c.l.b16 %v3301
    %v6228 = vunpack.c.h.b16 %v3301
    %v6229 = vunpack.c.l.b16 %v3302
    %v6230 = vunpack.c.h.b16 %v3302
    %v6231 = vunpack.c.l.b16 %v3303
    %v6232 = vunpack.c.h.b16 %v3303
    %v6233 = vunpack.c.l.b16 %v3304
    %v6234 = vunpack.c.h.b16 %v3304
    %v6235 = vunpack.c.l.b16 %v3305
    %v6236 = vunpack.c.h.b16 %v3305
    %v6237 = vunpack.c.l.b16 %v3306
    %v6238 = vunpack.c.h.b16 %v3306
    %v6239 = vunpack.c.l.b16 %v3307
    %v6240 = vunpack.c.h.b16 %v3307
    %v6241 = vunpack.c.l.b16 %v3308
    %v6242 = vunpack.c.h.b16 %v3308
    %v6243 = vunpack.c.l.b16 %v3309
    %v6244 = vunpack.c.h.b16 %v3309
    %v6245 = vunpack.c.l.b16 %v3310
    %v6246 = vunpack.c.h.b16 %v3310
    %v6247 = vunpack.c.l.b16 %v3311
    %v6248 = vunpack.c.h.b16 %v3311
    %v6249 = vunpack.c.l.b16 %v3312
    %v6250 = vunpack.c.h.b16 %v3312
    %v6251 = vunpack.c.l.b16 %v3313
    %v6252 = vunpack.c.h.b16 %v3313
    %v6253 = vunpack.c.l.b16 %v3314
    %v6254 = vunpack.c.h.b16 %v3314
    %v6255 = vunpack.c.l.b16 %v3315
    %v6256 = vunpack.c.h.b16 %v3315
    %v6257 = vunpack.c.l.b16 %v3316
    %v6258 = vunpack.c.h.b16 %v3316
    %v6259 = vunpack.c.l.b16 %v3317
    %v6260 = vunpack.c.h.b16 %v3317
    %v6261 = vunpack.c.l.b16 %v3318
    %v6262 = vunpack.c.h.b16 %v3318
    %v6263 = vunpack.c.l.b16 %v3319
    %v6264 = vunpack.c.h.b16 %v3319
    %v6265 = vunpack.c.l.b16 %v3320
    %v6266 = vunpack.c.h.b16 %v3320
    %v6267 = vunpack.c.l.b16 %v3321
    %v6268 = vunpack.c.h.b16 %v3321
    %v6269 = vunpack.c.l.b16 %v3322
    %v6270 = vunpack.c.h.b16 %v3322
    %v6271 = vunpack.c.l.b16 %v3323
    %v6272 = vunpack.c.h.b16 %v3323
    %v6273 = vunpack.c.l.b16 %v3324
    %v6274 = vunpack.c.h.b16 %v3324
    %v6275 = vunpack.c.l.b16 %v3325
    %v6276 = vunpack.c.h.b16 %v3325
    %v6277 = vunpack.c.l.b16 %v3326
    %v6278 = vunpack.c.h.b16 %v3326
    %v6279 = vunpack.c.l.b16 %v3327
    %v6280 = vunpack.c.h.b16 %v3327
    %v6281 = vunpack.c.l.b16 %v3328
    %v6282 = vunpack.c.h.b16 %v3328
    %v6283 = vunpack.c.l.b16 %v3329
    %v6284 = vunpack.c.h.b16 %v3329
    %v6285 = vunpack.c.l.b16 %v3330
    %v6286 = vunpack.c.h.b16 %v3330
    %v6287 = vunpack.c.l.b16 %v3331
    %v6288 = vunpack.c.h.b16 %v3331
    %v6289 = vunpack.c.l.b16 %v3332
    %v6290 = vunpack.c.h.b16 %v3332
    %v6291 = vunpack.c.l.b16 %v3333
    %v6292 = vunpack.c.h.b16 %v3333
    %v6293 = vunpack.c.l.b16 %v3334
    %v6294 = vunpack.c.h.b16 %v3334
    %v6295 = vunpack.c.l.b16 %v3335
    %v6296 = vunpack.c.h.b16 %v3335
    %v6297 = vunpack.c.l.b16 %v3336
    %v6298 = vunpack.c.h.b16 %v3336
    %v6299 = vunpack.c.l.b16 %v3337
    %v6300 = vunpack.c.h.b16 %v3337
    %v6301 = vunpack.c.l.b16 %v3338
    %v6302 = vunpack.c.h.b16 %v3338
    %v6303 = vunpack.c.l.b16 %v3339
    %v6304 = vunpack.c.h.b16 %v3339
    %v6305 = vunpack.c.l.b16 %v3340
    %v6306 = vunpack.c.h.b16 %v3340
    %v6307 = vunpack.c.l.b16 %v3341
    %v6308 = vunpack.c.h.b16 %v3341
    %v6309 = vunpack.c.l.b16 %v3342
    %v6310 = vunpack.c.h.b16 %v3342
    %v6311 = vunpack.c.l.b16 %v3343
    %v6312 = vunpack.c.h.b16 %v3343
    %v6313 = vunpack.c.l.b16 %v3344
    %v6314 = vunpack.c.h.b16 %v3344
    %v6315 = vunpack.c.l.b16 %v3345
    %v6316 = vunpack.c.h.b16 %v3345
    %v6317 = vunpack.c.l.b16 %v3346
    %v6318 = vunpack.c.h.b16 %v3346
    %v6319 = vunpack.c.l.b16 %v3347
    %v6320 = vunpack.c.h.b16 %v3347
    %v6321 = vunpack.c.l.b16 %v3348
    %v6322 = vunpack.c.h.b16 %v3348
    %v6323 = vunpack.c.l.b16 %v3349
    %v6324 = vunpack.c.h.b16 %v3349
    %v6325 = vunpack.c.l.b16 %v3350
    %v6326 = vunpack.c.h.b16 %v3350
    %v6327 = vunpack.c.l.b16 %v3351
    %v6328 = vunpack.c.h.b16 %v3351
    %v6329 = vunpack.c.l.b16 %v3352
    %v6330 = vunpack.c.h.b16 %v3352
    %v6331 = vunpack.c.l.b16 %v3353
    %v6332 = vunpack.c.h.b16 %v3353
    %v6333 = vunpack.c.l.b16 %v3354
    %v6334 = vunpack.c.h.b16 %v3354
    %v6335 = vunpack.c.l.b16 %v3355
    %v6336 = vunpack.c.h.b16 %v3355
    %v6337 = vunpack.c.l.b16 %v3356
    %v6338 = vunpack.c.h.b16 %v3356
    %v6339 = vunpack.c.l.b16 %v3357
    %v6340 = vunpack.c.h.b16 %v3357
    %v6341 = vunpack.c.l.b16 %v3358
    %v6342 = vunpack.c.h.b16 %v3358
    %v6343 = vunpack.c.l.b16 %v3359
    %v6344 = vunpack.c.h.b16 %v3359
    %v6345 = vunpack.c.l.b16 %v3360
    %v6346 = vunpack.c.h.b16 %v3360
    %v6347 = vunpack.c.l.b16 %v3361
    %v6348 = vunpack.c.h.b16 %v3361
    %v6349 = vunpack.c.l.b16 %v3362
    %v6350 = vunpack.c.h.b16 %v3362
    %v6351 = vunpack.c.l.b16 %v3363
    %v6352 = vunpack.c.h.b16 %v3363
    %v6353 = vunpack.c.l.b16 %v3364
    %v6354 = vunpack.c.h.b16 %v3364
    %v6355 = vunpack.c.l.b16 %v3365
    %v6356 = vunpack.c.h.b16 %v3365
    %v6357 = vunpack.c.l.b16 %v3366
    %v6358 = vunpack.c.h.b16 %v3366
    %v6359 = vunpack.c.l.b16 %v3367
    %v6360 = vunpack.c.h.b16 %v3367
    %v6361 = vunpack.c.l.b16 %v3368
    %v6362 = vunpack.c.h.b16 %v3368
    %v6363 = vunpack.c.l.b16 %v3369
    %v6364 = vunpack.c.h.b16 %v3369
    %v6365 = vunpack.c.l.b16 %v3370
    %v6366 = vunpack.c.h.b16 %v3370
    %v6367 = vunpack.c.l.b16 %v3371
    %v6368 = vunpack.c.h.b16 %v3371
    %v6369 = vunpack.c.l.b16 %v3372
    %v6370 = vunpack.c.h.b16 %v3372
    %v6371 = vunpack.c.l.b16 %v3373
    %v6372 = vunpack.c.h.b16 %v3373
    %v6373 = vunpack.c.l.b16 %v3374
    %v6374 = vunpack.c.h.b16 %v3374
    %v6375 = vunpack.c.l.b16 %v3375
    %v6376 = vunpack.c.h.b16 %v3375
    %v6377 = vunpack.c.l.b16 %v3376
    %v6378 = vunpack.c.h.b16 %v3376
    %v6379 = vunpack.c.l.b16 %v3377
    %v6380 = vunpack.c.h.b16 %v3377
    %v6381 = vunpack.c.l.b16 %v3378
    %v6382 = vunpack.c.h.b16 %v3378
    %v6383 = vunpack.c.l.b16 %v3379
    %v6384 = vunpack.c.h.b16 %v3379
    %v6385 = vunpack.c.l.b16 %v3380
    %v6386 = vunpack.c.h.b16 %v3380
    %v6387 = vunpack.c.l.b16 %v3381
    %v6388 = vunpack.c.h.b16 %v3381
    %v6389 = vunpack.c.l.b16 %v3382
    %v6390 = vunpack.c.h.b16 %v3382
    %v6391 = vunpack.c.l.b16 %v3383
    %v6392 = vunpack.c.h.b16 %v3383
    %v6393 = vunpack.c.l.b16 %v3384
    %v6394 = vunpack.c.h.b16 %v3384
    %v6395 = vunpack.c.l.b16 %v3385
    %v6396 = vunpack.c.h.b16 %v3385
    %v6397 = vunpack.c.l.b16 %v3386
    %v6398 = vunpack.c.h.b16 %v3386
    %v6399 = vunpack.c.l.b16 %v3387
    %v6400 = vunpack.c.h.b16 %v3387
    %v6401 = vunpack.c.l.b16 %v3388
    %v6402 = vunpack.c.h.b16 %v3388
    %v6403 = vunpack.c.l.b16 %v3389
    %v6404 = vunpack.c.h.b16 %v3389
    %v6405 = vunpack.c.l.b16 %v3390
    %v6406 = vunpack.c.h.b16 %v3390
    %v6407 = vunpack.c.l.b16 %v3391
    %v6408 = vunpack.c.h.b16 %v3391
    %v6409 = vunpack.c.l.b16 %v3392
    %v6410 = vunpack.c.h.b16 %v3392
    %v6411 = vunpack.c.l.b16 %v3393
    %v6412 = vunpack.c.h.b16 %v3393
    %v6413 = vunpack.c.l.b16 %v3394
    %v6414 = vunpack.c.h.b16 %v3394
    %v6415 = vunpack.c.l.b16 %v3395
    %v6416 = vunpack.c.h.b16 %v3395
    %v6417 = vunpack.c.l.b16 %v3396
    %v6418 = vunpack.c.h.b16 %v3396
    %v6419 = vunpack.c.l.b16 %v3397
    %v6420 = vunpack.c.h.b16 %v3397
    %v6421 = vunpack.c.l.b16 %v3398
    %v6422 = vunpack.c.h.b16 %v3398
    %v6423 = vunpack.c.l.b16 %v3399
    %v6424 = vunpack.c.h.b16 %v3399
    %v6425 = vunpack.c.l.b16 %v3400
    %v6426 = vunpack.c.h.b16 %v3400
    %v6427 = vunpack.c.l.b16 %v3401
    %v6428 = vunpack.c.h.b16 %v3401
    %v6429 = vunpack.c.l.b16 %v3402
    %v6430 = vunpack.c.h.b16 %v3402
    %v6431 = vunpack.c.l.b16 %v3403
    %v6432 = vunpack.c.h.b16 %v3403
    %v6433 = vunpack.c.l.b16 %v3404
    %v6434 = vunpack.c.h.b16 %v3404
    %v6435 = vunpack.c.l.b16 %v3405
    %v6436 = vunpack.c.h.b16 %v3405
    %v6437 = vunpack.c.l.b16 %v3406
    %v6438 = vunpack.c.h.b16 %v3406
    %v6439 = vunpack.c.l.b16 %v3407
    %v6440 = vunpack.c.h.b16 %v3407
    %v6441 = vunpack.c.l.b16 %v3408
    %v6442 = vunpack.c.h.b16 %v3408
    %v6443 = vunpack.c.l.b16 %v3409
    %v6444 = vunpack.c.h.b16 %v3409
    %v6445 = vunpack.c.l.b16 %v3410
    %v6446 = vunpack.c.h.b16 %v3410
    %v6447 = vunpack.c.l.b16 %v3411
    %v6448 = vunpack.c.h.b16 %v3411
    %v6449 = vunpack.c.l.b16 %v3412
    %v6450 = vunpack.c.h.b16 %v3412
    %v6451 = vunpack.c.l.b16 %v3413
    %v6452 = vunpack.c.h.b16 %v3413
    %v6453 = vunpack.c.l.b16 %v3414
    %v6454 = vunpack.c.h.b16 %v3414
    %v6455 = vunpack.c.l.b16 %v3415
    %v6456 = vunpack.c.h.b16 %v3415
    %v6457 = vunpack.c.l.b16 %v3416
    %v6458 = vunpack.c.h.b16 %v3416
    %v6459 = vunpack.c.l.b16 %v3417
    %v6460 = vunpack.c.h.b16 %v3417
    %v6461 = vunpack.c.l.b16 %v3418
    %v6462 = vunpack.c.h.b16 %v3418
    %v6463 = vunpack.c.l.b16 %v3419
    %v6464 = vunpack.c.h.b16 %v3419
    %v6465 = vunpack.c.l.b16 %v3420
    %v6466 = vunpack.c.h.b16 %v3420
    %v6467 = vunpack.c.l.b16 %v3421
    %v6468 = vunpack.c.h.b16 %v3421
    %v6469 = vunpack.c.l.b16 %v3422
    %v6470 = vunpack.c.h.b16 %v3422
    %v6471 = vunpack.c.l.b16 %v3423
    %v6472 = vunpack.c.h.b16 %v3423
    %v6473 = vunpack.c.l.b16 %v3424
    %v6474 = vunpack.c.h.b16 %v3424
    %v6475 = vunpack.c.l.b16 %v3425
    %v6476 = vunpack.c.h.b16 %v3425
    %v6477 = vunpack.c.l.b16 %v3426
    %v6478 = vunpack.c.h.b16 %v3426
    %v6479 = vunpack.c.l.b16 %v3427
    %v6480 = vunpack.c.h.b16 %v3427
    %v6481 = vunpack.c.l.b16 %v3428
    %v6482 = vunpack.c.h.b16 %v3428
    %v6483 = vunpack.c.l.b16 %v3429
    %v6484 = vunpack.c.h.b16 %v3429
    %v6485 = vunpack.c.l.b16 %v3430
    %v6486 = vunpack.c.h.b16 %v3430
    %v6487 = vunpack.c.l.b16 %v3431
    %v6488 = vunpack.c.h.b16 %v3431
    %v6489 = vunpack.c.l.b16 %v3432
    %v6490 = vunpack.c.h.b16 %v3432
    %v6491 = vunpack.c.l.b16 %v3433
    %v6492 = vunpack.c.h.b16 %v3433
    %v6493 = vunpack.c.l.b16 %v3434
    %v6494 = vunpack.c.h.b16 %v3434
    %v6495 = vunpack.c.l.b16 %v3435
    %v6496 = vunpack.c.h.b16 %v3435
    %v6497 = vunpack.c.l.b16 %v3436
    %v6498 = vunpack.c.h.b16 %v3436
    %v6499 = vunpack.c.l.b16 %v3437
    %v6500 = vunpack.c.h.b16 %v3437
    %v6501 = vunpack.c.l.b16 %v3438
    %v6502 = vunpack.c.h.b16 %v3438
    %v6503 = vunpack.c.l.b16 %v3439
    %v6504 = vunpack.c.h.b16 %v3439
    %v6505 = vunpack.c.l.b16 %v3440
    %v6506 = vunpack.c.h.b16 %v3440
    %v6507 = vunpack.c.l.b16 %v3441
    %v6508 = vunpack.c.h.b16 %v3441
    %v6509 = vunpack.c.l.b16 %v3442
    %v6510 = vunpack.c.h.b16 %v3442
    %v6511 = vunpack.c.l.b16 %v3443
    %v6512 = vunpack.c.h.b16 %v3443
    %v6513 = vunpack.c.l.b16 %v3444
    %v6514 = vunpack.c.h.b16 %v3444
    %v6515 = vunpack.c.l.b16 %v3445
    %v6516 = vunpack.c.h.b16 %v3445
    %v6517 = vunpack.c.l.b16 %v3446
    %v6518 = vunpack.c.h.b16 %v3446
    %v6519 = vunpack.c.l.b16 %v3447
    %v6520 = vunpack.c.h.b16 %v3447
    %v6521 = vunpack.c.l.b16 %v3448
    %v6522 = vunpack.c.h.b16 %v3448
    %v6523 = vunpack.c.l.b16 %v3449
    %v6524 = vunpack.c.h.b16 %v3449
    %v6525 = vunpack.c.l.b16 %v3450
    %v6526 = vunpack.c.h.b16 %v3450
    %v6527 = vunpack.c.l.b16 %v3451
    %v6528 = vunpack.c.h.b16 %v3451
    %v6529 = vunpack.c.l.b16 %v3452
    %v6530 = vunpack.c.h.b16 %v3452
    %v6531 = vunpack.c.l.b16 %v3453
    %v6532 = vunpack.c.h.b16 %v3453
    %v6533 = vunpack.c.l.b16 %v3454
    %v6534 = vunpack.c.h.b16 %v3454
    %v6535 = vunpack.c.l.b16 %v3455
    %v6536 = vunpack.c.h.b16 %v3455
    %v6537 = vunpack.c.l.b16 %v3456
    %v6538 = vunpack.c.h.b16 %v3456
    %v6539 = vunpack.c.l.b16 %v3457
    %v6540 = vunpack.c.h.b16 %v3457
    %v6541 = vunpack.c.l.b16 %v3458
    %v6542 = vunpack.c.h.b16 %v3458
    %v6543 = vunpack.c.l.b16 %v3459
    %v6544 = vunpack.c.h.b16 %v3459
    %v6545 = vunpack.c.l.b16 %v3460
    %v6546 = vunpack.c.h.b16 %v3460
    %v6547 = vunpack.c.l.b16 %v3461
    %v6548 = vunpack.c.h.b16 %v3461
    %v6549 = vunpack.c.l.b16 %v3462
    %v6550 = vunpack.c.h.b16 %v3462
    %v6551 = vunpack.c.l.b16 %v3463
    %v6552 = vunpack.c.h.b16 %v3463
    %v6553 = vunpack.c.l.b16 %v3464
    %v6554 = vunpack.c.h.b16 %v3464
    %v6555 = vunpack.c.l.b16 %v3465
    %v6556 = vunpack.c.h.b16 %v3465
    %v6557 = vunpack.c.l.b16 %v3466
    %v6558 = vunpack.c.h.b16 %v3466
    %v6559 = vunpack.c.l.b16 %v3467
    %v6560 = vunpack.c.h.b16 %v3467
    %v6561 = vunpack.c.l.b16 %v3468
    %v6562 = vunpack.c.h.b16 %v3468
    %v6563 = vunpack.c.l.b16 %v3469
    %v6564 = vunpack.c.h.b16 %v3469
    %v6565 = vunpack.c.l.b16 %v3470
    %v6566 = vunpack.c.h.b16 %v3470
    %v6567 = vunpack.c.l.b16 %v3471
    %v6568 = vunpack.c.h.b16 %v3471
    %v6569 = vunpack.c.l.b16 %v3472
    %v6570 = vunpack.c.h.b16 %v3472
    %v6571 = vunpack.c.l.b16 %v3473
    %v6572 = vunpack.c.h.b16 %v3473
    %v6573 = vunpack.c.l.b16 %v3474
    %v6574 = vunpack.c.h.b16 %v3474
    %v6575 = vunpack.c.l.b16 %v3475
    %v6576 = vunpack.c.h.b16 %v3475
    %v6577 = vunpack.c.l.b16 %v3476
    %v6578 = vunpack.c.h.b16 %v3476
    %v6579 = vunpack.c.l.b16 %v3477
    %v6580 = vunpack.c.h.b16 %v3477
    %v6581 = vunpack.c.l.b16 %v3478
    %v6582 = vunpack.c.h.b16 %v3478
    %v6583 = vunpack.c.l.b16 %v3479
    %v6584 = vunpack.c.h.b16 %v3479
    %v6585 = vunpack.c.l.b16 %v3480
    %v6586 = vunpack.c.h.b16 %v3480
    %v6587 = vunpack.c.l.b16 %v3481
    %v6588 = vunpack.c.h.b16 %v3481
    %v6589 = vunpack.c.l.b16 %v3482
    %v6590 = vunpack.c.h.b16 %v3482
    %v6591 = vunpack.c.l.b16 %v3483
    %v6592 = vunpack.c.h.b16 %v3483
    %v6593 = vunpack.c.l.b16 %v3484
    %v6594 = vunpack.c.h.b16 %v3484
    %v6595 = vunpack.c.l.b16 %v3485
    %v6596 = vunpack.c.h.b16 %v3485
    %v6597 = vunpack.c.l.b16 %v3486
    %v6598 = vunpack.c.h.b16 %v3486
    %v6599 = vunpack.c.l.b16 %v3487
    %v6600 = vunpack.c.h.b16 %v3487
    %v6601 = vunpack.c.l.b16 %v3488
    %v6602 = vunpack.c.h.b16 %v3488
    %v6603 = vpack.c.b16 %v4563, %v4555
    %v6604 = vpack.c.b16 %v4564, %v4556
    %v6605 = vpack.c.b16 %v4565, %v4557
    %v6606 = vpack.c.b16 %v4566, %v4558
    %v6607 = vpack.c.b16 %v4567, %v4559
    %v6608 = vpack.c.b16 %v4568, %v4560
    %v6609 = vpack.c.b16 %v4569, %v4561
    %v6610 = vpack.c.b16 %v4570, %v4562
    %v6611 = vpack.c.b16 %v4579, %v4571
    %v6612 = vpack.c.b16 %v4580, %v4572
    %v6613 = vpack.c.b16 %v4581, %v4573
    %v6614 = vpack.c.b16 %v4582, %v4574
    %v6615 = vpack.c.b16 %v4583, %v4575
    %v6616 = vpack.c.b16 %v4584, %v4576
    %v6617 = vpack.c.b16 %v4585, %v4577
    %v6618 = vpack.c.b16 %v4586, %v4578
    %v6619 = vpack.c.b16 %v4595, %v4587
    %v6620 = vpack.c.b16 %v4596, %v4588
    %v6621 = vpack.c.b16 %v4597, %v4589
    %v6622 = vpack.c.b16 %v4598, %v4590
    %v6623 = vpack.c.b16 %v4599, %v4591
    %v6624 = vpack.c.b16 %v4600, %v4592
    %v6625 = vpack.c.b16 %v4601, %v4593
    %v6626 = vpack.c.b16 %v4602, %v4594
    %v6627 = vpack.c.b16 %v4611, %v4603
    %v6628 = vpack.c.b16 %v4612, %v4604
    %v6629 = vpack.c.b16 %v4613, %v4605
    %v6630 = vpack.c.b16 %v4614, %v4606
    %v6631 = vpack.c.b16 %v4615, %v4607
    %v6632 = vpack.c.b16 %v4616, %v4608
    %v6633 = vpack.c.b16 %v4617, %v4609
    %v6634 = vpack.c.b16 %v4618, %v4610
    %v6635 = vpack.c.b16 %v4627, %v4619
    %v6636 = vpack.c.b16 %v4628, %v4620
    %v6637 = vpack.c.b16 %v4629, %v4621
    %v6638 = vpack.c.b16 %v4630, %v4622
    %v6639 = vpack.c.b16 %v4631, %v4623
    %v6640 = vpack.c.b16 %v4632, %v4624
    %v6641 = vpack.c.b16 %v4633, %v4625
    %v6642 = vpack.c.b16 %v4634, %v4626
    %v6643 = vpack.c.b16 %v4643, %v4635
    %v6644 = vpack.c.b16 %v4644, %v4636
    %v6645 = vpack.c.b16 %v4645, %v4637
    %v6646 = vpack.c.b16 %v4646, %v4638
    %v6647 = vpack.c.b16 %v4647, %v4639
    %v6648 = vpack.c.b16 %v4648, %v4640
    %v6649 = vpack.c.b16 %v4649, %v4641
    %v6650 = vpack.c.b16 %v4650, %v4642
    %v6651 = vpack.c.b16 %v4659, %v4651
    %v6652 = vpack.c.b16 %v4660, %v4652
    %v6653 = vpack.c.b16 %v4661, %v4653
    %v6654 = vpack.c.b16 %v4662, %v4654
    %v6655 = vpack.c.b16 %v4663, %v4655
    %v6656 = vpack.c.b16 %v4664, %v4656
    %v6657 = vpack.c.b16 %v4665, %v4657
    %v6658 = vpack.c.b16 %v4666, %v4658
    %v6659 = vpack.c.b16 %v4675, %v4667
    %v6660 = vpack.c.b16 %v4676, %v4668
    %v6661 = vpack.c.b16 %v4677, %v4669
    %v6662 = vpack.c.b16 %v4678, %v4670
    %v6663 = vpack.c.b16 %v4679, %v4671
    %v6664 = vpack.c.b16 %v4680, %v4672
    %v6665 = vpack.c.b16 %v4681, %v4673
    %v6666 = vpack.c.b16 %v4682, %v4674
    %v6667 = vpack.c.b16 %v4691, %v4683
    %v6668 = vpack.c.b16 %v4692, %v4684
    %v6669 = vpack.c.b16 %v4693, %v4685
    %v6670 = vpack.c.b16 %v4694, %v4686
    %v6671 = vpack.c.b16 %v4695, %v4687
    %v6672 = vpack.c.b16 %v4696, %v4688
    %v6673 = vpack.c.b16 %v4697, %v4689
    %v6674 = vpack.c.b16 %v4698, %v4690
    %v6675 = vpack.c.b16 %v4707, %v4699
    %v6676 = vpack.c.b16 %v4708, %v4700
    %v6677 = vpack.c.b16 %v4709, %v4701
    %v6678 = vpack.c.b16 %v4710, %v4702
    %v6679 = vpack.c.b16 %v4711, %v4703
    %v6680 = vpack.c.b16 %v4712, %v4704
    %v6681 = vpack.c.b16 %v4713, %v4705
    %v6682 = vpack.c.b16 %v4714, %v4706
    %v6683 = vpack.c.b16 %v4723, %v4715
    %v6684 = vpack.c.b16 %v4724, %v4716
    %v6685 = vpack.c.b16 %v4725, %v4717
    %v6686 = vpack.c.b16 %v4726, %v4718
    %v6687 = vpack.c.b16 %v4727, %v4719
    %v6688 = vpack.c.b16 %v4728, %v4720
    %v6689 = vpack.c.b16 %v4729, %v4721
    %v6690 = vpack.c.b16 %v4730, %v4722
    %v6691 = vpack.c.b16 %v4739, %v4731
    %v6692 = vpack.c.b16 %v4740, %v4732
    %v6693 = vpack.c.b16 %v4741, %v4733
    %v6694 = vpack.c.b16 %v4742, %v4734
    %v6695 = vpack.c.b16 %v4743, %v4735
    %v6696 = vpack.c.b16 %v4744, %v4736
    %v6697 = vpack.c.b16 %v4745, %v4737
    %v6698 = vpack.c.b16 %v4746, %v4738
    %v6699 = vpack.c.b16 %v4755, %v4747
    %v6700 = vpack.c.b16 %v4756, %v4748
    %v6701 = vpack.c.b16 %v4757, %v4749
    %v6702 = vpack.c.b16 %v4758, %v4750
    %v6703 = vpack.c.b16 %v4759, %v4751
    %v6704 = vpack.c.b16 %v4760, %v4752
    %v6705 = vpack.c.b16 %v4761, %v4753
    %v6706 = vpack.c.b16 %v4762, %v4754
    %v6707 = vpack.c.b16 %v4771, %v4763
    %v6708 = vpack.c.b16 %v4772, %v4764
    %v6709 = vpack.c.b16 %v4773, %v4765
    %v6710 = vpack.c.b16 %v4774, %v4766
    %v6711 = vpack.c.b16 %v4775, %v4767
    %v6712 = vpack.c.b16 %v4776, %v4768
    %v6713 = vpack.c.b16 %v4777, %v4769
    %v6714 = vpack.c.b16 %v4778, %v4770
    %v6715 = vpack.c.b16 %v4787, %v4779
    %v6716 = vpack.c.b16 %v4788, %v4780
    %v6717 = vpack.c.b16 %v4789, %v4781
    %v6718 = vpack.c.b16 %v4790, %v4782
    %v6719 = vpack.c.b16 %v4791, %v4783
    %v6720 = vpack.c.b16 %v4792, %v4784
    %v6721 = vpack.c.b16 %v4793, %v4785
    %v6722 = vpack.c.b16 %v4794, %v4786
    %v6723 = vpack.c.b16 %v4803, %v4795
    %v6724 = vpack.c.b16 %v4804, %v4796
    %v6725 = vpack.c.b16 %v4805, %v4797
    %v6726 = vpack.c.b16 %v4806, %v4798
    %v6727 = vpack.c.b16 %v4807, %v4799
    %v6728 = vpack.c.b16 %v4808, %v4800
    %v6729 = vpack.c.b16 %v4809, %v4801
    %v6730 = vpack.c.b16 %v4810, %v4802
    %v6731 = vpack.c.b16 %v4819, %v4811
    %v6732 = vpack.c.b16 %v4820, %v4812
    %v6733 = vpack.c.b16 %v4821, %v4813
    %v6734 = vpack.c.b16 %v4822, %v4814
    %v6735 = vpack.c.b16 %v4823, %v4815
    %v6736 = vpack.c.b16 %v4824, %v4816
    %v6737 = vpack.c.b16 %v4825, %v4817
    %v6738 = vpack.c.b16 %v4826, %v4818
    %v6739 = vpack.c.b16 %v4835, %v4827
    %v6740 = vpack.c.b16 %v4836, %v4828
    %v6741 = vpack.c.b16 %v4837, %v4829
    %v6742 = vpack.c.b16 %v4838, %v4830
    %v6743 = vpack.c.b16 %v4839, %v4831
    %v6744 = vpack.c.b16 %v4840, %v4832
    %v6745 = vpack.c.b16 %v4841, %v4833
    %v6746 = vpack.c.b16 %v4842, %v4834
    %v6747 = vpack.c.b16 %v4851, %v4843
    %v6748 = vpack.c.b16 %v4852, %v4844
    %v6749 = vpack.c.b16 %v4853, %v4845
    %v6750 = vpack.c.b16 %v4854, %v4846
    %v6751 = vpack.c.b16 %v4855, %v4847
    %v6752 = vpack.c.b16 %v4856, %v4848
    %v6753 = vpack.c.b16 %v4857, %v4849
    %v6754 = vpack.c.b16 %v4858, %v4850
    %v6755 = vpack.c.b16 %v4867, %v4859
    %v6756 = vpack.c.b16 %v4868, %v4860
    %v6757 = vpack.c.b16 %v4869, %v4861
    %v6758 = vpack.c.b16 %v4870, %v4862
    %v6759 = vpack.c.b16 %v4871, %v4863
    %v6760 = vpack.c.b16 %v4872, %v4864
    %v6761 = vpack.c.b16 %v4873, %v4865
    %v6762 = vpack.c.b16 %v4874, %v4866
    %v6763 = vpack.c.b16 %v4883, %v4875
    %v6764 = vpack.c.b16 %v4884, %v4876
    %v6765 = vpack.c.b16 %v4885, %v4877
    %v6766 = vpack.c.b16 %v4886, %v4878
    %v6767 = vpack.c.b16 %v4887, %v4879
    %v6768 = vpack.c.b16 %v4888, %v4880
    %v6769 = vpack.c.b16 %v4889, %v4881
    %v6770 = vpack.c.b16 %v4890, %v4882
    %v6771 = vpack.c.b16 %v4899, %v4891
    %v6772 = vpack.c.b16 %v4900, %v4892
    %v6773 = vpack.c.b16 %v4901, %v4893
    %v6774 = vpack.c.b16 %v4902, %v4894
    %v6775 = vpack.c.b16 %v4903, %v4895
    %v6776 = vpack.c.b16 %v4904, %v4896
    %v6777 = vpack.c.b16 %v4905, %v4897
    %v6778 = vpack.c.b16 %v4906, %v4898
    %v6779 = vpack.c.b16 %v4915, %v4907
    %v6780 = vpack.c.b16 %v4916, %v4908
    %v6781 = vpack.c.b16 %v4917, %v4909
    %v6782 = vpack.c.b16 %v4918, %v4910
    %v6783 = vpack.c.b16 %v4919, %v4911
    %v6784 = vpack.c.b16 %v4920, %v4912
    %v6785 = vpack.c.b16 %v4921, %v4913
    %v6786 = vpack.c.b16 %v4922, %v4914
    %v6787 = vpack.c.b16 %v4931, %v4923
    %v6788 = vpack.c.b16 %v4932, %v4924
    %v6789 = vpack.c.b16 %v4933, %v4925
    %v6790 = vpack.c.b16 %v4934, %v4926
    %v6791 = vpack.c.b16 %v4935, %v4927
    %v6792 = vpack.c.b16 %v4936, %v4928
    %v6793 = vpack.c.b16 %v4937, %v4929
    %v6794 = vpack.c.b16 %v4938, %v4930
    %v6795 = vpack.c.b16 %v4947, %v4939
    %v6796 = vpack.c.b16 %v4948, %v4940
    %v6797 = vpack.c.b16 %v4949, %v4941
    %v6798 = vpack.c.b16 %v4950, %v4942
    %v6799 = vpack.c.b16 %v4951, %v4943
    %v6800 = vpack.c.b16 %v4952, %v4944
    %v6801 = vpack.c.b16 %v4953, %v4945
    %v6802 = vpack.c.b16 %v4954, %v4946
    %v6803 = vpack.c.b16 %v4963, %v4955
    %v6804 = vpack.c.b16 %v4964, %v4956
    %v6805 = vpack.c.b16 %v4965, %v4957
    %v6806 = vpack.c.b16 %v4966, %v4958
    %v6807 = vpack.c.b16 %v4967, %v4959
    %v6808 = vpack.c.b16 %v4968, %v4960
    %v6809 = vpack.c.b16 %v4969, %v4961
    %v6810 = vpack.c.b16 %v4970, %v4962
    %v6811 = vpack.c.b16 %v4979, %v4971
    %v6812 = vpack.c.b16 %v4980, %v4972
    %v6813 = vpack.c.b16 %v4981, %v4973
    %v6814 = vpack.c.b16 %v4982, %v4974
    %v6815 = vpack.c.b16 %v4983, %v4975
    %v6816 = vpack.c.b16 %v4984, %v4976
    %v6817 = vpack.c.b16 %v4985, %v4977
    %v6818 = vpack.c.b16 %v4986, %v4978
    %v6819 = vpack.c.b16 %v4995, %v4987
    %v6820 = vpack.c.b16 %v4996, %v4988
    %v6821 = vpack.c.b16 %v4997, %v4989
    %v6822 = vpack.c.b16 %v4998, %v4990
    %v6823 = vpack.c.b16 %v4999, %v4991
    %v6824 = vpack.c.b16 %v5000, %v4992
    %v6825 = vpack.c.b16 %v5001, %v4993
    %v6826 = vpack.c.b16 %v5002, %v4994
    %v6827 = vpack.c.b16 %v5011, %v5003
    %v6828 = vpack.c.b16 %v5012, %v5004
    %v6829 = vpack.c.b16 %v5013, %v5005
    %v6830 = vpack.c.b16 %v5014, %v5006
    %v6831 = vpack.c.b16 %v5015, %v5007
    %v6832 = vpack.c.b16 %v5016, %v5008
    %v6833 = vpack.c.b16 %v5017, %v5009
    %v6834 = vpack.c.b16 %v5018, %v5010
    %v6835 = vpack.c.b16 %v5027, %v5019
    %v6836 = vpack.c.b16 %v5028, %v5020
    %v6837 = vpack.c.b16 %v5029, %v5021
    %v6838 = vpack.c.b16 %v5030, %v5022
    %v6839 = vpack.c.b16 %v5031, %v5023
    %v6840 = vpack.c.b16 %v5032, %v5024
    %v6841 = vpack.c.b16 %v5033, %v5025
    %v6842 = vpack.c.b16 %v5034, %v5026
    %v6843 = vpack.c.b16 %v5043, %v5035
    %v6844 = vpack.c.b16 %v5044, %v5036
    %v6845 = vpack.c.b16 %v5045, %v5037
    %v6846 = vpack.c.b16 %v5046, %v5038
    %v6847 = vpack.c.b16 %v5047, %v5039
    %v6848 = vpack.c.b16 %v5048, %v5040
    %v6849 = vpack.c.b16 %v5049, %v5041
    %v6850 = vpack.c.b16 %v5050, %v5042
    %v6851 = vpack.c.b16 %v5059, %v5051
    %v6852 = vpack.c.b16 %v5060, %v5052
    %v6853 = vpack.c.b16 %v5061, %v5053
    %v6854 = vpack.c.b16 %v5062, %v5054
    %v6855 = vpack.c.b16 %v5063, %v5055
    %v6856 = vpack.c.b16 %v5064, %v5056
    %v6857 = vpack.c.b16 %v5065, %v5057
    %v6858 = vpack.c.b16 %v5066, %v5058
    %v6859 = vpack.c.b16 %v5075, %v5067
    %v6860 = vpack.c.b16 %v5076, %v5068
    %v6861 = vpack.c.b16 %v5077, %v5069
    %v6862 = vpack.c.b16 %v5078, %v5070
    %v6863 = vpack.c.b16 %v5079, %v5071
    %v6864 = vpack.c.b16 %v5080, %v5072
    %v6865 = vpack.c.b16 %v5081, %v5073
    %v6866 = vpack.c.b16 %v5082, %v5074
    %v6867 = vpack.c.b16 %v5091, %v5083
    %v6868 = vpack.c.b16 %v5092, %v5084
    %v6869 = vpack.c.b16 %v5093, %v5085
    %v6870 = vpack.c.b16 %v5094, %v5086
    %v6871 = vpack.c.b16 %v5095, %v5087
    %v6872 = vpack.c.b16 %v5096, %v5088
    %v6873 = vpack.c.b16 %v5097, %v5089
    %v6874 = vpack.c.b16 %v5098, %v5090
    %v6875 = vpack.c.b16 %v5107, %v5099
    %v6876 = vpack.c.b16 %v5108, %v5100
    %v6877 = vpack.c.b16 %v5109, %v5101
    %v6878 = vpack.c.b16 %v5110, %v5102
    %v6879 = vpack.c.b16 %v5111, %v5103
    %v6880 = vpack.c.b16 %v5112, %v5104
    %v6881 = vpack.c.b16 %v5113, %v5105
    %v6882 = vpack.c.b16 %v5114, %v5106
    %v6883 = vpack.c.b16 %v5123, %v5115
    %v6884 = vpack.c.b16 %v5124, %v5116
    %v6885 = vpack.c.b16 %v5125, %v5117
    %v6886 = vpack.c.b16 %v5126, %v5118
    %v6887 = vpack.c.b16 %v5127, %v5119
    %v6888 = vpack.c.b16 %v5128, %v5120
    %v6889 = vpack.c.b16 %v5129, %v5121
    %v6890 = vpack.c.b16 %v5130, %v5122
    %v6891 = vpack.c.b16 %v5139, %v5131
    %v6892 = vpack.c.b16 %v5140, %v5132
    %v6893 = vpack.c.b16 %v5141, %v5133
    %v6894 = vpack.c.b16 %v5142, %v5134
    %v6895 = vpack.c.b16 %v5143, %v5135
    %v6896 = vpack.c.b16 %v5144, %v5136
    %v6897 = vpack.c.b16 %v5145, %v5137
    %v6898 = vpack.c.b16 %v5146, %v5138
    %v6899 = vpack.c.b16 %v5155, %v5147
    %v6900 = vpack.c.b16 %v5156, %v5148
    %v6901 = vpack.c.b16 %v5157, %v5149
    %v6902 = vpack.c.b16 %v5158, %v5150
    %v6903 = vpack.c.b16 %v5159, %v5151
    %v6904 = vpack.c.b16 %v5160, %v5152
    %v6905 = vpack.c.b16 %v5161, %v5153
    %v6906 = vpack.c.b16 %v5162, %v5154
    %v6907 = vpack.c.b16 %v5171, %v5163
    %v6908 = vpack.c.b16 %v5172, %v5164
    %v6909 = vpack.c.b16 %v5173, %v5165
    %v6910 = vpack.c.b16 %v5174, %v5166
    %v6911 = vpack.c.b16 %v5175, %v5167
    %v6912 = vpack.c.b16 %v5176, %v5168
    %v6913 = vpack.c.b16 %v5177, %v5169
    %v6914 = vpack.c.b16 %v5178, %v5170
    %v6915 = vpack.c.b16 %v5187, %v5179
    %v6916 = vpack.c.b16 %v5188, %v5180
    %v6917 = vpack.c.b16 %v5189, %v5181
    %v6918 = vpack.c.b16 %v5190, %v5182
    %v6919 = vpack.c.b16 %v5191, %v5183
    %v6920 = vpack.c.b16 %v5192, %v5184
    %v6921 = vpack.c.b16 %v5193, %v5185
    %v6922 = vpack.c.b16 %v5194, %v5186
    %v6923 = vpack.c.b16 %v5203, %v5195
    %v6924 = vpack.c.b16 %v5204, %v5196
    %v6925 = vpack.c.b16 %v5205, %v5197
    %v6926 = vpack.c.b16 %v5206, %v5198
    %v6927 = vpack.c.b16 %v5207, %v5199
    %v6928 = vpack.c.b16 %v5208, %v5200
    %v6929 = vpack.c.b16 %v5209, %v5201
    %v6930 = vpack.c.b16 %v5210, %v5202
    %v6931 = vpack.c.b16 %v5219, %v5211
    %v6932 = vpack.c.b16 %v5220, %v5212
    %v6933 = vpack.c.b16 %v5221, %v5213
    %v6934 = vpack.c.b16 %v5222, %v5214
    %v6935 = vpack.c.b16 %v5223, %v5215
    %v6936 = vpack.c.b16 %v5224, %v5216
    %v6937 = vpack.c.b16 %v5225, %v5217
    %v6938 = vpack.c.b16 %v5226, %v5218
    %v6939 = vpack.c.b16 %v5235, %v5227
    %v6940 = vpack.c.b16 %v5236, %v5228
    %v6941 = vpack.c.b16 %v5237, %v5229
    %v6942 = vpack.c.b16 %v5238, %v5230
    %v6943 = vpack.c.b16 %v5239, %v5231
    %v6944 = vpack.c.b16 %v5240, %v5232
    %v6945 = vpack.c.b16 %v5241, %v5233
    %v6946 = vpack.c.b16 %v5242, %v5234
    %v6947 = vpack.c.b16 %v5251, %v5243
    %v6948 = vpack.c.b16 %v5252, %v5244
    %v6949 = vpack.c.b16 %v5253, %v5245
    %v6950 = vpack.c.b16 %v5254, %v5246
    %v6951 = vpack.c.b16 %v5255, %v5247
    %v6952 = vpack.c.b16 %v5256, %v5248
    %v6953 = vpack.c.b16 %v5257, %v5249
    %v6954 = vpack.c.b16 %v5258, %v5250
    %v6955 = vpack.c.b16 %v5267, %v5259
    %v6956 = vpack.c.b16 %v5268, %v5260
    %v6957 = vpack.c.b16 %v5269, %v5261
    %v6958 = vpack.c.b16 %v5270, %v5262
    %v6959 = vpack.c.b16 %v5271, %v5263
    %v6960 = vpack.c.b16 %v5272, %v5264
    %v6961 = vpack.c.b16 %v5273, %v5265
    %v6962 = vpack.c.b16 %v5274, %v5266
    %v6963 = vpack.c.b16 %v5283, %v5275
    %v6964 = vpack.c.b16 %v5284, %v5276
    %v6965 = vpack.c.b16 %v5285, %v5277
    %v6966 = vpack.c.b16 %v5286, %v5278
    %v6967 = vpack.c.b16 %v5287, %v5279
    %v6968 = vpack.c.b16 %v5288, %v5280
    %v6969 = vpack.c.b16 %v5289, %v5281
    %v6970 = vpack.c.b16 %v5290, %v5282
    %v6971 = vpack.c.b16 %v5299, %v5291
    %v6972 = vpack.c.b16 %v5300, %v5292
    %v6973 = vpack.c.b16 %v5301, %v5293
    %v6974 = vpack.c.b16 %v5302, %v5294
    %v6975 = vpack.c.b16 %v5303, %v5295
    %v6976 = vpack.c.b16 %v5304, %v5296
    %v6977 = vpack.c.b16 %v5305, %v5297
    %v6978 = vpack.c.b16 %v5306, %v5298
    %v6979 = vpack.c.b16 %v5315, %v5307
    %v6980 = vpack.c.b16 %v5316, %v5308
    %v6981 = vpack.c.b16 %v5317, %v5309
    %v6982 = vpack.c.b16 %v5318, %v5310
    %v6983 = vpack.c.b16 %v5319, %v5311
    %v6984 = vpack.c.b16 %v5320, %v5312
    %v6985 = vpack.c.b16 %v5321, %v5313
    %v6986 = vpack.c.b16 %v5322, %v5314
    %v6987 = vpack.c.b16 %v5331, %v5323
    %v6988 = vpack.c.b16 %v5332, %v5324
    %v6989 = vpack.c.b16 %v5333, %v5325
    %v6990 = vpack.c.b16 %v5334, %v5326
    %v6991 = vpack.c.b16 %v5335, %v5327
    %v6992 = vpack.c.b16 %v5336, %v5328
    %v6993 = vpack.c.b16 %v5337, %v5329
    %v6994 = vpack.c.b16 %v5338, %v5330
    %v6995 = vpack.c.b16 %v5347, %v5339
    %v6996 = vpack.c.b16 %v5348, %v5340
    %v6997 = vpack.c.b16 %v5349, %v5341
    %v6998 = vpack.c.b16 %v5350, %v5342
    %v6999 = vpack.c.b16 %v5351, %v5343
    %v7000 = vpack.c.b16 %v5352, %v5344
    %v7001 = vpack.c.b16 %v5353, %v5345
    %v7002 = vpack.c.b16 %v5354, %v5346
    %v7003 = vpack.c.b16 %v5363, %v5355
    %v7004 = vpack.c.b16 %v5364, %v5356
    %v7005 = vpack.c.b16 %v5365, %v5357
    %v7006 = vpack.c.b16 %v5366, %v5358
    %v7007 = vpack.c.b16 %v5367, %v5359
    %v7008 = vpack.c.b16 %v5368, %v5360
    %v7009 = vpack.c.b16 %v5369, %v5361
    %v7010 = vpack.c.b16 %v5370, %v5362
    %v7011 = vpack.c.b16 %v5379, %v5371
    %v7012 = vpack.c.b16 %v5380, %v5372
    %v7013 = vpack.c.b16 %v5381, %v5373
    %v7014 = vpack.c.b16 %v5382, %v5374
    %v7015 = vpack.c.b16 %v5383, %v5375
    %v7016 = vpack.c.b16 %v5384, %v5376
    %v7017 = vpack.c.b16 %v5385, %v5377
    %v7018 = vpack.c.b16 %v5386, %v5378
    %v7019 = vpack.c.b16 %v5395, %v5387
    %v7020 = vpack.c.b16 %v5396, %v5388
    %v7021 = vpack.c.b16 %v5397, %v5389
    %v7022 = vpack.c.b16 %v5398, %v5390
    %v7023 = vpack.c.b16 %v5399, %v5391
    %v7024 = vpack.c.b16 %v5400, %v5392
    %v7025 = vpack.c.b16 %v5401, %v5393
    %v7026 = vpack.c.b16 %v5402, %v5394
    %v7027 = vpack.c.b16 %v5411, %v5403
    %v7028 = vpack.c.b16 %v5412, %v5404
    %v7029 = vpack.c.b16 %v5413, %v5405
    %v7030 = vpack.c.b16 %v5414, %v5406
    %v7031 = vpack.c.b16 %v5415, %v5407
    %v7032 = vpack.c.b16 %v5416, %v5408
    %v7033 = vpack.c.b16 %v5417, %v5409
    %v7034 = vpack.c.b16 %v5418, %v5410
    %v7035 = vpack.c.b16 %v5427, %v5419
    %v7036 = vpack.c.b16 %v5428, %v5420
    %v7037 = vpack.c.b16 %v5429, %v5421
    %v7038 = vpack.c.b16 %v5430, %v5422
    %v7039 = vpack.c.b16 %v5431, %v5423
    %v7040 = vpack.c.b16 %v5432, %v5424
    %v7041 = vpack.c.b16 %v5433, %v5425
    %v7042 = vpack.c.b16 %v5434, %v5426
    %v7043 = vpack.c.b16 %v5443, %v5435
    %v7044 = vpack.c.b16 %v5444, %v5436
    %v7045 = vpack.c.b16 %v5445, %v5437
    %v7046 = vpack.c.b16 %v5446, %v5438
    %v7047 = vpack.c.b16 %v5447, %v5439
    %v7048 = vpack.c.b16 %v5448, %v5440
    %v7049 = vpack.c.b16 %v5449, %v5441
    %v7050 = vpack.c.b16 %v5450, %v5442
    %v7051 = vpack.c.b16 %v5459, %v5451
    %v7052 = vpack.c.b16 %v5460, %v5452
    %v7053 = vpack.c.b16 %v5461, %v5453
    %v7054 = vpack.c.b16 %v5462, %v5454
    %v7055 = vpack.c.b16 %v5463, %v5455
    %v7056 = vpack.c.b16 %v5464, %v5456
    %v7057 = vpack.c.b16 %v5465, %v5457
    %v7058 = vpack.c.b16 %v5466, %v5458
    %v7059 = vpack.c.b16 %v5475, %v5467
    %v7060 = vpack.c.b16 %v5476, %v5468
    %v7061 = vpack.c.b16 %v5477, %v5469
    %v7062 = vpack.c.b16 %v5478, %v5470
    %v7063 = vpack.c.b16 %v5479, %v5471
    %v7064 = vpack.c.b16 %v5480, %v5472
    %v7065 = vpack.c.b16 %v5481, %v5473
    %v7066 = vpack.c.b16 %v5482, %v5474
    %v7067 = vpack.c.b16 %v5491, %v5483
    %v7068 = vpack.c.b16 %v5492, %v5484
    %v7069 = vpack.c.b16 %v5493, %v5485
    %v7070 = vpack.c.b16 %v5494, %v5486
    %v7071 = vpack.c.b16 %v5495, %v5487
    %v7072 = vpack.c.b16 %v5496, %v5488
    %v7073 = vpack.c.b16 %v5497, %v5489
    %v7074 = vpack.c.b16 %v5498, %v5490
    %v7075 = vpack.c.b16 %v5507, %v5499
    %v7076 = vpack.c.b16 %v5508, %v5500
    %v7077 = vpack.c.b16 %v5509, %v5501
    %v7078 = vpack.c.b16 %v5510, %v5502
    %v7079 = vpack.c.b16 %v5511, %v5503
    %v7080 = vpack.c.b16 %v5512, %v5504
    %v7081 = vpack.c.b16 %v5513, %v5505
    %v7082 = vpack.c.b16 %v5514, %v5506
    %v7083 = vpack.c.b16 %v5523, %v5515
    %v7084 = vpack.c.b16 %v5524, %v5516
    %v7085 = vpack.c.b16 %v5525, %v5517
    %v7086 = vpack.c.b16 %v5526, %v5518
    %v7087 = vpack.c.b16 %v5527, %v5519
    %v7088 = vpack.c.b16 %v5528, %v5520
    %v7089 = vpack.c.b16 %v5529, %v5521
    %v7090 = vpack.c.b16 %v5530, %v5522
    %v7091 = vpack.c.b16 %v5539, %v5531
    %v7092 = vpack.c.b16 %v5540, %v5532
    %v7093 = vpack.c.b16 %v5541, %v5533
    %v7094 = vpack.c.b16 %v5542, %v5534
    %v7095 = vpack.c.b16 %v5543, %v5535
    %v7096 = vpack.c.b16 %v5544, %v5536
    %v7097 = vpack.c.b16 %v5545, %v5537
    %v7098 = vpack.c.b16 %v5546, %v5538
    %v7099 = vpack.c.b16 %v5555, %v5547
    %v7100 = vpack.c.b16 %v5556, %v5548
    %v7101 = vpack.c.b16 %v5557, %v5549
    %v7102 = vpack.c.b16 %v5558, %v5550
    %v7103 = vpack.c.b16 %v5559, %v5551
    %v7104 = vpack.c.b16 %v5560, %v5552
    %v7105 = vpack.c.b16 %v5561, %v5553
    %v7106 = vpack.c.b16 %v5562, %v5554
    %v7107 = vpack.c.b16 %v5571, %v5563
    %v7108 = vpack.c.b16 %v5572, %v5564
    %v7109 = vpack.c.b16 %v5573, %v5565
    %v7110 = vpack.c.b16 %v5574, %v5566
    %v7111 = vpack.c.b16 %v5575, %v5567
    %v7112 = vpack.c.b16 %v5576, %v5568
    %v7113 = vpack.c.b16 %v5577, %v5569
    %v7114 = vpack.c.b16 %v5578, %v5570
    %v7115 = vpack.c.b16 %v5587, %v5579
    %v7116 = vpack.c.b16 %v5588, %v5580
    %v7117 = vpack.c.b16 %v5589, %v5581
    %v7118 = vpack.c.b16 %v5590, %v5582
    %v7119 = vpack.c.b16 %v5591, %v5583
    %v7120 = vpack.c.b16 %v5592, %v5584
    %v7121 = vpack.c.b16 %v5593, %v5585
    %v7122 = vpack.c.b16 %v5594, %v5586
    %v7123 = vpack.c.b16 %v5603, %v5595
    %v7124 = vpack.c.b16 %v5604, %v5596
    %v7125 = vpack.c.b16 %v5605, %v5597
    %v7126 = vpack.c.b16 %v5606, %v5598
    %v7127 = vpack.c.b16 %v5607, %v5599
    %v7128 = vpack.c.b16 %v5608, %v5600
    %v7129 = vpack.c.b16 %v5609, %v5601
    %v7130 = vpack.c.b16 %v5610, %v5602
    %v7131 = vpack.c.b16 %v5619, %v5611
    %v7132 = vpack.c.b16 %v5620, %v5612
    %v7133 = vpack.c.b16 %v5621, %v5613
    %v7134 = vpack.c.b16 %v5622, %v5614
    %v7135 = vpack.c.b16 %v5623, %v5615
    %v7136 = vpack.c.b16 %v5624, %v5616
    %v7137 = vpack.c.b16 %v5625, %v5617
    %v7138 = vpack.c.b16 %v5626, %v5618
    %v7139 = vpack.c.b16 %v5635, %v5627
    %v7140 = vpack.c.b16 %v5636, %v5628
    %v7141 = vpack.c.b16 %v5637, %v5629
    %v7142 = vpack.c.b16 %v5638, %v5630
    %v7143 = vpack.c.b16 %v5639, %v5631
    %v7144 = vpack.c.b16 %v5640, %v5632
    %v7145 = vpack.c.b16 %v5641, %v5633
    %v7146 = vpack.c.b16 %v5642, %v5634
    %v7147 = vpack.c.b16 %v5651, %v5643
    %v7148 = vpack.c.b16 %v5652, %v5644
    %v7149 = vpack.c.b16 %v5653, %v5645
    %v7150 = vpack.c.b16 %v5654, %v5646
    %v7151 = vpack.c.b16 %v5655, %v5647
    %v7152 = vpack.c.b16 %v5656, %v5648
    %v7153 = vpack.c.b16 %v5657, %v5649
    %v7154 = vpack.c.b16 %v5658, %v5650
    %v7155 = vpack.c.b16 %v5667, %v5659
    %v7156 = vpack.c.b16 %v5668, %v5660
    %v7157 = vpack.c.b16 %v5669, %v5661
    %v7158 = vpack.c.b16 %v5670, %v5662
    %v7159 = vpack.c.b16 %v5671, %v5663
    %v7160 = vpack.c.b16 %v5672, %v5664
    %v7161 = vpack.c.b16 %v5673, %v5665
    %v7162 = vpack.c.b16 %v5674, %v5666
    %v7163 = vpack.c.b16 %v5683, %v5675
    %v7164 = vpack.c.b16 %v5684, %v5676
    %v7165 = vpack.c.b16 %v5685, %v5677
    %v7166 = vpack.c.b16 %v5686, %v5678
    %v7167 = vpack.c.b16 %v5687, %v5679
    %v7168 = vpack.c.b16 %v5688, %v5680
    %v7169 = vpack.c.b16 %v5689, %v5681
    %v7170 = vpack.c.b16 %v5690, %v5682
    %v7171 = vpack.c.b16 %v5699, %v5691
    %v7172 = vpack.c.b16 %v5700, %v5692
    %v7173 = vpack.c.b16 %v5701, %v5693
    %v7174 = vpack.c.b16 %v5702, %v5694
    %v7175 = vpack.c.b16 %v5703, %v5695
    %v7176 = vpack.c.b16 %v5704, %v5696
    %v7177 = vpack.c.b16 %v5705, %v5697
    %v7178 = vpack.c.b16 %v5706, %v5698
    %v7179 = vpack.c.b16 %v5715, %v5707
    %v7180 = vpack.c.b16 %v5716, %v5708
    %v7181 = vpack.c.b16 %v5717, %v5709
    %v7182 = vpack.c.b16 %v5718, %v5710
    %v7183 = vpack.c.b16 %v5719, %v5711
    %v7184 = vpack.c.b16 %v5720, %v5712
    %v7185 = vpack.c.b16 %v5721, %v5713
    %v7186 = vpack.c.b16 %v5722, %v5714
    %v7187 = vpack.c.b16 %v5731, %v5723
    %v7188 = vpack.c.b16 %v5732, %v5724
    %v7189 = vpack.c.b16 %v5733, %v5725
    %v7190 = vpack.c.b16 %v5734, %v5726
    %v7191 = vpack.c.b16 %v5735, %v5727
    %v7192 = vpack.c.b16 %v5736, %v5728
    %v7193 = vpack.c.b16 %v5737, %v5729
    %v7194 = vpack.c.b16 %v5738, %v5730
    %v7195 = vpack.c.b16 %v5747, %v5739
    %v7196 = vpack.c.b16 %v5748, %v5740
    %v7197 = vpack.c.b16 %v5749, %v5741
    %v7198 = vpack.c.b16 %v5750, %v5742
    %v7199 = vpack.c.b16 %v5751, %v5743
    %v7200 = vpack.c.b16 %v5752, %v5744
    %v7201 = vpack.c.b16 %v5753, %v5745
    %v7202 = vpack.c.b16 %v5754, %v5746
    %v7203 = vpack.c.b16 %v5763, %v5755
    %v7204 = vpack.c.b16 %v5764, %v5756
    %v7205 = vpack.c.b16 %v5765, %v5757
    %v7206 = vpack.c.b16 %v5766, %v5758
    %v7207 = vpack.c.b16 %v5767, %v5759
    %v7208 = vpack.c.b16 %v5768, %v5760
    %v7209 = vpack.c.b16 %v5769, %v5761
    %v7210 = vpack.c.b16 %v5770, %v5762
    %v7211 = vpack.c.b16 %v5779, %v5771
    %v7212 = vpack.c.b16 %v5780, %v5772
    %v7213 = vpack.c.b16 %v5781, %v5773
    %v7214 = vpack.c.b16 %v5782, %v5774
    %v7215 = vpack.c.b16 %v5783, %v5775
    %v7216 = vpack.c.b16 %v5784, %v5776
    %v7217 = vpack.c.b16 %v5785, %v5777
    %v7218 = vpack.c.b16 %v5786, %v5778
    %v7219 = vpack.c.b16 %v5795, %v5787
    %v7220 = vpack.c.b16 %v5796, %v5788
    %v7221 = vpack.c.b16 %v5797, %v5789
    %v7222 = vpack.c.b16 %v5798, %v5790
    %v7223 = vpack.c.b16 %v5799, %v5791
    %v7224 = vpack.c.b16 %v5800, %v5792
    %v7225 = vpack.c.b16 %v5801, %v5793
    %v7226 = vpack.c.b16 %v5802, %v5794
    %v7227 = vpack.c.b16 %v5811, %v5803
    %v7228 = vpack.c.b16 %v5812, %v5804
    %v7229 = vpack.c.b16 %v5813, %v5805
    %v7230 = vpack.c.b16 %v5814, %v5806
    %v7231 = vpack.c.b16 %v5815, %v5807
    %v7232 = vpack.c.b16 %v5816, %v5808
    %v7233 = vpack.c.b16 %v5817, %v5809
    %v7234 = vpack.c.b16 %v5818, %v5810
    %v7235 = vpack.c.b16 %v5827, %v5819
    %v7236 = vpack.c.b16 %v5828, %v5820
    %v7237 = vpack.c.b16 %v5829, %v5821
    %v7238 = vpack.c.b16 %v5830, %v5822
    %v7239 = vpack.c.b16 %v5831, %v5823
    %v7240 = vpack.c.b16 %v5832, %v5824
    %v7241 = vpack.c.b16 %v5833, %v5825
    %v7242 = vpack.c.b16 %v5834, %v5826
    %v7243 = vpack.c.b16 %v5843, %v5835
    %v7244 = vpack.c.b16 %v5844, %v5836
    %v7245 = vpack.c.b16 %v5845, %v5837
    %v7246 = vpack.c.b16 %v5846, %v5838
    %v7247 = vpack.c.b16 %v5847, %v5839
    %v7248 = vpack.c.b16 %v5848, %v5840
    %v7249 = vpack.c.b16 %v5849, %v5841
    %v7250 = vpack.c.b16 %v5850, %v5842
    %v7251 = vpack.c.b16 %v5859, %v5851
    %v7252 = vpack.c.b16 %v5860, %v5852
    %v7253 = vpack.c.b16 %v5861, %v5853
    %v7254 = vpack.c.b16 %v5862, %v5854
    %v7255 = vpack.c.b16 %v5863, %v5855
    %v7256 = vpack.c.b16 %v5864, %v5856
    %v7257 = vpack.c.b16 %v5865, %v5857
    %v7258 = vpack.c.b16 %v5866, %v5858
    %v7259 = vpack.c.b16 %v5875, %v5867
    %v7260 = vpack.c.b16 %v5876, %v5868
    %v7261 = vpack.c.b16 %v5877, %v5869
    %v7262 = vpack.c.b16 %v5878, %v5870
    %v7263 = vpack.c.b16 %v5879, %v5871
    %v7264 = vpack.c.b16 %v5880, %v5872
    %v7265 = vpack.c.b16 %v5881, %v5873
    %v7266 = vpack.c.b16 %v5882, %v5874
    %v7267 = vpack.c.b16 %v5891, %v5883
    %v7268 = vpack.c.b16 %v5892, %v5884
    %v7269 = vpack.c.b16 %v5893, %v5885
    %v7270 = vpack.c.b16 %v5894, %v5886
    %v7271 = vpack.c.b16 %v5895, %v5887
    %v7272 = vpack.c.b16 %v5896, %v5888
    %v7273 = vpack.c.b16 %v5897, %v5889
    %v7274 = vpack.c.b16 %v5898, %v5890
    %v7275 = vpack.c.b16 %v5907, %v5899
    %v7276 = vpack.c.b16 %v5908, %v5900
    %v7277 = vpack.c.b16 %v5909, %v5901
    %v7278 = vpack.c.b16 %v5910, %v5902
    %v7279 = vpack.c.b16 %v5911, %v5903
    %v7280 = vpack.c.b16 %v5912, %v5904
    %v7281 = vpack.c.b16 %v5913, %v5905
    %v7282 = vpack.c.b16 %v5914, %v5906
    %v7283 = vpack.c.b16 %v5923, %v5915
    %v7284 = vpack.c.b16 %v5924, %v5916
    %v7285 = vpack.c.b16 %v5925, %v5917
    %v7286 = vpack.c.b16 %v5926, %v5918
    %v7287 = vpack.c.b16 %v5927, %v5919
    %v7288 = vpack.c.b16 %v5928, %v5920
    %v7289 = vpack.c.b16 %v5929, %v5921
    %v7290 = vpack.c.b16 %v5930, %v5922
    %v7291 = vpack.c.b16 %v5939, %v5931
    %v7292 = vpack.c.b16 %v5940, %v5932
    %v7293 = vpack.c.b16 %v5941, %v5933
    %v7294 = vpack.c.b16 %v5942, %v5934
    %v7295 = vpack.c.b16 %v5943, %v5935
    %v7296 = vpack.c.b16 %v5944, %v5936
    %v7297 = vpack.c.b16 %v5945, %v5937
    %v7298 = vpack.c.b16 %v5946, %v5938
    %v7299 = vpack.c.b16 %v5955, %v5947
    %v7300 = vpack.c.b16 %v5956, %v5948
    %v7301 = vpack.c.b16 %v5957, %v5949
    %v7302 = vpack.c.b16 %v5958, %v5950
    %v7303 = vpack.c.b16 %v5959, %v5951
    %v7304 = vpack.c.b16 %v5960, %v5952
    %v7305 = vpack.c.b16 %v5961, %v5953
    %v7306 = vpack.c.b16 %v5962, %v5954
    %v7307 = vpack.c.b16 %v5971, %v5963
    %v7308 = vpack.c.b16 %v5972, %v5964
    %v7309 = vpack.c.b16 %v5973, %v5965
    %v7310 = vpack.c.b16 %v5974, %v5966
    %v7311 = vpack.c.b16 %v5975, %v5967
    %v7312 = vpack.c.b16 %v5976, %v5968
    %v7313 = vpack.c.b16 %v5977, %v5969
    %v7314 = vpack.c.b16 %v5978, %v5970
    %v7315 = vpack.c.b16 %v5987, %v5979
    %v7316 = vpack.c.b16 %v5988, %v5980
    %v7317 = vpack.c.b16 %v5989, %v5981
    %v7318 = vpack.c.b16 %v5990, %v5982
    %v7319 = vpack.c.b16 %v5991, %v5983
    %v7320 = vpack.c.b16 %v5992, %v5984
    %v7321 = vpack.c.b16 %v5993, %v5985
    %v7322 = vpack.c.b16 %v5994, %v5986
    %v7323 = vpack.c.b16 %v6003, %v5995
    %v7324 = vpack.c.b16 %v6004, %v5996
    %v7325 = vpack.c.b16 %v6005, %v5997
    %v7326 = vpack.c.b16 %v6006, %v5998
    %v7327 = vpack.c.b16 %v6007, %v5999
    %v7328 = vpack.c.b16 %v6008, %v6000
    %v7329 = vpack.c.b16 %v6009, %v6001
    %v7330 = vpack.c.b16 %v6010, %v6002
    %v7331 = vpack.c.b16 %v6019, %v6011
    %v7332 = vpack.c.b16 %v6020, %v6012
    %v7333 = vpack.c.b16 %v6021, %v6013
    %v7334 = vpack.c.b16 %v6022, %v6014
    %v7335 = vpack.c.b16 %v6023, %v6015
    %v7336 = vpack.c.b16 %v6024, %v6016
    %v7337 = vpack.c.b16 %v6025, %v6017
    %v7338 = vpack.c.b16 %v6026, %v6018
    %v7339 = vpack.c.b16 %v6035, %v6027
    %v7340 = vpack.c.b16 %v6036, %v6028
    %v7341 = vpack.c.b16 %v6037, %v6029
    %v7342 = vpack.c.b16 %v6038, %v6030
    %v7343 = vpack.c.b16 %v6039, %v6031
    %v7344 = vpack.c.b16 %v6040, %v6032
    %v7345 = vpack.c.b16 %v6041, %v6033
    %v7346 = vpack.c.b16 %v6042, %v6034
    %v7347 = vpack.c.b16 %v6051, %v6043
    %v7348 = vpack.c.b16 %v6052, %v6044
    %v7349 = vpack.c.b16 %v6053, %v6045
    %v7350 = vpack.c.b16 %v6054, %v6046
    %v7351 = vpack.c.b16 %v6055, %v6047
    %v7352 = vpack.c.b16 %v6056, %v6048
    %v7353 = vpack.c.b16 %v6057, %v6049
    %v7354 = vpack.c.b16 %v6058, %v6050
    %v7355 = vpack.c.b16 %v6067, %v6059
    %v7356 = vpack.c.b16 %v6068, %v6060
    %v7357 = vpack.c.b16 %v6069, %v6061
    %v7358 = vpack.c.b16 %v6070, %v6062
    %v7359 = vpack.c.b16 %v6071, %v6063
    %v7360 = vpack.c.b16 %v6072, %v6064
    %v7361 = vpack.c.b16 %v6073, %v6065
    %v7362 = vpack.c.b16 %v6074, %v6066
    %v7363 = vpack.c.b16 %v6083, %v6075
    %v7364 = vpack.c.b16 %v6084, %v6076
    %v7365 = vpack.c.b16 %v6085, %v6077
    %v7366 = vpack.c.b16 %v6086, %v6078
    %v7367 = vpack.c.b16 %v6087, %v6079
    %v7368 = vpack.c.b16 %v6088, %v6080
    %v7369 = vpack.c.b16 %v6089, %v6081
    %v7370 = vpack.c.b16 %v6090, %v6082
    %v7371 = vpack.c.b16 %v6099, %v6091
    %v7372 = vpack.c.b16 %v6100, %v6092
    %v7373 = vpack.c.b16 %v6101, %v6093
    %v7374 = vpack.c.b16 %v6102, %v6094
    %v7375 = vpack.c.b16 %v6103, %v6095
    %v7376 = vpack.c.b16 %v6104, %v6096
    %v7377 = vpack.c.b16 %v6105, %v6097
    %v7378 = vpack.c.b16 %v6106, %v6098
    %v7379 = vpack.c.b16 %v6115, %v6107
    %v7380 = vpack.c.b16 %v6116, %v6108
    %v7381 = vpack.c.b16 %v6117, %v6109
    %v7382 = vpack.c.b16 %v6118, %v6110
    %v7383 = vpack.c.b16 %v6119, %v6111
    %v7384 = vpack.c.b16 %v6120, %v6112
    %v7385 = vpack.c.b16 %v6121, %v6113
    %v7386 = vpack.c.b16 %v6122, %v6114
    %v7387 = vpack.c.b16 %v6131, %v6123
    %v7388 = vpack.c.b16 %v6132, %v6124
    %v7389 = vpack.c.b16 %v6133, %v6125
    %v7390 = vpack.c.b16 %v6134, %v6126
    %v7391 = vpack.c.b16 %v6135, %v6127
    %v7392 = vpack.c.b16 %v6136, %v6128
    %v7393 = vpack.c.b16 %v6137, %v6129
    %v7394 = vpack.c.b16 %v6138, %v6130
    %v7395 = vpack.c.b16 %v6147, %v6139
    %v7396 = vpack.c.b16 %v6148, %v6140
    %v7397 = vpack.c.b16 %v6149, %v6141
    %v7398 = vpack.c.b16 %v6150, %v6142
    %v7399 = vpack.c.b16 %v6151, %v6143
    %v7400 = vpack.c.b16 %v6152, %v6144
    %v7401 = vpack.c.b16 %v6153, %v6145
    %v7402 = vpack.c.b16 %v6154, %v6146
    %v7403 = vpack.c.b16 %v6163, %v6155
    %v7404 = vpack.c.b16 %v6164, %v6156
    %v7405 = vpack.c.b16 %v6165, %v6157
    %v7406 = vpack.c.b16 %v6166, %v6158
    %v7407 = vpack.c.b16 %v6167, %v6159
    %v7408 = vpack.c.b16 %v6168, %v6160
    %v7409 = vpack.c.b16 %v6169, %v6161
    %v7410 = vpack.c.b16 %v6170, %v6162
    %v7411 = vpack.c.b16 %v6179, %v6171
    %v7412 = vpack.c.b16 %v6180, %v6172
    %v7413 = vpack.c.b16 %v6181, %v6173
    %v7414 = vpack.c.b16 %v6182, %v6174
    %v7415 = vpack.c.b16 %v6183, %v6175
    %v7416 = vpack.c.b16 %v6184, %v6176
    %v7417 = vpack.c.b16 %v6185, %v6177
    %v7418 = vpack.c.b16 %v6186, %v6178
    %v7419 = vpack.c.b16 %v6195, %v6187
    %v7420 = vpack.c.b16 %v6196, %v6188
    %v7421 = vpack.c.b16 %v6197, %v6189
    %v7422 = vpack.c.b16 %v6198, %v6190
    %v7423 = vpack.c.b16 %v6199, %v6191
    %v7424 = vpack.c.b16 %v6200, %v6192
    %v7425 = vpack.c.b16 %v6201, %v6193
    %v7426 = vpack.c.b16 %v6202, %v6194
    %v7427 = vpack.c.b16 %v6211, %v6203
    %v7428 = vpack.c.b16 %v6212, %v6204
    %v7429 = vpack.c.b16 %v6213, %v6205
    %v7430 = vpack.c.b16 %v6214, %v6206
    %v7431 = vpack.c.b16 %v6215, %v6207
    %v7432 = vpack.c.b16 %v6216, %v6208
    %v7433 = vpack.c.b16 %v6217, %v6209
    %v7434 = vpack.c.b16 %v6218, %v6210
    %v7435 = vpack.c.b16 %v6227, %v6219
    %v7436 = vpack.c.b16 %v6228, %v6220
    %v7437 = vpack.c.b16 %v6229, %v6221
    %v7438 = vpack.c.b16 %v6230, %v6222
    %v7439 = vpack.c.b16 %v6231, %v6223
    %v7440 = vpack.c.b16 %v6232, %v6224
    %v7441 = vpack.c.b16 %v6233, %v6225
    %v7442 = vpack.c.b16 %v6234, %v6226
    %v7443 = vpack.c.b16 %v6243, %v6235
    %v7444 = vpack.c.b16 %v6244, %v6236
    %v7445 = vpack.c.b16 %v6245, %v6237
    %v7446 = vpack.c.b16 %v6246, %v6238
    %v7447 = vpack.c.b16 %v6247, %v6239
    %v7448 = vpack.c.b16 %v6248, %v6240
    %v7449 = vpack.c.b16 %v6249, %v6241
    %v7450 = vpack.c.b16 %v6250, %v6242
    %v7451 = vpack.c.b16 %v6259, %v6251
    %v7452 = vpack.c.b16 %v6260, %v6252
    %v7453 = vpack.c.b16 %v6261, %v6253
    %v7454 = vpack.c.b16 %v6262, %v6254
    %v7455 = vpack.c.b16 %v6263, %v6255
    %v7456 = vpack.c.b16 %v6264, %v6256
    %v7457 = vpack.c.b16 %v6265, %v6257
    %v7458 = vpack.c.b16 %v6266, %v6258
    %v7459 = vpack.c.b16 %v6275, %v6267
    %v7460 = vpack.c.b16 %v6276, %v6268
    %v7461 = vpack.c.b16 %v6277, %v6269
    %v7462 = vpack.c.b16 %v6278, %v6270
    %v7463 = vpack.c.b16 %v6279, %v6271
    %v7464 = vpack.c.b16 %v6280, %v6272
    %v7465 = vpack.c.b16 %v6281, %v6273
    %v7466 = vpack.c.b16 %v6282, %v6274
    %v7467 = vpack.c.b16 %v6291, %v6283
    %v7468 = vpack.c.b16 %v6292, %v6284
    %v7469 = vpack.c.b16 %v6293, %v6285
    %v7470 = vpack.c.b16 %v6294, %v6286
    %v7471 = vpack.c.b16 %v6295, %v6287
    %v7472 = vpack.c.b16 %v6296, %v6288
    %v7473 = vpack.c.b16 %v6297, %v6289
    %v7474 = vpack.c.b16 %v6298, %v6290
    %v7475 = vpack.c.b16 %v6307, %v6299
    %v7476 = vpack.c.b16 %v6308, %v6300
    %v7477 = vpack.c.b16 %v6309, %v6301
    %v7478 = vpack.c.b16 %v6310, %v6302
    %v7479 = vpack.c.b16 %v6311, %v6303
    %v7480 = vpack.c.b16 %v6312, %v6304
    %v7481 = vpack.c.b16 %v6313, %v6305
    %v7482 = vpack.c.b16 %v6314, %v6306
    %v7483 = vpack.c.b16 %v6323, %v6315
    %v7484 = vpack.c.b16 %v6324, %v6316
    %v7485 = vpack.c.b16 %v6325, %v6317
    %v7486 = vpack.c.b16 %v6326, %v6318
    %v7487 = vpack.c.b16 %v6327, %v6319
    %v7488 = vpack.c.b16 %v6328, %v6320
    %v7489 = vpack.c.b16 %v6329, %v6321
    %v7490 = vpack.c.b16 %v6330, %v6322
    %v7491 = vpack.c.b16 %v6339, %v6331
    %v7492 = vpack.c.b16 %v6340, %v6332
    %v7493 = vpack.c.b16 %v6341, %v6333
    %v7494 = vpack.c.b16 %v6342, %v6334
    %v7495 = vpack.c.b16 %v6343, %v6335
    %v7496 = vpack.c.b16 %v6344, %v6336
    %v7497 = vpack.c.b16 %v6345, %v6337
    %v7498 = vpack.c.b16 %v6346, %v6338
    %v7499 = vpack.c.b16 %v6355, %v6347
    %v7500 = vpack.c.b16 %v6356, %v6348
    %v7501 = vpack.c.b16 %v6357, %v6349
    %v7502 = vpack.c.b16 %v6358, %v6350
    %v7503 = vpack.c.b16 %v6359, %v6351
    %v7504 = vpack.c.b16 %v6360, %v6352
    %v7505 = vpack.c.b16 %v6361, %v6353
    %v7506 = vpack.c.b16 %v6362, %v6354
    %v7507 = vpack.c.b16 %v6371, %v6363
    %v7508 = vpack.c.b16 %v6372, %v6364
    %v7509 = vpack.c.b16 %v6373, %v6365
    %v7510 = vpack.c.b16 %v6374, %v6366
    %v7511 = vpack.c.b16 %v6375, %v6367
    %v7512 = vpack.c.b16 %v6376, %v6368
    %v7513 = vpack.c.b16 %v6377, %v6369
    %v7514 = vpack.c.b16 %v6378, %v6370
    %v7515 = vpack.c.b16 %v6387, %v6379
    %v7516 = vpack.c.b16 %v6388, %v6380
    %v7517 = vpack.c.b16 %v6389, %v6381
    %v7518 = vpack.c.b16 %v6390, %v6382
    %v7519 = vpack.c.b16 %v6391, %v6383
    %v7520 = vpack.c.b16 %v6392, %v6384
    %v7521 = vpack.c.b16 %v6393, %v6385
    %v7522 = vpack.c.b16 %v6394, %v6386
    %v7523 = vpack.c.b16 %v6403, %v6395
    %v7524 = vpack.c.b16 %v6404, %v6396
    %v7525 = vpack.c.b16 %v6405, %v6397
    %v7526 = vpack.c.b16 %v6406, %v6398
    %v7527 = vpack.c.b16 %v6407, %v6399
    %v7528 = vpack.c.b16 %v6408, %v6400
    %v7529 = vpack.c.b16 %v6409, %v6401
    %v7530 = vpack.c.b16 %v6410, %v6402
    %v7531 = vpack.c.b16 %v6419, %v6411
    %v7532 = vpack.c.b16 %v6420, %v6412
    %v7533 = vpack.c.b16 %v6421, %v6413
    %v7534 = vpack.c.b16 %v6422, %v6414
    %v7535 = vpack.c.b16 %v6423, %v6415
    %v7536 = vpack.c.b16 %v6424, %v6416
    %v7537 = vpack.c.b16 %v6425, %v6417
    %v7538 = vpack.c.b16 %v6426, %v6418
    %v7539 = vpack.c.b16 %v6435, %v6427
    %v7540 = vpack.c.b16 %v6436, %v6428
    %v7541 = vpack.c.b16 %v6437, %v6429
    %v7542 = vpack.c.b16 %v6438, %v6430
    %v7543 = vpack.c.b16 %v6439, %v6431
    %v7544 = vpack.c.b16 %v6440, %v6432
    %v7545 = vpack.c.b16 %v6441, %v6433
    %v7546 = vpack.c.b16 %v6442, %v6434
    %v7547 = vpack.c.b16 %v6451, %v6443
    %v7548 = vpack.c.b16 %v6452, %v6444
    %v7549 = vpack.c.b16 %v6453, %v6445
    %v7550 = vpack.c.b16 %v6454, %v6446
    %v7551 = vpack.c.b16 %v6455, %v6447
    %v7552 = vpack.c.b16 %v6456, %v6448
    %v7553 = vpack.c.b16 %v6457, %v6449
    %v7554 = vpack.c.b16 %v6458, %v6450
    %v7555 = vpack.c.b16 %v6467, %v6459
    %v7556 = vpack.c.b16 %v6468, %v6460
    %v7557 = vpack.c.b16 %v6469, %v6461
    %v7558 = vpack.c.b16 %v6470, %v6462
    %v7559 = vpack.c.b16 %v6471, %v6463
    %v7560 = vpack.c.b16 %v6472, %v6464
    %v7561 = vpack.c.b16 %v6473, %v6465
    %v7562 = vpack.c.b16 %v6474, %v6466
    %v7563 = vpack.c.b16 %v6483, %v6475
    %v7564 = vpack.c.b16 %v6484, %v6476
    %v7565 = vpack.c.b16 %v6485, %v6477
    %v7566 = vpack.c.b16 %v6486, %v6478
    %v7567 = vpack.c.b16 %v6487, %v6479
    %v7568 = vpack.c.b16 %v6488, %v6480
    %v7569 = vpack.c.b16 %v6489, %v6481
    %v7570 = vpack.c.b16 %v6490, %v6482
    %v7571 = vpack.c.b16 %v6499, %v6491
    %v7572 = vpack.c.b16 %v6500, %v6492
    %v7573 = vpack.c.b16 %v6501, %v6493
    %v7574 = vpack.c.b16 %v6502, %v6494
    %v7575 = vpack.c.b16 %v6503, %v6495
    %v7576 = vpack.c.b16 %v6504, %v6496
    %v7577 = vpack.c.b16 %v6505, %v6497
    %v7578 = vpack.c.b16 %v6506, %v6498
    %v7579 = vpack.c.b16 %v6515, %v6507
    %v7580 = vpack.c.b16 %v6516, %v6508
    %v7581 = vpack.c.b16 %v6517, %v6509
    %v7582 = vpack.c.b16 %v6518, %v6510
    %v7583 = vpack.c.b16 %v6519, %v6511
    %v7584 = vpack.c.b16 %v6520, %v6512
    %v7585 = vpack.c.b16 %v6521, %v6513
    %v7586 = vpack.c.b16 %v6522, %v6514
    %v7587 = vpack.c.b16 %v6531, %v6523
    %v7588 = vpack.c.b16 %v6532, %v6524
    %v7589 = vpack.c.b16 %v6533, %v6525
    %v7590 = vpack.c.b16 %v6534, %v6526
    %v7591 = vpack.c.b16 %v6535, %v6527
    %v7592 = vpack.c.b16 %v6536, %v6528
    %v7593 = vpack.c.b16 %v6537, %v6529
    %v7594 = vpack.c.b16 %v6538, %v6530
    %v7595 = vpack.c.b16 %v6547, %v6539
    %v7596 = vpack.c.b16 %v6548, %v6540
    %v7597 = vpack.c.b16 %v6549, %v6541
    %v7598 = vpack.c.b16 %v6550, %v6542
    %v7599 = vpack.c.b16 %v6551, %v6543
    %v7600 = vpack.c.b16 %v6552, %v6544
    %v7601 = vpack.c.b16 %v6553, %v6545
    %v7602 = vpack.c.b16 %v6554, %v6546
    %v7603 = vpack.c.b16 %v6563, %v6555
    %v7604 = vpack.c.b16 %v6564, %v6556
    %v7605 = vpack.c.b16 %v6565, %v6557
    %v7606 = vpack.c.b16 %v6566, %v6558
    %v7607 = vpack.c.b16 %v6567, %v6559
    %v7608 = vpack.c.b16 %v6568, %v6560
    %v7609 = vpack.c.b16 %v6569, %v6561
    %v7610 = vpack.c.b16 %v6570, %v6562
    %v7611 = vpack.c.b16 %v6579, %v6571
    %v7612 = vpack.c.b16 %v6580, %v6572
    %v7613 = vpack.c.b16 %v6581, %v6573
    %v7614 = vpack.c.b16 %v6582, %v6574
    %v7615 = vpack.c.b16 %v6583, %v6575
    %v7616 = vpack.c.b16 %v6584, %v6576
    %v7617 = vpack.c.b16 %v6585, %v6577
    %v7618 = vpack.c.b16 %v6586, %v6578
    %v7619 = vpack.c.b16 %v6595, %v6587
    %v7620 = vpack.c.b16 %v6596, %v6588
    %v7621 = vpack.c.b16 %v6597, %v6589
    %v7622 = vpack.c.b16 %v6598, %v6590
    %v7623 = vpack.c.b16 %v6599, %v6591
    %v7624 = vpack.c.b16 %v6600, %v6592
    %v7625 = vpack.c.b16 %v6601, %v6593
    %v7626 = vpack.c.b16 %v6602, %v6594
    %8651 = vmatprep.subr.bf16.mxu0 %v6604
    %8652 = vmatpush1.bf16.msra.mxu0 %v6603
    %8653 = vmatprep.subr.bf16.mxu0 %v6612
    %8654 = vmatpush1.bf16.msra.mxu0 %v6611
    %8655 = vmatprep.subr.bf16.mxu0 %v6620
    %8656 = vmatpush1.bf16.msra.mxu0 %v6619
    %8657 = vmatprep.subr.bf16.mxu0 %v6628
    %8658 = vmatpush1.bf16.msra.mxu0 %v6627
    %8659 = vmatprep.subr.bf16.mxu0 %v6636
    %8660 = vmatpush1.bf16.msra.mxu0 %v6635
    %8661 = vmatprep.subr.bf16.mxu0 %v6644
    %8662 = vmatpush1.bf16.msra.mxu0 %v6643
    %8663 = vmatprep.subr.bf16.mxu0 %v6652
    %8664 = vmatpush1.bf16.msra.mxu0 %v6651
    %8665 = vmatprep.subr.bf16.mxu0 %v6660
    %8666 = vmatpush1.bf16.msra.mxu0 %v6659
    %8667 = vmatprep.subr.bf16.mxu0 %v6668
    %8668 = vmatpush1.bf16.msra.mxu0 %v6667
    %8669 = vmatprep.subr.bf16.mxu0 %v6676
    %8670 = vmatpush1.bf16.msra.mxu0 %v6675
    %8671 = vmatprep.subr.bf16.mxu0 %v6684
    %8672 = vmatpush1.bf16.msra.mxu0 %v6683
    %8673 = vmatprep.subr.bf16.mxu0 %v6692
    %8674 = vmatpush1.bf16.msra.mxu0 %v6691
    %8675 = vmatprep.subr.bf16.mxu0 %v6700
    %8676 = vmatpush1.bf16.msra.mxu0 %v6699
    %8677 = vmatprep.subr.bf16.mxu0 %v6708
    %8678 = vmatpush1.bf16.msra.mxu0 %v6707
    %8679 = vmatprep.subr.bf16.mxu0 %v6716
    %8680 = vmatpush1.bf16.msra.mxu0 %v6715
    %8681 = vmatprep.subr.bf16.mxu0 %v6724
    %8682 = vmatpush1.bf16.msra.mxu0 %v6723
    %8683 = vmatprep.mubr.bf16.mxu0 %v2450
    %8684 = vmatmul.mubr.bf16.gmra.mrb[0].mxu0 %v2449
    %v8685 = vpop.f32.mrb[0].mxu0
    %v8686 = vadd.f32 %v3494, %v8685
    %v8687 = vpop.f32.mrb[0].mxu0
    %v8688 = vadd.f32 %v3498, %v8687
    %v8689 = vpop.f32.mrb[0].mxu0
    %v8690 = vpop.f32.mrb[0].mxu0
    %8691 = vdwg.mxu0
    %8692 = vmatprep.subr.bf16.mxu0 %v6732
    %8693 = vmatpush1.bf16.msra.mxu0 %v6731
    %8694 = vmatprep.subr.bf16.mxu0 %v6740
    %8695 = vmatpush1.bf16.msra.mxu0 %v6739
    %8696 = vmatprep.subr.bf16.mxu0 %v6748
    %8697 = vmatpush1.bf16.msra.mxu0 %v6747
    %8698 = vmatprep.subr.bf16.mxu0 %v6756
    %8699 = vmatpush1.bf16.msra.mxu0 %v6755
    %8700 = vmatprep.subr.bf16.mxu0 %v6764
    %8701 = vmatpush1.bf16.msra.mxu0 %v6763
    %8702 = vmatprep.subr.bf16.mxu0 %v6772
    %8703 = vmatpush1.bf16.msra.mxu0 %v6771
    %8704 = vmatprep.subr.bf16.mxu0 %v6780
    %8705 = vmatpush1.bf16.msra.mxu0 %v6779
    %8706 = vmatprep.subr.bf16.mxu0 %v6788
    %8707 = vmatpush1.bf16.msra.mxu0 %v6787
    %8708 = vmatprep.subr.bf16.mxu0 %v6796
    %8709 = vmatpush1.bf16.msra.mxu0 %v6795
    %8710 = vmatprep.subr.bf16.mxu0 %v6804
    %8711 = vmatpush1.bf16.msra.mxu0 %v6803
    %8712 = vmatprep.subr.bf16.mxu0 %v6812
    %8713 = vmatpush1.bf16.msra.mxu0 %v6811
    %8714 = vmatprep.subr.bf16.mxu0 %v6820
    %8715 = vmatpush1.bf16.msra.mxu0 %v6819
    %8716 = vmatprep.subr.bf16.mxu0 %v6828
    %8717 = vmatpush1.bf16.msra.mxu0 %v6827
    %8718 = vmatprep.subr.bf16.mxu0 %v6836
    %8719 = vmatpush1.bf16.msra.mxu0 %v6835
    %8720 = vmatprep.subr.bf16.mxu0 %v6844
    %8721 = vmatpush1.bf16.msra.mxu0 %v6843
    %8722 = vmatprep.subr.bf16.mxu0 %v6852
    %8723 = vmatpush1.bf16.msra.mxu0 %v6851
    %8724 = vmatprep.mubr.bf16.mxu0 %v2452
    %8725 = vmatmul.mubr.bf16.gmra.mrb[0].mxu0 %v2451
    %v8726 = vpop.f32.mrb[0].mxu0
    %v8727 = vadd.f32 %v8686, %v8726
    %v8728 = vpop.f32.mrb[0].mxu0
    %v8729 = vadd.f32 %v8688, %v8728
    %v8730 = vpop.f32.mrb[0].mxu0
    %v8731 = vpop.f32.mrb[0].mxu0
    %8732 = vdwg.mxu0
    %8733 = vmatprep.subr.bf16.mxu0 %v6860
    %8734 = vmatpush1.bf16.msra.mxu0 %v6859
    %8735 = vmatprep.subr.bf16.mxu0 %v6868
    %8736 = vmatpush1.bf16.msra.mxu0 %v6867
    %8737 = vmatprep.subr.bf16.mxu0 %v6876
    %8738 = vmatpush1.bf16.msra.mxu0 %v6875
    %8739 = vmatprep.subr.bf16.mxu0 %v6884
    %8740 = vmatpush1.bf16.msra.mxu0 %v6883
    %8741 = vmatprep.subr.bf16.mxu0 %v6892
    %8742 = vmatpush1.bf16.msra.mxu0 %v6891
    %8743 = vmatprep.subr.bf16.mxu0 %v6900
    %8744 = vmatpush1.bf16.msra.mxu0 %v6899
    %8745 = vmatprep.subr.bf16.mxu0 %v6908
    %8746 = vmatpush1.bf16.msra.mxu0 %v6907
    %8747 = vmatprep.subr.bf16.mxu0 %v6916
    %8748 = vmatpush1.bf16.msra.mxu0 %v6915
    %8749 = vmatprep.subr.bf16.mxu0 %v6924
    %8750 = vmatpush1.bf16.msra.mxu0 %v6923
    %8751 = vmatprep.subr.bf16.mxu0 %v6932
    %8752 = vmatpush1.bf16.msra.mxu0 %v6931
    %8753 = vmatprep.subr.bf16.mxu0 %v6940
    %8754 = vmatpush1.bf16.msra.mxu0 %v6939
    %8755 = vmatprep.subr.bf16.mxu0 %v6948
    %8756 = vmatpush1.bf16.msra.mxu0 %v6947
    %8757 = vmatprep.subr.bf16.mxu0 %v6956
    %8758 = vmatpush1.bf16.msra.mxu0 %v6955
    %8759 = vmatprep.subr.bf16.mxu0 %v6964
    %8760 = vmatpush1.bf16.msra.mxu0 %v6963
    %8761 = vmatprep.subr.bf16.mxu0 %v6972
    %8762 = vmatpush1.bf16.msra.mxu0 %v6971
    %8763 = vmatprep.subr.bf16.mxu0 %v6980
    %8764 = vmatpush1.bf16.msra.mxu0 %v6979
    %8765 = vmatprep.mubr.bf16.mxu0 %v2454
    %8766 = vmatmul.mubr.bf16.gmra.mrb[0].mxu0 %v2453
    %v8767 = vpop.f32.mrb[0].mxu0
    %v8768 = vadd.f32 %v8727, %v8767
    %v8769 = vpop.f32.mrb[0].mxu0
    %v8770 = vadd.f32 %v8729, %v8769
    %v8771 = vpop.f32.mrb[0].mxu0
    %v8772 = vpop.f32.mrb[0].mxu0
    %8773 = vdwg.mxu0
    %8774 = vmatprep.subr.bf16.mxu0 %v6988
    %8775 = vmatpush1.bf16.msra.mxu0 %v6987
    %8776 = vmatprep.subr.bf16.mxu0 %v6996
    %8777 = vmatpush1.bf16.msra.mxu0 %v6995
    %8778 = vmatprep.subr.bf16.mxu0 %v7004
    %8779 = vmatpush1.bf16.msra.mxu0 %v7003
    %8780 = vmatprep.subr.bf16.mxu0 %v7012
    %8781 = vmatpush1.bf16.msra.mxu0 %v7011
    %8782 = vmatprep.subr.bf16.mxu0 %v7020
    %8783 = vmatpush1.bf16.msra.mxu0 %v7019
    %8784 = vmatprep.subr.bf16.mxu0 %v7028
    %8785 = vmatpush1.bf16.msra.mxu0 %v7027
    %8786 = vmatprep.subr.bf16.mxu0 %v7036
    %8787 = vmatpush1.bf16.msra.mxu0 %v7035
    %8788 = vmatprep.subr.bf16.mxu0 %v7044
    %8789 = vmatpush1.bf16.msra.mxu0 %v7043
    %8790 = vmatprep.subr.bf16.mxu0 %v7052
    %8791 = vmatpush1.bf16.msra.mxu0 %v7051
    %8792 = vmatprep.subr.bf16.mxu0 %v7060
    %8793 = vmatpush1.bf16.msra.mxu0 %v7059
    %8794 = vmatprep.subr.bf16.mxu0 %v7068
    %8795 = vmatpush1.bf16.msra.mxu0 %v7067
    %8796 = vmatprep.subr.bf16.mxu0 %v7076
    %8797 = vmatpush1.bf16.msra.mxu0 %v7075
    %8798 = vmatprep.subr.bf16.mxu0 %v7084
    %8799 = vmatpush1.bf16.msra.mxu0 %v7083
    %8800 = vmatprep.subr.bf16.mxu0 %v7092
    %8801 = vmatpush1.bf16.msra.mxu0 %v7091
    %8802 = vmatprep.subr.bf16.mxu0 %v7100
    %8803 = vmatpush1.bf16.msra.mxu0 %v7099
    %8804 = vmatprep.subr.bf16.mxu0 %v7108
    %8805 = vmatpush1.bf16.msra.mxu0 %v7107
    %8806 = vmatprep.mubr.bf16.mxu0 %v2456
    %8807 = vmatmul.mubr.bf16.gmra.mrb[0].mxu0 %v2455
    %v8808 = vpop.f32.mrb[0].mxu0
    %v8809 = vadd.f32 %v8768, %v8808
    %v8810 = vpop.f32.mrb[0].mxu0
    %v8811 = vadd.f32 %v8770, %v8810
    %v8812 = vpop.f32.mrb[0].mxu0
    %v8813 = vpop.f32.mrb[0].mxu0
    %8814 = vdwg.mxu0
    %8815 = vmatprep.subr.bf16.mxu0 %v7116
    %8816 = vmatpush1.bf16.msra.mxu0 %v7115
    %8817 = vmatprep.subr.bf16.mxu0 %v7124
    %8818 = vmatpush1.bf16.msra.mxu0 %v7123
    %8819 = vmatprep.subr.bf16.mxu0 %v7132
    %8820 = vmatpush1.bf16.msra.mxu0 %v7131
    %8821 = vmatprep.subr.bf16.mxu0 %v7140
    %8822 = vmatpush1.bf16.msra.mxu0 %v7139
    %8823 = vmatprep.subr.bf16.mxu0 %v7148
    %8824 = vmatpush1.bf16.msra.mxu0 %v7147
    %8825 = vmatprep.subr.bf16.mxu0 %v7156
    %8826 = vmatpush1.bf16.msra.mxu0 %v7155
    %8827 = vmatprep.subr.bf16.mxu0 %v7164
    %8828 = vmatpush1.bf16.msra.mxu0 %v7163
    %8829 = vmatprep.subr.bf16.mxu0 %v7172
    %8830 = vmatpush1.bf16.msra.mxu0 %v7171
    %8831 = vmatprep.subr.bf16.mxu0 %v7180
    %8832 = vmatpush1.bf16.msra.mxu0 %v7179
    %8833 = vmatprep.subr.bf16.mxu0 %v7188
    %8834 = vmatpush1.bf16.msra.mxu0 %v7187
    %8835 = vmatprep.subr.bf16.mxu0 %v7196
    %8836 = vmatpush1.bf16.msra.mxu0 %v7195
    %8837 = vmatprep.subr.bf16.mxu0 %v7204
    %8838 = vmatpush1.bf16.msra.mxu0 %v7203
    %8839 = vmatprep.subr.bf16.mxu0 %v7212
    %8840 = vmatpush1.bf16.msra.mxu0 %v7211
    %8841 = vmatprep.subr.bf16.mxu0 %v7220
    %8842 = vmatpush1.bf16.msra.mxu0 %v7219
    %8843 = vmatprep.subr.bf16.mxu0 %v7228
    %8844 = vmatpush1.bf16.msra.mxu0 %v7227
    %8845 = vmatprep.subr.bf16.mxu0 %v7236
    %8846 = vmatpush1.bf16.msra.mxu0 %v7235
    %8847 = vmatprep.mubr.bf16.mxu0 %v2458
    %8848 = vmatmul.mubr.bf16.gmra.mrb[0].mxu0 %v2457
    %v8849 = vpop.f32.mrb[0].mxu0
    %v8850 = vadd.f32 %v8809, %v8849
    %v8851 = vpop.f32.mrb[0].mxu0
    %v8852 = vadd.f32 %v8811, %v8851
    %v8853 = vpop.f32.mrb[0].mxu0
    %v8854 = vpop.f32.mrb[0].mxu0
    %8855 = vdwg.mxu0
    %8856 = vmatprep.subr.bf16.mxu0 %v7244
    %8857 = vmatpush1.bf16.msra.mxu0 %v7243
    %8858 = vmatprep.subr.bf16.mxu0 %v7252
    %8859 = vmatpush1.bf16.msra.mxu0 %v7251
    %8860 = vmatprep.subr.bf16.mxu0 %v7260
    %8861 = vmatpush1.bf16.msra.mxu0 %v7259
    %8862 = vmatprep.subr.bf16.mxu0 %v7268
    %8863 = vmatpush1.bf16.msra.mxu0 %v7267
    %8864 = vmatprep.subr.bf16.mxu0 %v7276
    %8865 = vmatpush1.bf16.msra.mxu0 %v7275
    %8866 = vmatprep.subr.bf16.mxu0 %v7284
    %8867 = vmatpush1.bf16.msra.mxu0 %v7283
    %8868 = vmatprep.subr.bf16.mxu0 %v7292
    %8869 = vmatpush1.bf16.msra.mxu0 %v7291
    %8870 = vmatprep.subr.bf16.mxu0 %v7300
    %8871 = vmatpush1.bf16.msra.mxu0 %v7299
    %8872 = vmatprep.subr.bf16.mxu0 %v7308
    %8873 = vmatpush1.bf16.msra.mxu0 %v7307
    %8874 = vmatprep.subr.bf16.mxu0 %v7316
    %8875 = vmatpush1.bf16.msra.mxu0 %v7315
    %8876 = vmatprep.subr.bf16.mxu0 %v7324
    %8877 = vmatpush1.bf16.msra.mxu0 %v7323
    %8878 = vmatprep.subr.bf16.mxu0 %v7332
    %8879 = vmatpush1.bf16.msra.mxu0 %v7331
    %8880 = vmatprep.subr.bf16.mxu0 %v7340
    %8881 = vmatpush1.bf16.msra.mxu0 %v7339
    %8882 = vmatprep.subr.bf16.mxu0 %v7348
    %8883 = vmatpush1.bf16.msra.mxu0 %v7347
    %8884 = vmatprep.subr.bf16.mxu0 %v7356
    %8885 = vmatpush1.bf16.msra.mxu0 %v7355
    %8886 = vmatprep.subr.bf16.mxu0 %v7364
    %8887 = vmatpush1.bf16.msra.mxu0 %v7363
    %8888 = vmatprep.mubr.bf16.mxu0 %v2460
    %8889 = vmatmul.mubr.bf16.gmra.mrb[0].mxu0 %v2459
    %v8890 = vpop.f32.mrb[0].mxu0
    %v8891 = vadd.f32 %v8850, %v8890
    %v8892 = vpop.f32.mrb[0].mxu0
    %v8893 = vadd.f32 %v8852, %v8892
    %v8894 = vpop.f32.mrb[0].mxu0
    %v8895 = vpop.f32.mrb[0].mxu0
    %8896 = vdwg.mxu0
    %8897 = vmatprep.subr.bf16.mxu0 %v7372
    %8898 = vmatpush1.bf16.msra.mxu0 %v7371
    %8899 = vmatprep.subr.bf16.mxu0 %v7380
    %8900 = vmatpush1.bf16.msra.mxu0 %v7379
    %8901 = vmatprep.subr.bf16.mxu0 %v7388
    %8902 = vmatpush1.bf16.msra.mxu0 %v7387
    %8903 = vmatprep.subr.bf16.mxu0 %v7396
    %8904 = vmatpush1.bf16.msra.mxu0 %v7395
    %8905 = vmatprep.subr.bf16.mxu0 %v7404
    %8906 = vmatpush1.bf16.msra.mxu0 %v7403
    %8907 = vmatprep.subr.bf16.mxu0 %v7412
    %8908 = vmatpush1.bf16.msra.mxu0 %v7411
    %8909 = vmatprep.subr.bf16.mxu0 %v7420
    %8910 = vmatpush1.bf16.msra.mxu0 %v7419
    %8911 = vmatprep.subr.bf16.mxu0 %v7428
    %8912 = vmatpush1.bf16.msra.mxu0 %v7427
    %8913 = vmatprep.subr.bf16.mxu0 %v7436
    %8914 = vmatpush1.bf16.msra.mxu0 %v7435
    %8915 = vmatprep.subr.bf16.mxu0 %v7444
    %8916 = vmatpush1.bf16.msra.mxu0 %v7443
    %8917 = vmatprep.subr.bf16.mxu0 %v7452
    %8918 = vmatpush1.bf16.msra.mxu0 %v7451
    %8919 = vmatprep.subr.bf16.mxu0 %v7460
    %8920 = vmatpush1.bf16.msra.mxu0 %v7459
    %8921 = vmatprep.subr.bf16.mxu0 %v7468
    %8922 = vmatpush1.bf16.msra.mxu0 %v7467
    %8923 = vmatprep.subr.bf16.mxu0 %v7476
    %8924 = vmatpush1.bf16.msra.mxu0 %v7475
    %8925 = vmatprep.subr.bf16.mxu0 %v7484
    %8926 = vmatpush1.bf16.msra.mxu0 %v7483
    %8927 = vmatprep.subr.bf16.mxu0 %v7492
    %8928 = vmatpush1.bf16.msra.mxu0 %v7491
    %8929 = vmatprep.mubr.bf16.mxu0 %v2462
    %8930 = vmatmul.mubr.bf16.gmra.mrb[0].mxu0 %v2461
    %v8931 = vpop.f32.mrb[0].mxu0
    %v8932 = vadd.f32 %v8891, %v8931
    %v8933 = vpop.f32.mrb[0].mxu0
    %v8934 = vadd.f32 %v8893, %v8933
    %v8935 = vpop.f32.mrb[0].mxu0
    %v8936 = vpop.f32.mrb[0].mxu0
    %8937 = vdwg.mxu0
    %8938 = vmatprep.subr.bf16.mxu0 %v7500
    %8939 = vmatpush1.bf16.msra.mxu0 %v7499
    %8940 = vmatprep.subr.bf16.mxu0 %v7508
    %8941 = vmatpush1.bf16.msra.mxu0 %v7507
    %8942 = vmatprep.subr.bf16.mxu0 %v7516
    %8943 = vmatpush1.bf16.msra.mxu0 %v7515
    %8944 = vmatprep.subr.bf16.mxu0 %v7524
    %8945 = vmatpush1.bf16.msra.mxu0 %v7523
    %8946 = vmatprep.subr.bf16.mxu0 %v7532
    %8947 = vmatpush1.bf16.msra.mxu0 %v7531
    %8948 = vmatprep.subr.bf16.mxu0 %v7540
    %8949 = vmatpush1.bf16.msra.mxu0 %v7539
    %8950 = vmatprep.subr.bf16.mxu0 %v7548
    %8951 = vmatpush1.bf16.msra.mxu0 %v7547
    %8952 = vmatprep.subr.bf16.mxu0 %v7556
    %8953 = vmatpush1.bf16.msra.mxu0 %v7555
    %8954 = vmatprep.subr.bf16.mxu0 %v7564
    %8955 = vmatpush1.bf16.msra.mxu0 %v7563
    %8956 = vmatprep.subr.bf16.mxu0 %v7572
    %8957 = vmatpush1.bf16.msra.mxu0 %v7571
    %8958 = vmatprep.subr.bf16.mxu0 %v7580
    %8959 = vmatpush1.bf16.msra.mxu0 %v7579
    %8960 = vmatprep.subr.bf16.mxu0 %v7588
    %8961 = vmatpush1.bf16.msra.mxu0 %v7587
    %8962 = vmatprep.subr.bf16.mxu0 %v7596
    %8963 = vmatpush1.bf16.msra.mxu0 %v7595
    %8964 = vmatprep.subr.bf16.mxu0 %v7604
    %8965 = vmatpush1.bf16.msra.mxu0 %v7603
    %8966 = vmatprep.subr.bf16.mxu0 %v7612
    %8967 = vmatpush1.bf16.msra.mxu0 %v7611
    %8968 = vmatprep.subr.bf16.mxu0 %v7620
    %8969 = vmatpush1.bf16.msra.mxu0 %v7619
    %8970 = vmatprep.mubr.bf16.mxu0 %v2464
    %8971 = vmatmul.mubr.bf16.gmra.mrb[0].mxu0 %v2463
    %v8972 = vpop.f32.mrb[0].mxu0
    %v8973 = vadd.f32 %v8932, %v8972
    %v8974 = vpop.f32.mrb[0].mxu0
    %v8975 = vadd.f32 %v8934, %v8974
    %v8976 = vpop.f32.mrb[0].mxu0
    %v8977 = vpop.f32.mrb[0].mxu0
    %8978 = vdwg.mxu0
    %8979 = vmatprep.subr.bf16.mxu0 %v6606
    %8980 = vmatpush1.bf16.msra.mxu0 %v6605
    %8981 = vmatprep.subr.bf16.mxu0 %v6614
    %8982 = vmatpush1.bf16.msra.mxu0 %v6613
    %8983 = vmatprep.subr.bf16.mxu0 %v6622
    %8984 = vmatpush1.bf16.msra.mxu0 %v6621
    %8985 = vmatprep.subr.bf16.mxu0 %v6630
    %8986 = vmatpush1.bf16.msra.mxu0 %v6629
    %8987 = vmatprep.subr.bf16.mxu0 %v6638
    %8988 = vmatpush1.bf16.msra.mxu0 %v6637
    %8989 = vmatprep.subr.bf16.mxu0 %v6646
    %8990 = vmatpush1.bf16.msra.mxu0 %v6645
    %8991 = vmatprep.subr.bf16.mxu0 %v6654
    %8992 = vmatpush1.bf16.msra.mxu0 %v6653
    %8993 = vmatprep.subr.bf16.mxu0 %v6662
    %8994 = vmatpush1.bf16.msra.mxu0 %v6661
    %8995 = vmatprep.subr.bf16.mxu0 %v6670
    %8996 = vmatpush1.bf16.msra.mxu0 %v6669
    %8997 = vmatprep.subr.bf16.mxu0 %v6678
    %8998 = vmatpush1.bf16.msra.mxu0 %v6677
    %8999 = vmatprep.subr.bf16.mxu0 %v6686
    %9000 = vmatpush1.bf16.msra.mxu0 %v6685
    %9001 = vmatprep.subr.bf16.mxu0 %v6694
    %9002 = vmatpush1.bf16.msra.mxu0 %v6693
    %9003 = vmatprep.subr.bf16.mxu0 %v6702
    %9004 = vmatpush1.bf16.msra.mxu0 %v6701
    %9005 = vmatprep.subr.bf16.mxu0 %v6710
    %9006 = vmatpush1.bf16.msra.mxu0 %v6709
    %9007 = vmatprep.subr.bf16.mxu0 %v6718
    %9008 = vmatpush1.bf16.msra.mxu0 %v6717
    %9009 = vmatprep.subr.bf16.mxu0 %v6726
    %9010 = vmatpush1.bf16.msra.mxu0 %v6725
    %9011 = vmatprep.mubr.bf16.mxu0 %v2450
    %9012 = vmatmul.mubr.bf16.gmra.mrb[0].mxu0 %v2449
    %v9013 = vpop.f32.mrb[0].mxu0
    %v9014 = vadd.f32 %v3502, %v9013
    %v9015 = vpop.f32.mrb[0].mxu0
    %v9016 = vadd.f32 %v3506, %v9015
    %v9017 = vpop.f32.mrb[0].mxu0
    %v9018 = vpop.f32.mrb[0].mxu0
    %9019 = vdwg.mxu0
    %9020 = vmatprep.subr.bf16.mxu0 %v6734
    %9021 = vmatpush1.bf16.msra.mxu0 %v6733
    %9022 = vmatprep.subr.bf16.mxu0 %v6742
    %9023 = vmatpush1.bf16.msra.mxu0 %v6741
    %9024 = vmatprep.subr.bf16.mxu0 %v6750
    %9025 = vmatpush1.bf16.msra.mxu0 %v6749
    %9026 = vmatprep.subr.bf16.mxu0 %v6758
    %9027 = vmatpush1.bf16.msra.mxu0 %v6757
    %9028 = vmatprep.subr.bf16.mxu0 %v6766
    %9029 = vmatpush1.bf16.msra.mxu0 %v6765
    %9030 = vmatprep.subr.bf16.mxu0 %v6774
    %9031 = vmatpush1.bf16.msra.mxu0 %v6773
    %9032 = vmatprep.subr.bf16.mxu0 %v6782
    %9033 = vmatpush1.bf16.msra.mxu0 %v6781
    %9034 = vmatprep.subr.bf16.mxu0 %v6790
    %9035 = vmatpush1.bf16.msra.mxu0 %v6789
    %9036 = vmatprep.subr.bf16.mxu0 %v6798
    %9037 = vmatpush1.bf16.msra.mxu0 %v6797
    %9038 = vmatprep.subr.bf16.mxu0 %v6806
    %9039 = vmatpush1.bf16.msra.mxu0 %v6805
    %9040 = vmatprep.subr.bf16.mxu0 %v6814
    %9041 = vmatpush1.bf16.msra.mxu0 %v6813
    %9042 = vmatprep.subr.bf16.mxu0 %v6822
    %9043 = vmatpush1.bf16.msra.mxu0 %v6821
    %9044 = vmatprep.subr.bf16.mxu0 %v6830
    %9045 = vmatpush1.bf16.msra.mxu0 %v6829
    %9046 = vmatprep.subr.bf16.mxu0 %v6838
    %9047 = vmatpush1.bf16.msra.mxu0 %v6837
    %9048 = vmatprep.subr.bf16.mxu0 %v6846
    %9049 = vmatpush1.bf16.msra.mxu0 %v6845
    %9050 = vmatprep.subr.bf16.mxu0 %v6854
    %9051 = vmatpush1.bf16.msra.mxu0 %v6853
    %9052 = vmatprep.mubr.bf16.mxu0 %v2452
    %9053 = vmatmul.mubr.bf16.gmra.mrb[0].mxu0 %v2451
    %v9054 = vpop.f32.mrb[0].mxu0
    %v9055 = vadd.f32 %v9014, %v9054
    %v9056 = vpop.f32.mrb[0].mxu0
    %v9057 = vadd.f32 %v9016, %v9056
    %v9058 = vpop.f32.mrb[0].mxu0
    %v9059 = vpop.f32.mrb[0].mxu0
    %9060 = vdwg.mxu0
    %9061 = vmatprep.subr.bf16.mxu0 %v6862
    %9062 = vmatpush1.bf16.msra.mxu0 %v6861
    %9063 = vmatprep.subr.bf16.mxu0 %v6870
    %9064 = vmatpush1.bf16.msra.mxu0 %v6869
    %9065 = vmatprep.subr.bf16.mxu0 %v6878
    %9066 = vmatpush1.bf16.msra.mxu0 %v6877
    %9067 = vmatprep.subr.bf16.mxu0 %v6886
    %9068 = vmatpush1.bf16.msra.mxu0 %v6885
    %9069 = vmatprep.subr.bf16.mxu0 %v6894
    %9070 = vmatpush1.bf16.msra.mxu0 %v6893
    %9071 = vmatprep.subr.bf16.mxu0 %v6902
    %9072 = vmatpush1.bf16.msra.mxu0 %v6901
    %9073 = vmatprep.subr.bf16.mxu0 %v6910
    %9074 = vmatpush1.bf16.msra.mxu0 %v6909
    %9075 = vmatprep.subr.bf16.mxu0 %v6918
    %9076 = vmatpush1.bf16.msra.mxu0 %v6917
    %9077 = vmatprep.subr.bf16.mxu0 %v6926
    %9078 = vmatpush1.bf16.msra.mxu0 %v6925
    %9079 = vmatprep.subr.bf16.mxu0 %v6934
    %9080 = vmatpush1.bf16.msra.mxu0 %v6933
    %9081 = vmatprep.subr.bf16.mxu0 %v6942
    %9082 = vmatpush1.bf16.msra.mxu0 %v6941
    %9083 = vmatprep.subr.bf16.mxu0 %v6950
    %9084 = vmatpush1.bf16.msra.mxu0 %v6949
    %9085 = vmatprep.subr.bf16.mxu0 %v6958
    %9086 = vmatpush1.bf16.msra.mxu0 %v6957
    %9087 = vmatprep.subr.bf16.mxu0 %v6966
    %9088 = vmatpush1.bf16.msra.mxu0 %v6965
    %9089 = vmatprep.subr.bf16.mxu0 %v6974
    %9090 = vmatpush1.bf16.msra.mxu0 %v6973
    %9091 = vmatprep.subr.bf16.mxu0 %v6982
    %9092 = vmatpush1.bf16.msra.mxu0 %v6981
    %9093 = vmatprep.mubr.bf16.mxu0 %v2454
    %9094 = vmatmul.mubr.bf16.gmra.mrb[0].mxu0 %v2453
    %v9095 = vpop.f32.mrb[0].mxu0
    %v9096 = vadd.f32 %v9055, %v9095
    %v9097 = vpop.f32.mrb[0].mxu0
    %v9098 = vadd.f32 %v9057, %v9097
    %v9099 = vpop.f32.mrb[0].mxu0
    %v9100 = vpop.f32.mrb[0].mxu0
    %9101 = vdwg.mxu0
    %9102 = vmatprep.subr.bf16.mxu0 %v6990
    %9103 = vmatpush1.bf16.msra.mxu0 %v6989
    %9104 = vmatprep.subr.bf16.mxu0 %v6998
    %9105 = vmatpush1.bf16.msra.mxu0 %v6997
    %9106 = vmatprep.subr.bf16.mxu0 %v7006
    %9107 = vmatpush1.bf16.msra.mxu0 %v7005
    %9108 = vmatprep.subr.bf16.mxu0 %v7014
    %9109 = vmatpush1.bf16.msra.mxu0 %v7013
    %9110 = vmatprep.subr.bf16.mxu0 %v7022
    %9111 = vmatpush1.bf16.msra.mxu0 %v7021
    %9112 = vmatprep.subr.bf16.mxu0 %v7030
    %9113 = vmatpush1.bf16.msra.mxu0 %v7029
    %9114 = vmatprep.subr.bf16.mxu0 %v7038
    %9115 = vmatpush1.bf16.msra.mxu0 %v7037
    %9116 = vmatprep.subr.bf16.mxu0 %v7046
    %9117 = vmatpush1.bf16.msra.mxu0 %v7045
    %9118 = vmatprep.subr.bf16.mxu0 %v7054
    %9119 = vmatpush1.bf16.msra.mxu0 %v7053
    %9120 = vmatprep.subr.bf16.mxu0 %v7062
    %9121 = vmatpush1.bf16.msra.mxu0 %v7061
    %9122 = vmatprep.subr.bf16.mxu0 %v7070
    %9123 = vmatpush1.bf16.msra.mxu0 %v7069
    %9124 = vmatprep.subr.bf16.mxu0 %v7078
    %9125 = vmatpush1.bf16.msra.mxu0 %v7077
    %9126 = vmatprep.subr.bf16.mxu0 %v7086
    %9127 = vmatpush1.bf16.msra.mxu0 %v7085
    %9128 = vmatprep.subr.bf16.mxu0 %v7094
    %9129 = vmatpush1.bf16.msra.mxu0 %v7093
    %9130 = vmatprep.subr.bf16.mxu0 %v7102
    %9131 = vmatpush1.bf16.msra.mxu0 %v7101
    %9132 = vmatprep.subr.bf16.mxu0 %v7110
    %9133 = vmatpush1.bf16.msra.mxu0 %v7109
    %9134 = vmatprep.mubr.bf16.mxu0 %v2456
    %9135 = vmatmul.mubr.bf16.gmra.mrb[0].mxu0 %v2455
    %v9136 = vpop.f32.mrb[0].mxu0
    %v9137 = vadd.f32 %v9096, %v9136
    %v9138 = vpop.f32.mrb[0].mxu0
    %v9139 = vadd.f32 %v9098, %v9138
    %v9140 = vpop.f32.mrb[0].mxu0
    %v9141 = vpop.f32.mrb[0].mxu0
    %9142 = vdwg.mxu0
    %9143 = vmatprep.subr.bf16.mxu0 %v7118
    %9144 = vmatpush1.bf16.msra.mxu0 %v7117
    %9145 = vmatprep.subr.bf16.mxu0 %v7126
    %9146 = vmatpush1.bf16.msra.mxu0 %v7125
    %9147 = vmatprep.subr.bf16.mxu0 %v7134
    %9148 = vmatpush1.bf16.msra.mxu0 %v7133
    %9149 = vmatprep.subr.bf16.mxu0 %v7142
    %9150 = vmatpush1.bf16.msra.mxu0 %v7141
    %9151 = vmatprep.subr.bf16.mxu0 %v7150
    %9152 = vmatpush1.bf16.msra.mxu0 %v7149
    %9153 = vmatprep.subr.bf16.mxu0 %v7158
    %9154 = vmatpush1.bf16.msra.mxu0 %v7157
    %9155 = vmatprep.subr.bf16.mxu0 %v7166
    %9156 = vmatpush1.bf16.msra.mxu0 %v7165
    %9157 = vmatprep.subr.bf16.mxu0 %v7174
    %9158 = vmatpush1.bf16.msra.mxu0 %v7173
    %9159 = vmatprep.subr.bf16.mxu0 %v7182
    %9160 = vmatpush1.bf16.msra.mxu0 %v7181
    %9161 = vmatprep.subr.bf16.mxu0 %v7190
    %9162 = vmatpush1.bf16.msra.mxu0 %v7189
    %9163 = vmatprep.subr.bf16.mxu0 %v7198
    %9164 = vmatpush1.bf16.msra.mxu0 %v7197
    %9165 = vmatprep.subr.bf16.mxu0 %v7206
    %9166 = vmatpush1.bf16.msra.mxu0 %v7205
    %9167 = vmatprep.subr.bf16.mxu0 %v7214
    %9168 = vmatpush1.bf16.msra.mxu0 %v7213
    %9169 = vmatprep.subr.bf16.mxu0 %v7222
    %9170 = vmatpush1.bf16.msra.mxu0 %v7221
    %9171 = vmatprep.subr.bf16.mxu0 %v7230
    %9172 = vmatpush1.bf16.msra.mxu0 %v7229
    %9173 = vmatprep.subr.bf16.mxu0 %v7238
    %9174 = vmatpush1.bf16.msra.mxu0 %v7237
    %9175 = vmatprep.mubr.bf16.mxu0 %v2458
    %9176 = vmatmul.mubr.bf16.gmra.mrb[0].mxu0 %v2457
    %v9177 = vpop.f32.mrb[0].mxu0
    %v9178 = vadd.f32 %v9137, %v9177
    %v9179 = vpop.f32.mrb[0].mxu0
    %v9180 = vadd.f32 %v9139, %v9179
    %v9181 = vpop.f32.mrb[0].mxu0
    %v9182 = vpop.f32.mrb[0].mxu0
    %9183 = vdwg.mxu0
    %9184 = vmatprep.subr.bf16.mxu0 %v7246
    %9185 = vmatpush1.bf16.msra.mxu0 %v7245
    %9186 = vmatprep.subr.bf16.mxu0 %v7254
    %9187 = vmatpush1.bf16.msra.mxu0 %v7253
    %9188 = vmatprep.subr.bf16.mxu0 %v7262
    %9189 = vmatpush1.bf16.msra.mxu0 %v7261
    %9190 = vmatprep.subr.bf16.mxu0 %v7270
    %9191 = vmatpush1.bf16.msra.mxu0 %v7269
    %9192 = vmatprep.subr.bf16.mxu0 %v7278
    %9193 = vmatpush1.bf16.msra.mxu0 %v7277
    %9194 = vmatprep.subr.bf16.mxu0 %v7286
    %9195 = vmatpush1.bf16.msra.mxu0 %v7285
    %9196 = vmatprep.subr.bf16.mxu0 %v7294
    %9197 = vmatpush1.bf16.msra.mxu0 %v7293
    %9198 = vmatprep.subr.bf16.mxu0 %v7302
    %9199 = vmatpush1.bf16.msra.mxu0 %v7301
    %9200 = vmatprep.subr.bf16.mxu0 %v7310
    %9201 = vmatpush1.bf16.msra.mxu0 %v7309
    %9202 = vmatprep.subr.bf16.mxu0 %v7318
    %9203 = vmatpush1.bf16.msra.mxu0 %v7317
    %9204 = vmatprep.subr.bf16.mxu0 %v7326
    %9205 = vmatpush1.bf16.msra.mxu0 %v7325
    %9206 = vmatprep.subr.bf16.mxu0 %v7334
    %9207 = vmatpush1.bf16.msra.mxu0 %v7333
    %9208 = vmatprep.subr.bf16.mxu0 %v7342
    %9209 = vmatpush1.bf16.msra.mxu0 %v7341
    %9210 = vmatprep.subr.bf16.mxu0 %v7350
    %9211 = vmatpush1.bf16.msra.mxu0 %v7349
    %9212 = vmatprep.subr.bf16.mxu0 %v7358
    %9213 = vmatpush1.bf16.msra.mxu0 %v7357
    %9214 = vmatprep.subr.bf16.mxu0 %v7366
    %9215 = vmatpush1.bf16.msra.mxu0 %v7365
    %9216 = vmatprep.mubr.bf16.mxu0 %v2460
    %9217 = vmatmul.mubr.bf16.gmra.mrb[0].mxu0 %v2459
    %v9218 = vpop.f32.mrb[0].mxu0
    %v9219 = vadd.f32 %v9178, %v9218
    %v9220 = vpop.f32.mrb[0].mxu0
    %v9221 = vadd.f32 %v9180, %v9220
    %v9222 = vpop.f32.mrb[0].mxu0
    %v9223 = vpop.f32.mrb[0].mxu0
    %9224 = vdwg.mxu0
    %9225 = vmatprep.subr.bf16.mxu0 %v7374
    %9226 = vmatpush1.bf16.msra.mxu0 %v7373
    %9227 = vmatprep.subr.bf16.mxu0 %v7382
    %9228 = vmatpush1.bf16.msra.mxu0 %v7381
    %9229 = vmatprep.subr.bf16.mxu0 %v7390
    %9230 = vmatpush1.bf16.msra.mxu0 %v7389
    %9231 = vmatprep.subr.bf16.mxu0 %v7398
    %9232 = vmatpush1.bf16.msra.mxu0 %v7397
    %9233 = vmatprep.subr.bf16.mxu0 %v7406
    %9234 = vmatpush1.bf16.msra.mxu0 %v7405
    %9235 = vmatprep.subr.bf16.mxu0 %v7414
    %9236 = vmatpush1.bf16.msra.mxu0 %v7413
    %9237 = vmatprep.subr.bf16.mxu0 %v7422
    %9238 = vmatpush1.bf16.msra.mxu0 %v7421
    %9239 = vmatprep.subr.bf16.mxu0 %v7430
    %9240 = vmatpush1.bf16.msra.mxu0 %v7429
    %9241 = vmatprep.subr.bf16.mxu0 %v7438
    %9242 = vmatpush1.bf16.msra.mxu0 %v7437
    %9243 = vmatprep.subr.bf16.mxu0 %v7446
    %9244 = vmatpush1.bf16.msra.mxu0 %v7445
    %9245 = vmatprep.subr.bf16.mxu0 %v7454
    %9246 = vmatpush1.bf16.msra.mxu0 %v7453
    %9247 = vmatprep.subr.bf16.mxu0 %v7462
    %9248 = vmatpush1.bf16.msra.mxu0 %v7461
    %9249 = vmatprep.subr.bf16.mxu0 %v7470
    %9250 = vmatpush1.bf16.msra.mxu0 %v7469
    %9251 = vmatprep.subr.bf16.mxu0 %v7478
    %9252 = vmatpush1.bf16.msra.mxu0 %v7477
    %9253 = vmatprep.subr.bf16.mxu0 %v7486
    %9254 = vmatpush1.bf16.msra.mxu0 %v7485
    %9255 = vmatprep.subr.bf16.mxu0 %v7494
    %9256 = vmatpush1.bf16.msra.mxu0 %v7493
    %9257 = vmatprep.mubr.bf16.mxu0 %v2462
    %9258 = vmatmul.mubr.bf16.gmra.mrb[0].mxu0 %v2461
    %v9259 = vpop.f32.mrb[0].mxu0
    %v9260 = vadd.f32 %v9219, %v9259
    %v9261 = vpop.f32.mrb[0].mxu0
    %v9262 = vadd.f32 %v9221, %v9261
    %v9263 = vpop.f32.mrb[0].mxu0
    %v9264 = vpop.f32.mrb[0].mxu0
    %9265 = vdwg.mxu0
    %9266 = vmatprep.subr.bf16.mxu0 %v7502
    %9267 = vmatpush1.bf16.msra.mxu0 %v7501
    %9268 = vmatprep.subr.bf16.mxu0 %v7510
    %9269 = vmatpush1.bf16.msra.mxu0 %v7509
    %9270 = vmatprep.subr.bf16.mxu0 %v7518
    %9271 = vmatpush1.bf16.msra.mxu0 %v7517
    %9272 = vmatprep.subr.bf16.mxu0 %v7526
    %9273 = vmatpush1.bf16.msra.mxu0 %v7525
    %9274 = vmatprep.subr.bf16.mxu0 %v7534
    %9275 = vmatpush1.bf16.msra.mxu0 %v7533
    %9276 = vmatprep.subr.bf16.mxu0 %v7542
    %9277 = vmatpush1.bf16.msra.mxu0 %v7541
    %9278 = vmatprep.subr.bf16.mxu0 %v7550
    %9279 = vmatpush1.bf16.msra.mxu0 %v7549
    %9280 = vmatprep.subr.bf16.mxu0 %v7558
    %9281 = vmatpush1.bf16.msra.mxu0 %v7557
    %9282 = vmatprep.subr.bf16.mxu0 %v7566
    %9283 = vmatpush1.bf16.msra.mxu0 %v7565
    %9284 = vmatprep.subr.bf16.mxu0 %v7574
    %9285 = vmatpush1.bf16.msra.mxu0 %v7573
    %9286 = vmatprep.subr.bf16.mxu0 %v7582
    %9287 = vmatpush1.bf16.msra.mxu0 %v7581
    %9288 = vmatprep.subr.bf16.mxu0 %v7590
    %9289 = vmatpush1.bf16.msra.mxu0 %v7589
    %9290 = vmatprep.subr.bf16.mxu0 %v7598
    %9291 = vmatpush1.bf16.msra.mxu0 %v7597
    %9292 = vmatprep.subr.bf16.mxu0 %v7606
    %9293 = vmatpush1.bf16.msra.mxu0 %v7605
    %9294 = vmatprep.subr.bf16.mxu0 %v7614
    %9295 = vmatpush1.bf16.msra.mxu0 %v7613
    %9296 = vmatprep.subr.bf16.mxu0 %v7622
    %9297 = vmatpush1.bf16.msra.mxu0 %v7621
    %9298 = vmatprep.mubr.bf16.mxu0 %v2464
    %9299 = vmatmul.mubr.bf16.gmra.mrb[0].mxu0 %v2463
    %v9300 = vpop.f32.mrb[0].mxu0
    %v9301 = vadd.f32 %v9260, %v9300
    %v9302 = vpop.f32.mrb[0].mxu0
    %v9303 = vadd.f32 %v9262, %v9302
    %v9304 = vpop.f32.mrb[0].mxu0
    %v9305 = vpop.f32.mrb[0].mxu0
    %9306 = vdwg.mxu0
    %9307 = vmatprep.subr.bf16.mxu0 %v6608
    %9308 = vmatpush1.bf16.msra.mxu0 %v6607
    %9309 = vmatprep.subr.bf16.mxu0 %v6616
    %9310 = vmatpush1.bf16.msra.mxu0 %v6615
    %9311 = vmatprep.subr.bf16.mxu0 %v6624
    %9312 = vmatpush1.bf16.msra.mxu0 %v6623
    %9313 = vmatprep.subr.bf16.mxu0 %v6632
    %9314 = vmatpush1.bf16.msra.mxu0 %v6631
    %9315 = vmatprep.subr.bf16.mxu0 %v6640
    %9316 = vmatpush1.bf16.msra.mxu0 %v6639
    %9317 = vmatprep.subr.bf16.mxu0 %v6648
    %9318 = vmatpush1.bf16.msra.mxu0 %v6647
    %9319 = vmatprep.subr.bf16.mxu0 %v6656
    %9320 = vmatpush1.bf16.msra.mxu0 %v6655
    %9321 = vmatprep.subr.bf16.mxu0 %v6664
    %9322 = vmatpush1.bf16.msra.mxu0 %v6663
    %9323 = vmatprep.subr.bf16.mxu0 %v6672
    %9324 = vmatpush1.bf16.msra.mxu0 %v6671
    %9325 = vmatprep.subr.bf16.mxu0 %v6680
    %9326 = vmatpush1.bf16.msra.mxu0 %v6679
    %9327 = vmatprep.subr.bf16.mxu0 %v6688
    %9328 = vmatpush1.bf16.msra.mxu0 %v6687
    %9329 = vmatprep.subr.bf16.mxu0 %v6696
    %9330 = vmatpush1.bf16.msra.mxu0 %v6695
    %9331 = vmatprep.subr.bf16.mxu0 %v6704
    %9332 = vmatpush1.bf16.msra.mxu0 %v6703
    %9333 = vmatprep.subr.bf16.mxu0 %v6712
    %9334 = vmatpush1.bf16.msra.mxu0 %v6711
    %9335 = vmatprep.subr.bf16.mxu0 %v6720
    %9336 = vmatpush1.bf16.msra.mxu0 %v6719
    %9337 = vmatprep.subr.bf16.mxu0 %v6728
    %9338 = vmatpush1.bf16.msra.mxu0 %v6727
    %9339 = vmatprep.mubr.bf16.mxu0 %v2450
    %9340 = vmatmul.mubr.bf16.gmra.mrb[0].mxu0 %v2449
    %v9341 = vpop.f32.mrb[0].mxu0
    %v9342 = vadd.f32 %v3510, %v9341
    %v9343 = vpop.f32.mrb[0].mxu0
    %v9344 = vadd.f32 %v3514, %v9343
    %v9345 = vpop.f32.mrb[0].mxu0
    %v9346 = vpop.f32.mrb[0].mxu0
    %9347 = vdwg.mxu0
    %9348 = vmatprep.subr.bf16.mxu0 %v6736
    %9349 = vmatpush1.bf16.msra.mxu0 %v6735
    %9350 = vmatprep.subr.bf16.mxu0 %v6744
    %9351 = vmatpush1.bf16.msra.mxu0 %v6743
    %9352 = vmatprep.subr.bf16.mxu0 %v6752
    %9353 = vmatpush1.bf16.msra.mxu0 %v6751
    %9354 = vmatprep.subr.bf16.mxu0 %v6760
    %9355 = vmatpush1.bf16.msra.mxu0 %v6759
    %9356 = vmatprep.subr.bf16.mxu0 %v6768
    %9357 = vmatpush1.bf16.msra.mxu0 %v6767
    %9358 = vmatprep.subr.bf16.mxu0 %v6776
    %9359 = vmatpush1.bf16.msra.mxu0 %v6775
    %9360 = vmatprep.subr.bf16.mxu0 %v6784
    %9361 = vmatpush1.bf16.msra.mxu0 %v6783
    %9362 = vmatprep.subr.bf16.mxu0 %v6792
    %9363 = vmatpush1.bf16.msra.mxu0 %v6791
    %9364 = vmatprep.subr.bf16.mxu0 %v6800
    %9365 = vmatpush1.bf16.msra.mxu0 %v6799
    %9366 = vmatprep.subr.bf16.mxu0 %v6808
    %9367 = vmatpush1.bf16.msra.mxu0 %v6807
    %9368 = vmatprep.subr.bf16.mxu0 %v6816
    %9369 = vmatpush1.bf16.msra.mxu0 %v6815
    %9370 = vmatprep.subr.bf16.mxu0 %v6824
    %9371 = vmatpush1.bf16.msra.mxu0 %v6823
    %9372 = vmatprep.subr.bf16.mxu0 %v6832
    %9373 = vmatpush1.bf16.msra.mxu0 %v6831
    %9374 = vmatprep.subr.bf16.mxu0 %v6840
    %9375 = vmatpush1.bf16.msra.mxu0 %v6839
    %9376 = vmatprep.subr.bf16.mxu0 %v6848
    %9377 = vmatpush1.bf16.msra.mxu0 %v6847
    %9378 = vmatprep.subr.bf16.mxu0 %v6856
    %9379 = vmatpush1.bf16.msra.mxu0 %v6855
    %9380 = vmatprep.mubr.bf16.mxu0 %v2452
    %9381 = vmatmul.mubr.bf16.gmra.mrb[0].mxu0 %v2451
    %v9382 = vpop.f32.mrb[0].mxu0
    %v9383 = vadd.f32 %v9342, %v9382
    %v9384 = vpop.f32.mrb[0].mxu0
    %v9385 = vadd.f32 %v9344, %v9384
    %v9386 = vpop.f32.mrb[0].mxu0
    %v9387 = vpop.f32.mrb[0].mxu0
    %9388 = vdwg.mxu0
    %9389 = vmatprep.subr.bf16.mxu0 %v6864
    %9390 = vmatpush1.bf16.msra.mxu0 %v6863
    %9391 = vmatprep.subr.bf16.mxu0 %v6872
    %9392 = vmatpush1.bf16.msra.mxu0 %v6871
    %9393 = vmatprep.subr.bf16.mxu0 %v6880
    %9394 = vmatpush1.bf16.msra.mxu0 %v6879
    %9395 = vmatprep.subr.bf16.mxu0 %v6888
    %9396 = vmatpush1.bf16.msra.mxu0 %v6887
    %9397 = vmatprep.subr.bf16.mxu0 %v6896
    %9398 = vmatpush1.bf16.msra.mxu0 %v6895
    %9399 = vmatprep.subr.bf16.mxu0 %v6904
    %9400 = vmatpush1.bf16.msra.mxu0 %v6903
    %9401 = vmatprep.subr.bf16.mxu0 %v6912
    %9402 = vmatpush1.bf16.msra.mxu0 %v6911
    %9403 = vmatprep.subr.bf16.mxu0 %v6920
    %9404 = vmatpush1.bf16.msra.mxu0 %v6919
    %9405 = vmatprep.subr.bf16.mxu0 %v6928
    %9406 = vmatpush1.bf16.msra.mxu0 %v6927
    %9407 = vmatprep.subr.bf16.mxu0 %v6936
    %9408 = vmatpush1.bf16.msra.mxu0 %v6935
    %9409 = vmatprep.subr.bf16.mxu0 %v6944
    %9410 = vmatpush1.bf16.msra.mxu0 %v6943
    %9411 = vmatprep.subr.bf16.mxu0 %v6952
    %9412 = vmatpush1.bf16.msra.mxu0 %v6951
    %9413 = vmatprep.subr.bf16.mxu0 %v6960
    %9414 = vmatpush1.bf16.msra.mxu0 %v6959
    %9415 = vmatprep.subr.bf16.mxu0 %v6968
    %9416 = vmatpush1.bf16.msra.mxu0 %v6967
    %9417 = vmatprep.subr.bf16.mxu0 %v6976
    %9418 = vmatpush1.bf16.msra.mxu0 %v6975
    %9419 = vmatprep.subr.bf16.mxu0 %v6984
    %9420 = vmatpush1.bf16.msra.mxu0 %v6983
    %9421 = vmatprep.mubr.bf16.mxu0 %v2454
    %9422 = vmatmul.mubr.bf16.gmra.mrb[0].mxu0 %v2453
    %v9423 = vpop.f32.mrb[0].mxu0
    %v9424 = vadd.f32 %v9383, %v9423
    %v9425 = vpop.f32.mrb[0].mxu0
    %v9426 = vadd.f32 %v9385, %v9425
    %v9427 = vpop.f32.mrb[0].mxu0
    %v9428 = vpop.f32.mrb[0].mxu0
    %9429 = vdwg.mxu0
    %9430 = vmatprep.subr.bf16.mxu0 %v6992
    %9431 = vmatpush1.bf16.msra.mxu0 %v6991
    %9432 = vmatprep.subr.bf16.mxu0 %v7000
    %9433 = vmatpush1.bf16.msra.mxu0 %v6999
    %9434 = vmatprep.subr.bf16.mxu0 %v7008
    %9435 = vmatpush1.bf16.msra.mxu0 %v7007
    %9436 = vmatprep.subr.bf16.mxu0 %v7016
    %9437 = vmatpush1.bf16.msra.mxu0 %v7015
    %9438 = vmatprep.subr.bf16.mxu0 %v7024
    %9439 = vmatpush1.bf16.msra.mxu0 %v7023
    %9440 = vmatprep.subr.bf16.mxu0 %v7032
    %9441 = vmatpush1.bf16.msra.mxu0 %v7031
    %9442 = vmatprep.subr.bf16.mxu0 %v7040
    %9443 = vmatpush1.bf16.msra.mxu0 %v7039
    %9444 = vmatprep.subr.bf16.mxu0 %v7048
    %9445 = vmatpush1.bf16.msra.mxu0 %v7047
    %9446 = vmatprep.subr.bf16.mxu0 %v7056
    %9447 = vmatpush1.bf16.msra.mxu0 %v7055
    %9448 = vmatprep.subr.bf16.mxu0 %v7064
    %9449 = vmatpush1.bf16.msra.mxu0 %v7063
    %9450 = vmatprep.subr.bf16.mxu0 %v7072
    %9451 = vmatpush1.bf16.msra.mxu0 %v7071
    %9452 = vmatprep.subr.bf16.mxu0 %v7080
    %9453 = vmatpush1.bf16.msra.mxu0 %v7079
    %9454 = vmatprep.subr.bf16.mxu0 %v7088
    %9455 = vmatpush1.bf16.msra.mxu0 %v7087
    %9456 = vmatprep.subr.bf16.mxu0 %v7096
    %9457 = vmatpush1.bf16.msra.mxu0 %v7095
    %9458 = vmatprep.subr.bf16.mxu0 %v7104
    %9459 = vmatpush1.bf16.msra.mxu0 %v7103
    %9460 = vmatprep.subr.bf16.mxu0 %v7112
    %9461 = vmatpush1.bf16.msra.mxu0 %v7111
    %9462 = vmatprep.mubr.bf16.mxu0 %v2456
    %9463 = vmatmul.mubr.bf16.gmra.mrb[0].mxu0 %v2455
    %v9464 = vpop.f32.mrb[0].mxu0
    %v9465 = vadd.f32 %v9424, %v9464
    %v9466 = vpop.f32.mrb[0].mxu0
    %v9467 = vadd.f32 %v9426, %v9466
    %v9468 = vpop.f32.mrb[0].mxu0
    %v9469 = vpop.f32.mrb[0].mxu0
    %9470 = vdwg.mxu0
    %9471 = vmatprep.subr.bf16.mxu0 %v7120
    %9472 = vmatpush1.bf16.msra.mxu0 %v7119
    %9473 = vmatprep.subr.bf16.mxu0 %v7128
    %9474 = vmatpush1.bf16.msra.mxu0 %v7127
    %9475 = vmatprep.subr.bf16.mxu0 %v7136
    %9476 = vmatpush1.bf16.msra.mxu0 %v7135
    %9477 = vmatprep.subr.bf16.mxu0 %v7144
    %9478 = vmatpush1.bf16.msra.mxu0 %v7143
    %9479 = vmatprep.subr.bf16.mxu0 %v7152
    %9480 = vmatpush1.bf16.msra.mxu0 %v7151
    %9481 = vmatprep.subr.bf16.mxu0 %v7160
    %9482 = vmatpush1.bf16.msra.mxu0 %v7159
    %9483 = vmatprep.subr.bf16.mxu0 %v7168
    %9484 = vmatpush1.bf16.msra.mxu0 %v7167
    %9485 = vmatprep.subr.bf16.mxu0 %v7176
    %9486 = vmatpush1.bf16.msra.mxu0 %v7175
    %9487 = vmatprep.subr.bf16.mxu0 %v7184
    %9488 = vmatpush1.bf16.msra.mxu0 %v7183
    %9489 = vmatprep.subr.bf16.mxu0 %v7192
    %9490 = vmatpush1.bf16.msra.mxu0 %v7191
    %9491 = vmatprep.subr.bf16.mxu0 %v7200
    %9492 = vmatpush1.bf16.msra.mxu0 %v7199
    %9493 = vmatprep.subr.bf16.mxu0 %v7208
    %9494 = vmatpush1.bf16.msra.mxu0 %v7207
    %9495 = vmatprep.subr.bf16.mxu0 %v7216
    %9496 = vmatpush1.bf16.msra.mxu0 %v7215
    %9497 = vmatprep.subr.bf16.mxu0 %v7224
    %9498 = vmatpush1.bf16.msra.mxu0 %v7223
    %9499 = vmatprep.subr.bf16.mxu0 %v7232
    %9500 = vmatpush1.bf16.msra.mxu0 %v7231
    %9501 = vmatprep.subr.bf16.mxu0 %v7240
    %9502 = vmatpush1.bf16.msra.mxu0 %v7239
    %9503 = vmatprep.mubr.bf16.mxu0 %v2458
    %9504 = vmatmul.mubr.bf16.gmra.mrb[0].mxu0 %v2457
    %v9505 = vpop.f32.mrb[0].mxu0
    %v9506 = vadd.f32 %v9465, %v9505
    %v9507 = vpop.f32.mrb[0].mxu0
    %v9508 = vadd.f32 %v9467, %v9507
    %v9509 = vpop.f32.mrb[0].mxu0
    %v9510 = vpop.f32.mrb[0].mxu0
    %9511 = vdwg.mxu0
    %9512 = vmatprep.subr.bf16.mxu0 %v7248
    %9513 = vmatpush1.bf16.msra.mxu0 %v7247
    %9514 = vmatprep.subr.bf16.mxu0 %v7256
    %9515 = vmatpush1.bf16.msra.mxu0 %v7255
    %9516 = vmatprep.subr.bf16.mxu0 %v7264
    %9517 = vmatpush1.bf16.msra.mxu0 %v7263
    %9518 = vmatprep.subr.bf16.mxu0 %v7272
    %9519 = vmatpush1.bf16.msra.mxu0 %v7271
    %9520 = vmatprep.subr.bf16.mxu0 %v7280
    %9521 = vmatpush1.bf16.msra.mxu0 %v7279
    %9522 = vmatprep.subr.bf16.mxu0 %v7288
    %9523 = vmatpush1.bf16.msra.mxu0 %v7287
    %9524 = vmatprep.subr.bf16.mxu0 %v7296
    %9525 = vmatpush1.bf16.msra.mxu0 %v7295
    %9526 = vmatprep.subr.bf16.mxu0 %v7304
    %9527 = vmatpush1.bf16.msra.mxu0 %v7303
    %9528 = vmatprep.subr.bf16.mxu0 %v7312
    %9529 = vmatpush1.bf16.msra.mxu0 %v7311
    %9530 = vmatprep.subr.bf16.mxu0 %v7320
    %9531 = vmatpush1.bf16.msra.mxu0 %v7319
    %9532 = vmatprep.subr.bf16.mxu0 %v7328
    %9533 = vmatpush1.bf16.msra.mxu0 %v7327
    %9534 = vmatprep.subr.bf16.mxu0 %v7336
    %9535 = vmatpush1.bf16.msra.mxu0 %v7335
    %9536 = vmatprep.subr.bf16.mxu0 %v7344
    %9537 = vmatpush1.bf16.msra.mxu0 %v7343
    %9538 = vmatprep.subr.bf16.mxu0 %v7352
    %9539 = vmatpush1.bf16.msra.mxu0 %v7351
    %9540 = vmatprep.subr.bf16.mxu0 %v7360
    %9541 = vmatpush1.bf16.msra.mxu0 %v7359
    %9542 = vmatprep.subr.bf16.mxu0 %v7368
    %9543 = vmatpush1.bf16.msra.mxu0 %v7367
    %9544 = vmatprep.mubr.bf16.mxu0 %v2460
    %9545 = vmatmul.mubr.bf16.gmra.mrb[0].mxu0 %v2459
    %v9546 = vpop.f32.mrb[0].mxu0
    %v9547 = vadd.f32 %v9506, %v9546
    %v9548 = vpop.f32.mrb[0].mxu0
    %v9549 = vadd.f32 %v9508, %v9548
    %v9550 = vpop.f32.mrb[0].mxu0
    %v9551 = vpop.f32.mrb[0].mxu0
    %9552 = vdwg.mxu0
    %9553 = vmatprep.subr.bf16.mxu0 %v7376
    %9554 = vmatpush1.bf16.msra.mxu0 %v7375
    %9555 = vmatprep.subr.bf16.mxu0 %v7384
    %9556 = vmatpush1.bf16.msra.mxu0 %v7383
    %9557 = vmatprep.subr.bf16.mxu0 %v7392
    %9558 = vmatpush1.bf16.msra.mxu0 %v7391
    %9559 = vmatprep.subr.bf16.mxu0 %v7400
    %9560 = vmatpush1.bf16.msra.mxu0 %v7399
    %9561 = vmatprep.subr.bf16.mxu0 %v7408
    %9562 = vmatpush1.bf16.msra.mxu0 %v7407
    %9563 = vmatprep.subr.bf16.mxu0 %v7416
    %9564 = vmatpush1.bf16.msra.mxu0 %v7415
    %9565 = vmatprep.subr.bf16.mxu0 %v7424
    %9566 = vmatpush1.bf16.msra.mxu0 %v7423
    %9567 = vmatprep.subr.bf16.mxu0 %v7432
    %9568 = vmatpush1.bf16.msra.mxu0 %v7431
    %9569 = vmatprep.subr.bf16.mxu0 %v7440
    %9570 = vmatpush1.bf16.msra.mxu0 %v7439
    %9571 = vmatprep.subr.bf16.mxu0 %v7448
    %9572 = vmatpush1.bf16.msra.mxu0 %v7447
    %9573 = vmatprep.subr.bf16.mxu0 %v7456
    %9574 = vmatpush1.bf16.msra.mxu0 %v7455
    %9575 = vmatprep.subr.bf16.mxu0 %v7464
    %9576 = vmatpush1.bf16.msra.mxu0 %v7463
    %9577 = vmatprep.subr.bf16.mxu0 %v7472
    %9578 = vmatpush1.bf16.msra.mxu0 %v7471
    %9579 = vmatprep.subr.bf16.mxu0 %v7480
    %9580 = vmatpush1.bf16.msra.mxu0 %v7479
    %9581 = vmatprep.subr.bf16.mxu0 %v7488
    %9582 = vmatpush1.bf16.msra.mxu0 %v7487
    %9583 = vmatprep.subr.bf16.mxu0 %v7496
    %9584 = vmatpush1.bf16.msra.mxu0 %v7495
    %9585 = vmatprep.mubr.bf16.mxu0 %v2462
    %9586 = vmatmul.mubr.bf16.gmra.mrb[0].mxu0 %v2461
    %v9587 = vpop.f32.mrb[0].mxu0
    %v9588 = vadd.f32 %v9547, %v9587
    %v9589 = vpop.f32.mrb[0].mxu0
    %v9590 = vadd.f32 %v9549, %v9589
    %v9591 = vpop.f32.mrb[0].mxu0
    %v9592 = vpop.f32.mrb[0].mxu0
    %9593 = vdwg.mxu0
    %9594 = vmatprep.subr.bf16.mxu0 %v7504
    %9595 = vmatpush1.bf16.msra.mxu0 %v7503
    %9596 = vmatprep.subr.bf16.mxu0 %v7512
    %9597 = vmatpush1.bf16.msra.mxu0 %v7511
    %9598 = vmatprep.subr.bf16.mxu0 %v7520
    %9599 = vmatpush1.bf16.msra.mxu0 %v7519
    %9600 = vmatprep.subr.bf16.mxu0 %v7528
    %9601 = vmatpush1.bf16.msra.mxu0 %v7527
    %9602 = vmatprep.subr.bf16.mxu0 %v7536
    %9603 = vmatpush1.bf16.msra.mxu0 %v7535
    %9604 = vmatprep.subr.bf16.mxu0 %v7544
    %9605 = vmatpush1.bf16.msra.mxu0 %v7543
    %9606 = vmatprep.subr.bf16.mxu0 %v7552
    %9607 = vmatpush1.bf16.msra.mxu0 %v7551
    %9608 = vmatprep.subr.bf16.mxu0 %v7560
    %9609 = vmatpush1.bf16.msra.mxu0 %v7559
    %9610 = vmatprep.subr.bf16.mxu0 %v7568
    %9611 = vmatpush1.bf16.msra.mxu0 %v7567
    %9612 = vmatprep.subr.bf16.mxu0 %v7576
    %9613 = vmatpush1.bf16.msra.mxu0 %v7575
    %9614 = vmatprep.subr.bf16.mxu0 %v7584
    %9615 = vmatpush1.bf16.msra.mxu0 %v7583
    %9616 = vmatprep.subr.bf16.mxu0 %v7592
    %9617 = vmatpush1.bf16.msra.mxu0 %v7591
    %9618 = vmatprep.subr.bf16.mxu0 %v7600
    %9619 = vmatpush1.bf16.msra.mxu0 %v7599
    %9620 = vmatprep.subr.bf16.mxu0 %v7608
    %9621 = vmatpush1.bf16.msra.mxu0 %v7607
    %9622 = vmatprep.subr.bf16.mxu0 %v7616
    %9623 = vmatpush1.bf16.msra.mxu0 %v7615
    %9624 = vmatprep.subr.bf16.mxu0 %v7624
    %9625 = vmatpush1.bf16.msra.mxu0 %v7623
    %9626 = vmatprep.mubr.bf16.mxu0 %v2464
    %9627 = vmatmul.mubr.bf16.gmra.mrb[0].mxu0 %v2463
    %v9628 = vpop.f32.mrb[0].mxu0
    %v9629 = vadd.f32 %v9588, %v9628
    %v9630 = vpop.f32.mrb[0].mxu0
    %v9631 = vadd.f32 %v9590, %v9630
    %v9632 = vpop.f32.mrb[0].mxu0
    %v9633 = vpop.f32.mrb[0].mxu0
    %9634 = vdwg.mxu0
    %9635 = vmatprep.subr.bf16.mxu0 %v6610
    %9636 = vmatpush1.bf16.msra.mxu0 %v6609
    %9637 = vmatprep.subr.bf16.mxu0 %v6618
    %9638 = vmatpush1.bf16.msra.mxu0 %v6617
    %9639 = vmatprep.subr.bf16.mxu0 %v6626
    %9640 = vmatpush1.bf16.msra.mxu0 %v6625
    %9641 = vmatprep.subr.bf16.mxu0 %v6634
    %9642 = vmatpush1.bf16.msra.mxu0 %v6633
    %9643 = vmatprep.subr.bf16.mxu0 %v6642
    %9644 = vmatpush1.bf16.msra.mxu0 %v6641
    %9645 = vmatprep.subr.bf16.mxu0 %v6650
    %9646 = vmatpush1.bf16.msra.mxu0 %v6649
    %9647 = vmatprep.subr.bf16.mxu0 %v6658
    %9648 = vmatpush1.bf16.msra.mxu0 %v6657
    %9649 = vmatprep.subr.bf16.mxu0 %v6666
    %9650 = vmatpush1.bf16.msra.mxu0 %v6665
    %9651 = vmatprep.subr.bf16.mxu0 %v6674
    %9652 = vmatpush1.bf16.msra.mxu0 %v6673
    %9653 = vmatprep.subr.bf16.mxu0 %v6682
    %9654 = vmatpush1.bf16.msra.mxu0 %v6681
    %9655 = vmatprep.subr.bf16.mxu0 %v6690
    %9656 = vmatpush1.bf16.msra.mxu0 %v6689
    %9657 = vmatprep.subr.bf16.mxu0 %v6698
    %9658 = vmatpush1.bf16.msra.mxu0 %v6697
    %9659 = vmatprep.subr.bf16.mxu0 %v6706
    %9660 = vmatpush1.bf16.msra.mxu0 %v6705
    %9661 = vmatprep.subr.bf16.mxu0 %v6714
    %9662 = vmatpush1.bf16.msra.mxu0 %v6713
    %9663 = vmatprep.subr.bf16.mxu0 %v6722
    %9664 = vmatpush1.bf16.msra.mxu0 %v6721
    %9665 = vmatprep.subr.bf16.mxu0 %v6730
    %9666 = vmatpush1.bf16.msra.mxu0 %v6729
    %9667 = vmatprep.mubr.bf16.mxu0 %v2450
    %9668 = vmatmul.mubr.bf16.gmra.mrb[0].mxu0 %v2449
    %v9669 = vpop.f32.mrb[0].mxu0
    %v9670 = vadd.f32 %v3518, %v9669
    %v9671 = vpop.f32.mrb[0].mxu0
    %v9672 = vadd.f32 %v3522, %v9671
    %v9673 = vpop.f32.mrb[0].mxu0
    %v9674 = vpop.f32.mrb[0].mxu0
    %9675 = vdwg.mxu0
    %9676 = vmatprep.subr.bf16.mxu0 %v6738
    %9677 = vmatpush1.bf16.msra.mxu0 %v6737
    %9678 = vmatprep.subr.bf16.mxu0 %v6746
    %9679 = vmatpush1.bf16.msra.mxu0 %v6745
    %9680 = vmatprep.subr.bf16.mxu0 %v6754
    %9681 = vmatpush1.bf16.msra.mxu0 %v6753
    %9682 = vmatprep.subr.bf16.mxu0 %v6762
    %9683 = vmatpush1.bf16.msra.mxu0 %v6761
    %9684 = vmatprep.subr.bf16.mxu0 %v6770
    %9685 = vmatpush1.bf16.msra.mxu0 %v6769
    %9686 = vmatprep.subr.bf16.mxu0 %v6778
    %9687 = vmatpush1.bf16.msra.mxu0 %v6777
    %9688 = vmatprep.subr.bf16.mxu0 %v6786
    %9689 = vmatpush1.bf16.msra.mxu0 %v6785
    %9690 = vmatprep.subr.bf16.mxu0 %v6794
    %9691 = vmatpush1.bf16.msra.mxu0 %v6793
    %9692 = vmatprep.subr.bf16.mxu0 %v6802
    %9693 = vmatpush1.bf16.msra.mxu0 %v6801
    %9694 = vmatprep.subr.bf16.mxu0 %v6810
    %9695 = vmatpush1.bf16.msra.mxu0 %v6809
    %9696 = vmatprep.subr.bf16.mxu0 %v6818
    %9697 = vmatpush1.bf16.msra.mxu0 %v6817
    %9698 = vmatprep.subr.bf16.mxu0 %v6826
    %9699 = vmatpush1.bf16.msra.mxu0 %v6825
    %9700 = vmatprep.subr.bf16.mxu0 %v6834
    %9701 = vmatpush1.bf16.msra.mxu0 %v6833
    %9702 = vmatprep.subr.bf16.mxu0 %v6842
    %9703 = vmatpush1.bf16.msra.mxu0 %v6841
    %9704 = vmatprep.subr.bf16.mxu0 %v6850
    %9705 = vmatpush1.bf16.msra.mxu0 %v6849
    %9706 = vmatprep.subr.bf16.mxu0 %v6858
    %9707 = vmatpush1.bf16.msra.mxu0 %v6857
    %9708 = vmatprep.mubr.bf16.mxu0 %v2452
    %9709 = vmatmul.mubr.bf16.gmra.mrb[0].mxu0 %v2451
    %v9710 = vpop.f32.mrb[0].mxu0
    %v9711 = vadd.f32 %v9670, %v9710
    %v9712 = vpop.f32.mrb[0].mxu0
    %v9713 = vadd.f32 %v9672, %v9712
    %v9714 = vpop.f32.mrb[0].mxu0
    %v9715 = vpop.f32.mrb[0].mxu0
    %9716 = vdwg.mxu0
    %9717 = vmatprep.subr.bf16.mxu0 %v6866
    %9718 = vmatpush1.bf16.msra.mxu0 %v6865
    %9719 = vmatprep.subr.bf16.mxu0 %v6874
    %9720 = vmatpush1.bf16.msra.mxu0 %v6873
    %9721 = vmatprep.subr.bf16.mxu0 %v6882
    %9722 = vmatpush1.bf16.msra.mxu0 %v6881
    %9723 = vmatprep.subr.bf16.mxu0 %v6890
    %9724 = vmatpush1.bf16.msra.mxu0 %v6889
    %9725 = vmatprep.subr.bf16.mxu0 %v6898
    %9726 = vmatpush1.bf16.msra.mxu0 %v6897
    %9727 = vmatprep.subr.bf16.mxu0 %v6906
    %9728 = vmatpush1.bf16.msra.mxu0 %v6905
    %9729 = vmatprep.subr.bf16.mxu0 %v6914
    %9730 = vmatpush1.bf16.msra.mxu0 %v6913
    %9731 = vmatprep.subr.bf16.mxu0 %v6922
    %9732 = vmatpush1.bf16.msra.mxu0 %v6921
    %9733 = vmatprep.subr.bf16.mxu0 %v6930
    %9734 = vmatpush1.bf16.msra.mxu0 %v6929
    %9735 = vmatprep.subr.bf16.mxu0 %v6938
    %9736 = vmatpush1.bf16.msra.mxu0 %v6937
    %9737 = vmatprep.subr.bf16.mxu0 %v6946
    %9738 = vmatpush1.bf16.msra.mxu0 %v6945
    %9739 = vmatprep.subr.bf16.mxu0 %v6954
    %9740 = vmatpush1.bf16.msra.mxu0 %v6953
    %9741 = vmatprep.subr.bf16.mxu0 %v6962
    %9742 = vmatpush1.bf16.msra.mxu0 %v6961
    %9743 = vmatprep.subr.bf16.mxu0 %v6970
    %9744 = vmatpush1.bf16.msra.mxu0 %v6969
    %9745 = vmatprep.subr.bf16.mxu0 %v6978
    %9746 = vmatpush1.bf16.msra.mxu0 %v6977
    %9747 = vmatprep.subr.bf16.mxu0 %v6986
    %9748 = vmatpush1.bf16.msra.mxu0 %v6985
    %9749 = vmatprep.mubr.bf16.mxu0 %v2454
    %9750 = vmatmul.mubr.bf16.gmra.mrb[0].mxu0 %v2453
    %v9751 = vpop.f32.mrb[0].mxu0
    %v9752 = vadd.f32 %v9711, %v9751
    %v9753 = vpop.f32.mrb[0].mxu0
    %v9754 = vadd.f32 %v9713, %v9753
    %v9755 = vpop.f32.mrb[0].mxu0
    %v9756 = vpop.f32.mrb[0].mxu0
    %9757 = vdwg.mxu0
    %9758 = vmatprep.subr.bf16.mxu0 %v6994
    %9759 = vmatpush1.bf16.msra.mxu0 %v6993
    %9760 = vmatprep.subr.bf16.mxu0 %v7002
    %9761 = vmatpush1.bf16.msra.mxu0 %v7001
    %9762 = vmatprep.subr.bf16.mxu0 %v7010
    %9763 = vmatpush1.bf16.msra.mxu0 %v7009
    %9764 = vmatprep.subr.bf16.mxu0 %v7018
    %9765 = vmatpush1.bf16.msra.mxu0 %v7017
    %9766 = vmatprep.subr.bf16.mxu0 %v7026
    %9767 = vmatpush1.bf16.msra.mxu0 %v7025
    %9768 = vmatprep.subr.bf16.mxu0 %v7034
    %9769 = vmatpush1.bf16.msra.mxu0 %v7033
    %9770 = vmatprep.subr.bf16.mxu0 %v7042
    %9771 = vmatpush1.bf16.msra.mxu0 %v7041
    %9772 = vmatprep.subr.bf16.mxu0 %v7050
    %9773 = vmatpush1.bf16.msra.mxu0 %v7049
    %9774 = vmatprep.subr.bf16.mxu0 %v7058
    %9775 = vmatpush1.bf16.msra.mxu0 %v7057
    %9776 = vmatprep.subr.bf16.mxu0 %v7066
    %9777 = vmatpush1.bf16.msra.mxu0 %v7065
    %9778 = vmatprep.subr.bf16.mxu0 %v7074
    %9779 = vmatpush1.bf16.msra.mxu0 %v7073
    %9780 = vmatprep.subr.bf16.mxu0 %v7082
    %9781 = vmatpush1.bf16.msra.mxu0 %v7081
    %9782 = vmatprep.subr.bf16.mxu0 %v7090
    %9783 = vmatpush1.bf16.msra.mxu0 %v7089
    %9784 = vmatprep.subr.bf16.mxu0 %v7098
    %9785 = vmatpush1.bf16.msra.mxu0 %v7097
    %9786 = vmatprep.subr.bf16.mxu0 %v7106
    %9787 = vmatpush1.bf16.msra.mxu0 %v7105
    %9788 = vmatprep.subr.bf16.mxu0 %v7114
    %9789 = vmatpush1.bf16.msra.mxu0 %v7113
    %9790 = vmatprep.mubr.bf16.mxu0 %v2456
    %9791 = vmatmul.mubr.bf16.gmra.mrb[0].mxu0 %v2455
    %v9792 = vpop.f32.mrb[0].mxu0
    %v9793 = vadd.f32 %v9752, %v9792
    %v9794 = vpop.f32.mrb[0].mxu0
    %v9795 = vadd.f32 %v9754, %v9794
    %v9796 = vpop.f32.mrb[0].mxu0
    %v9797 = vpop.f32.mrb[0].mxu0
    %9798 = vdwg.mxu0
    %9799 = vmatprep.subr.bf16.mxu0 %v7122
    %9800 = vmatpush1.bf16.msra.mxu0 %v7121
    %9801 = vmatprep.subr.bf16.mxu0 %v7130
    %9802 = vmatpush1.bf16.msra.mxu0 %v7129
    %9803 = vmatprep.subr.bf16.mxu0 %v7138
    %9804 = vmatpush1.bf16.msra.mxu0 %v7137
    %9805 = vmatprep.subr.bf16.mxu0 %v7146
    %9806 = vmatpush1.bf16.msra.mxu0 %v7145
    %9807 = vmatprep.subr.bf16.mxu0 %v7154
    %9808 = vmatpush1.bf16.msra.mxu0 %v7153
    %9809 = vmatprep.subr.bf16.mxu0 %v7162
    %9810 = vmatpush1.bf16.msra.mxu0 %v7161
    %9811 = vmatprep.subr.bf16.mxu0 %v7170
    %9812 = vmatpush1.bf16.msra.mxu0 %v7169
    %9813 = vmatprep.subr.bf16.mxu0 %v7178
    %9814 = vmatpush1.bf16.msra.mxu0 %v7177
    %9815 = vmatprep.subr.bf16.mxu0 %v7186
    %9816 = vmatpush1.bf16.msra.mxu0 %v7185
    %9817 = vmatprep.subr.bf16.mxu0 %v7194
    %9818 = vmatpush1.bf16.msra.mxu0 %v7193
    %9819 = vmatprep.subr.bf16.mxu0 %v7202
    %9820 = vmatpush1.bf16.msra.mxu0 %v7201
    %9821 = vmatprep.subr.bf16.mxu0 %v7210
    %9822 = vmatpush1.bf16.msra.mxu0 %v7209
    %9823 = vmatprep.subr.bf16.mxu0 %v7218
    %9824 = vmatpush1.bf16.msra.mxu0 %v7217
    %9825 = vmatprep.subr.bf16.mxu0 %v7226
    %9826 = vmatpush1.bf16.msra.mxu0 %v7225
    %9827 = vmatprep.subr.bf16.mxu0 %v7234
    %9828 = vmatpush1.bf16.msra.mxu0 %v7233
    %9829 = vmatprep.subr.bf16.mxu0 %v7242
    %9830 = vmatpush1.bf16.msra.mxu0 %v7241
    %9831 = vmatprep.mubr.bf16.mxu0 %v2458
    %9832 = vmatmul.mubr.bf16.gmra.mrb[0].mxu0 %v2457
    %v9833 = vpop.f32.mrb[0].mxu0
    %v9834 = vadd.f32 %v9793, %v9833
    %v9835 = vpop.f32.mrb[0].mxu0
    %v9836 = vadd.f32 %v9795, %v9835
    %v9837 = vpop.f32.mrb[0].mxu0
    %v9838 = vpop.f32.mrb[0].mxu0
    %9839 = vdwg.mxu0
    %9840 = vmatprep.subr.bf16.mxu0 %v7250
    %9841 = vmatpush1.bf16.msra.mxu0 %v7249
    %9842 = vmatprep.subr.bf16.mxu0 %v7258
    %9843 = vmatpush1.bf16.msra.mxu0 %v7257
    %9844 = vmatprep.subr.bf16.mxu0 %v7266
    %9845 = vmatpush1.bf16.msra.mxu0 %v7265
    %9846 = vmatprep.subr.bf16.mxu0 %v7274
    %9847 = vmatpush1.bf16.msra.mxu0 %v7273
    %9848 = vmatprep.subr.bf16.mxu0 %v7282
    %9849 = vmatpush1.bf16.msra.mxu0 %v7281
    %9850 = vmatprep.subr.bf16.mxu0 %v7290
    %9851 = vmatpush1.bf16.msra.mxu0 %v7289
    %9852 = vmatprep.subr.bf16.mxu0 %v7298
    %9853 = vmatpush1.bf16.msra.mxu0 %v7297
    %9854 = vmatprep.subr.bf16.mxu0 %v7306
    %9855 = vmatpush1.bf16.msra.mxu0 %v7305
    %9856 = vmatprep.subr.bf16.mxu0 %v7314
    %9857 = vmatpush1.bf16.msra.mxu0 %v7313
    %9858 = vmatprep.subr.bf16.mxu0 %v7322
    %9859 = vmatpush1.bf16.msra.mxu0 %v7321
    %9860 = vmatprep.subr.bf16.mxu0 %v7330
    %9861 = vmatpush1.bf16.msra.mxu0 %v7329
    %9862 = vmatprep.subr.bf16.mxu0 %v7338
    %9863 = vmatpush1.bf16.msra.mxu0 %v7337
    %9864 = vmatprep.subr.bf16.mxu0 %v7346
    %9865 = vmatpush1.bf16.msra.mxu0 %v7345
    %9866 = vmatprep.subr.bf16.mxu0 %v7354
    %9867 = vmatpush1.bf16.msra.mxu0 %v7353
    %9868 = vmatprep.subr.bf16.mxu0 %v7362
    %9869 = vmatpush1.bf16.msra.mxu0 %v7361
    %9870 = vmatprep.subr.bf16.mxu0 %v7370
    %9871 = vmatpush1.bf16.msra.mxu0 %v7369
    %9872 = vmatprep.mubr.bf16.mxu0 %v2460
    %9873 = vmatmul.mubr.bf16.gmra.mrb[0].mxu0 %v2459
    %v9874 = vpop.f32.mrb[0].mxu0
    %v9875 = vadd.f32 %v9834, %v9874
    %v9876 = vpop.f32.mrb[0].mxu0
    %v9877 = vadd.f32 %v9836, %v9876
    %v9878 = vpop.f32.mrb[0].mxu0
    %v9879 = vpop.f32.mrb[0].mxu0
    %9880 = vdwg.mxu0
    %9881 = vmatprep.subr.bf16.mxu0 %v7378
    %9882 = vmatpush1.bf16.msra.mxu0 %v7377
    %9883 = vmatprep.subr.bf16.mxu0 %v7386
    %9884 = vmatpush1.bf16.msra.mxu0 %v7385
    %9885 = vmatprep.subr.bf16.mxu0 %v7394
    %9886 = vmatpush1.bf16.msra.mxu0 %v7393
    %9887 = vmatprep.subr.bf16.mxu0 %v7402
    %9888 = vmatpush1.bf16.msra.mxu0 %v7401
    %9889 = vmatprep.subr.bf16.mxu0 %v7410
    %9890 = vmatpush1.bf16.msra.mxu0 %v7409
    %9891 = vmatprep.subr.bf16.mxu0 %v7418
    %9892 = vmatpush1.bf16.msra.mxu0 %v7417
    %9893 = vmatprep.subr.bf16.mxu0 %v7426
    %9894 = vmatpush1.bf16.msra.mxu0 %v7425
    %9895 = vmatprep.subr.bf16.mxu0 %v7434
    %9896 = vmatpush1.bf16.msra.mxu0 %v7433
    %9897 = vmatprep.subr.bf16.mxu0 %v7442
    %9898 = vmatpush1.bf16.msra.mxu0 %v7441
    %9899 = vmatprep.subr.bf16.mxu0 %v7450
    %9900 = vmatpush1.bf16.msra.mxu0 %v7449
    %9901 = vmatprep.subr.bf16.mxu0 %v7458
    %9902 = vmatpush1.bf16.msra.mxu0 %v7457
    %9903 = vmatprep.subr.bf16.mxu0 %v7466
    %9904 = vmatpush1.bf16.msra.mxu0 %v7465
    %9905 = vmatprep.subr.bf16.mxu0 %v7474
    %9906 = vmatpush1.bf16.msra.mxu0 %v7473
    %9907 = vmatprep.subr.bf16.mxu0 %v7482
    %9908 = vmatpush1.bf16.msra.mxu0 %v7481
    %9909 = vmatprep.subr.bf16.mxu0 %v7490
    %9910 = vmatpush1.bf16.msra.mxu0 %v7489
    %9911 = vmatprep.subr.bf16.mxu0 %v7498
    %9912 = vmatpush1.bf16.msra.mxu0 %v7497
    %9913 = vmatprep.mubr.bf16.mxu0 %v2462
    %9914 = vmatmul.mubr.bf16.gmra.mrb[0].mxu0 %v2461
    %v9915 = vpop.f32.mrb[0].mxu0
    %v9916 = vadd.f32 %v9875, %v9915
    %v9917 = vpop.f32.mrb[0].mxu0
    %v9918 = vadd.f32 %v9877, %v9917
    %v9919 = vpop.f32.mrb[0].mxu0
    %v9920 = vpop.f32.mrb[0].mxu0
    %9921 = vdwg.mxu0
    %9922 = vmatprep.subr.bf16.mxu0 %v7506
    %9923 = vmatpush1.bf16.msra.mxu0 %v7505
    %9924 = vmatprep.subr.bf16.mxu0 %v7514
    %9925 = vmatpush1.bf16.msra.mxu0 %v7513
    %9926 = vmatprep.subr.bf16.mxu0 %v7522
    %9927 = vmatpush1.bf16.msra.mxu0 %v7521
    %9928 = vmatprep.subr.bf16.mxu0 %v7530
    %9929 = vmatpush1.bf16.msra.mxu0 %v7529
    %9930 = vmatprep.subr.bf16.mxu0 %v7538
    %9931 = vmatpush1.bf16.msra.mxu0 %v7537
    %9932 = vmatprep.subr.bf16.mxu0 %v7546
    %9933 = vmatpush1.bf16.msra.mxu0 %v7545
    %9934 = vmatprep.subr.bf16.mxu0 %v7554
    %9935 = vmatpush1.bf16.msra.mxu0 %v7553
    %9936 = vmatprep.subr.bf16.mxu0 %v7562
    %9937 = vmatpush1.bf16.msra.mxu0 %v7561
    %9938 = vmatprep.subr.bf16.mxu0 %v7570
    %9939 = vmatpush1.bf16.msra.mxu0 %v7569
    %9940 = vmatprep.subr.bf16.mxu0 %v7578
    %9941 = vmatpush1.bf16.msra.mxu0 %v7577
    %9942 = vmatprep.subr.bf16.mxu0 %v7586
    %9943 = vmatpush1.bf16.msra.mxu0 %v7585
    %9944 = vmatprep.subr.bf16.mxu0 %v7594
    %9945 = vmatpush1.bf16.msra.mxu0 %v7593
    %9946 = vmatprep.subr.bf16.mxu0 %v7602
    %9947 = vmatpush1.bf16.msra.mxu0 %v7601
    %9948 = vmatprep.subr.bf16.mxu0 %v7610
    %9949 = vmatpush1.bf16.msra.mxu0 %v7609
    %9950 = vmatprep.subr.bf16.mxu0 %v7618
    %9951 = vmatpush1.bf16.msra.mxu0 %v7617
    %9952 = vmatprep.subr.bf16.mxu0 %v7626
    %9953 = vmatpush1.bf16.msra.mxu0 %v7625
    %9954 = vmatprep.mubr.bf16.mxu0 %v2464
    %9955 = vmatmul.mubr.bf16.gmra.mrb[0].mxu0 %v2463
    %v9956 = vpop.f32.mrb[0].mxu0
    %v9957 = vadd.f32 %v9916, %v9956
    %v9958 = vpop.f32.mrb[0].mxu0
    %v9959 = vadd.f32 %v9918, %v9958
    %v9960 = vpop.f32.mrb[0].mxu0
    %v9961 = vpop.f32.mrb[0].mxu0
    %9962 = vdwg.mxu0
    %v9963 = vmax.f32 %v8973, 0.0
    %v9964 = vmax.f32 %v8975, 0.0
    %v9965 = vmax.f32 %v9301, 0.0
    %v9966 = vmax.f32 %v9303, 0.0
    %v9967 = vmax.f32 %v9629, 0.0
    %v9968 = vmax.f32 %v9631, 0.0
    %v9969 = vmax.f32 %v9957, 0.0
    %v9970 = vmax.f32 %v9959, 0.0
    %v9971 = vpack.c.bf16 %v9963, %v9963
    %v9972 = vpack.c.bf16 %v9964, %v9964
    %v9973 = vpack.c.bf16 %v9965, %v9965
    %v9974 = vpack.c.bf16 %v9966, %v9966
    %v9975 = vpack.c.bf16 %v9967, %v9967
    %v9976 = vpack.c.bf16 %v9968, %v9968
    %v9977 = vpack.c.bf16 %v9969, %v9969
    %v9978 = vpack.c.bf16 %v9970, %v9970
    %v9979 = vld [vmem:[#allocation13] sm:$0xf]
    %v9980 = vld [vmem:[#allocation13 + $0x4] sm:$0xf]
    %v9981 = vld [vmem:[#allocation13 + $0x8] sm:$0xf]
    %v9982 = vld [vmem:[#allocation13 + $0xc] sm:$0xf]
    %v9983 = vld [vmem:[#allocation13 + $0x10] sm:$0xf]
    %v9984 = vld [vmem:[#allocation13 + $0x14] sm:$0xf]
    %v9985 = vld [vmem:[#allocation13 + $0x18] sm:$0xf]
    %v9986 = vld [vmem:[#allocation13 + $0x1c] sm:$0xf]
    %v9987 = vld [vmem:[#allocation13 + $0x20] sm:$0xf]
    %v9988 = vld [vmem:[#allocation13 + $0x24] sm:$0xf]
    %v9989 = vld [vmem:[#allocation13 + $0x28] sm:$0xf]
    %v9990 = vld [vmem:[#allocation13 + $0x2c] sm:$0xf]
    %v9991 = vld [vmem:[#allocation13 + $0x30] sm:$0xf]
    %v9992 = vld [vmem:[#allocation13 + $0x34] sm:$0xf]
    %v9993 = vld [vmem:[#allocation13 + $0x38] sm:$0xf]
    %v9994 = vld [vmem:[#allocation13 + $0x3c] sm:$0xf]
    %v9995 = vld [vmem:[#allocation13 + $0x40] sm:$0xf]
    %v9996 = vld [vmem:[#allocation13 + $0x44] sm:$0xf]
    %v9997 = vld [vmem:[#allocation13 + $0x48] sm:$0xf]
    %v9998 = vld [vmem:[#allocation13 + $0x4c] sm:$0xf]
    %v9999 = vld [vmem:[#allocation13 + $0x50] sm:$0xf]
    %v10000 = vld [vmem:[#allocation13 + $0x54] sm:$0xf]
    %v10001 = vld [vmem:[#allocation13 + $0x58] sm:$0xf]
    %v10002 = vld [vmem:[#allocation13 + $0x5c] sm:$0xf]
    %v10003 = vld [vmem:[#allocation13 + $0x60] sm:$0xf]
    %v10004 = vld [vmem:[#allocation13 + $0x64] sm:$0xf]
    %v10005 = vld [vmem:[#allocation13 + $0x68] sm:$0xf]
    %v10006 = vld [vmem:[#allocation13 + $0x6c] sm:$0xf]
    %v10007 = vld [vmem:[#allocation13 + $0x70] sm:$0xf]
    %v10008 = vld [vmem:[#allocation13 + $0x74] sm:$0xf]
    %v10009 = vld [vmem:[#allocation13 + $0x78] sm:$0xf]
    %v10010 = vld [vmem:[#allocation13 + $0x7c] sm:$0xf]
    %v10011 = vld [vmem:[#allocation13 + $0x80] sm:$0xf]
    %v10012 = vld [vmem:[#allocation13 + $0x84] sm:$0xf]
    %v10013 = vld [vmem:[#allocation13 + $0x88] sm:$0xf]
    %v10014 = vld [vmem:[#allocation13 + $0x8c] sm:$0xf]
    %v10015 = vld [vmem:[#allocation13 + $0x90] sm:$0xf]
    %v10016 = vld [vmem:[#allocation13 + $0x94] sm:$0xf]
    %v10017 = vld [vmem:[#allocation13 + $0x98] sm:$0xf]
    %v10018 = vld [vmem:[#allocation13 + $0x9c] sm:$0xf]
    %v10019 = vld [vmem:[#allocation13 + $0xa0] sm:$0xf]
    %v10020 = vld [vmem:[#allocation13 + $0xa4] sm:$0xf]
    %v10021 = vld [vmem:[#allocation13 + $0xa8] sm:$0xf]
    %v10022 = vld [vmem:[#allocation13 + $0xac] sm:$0xf]
    %v10023 = vld [vmem:[#allocation13 + $0xb0] sm:$0xf]
    %v10024 = vld [vmem:[#allocation13 + $0xb4] sm:$0xf]
    %v10025 = vld [vmem:[#allocation13 + $0xb8] sm:$0xf]
    %v10026 = vld [vmem:[#allocation13 + $0xbc] sm:$0xf]
    %v10027 = vld [vmem:[#allocation13 + $0xc0] sm:$0xf]
    %v10028 = vld [vmem:[#allocation13 + $0xc4] sm:$0xf]
    %v10029 = vld [vmem:[#allocation13 + $0xc8] sm:$0xf]
    %v10030 = vld [vmem:[#allocation13 + $0xcc] sm:$0xf]
    %v10031 = vld [vmem:[#allocation13 + $0xd0] sm:$0xf]
    %v10032 = vld [vmem:[#allocation13 + $0xd4] sm:$0xf]
    %v10033 = vld [vmem:[#allocation13 + $0xd8] sm:$0xf]
    %v10034 = vld [vmem:[#allocation13 + $0xdc] sm:$0xf]
    %v10035 = vld [vmem:[#allocation13 + $0xe0] sm:$0xf]
    %v10036 = vld [vmem:[#allocation13 + $0xe4] sm:$0xf]
    %v10037 = vld [vmem:[#allocation13 + $0xe8] sm:$0xf]
    %v10038 = vld [vmem:[#allocation13 + $0xec] sm:$0xf]
    %v10039 = vld [vmem:[#allocation13 + $0xf0] sm:$0xf]
    %v10040 = vld [vmem:[#allocation13 + $0xf4] sm:$0xf]
    %v10041 = vld [vmem:[#allocation13 + $0xf8] sm:$0xf]
    %v10042 = vld [vmem:[#allocation13 + $0xfc] sm:$0xf]
    %v10043 = vld [vmem:[#allocation13 + $0x100] sm:$0xf]
    %v10044 = vld [vmem:[#allocation13 + $0x104] sm:$0xf]
    %v10045 = vld [vmem:[#allocation13 + $0x108] sm:$0xf]
    %v10046 = vld [vmem:[#allocation13 + $0x10c] sm:$0xf]
    %v10047 = vld [vmem:[#allocation13 + $0x110] sm:$0xf]
    %v10048 = vld [vmem:[#allocation13 + $0x114] sm:$0xf]
    %v10049 = vld [vmem:[#allocation13 + $0x118] sm:$0xf]
    %v10050 = vld [vmem:[#allocation13 + $0x11c] sm:$0xf]
    %v10051 = vld [vmem:[#allocation13 + $0x120] sm:$0xf]
    %v10052 = vld [vmem:[#allocation13 + $0x124] sm:$0xf]
    %v10053 = vld [vmem:[#allocation13 + $0x128] sm:$0xf]
    %v10054 = vld [vmem:[#allocation13 + $0x12c] sm:$0xf]
    %v10055 = vld [vmem:[#allocation13 + $0x130] sm:$0xf]
    %v10056 = vld [vmem:[#allocation13 + $0x134] sm:$0xf]
    %v10057 = vld [vmem:[#allocation13 + $0x138] sm:$0xf]
    %v10058 = vld [vmem:[#allocation13 + $0x13c] sm:$0xf]
    %v10059 = vld [vmem:[#allocation13 + $0x140] sm:$0xf]
    %v10060 = vld [vmem:[#allocation13 + $0x144] sm:$0xf]
    %v10061 = vld [vmem:[#allocation13 + $0x148] sm:$0xf]
    %v10062 = vld [vmem:[#allocation13 + $0x14c] sm:$0xf]
    %v10063 = vld [vmem:[#allocation13 + $0x150] sm:$0xf]
    %v10064 = vld [vmem:[#allocation13 + $0x154] sm:$0xf]
    %v10065 = vld [vmem:[#allocation13 + $0x158] sm:$0xf]
    %v10066 = vld [vmem:[#allocation13 + $0x15c] sm:$0xf]
    %v10067 = vld [vmem:[#allocation13 + $0x160] sm:$0xf]
    %v10068 = vld [vmem:[#allocation13 + $0x164] sm:$0xf]
    %v10069 = vld [vmem:[#allocation13 + $0x168] sm:$0xf]
    %v10070 = vld [vmem:[#allocation13 + $0x16c] sm:$0xf]
    %v10071 = vld [vmem:[#allocation13 + $0x170] sm:$0xf]
    %v10072 = vld [vmem:[#allocation13 + $0x174] sm:$0xf]
    %v10073 = vld [vmem:[#allocation13 + $0x178] sm:$0xf]
    %v10074 = vld [vmem:[#allocation13 + $0x17c] sm:$0xf]
    %v10075 = vld [vmem:[#allocation13 + $0x180] sm:$0xf]
    %v10076 = vld [vmem:[#allocation13 + $0x184] sm:$0xf]
    %v10077 = vld [vmem:[#allocation13 + $0x188] sm:$0xf]
    %v10078 = vld [vmem:[#allocation13 + $0x18c] sm:$0xf]
    %v10079 = vld [vmem:[#allocation13 + $0x190] sm:$0xf]
    %v10080 = vld [vmem:[#allocation13 + $0x194] sm:$0xf]
    %v10081 = vld [vmem:[#allocation13 + $0x198] sm:$0xf]
    %v10082 = vld [vmem:[#allocation13 + $0x19c] sm:$0xf]
    %v10083 = vld [vmem:[#allocation13 + $0x1a0] sm:$0xf]
    %v10084 = vld [vmem:[#allocation13 + $0x1a4] sm:$0xf]
    %v10085 = vld [vmem:[#allocation13 + $0x1a8] sm:$0xf]
    %v10086 = vld [vmem:[#allocation13 + $0x1ac] sm:$0xf]
    %v10087 = vld [vmem:[#allocation13 + $0x1b0] sm:$0xf]
    %v10088 = vld [vmem:[#allocation13 + $0x1b4] sm:$0xf]
    %v10089 = vld [vmem:[#allocation13 + $0x1b8] sm:$0xf]
    %v10090 = vld [vmem:[#allocation13 + $0x1bc] sm:$0xf]
    %v10091 = vld [vmem:[#allocation13 + $0x1c0] sm:$0xf]
    %v10092 = vld [vmem:[#allocation13 + $0x1c4] sm:$0xf]
    %v10093 = vld [vmem:[#allocation13 + $0x1c8] sm:$0xf]
    %v10094 = vld [vmem:[#allocation13 + $0x1cc] sm:$0xf]
    %v10095 = vld [vmem:[#allocation13 + $0x1d0] sm:$0xf]
    %v10096 = vld [vmem:[#allocation13 + $0x1d4] sm:$0xf]
    %v10097 = vld [vmem:[#allocation13 + $0x1d8] sm:$0xf]
    %v10098 = vld [vmem:[#allocation13 + $0x1dc] sm:$0xf]
    %v10099 = vld [vmem:[#allocation13 + $0x1e0] sm:$0xf]
    %v10100 = vld [vmem:[#allocation13 + $0x1e4] sm:$0xf]
    %v10101 = vld [vmem:[#allocation13 + $0x1e8] sm:$0xf]
    %v10102 = vld [vmem:[#allocation13 + $0x1ec] sm:$0xf]
    %v10103 = vld [vmem:[#allocation13 + $0x1f0] sm:$0xf]
    %v10104 = vld [vmem:[#allocation13 + $0x1f4] sm:$0xf]
    %v10105 = vld [vmem:[#allocation13 + $0x1f8] sm:$0xf]
    %v10106 = vld [vmem:[#allocation13 + $0x1fc] sm:$0xf]
    %v10107 = vld [vmem:[#allocation14] sm:$0x1]
    %v10109 = vlaneseq
    %v10110 = vshrl.u32 %v10109, 7
    %v10111 = vsub.s32 0, %v10110
    %v10112 = vrot.slane %v10107, %v10111
    %v10242 = vunpack.c.l.b16 %v9979
    %v10243 = vunpack.c.l.b16 %v9980
    %v10244 = vunpack.c.l.b16 %v9981
    %v10245 = vunpack.c.l.b16 %v9982
    %v10246 = vunpack.c.l.b16 %v9983
    %v10247 = vunpack.c.l.b16 %v9984
    %v10248 = vunpack.c.l.b16 %v9985
    %v10249 = vunpack.c.l.b16 %v9986
    %v10250 = vunpack.c.l.b16 %v9987
    %v10251 = vunpack.c.l.b16 %v9988
    %v10252 = vunpack.c.l.b16 %v9989
    %v10253 = vunpack.c.l.b16 %v9990
    %v10254 = vunpack.c.l.b16 %v9991
    %v10255 = vunpack.c.l.b16 %v9992
    %v10256 = vunpack.c.l.b16 %v9993
    %v10257 = vunpack.c.l.b16 %v9994
    %v10258 = vunpack.c.l.b16 %v9995
    %v10259 = vunpack.c.l.b16 %v9996
    %v10260 = vunpack.c.l.b16 %v9997
    %v10261 = vunpack.c.l.b16 %v9998
    %v10262 = vunpack.c.l.b16 %v9999
    %v10263 = vunpack.c.l.b16 %v10000
    %v10264 = vunpack.c.l.b16 %v10001
    %v10265 = vunpack.c.l.b16 %v10002
    %v10266 = vunpack.c.l.b16 %v10003
    %v10267 = vunpack.c.l.b16 %v10004
    %v10268 = vunpack.c.l.b16 %v10005
    %v10269 = vunpack.c.l.b16 %v10006
    %v10270 = vunpack.c.l.b16 %v10007
    %v10271 = vunpack.c.l.b16 %v10008
    %v10272 = vunpack.c.l.b16 %v10009
    %v10273 = vunpack.c.l.b16 %v10010
    %v10274 = vunpack.c.l.b16 %v10011
    %v10275 = vunpack.c.l.b16 %v10012
    %v10276 = vunpack.c.l.b16 %v10013
    %v10277 = vunpack.c.l.b16 %v10014
    %v10278 = vunpack.c.l.b16 %v10015
    %v10279 = vunpack.c.l.b16 %v10016
    %v10280 = vunpack.c.l.b16 %v10017
    %v10281 = vunpack.c.l.b16 %v10018
    %v10282 = vunpack.c.l.b16 %v10019
    %v10283 = vunpack.c.l.b16 %v10020
    %v10284 = vunpack.c.l.b16 %v10021
    %v10285 = vunpack.c.l.b16 %v10022
    %v10286 = vunpack.c.l.b16 %v10023
    %v10287 = vunpack.c.l.b16 %v10024
    %v10288 = vunpack.c.l.b16 %v10025
    %v10289 = vunpack.c.l.b16 %v10026
    %v10290 = vunpack.c.l.b16 %v10027
    %v10291 = vunpack.c.l.b16 %v10028
    %v10292 = vunpack.c.l.b16 %v10029
    %v10293 = vunpack.c.l.b16 %v10030
    %v10294 = vunpack.c.l.b16 %v10031
    %v10295 = vunpack.c.l.b16 %v10032
    %v10296 = vunpack.c.l.b16 %v10033
    %v10297 = vunpack.c.l.b16 %v10034
    %v10298 = vunpack.c.l.b16 %v10035
    %v10299 = vunpack.c.l.b16 %v10036
    %v10300 = vunpack.c.l.b16 %v10037
    %v10301 = vunpack.c.l.b16 %v10038
    %v10302 = vunpack.c.l.b16 %v10039
    %v10303 = vunpack.c.l.b16 %v10040
    %v10304 = vunpack.c.l.b16 %v10041
    %v10305 = vunpack.c.l.b16 %v10042
    %v10306 = vunpack.c.l.b16 %v10043
    %v10307 = vunpack.c.l.b16 %v10044
    %v10308 = vunpack.c.l.b16 %v10045
    %v10309 = vunpack.c.l.b16 %v10046
    %v10310 = vunpack.c.l.b16 %v10047
    %v10311 = vunpack.c.l.b16 %v10048
    %v10312 = vunpack.c.l.b16 %v10049
    %v10313 = vunpack.c.l.b16 %v10050
    %v10314 = vunpack.c.l.b16 %v10051
    %v10315 = vunpack.c.l.b16 %v10052
    %v10316 = vunpack.c.l.b16 %v10053
    %v10317 = vunpack.c.l.b16 %v10054
    %v10318 = vunpack.c.l.b16 %v10055
    %v10319 = vunpack.c.l.b16 %v10056
    %v10320 = vunpack.c.l.b16 %v10057
    %v10321 = vunpack.c.l.b16 %v10058
    %v10322 = vunpack.c.l.b16 %v10059
    %v10323 = vunpack.c.l.b16 %v10060
    %v10324 = vunpack.c.l.b16 %v10061
    %v10325 = vunpack.c.l.b16 %v10062
    %v10326 = vunpack.c.l.b16 %v10063
    %v10327 = vunpack.c.l.b16 %v10064
    %v10328 = vunpack.c.l.b16 %v10065
    %v10329 = vunpack.c.l.b16 %v10066
    %v10330 = vunpack.c.l.b16 %v10067
    %v10331 = vunpack.c.l.b16 %v10068
    %v10332 = vunpack.c.l.b16 %v10069
    %v10333 = vunpack.c.l.b16 %v10070
    %v10334 = vunpack.c.l.b16 %v10071
    %v10335 = vunpack.c.l.b16 %v10072
    %v10336 = vunpack.c.l.b16 %v10073
    %v10337 = vunpack.c.l.b16 %v10074
    %v10338 = vunpack.c.l.b16 %v10075
    %v10339 = vunpack.c.l.b16 %v10076
    %v10340 = vunpack.c.l.b16 %v10077
    %v10341 = vunpack.c.l.b16 %v10078
    %v10342 = vunpack.c.l.b16 %v10079
    %v10343 = vunpack.c.l.b16 %v10080
    %v10344 = vunpack.c.l.b16 %v10081
    %v10345 = vunpack.c.l.b16 %v10082
    %v10346 = vunpack.c.l.b16 %v10083
    %v10347 = vunpack.c.l.b16 %v10084
    %v10348 = vunpack.c.l.b16 %v10085
    %v10349 = vunpack.c.l.b16 %v10086
    %v10350 = vunpack.c.l.b16 %v10087
    %v10351 = vunpack.c.l.b16 %v10088
    %v10352 = vunpack.c.l.b16 %v10089
    %v10353 = vunpack.c.l.b16 %v10090
    %v10354 = vunpack.c.l.b16 %v10091
    %v10355 = vunpack.c.l.b16 %v10092
    %v10356 = vunpack.c.l.b16 %v10093
    %v10357 = vunpack.c.l.b16 %v10094
    %v10358 = vunpack.c.l.b16 %v10095
    %v10359 = vunpack.c.l.b16 %v10096
    %v10360 = vunpack.c.l.b16 %v10097
    %v10361 = vunpack.c.l.b16 %v10098
    %v10362 = vunpack.c.l.b16 %v10099
    %v10363 = vunpack.c.l.b16 %v10100
    %v10364 = vunpack.c.l.b16 %v10101
    %v10365 = vunpack.c.l.b16 %v10102
    %v10366 = vunpack.c.l.b16 %v10103
    %v10367 = vunpack.c.l.b16 %v10104
    %v10368 = vunpack.c.l.b16 %v10105
    %v10369 = vunpack.c.l.b16 %v10106
    %v10370 = vpack.c.b16 %v10243, %v10242
    %v10371 = vpack.c.b16 %v10245, %v10244
    %v10372 = vpack.c.b16 %v10247, %v10246
    %v10373 = vpack.c.b16 %v10249, %v10248
    %v10374 = vpack.c.b16 %v10251, %v10250
    %v10375 = vpack.c.b16 %v10253, %v10252
    %v10376 = vpack.c.b16 %v10255, %v10254
    %v10377 = vpack.c.b16 %v10257, %v10256
    %v10378 = vpack.c.b16 %v10259, %v10258
    %v10379 = vpack.c.b16 %v10261, %v10260
    %v10380 = vpack.c.b16 %v10263, %v10262
    %v10381 = vpack.c.b16 %v10265, %v10264
    %v10382 = vpack.c.b16 %v10267, %v10266
    %v10383 = vpack.c.b16 %v10269, %v10268
    %v10384 = vpack.c.b16 %v10271, %v10270
    %v10385 = vpack.c.b16 %v10273, %v10272
    %v10386 = vpack.c.b16 %v10275, %v10274
    %v10387 = vpack.c.b16 %v10277, %v10276
    %v10388 = vpack.c.b16 %v10279, %v10278
    %v10389 = vpack.c.b16 %v10281, %v10280
    %v10390 = vpack.c.b16 %v10283, %v10282
    %v10391 = vpack.c.b16 %v10285, %v10284
    %v10392 = vpack.c.b16 %v10287, %v10286
    %v10393 = vpack.c.b16 %v10289, %v10288
    %v10394 = vpack.c.b16 %v10291, %v10290
    %v10395 = vpack.c.b16 %v10293, %v10292
    %v10396 = vpack.c.b16 %v10295, %v10294
    %v10397 = vpack.c.b16 %v10297, %v10296
    %v10398 = vpack.c.b16 %v10299, %v10298
    %v10399 = vpack.c.b16 %v10301, %v10300
    %v10400 = vpack.c.b16 %v10303, %v10302
    %v10401 = vpack.c.b16 %v10305, %v10304
    %v10402 = vpack.c.b16 %v10307, %v10306
    %v10403 = vpack.c.b16 %v10309, %v10308
    %v10404 = vpack.c.b16 %v10311, %v10310
    %v10405 = vpack.c.b16 %v10313, %v10312
    %v10406 = vpack.c.b16 %v10315, %v10314
    %v10407 = vpack.c.b16 %v10317, %v10316
    %v10408 = vpack.c.b16 %v10319, %v10318
    %v10409 = vpack.c.b16 %v10321, %v10320
    %v10410 = vpack.c.b16 %v10323, %v10322
    %v10411 = vpack.c.b16 %v10325, %v10324
    %v10412 = vpack.c.b16 %v10327, %v10326
    %v10413 = vpack.c.b16 %v10329, %v10328
    %v10414 = vpack.c.b16 %v10331, %v10330
    %v10415 = vpack.c.b16 %v10333, %v10332
    %v10416 = vpack.c.b16 %v10335, %v10334
    %v10417 = vpack.c.b16 %v10337, %v10336
    %v10418 = vpack.c.b16 %v10339, %v10338
    %v10419 = vpack.c.b16 %v10341, %v10340
    %v10420 = vpack.c.b16 %v10343, %v10342
    %v10421 = vpack.c.b16 %v10345, %v10344
    %v10422 = vpack.c.b16 %v10347, %v10346
    %v10423 = vpack.c.b16 %v10349, %v10348
    %v10424 = vpack.c.b16 %v10351, %v10350
    %v10425 = vpack.c.b16 %v10353, %v10352
    %v10426 = vpack.c.b16 %v10355, %v10354
    %v10427 = vpack.c.b16 %v10357, %v10356
    %v10428 = vpack.c.b16 %v10359, %v10358
    %v10429 = vpack.c.b16 %v10361, %v10360
    %v10430 = vpack.c.b16 %v10363, %v10362
    %v10431 = vpack.c.b16 %v10365, %v10364
    %v10432 = vpack.c.b16 %v10367, %v10366
    %v10433 = vpack.c.b16 %v10369, %v10368
    %10498 = vmatprep.subr.bf16.mxu0 0
    %10499 = vmatpush1.bf16.msra.mxu0 %v10370
    %10500 = vmatprep.subr.bf16.mxu0 0
    %10501 = vmatpush1.bf16.msra.mxu0 %v10371
    %10502 = vmatprep.subr.bf16.mxu0 0
    %10503 = vmatpush1.bf16.msra.mxu0 %v10372
    %10504 = vmatprep.subr.bf16.mxu0 0
    %10505 = vmatpush1.bf16.msra.mxu0 %v10373
    %10506 = vmatprep.subr.bf16.mxu0 0
    %10507 = vmatpush1.bf16.msra.mxu0 %v10374
    %10508 = vmatprep.subr.bf16.mxu0 0
    %10509 = vmatpush1.bf16.msra.mxu0 %v10375
    %10510 = vmatprep.subr.bf16.mxu0 0
    %10511 = vmatpush1.bf16.msra.mxu0 %v10376
    %10512 = vmatprep.subr.bf16.mxu0 0
    %10513 = vmatpush1.bf16.msra.mxu0 %v10377
    %10514 = vmatprep.subr.bf16.mxu0 0
    %10515 = vmatpush1.bf16.msra.mxu0 %v10378
    %10516 = vmatprep.subr.bf16.mxu0 0
    %10517 = vmatpush1.bf16.msra.mxu0 %v10379
    %10518 = vmatprep.subr.bf16.mxu0 0
    %10519 = vmatpush1.bf16.msra.mxu0 %v10380
    %10520 = vmatprep.subr.bf16.mxu0 0
    %10521 = vmatpush1.bf16.msra.mxu0 %v10381
    %10522 = vmatprep.subr.bf16.mxu0 0
    %10523 = vmatpush1.bf16.msra.mxu0 %v10382
    %10524 = vmatprep.subr.bf16.mxu0 0
    %10525 = vmatpush1.bf16.msra.mxu0 %v10383
    %10526 = vmatprep.subr.bf16.mxu0 0
    %10527 = vmatpush1.bf16.msra.mxu0 %v10384
    %10528 = vmatprep.subr.bf16.mxu0 0
    %10529 = vmatpush1.bf16.msra.mxu0 %v10385
    %10530 = vmatprep.mubr.bf16.mxu0 %v9972
    %10531 = vmatmul.mubr.bf16.gmra.mrb[0].mxu0 %v9971
    %v10532 = vpop.f32.mrb[0].mxu0
    %v10533 = vadd.f32 %v10112, %v10532
    %v10534 = vpop.f32.mrb[0].mxu0
    %v10535 = vpop.f32.mrb[0].mxu0
    %v10536 = vpop.f32.mrb[0].mxu0
    %10537 = vdwg.mxu0
    %10538 = vmatprep.subr.bf16.mxu0 0
    %10539 = vmatpush1.bf16.msra.mxu0 %v10386
    %10540 = vmatprep.subr.bf16.mxu0 0
    %10541 = vmatpush1.bf16.msra.mxu0 %v10387
    %10542 = vmatprep.subr.bf16.mxu0 0
    %10543 = vmatpush1.bf16.msra.mxu0 %v10388
    %10544 = vmatprep.subr.bf16.mxu0 0
    %10545 = vmatpush1.bf16.msra.mxu0 %v10389
    %10546 = vmatprep.subr.bf16.mxu0 0
    %10547 = vmatpush1.bf16.msra.mxu0 %v10390
    %10548 = vmatprep.subr.bf16.mxu0 0
    %10549 = vmatpush1.bf16.msra.mxu0 %v10391
    %10550 = vmatprep.subr.bf16.mxu0 0
    %10551 = vmatpush1.bf16.msra.mxu0 %v10392
    %10552 = vmatprep.subr.bf16.mxu0 0
    %10553 = vmatpush1.bf16.msra.mxu0 %v10393
    %10554 = vmatprep.subr.bf16.mxu0 0
    %10555 = vmatpush1.bf16.msra.mxu0 %v10394
    %10556 = vmatprep.subr.bf16.mxu0 0
    %10557 = vmatpush1.bf16.msra.mxu0 %v10395
    %10558 = vmatprep.subr.bf16.mxu0 0
    %10559 = vmatpush1.bf16.msra.mxu0 %v10396
    %10560 = vmatprep.subr.bf16.mxu0 0
    %10561 = vmatpush1.bf16.msra.mxu0 %v10397
    %10562 = vmatprep.subr.bf16.mxu0 0
    %10563 = vmatpush1.bf16.msra.mxu0 %v10398
    %10564 = vmatprep.subr.bf16.mxu0 0
    %10565 = vmatpush1.bf16.msra.mxu0 %v10399
    %10566 = vmatprep.subr.bf16.mxu0 0
    %10567 = vmatpush1.bf16.msra.mxu0 %v10400
    %10568 = vmatprep.subr.bf16.mxu0 0
    %10569 = vmatpush1.bf16.msra.mxu0 %v10401
    %10570 = vmatprep.mubr.bf16.mxu0 %v9974
    %10571 = vmatmul.mubr.bf16.gmra.mrb[0].mxu0 %v9973
    %v10572 = vpop.f32.mrb[0].mxu0
    %v10573 = vadd.f32 %v10533, %v10572
    %v10574 = vpop.f32.mrb[0].mxu0
    %v10575 = vpop.f32.mrb[0].mxu0
    %v10576 = vpop.f32.mrb[0].mxu0
    %10577 = vdwg.mxu0
    %10578 = vmatprep.subr.bf16.mxu0 0
    %10579 = vmatpush1.bf16.msra.mxu0 %v10402
    %10580 = vmatprep.subr.bf16.mxu0 0
    %10581 = vmatpush1.bf16.msra.mxu0 %v10403
    %10582 = vmatprep.subr.bf16.mxu0 0
    %10583 = vmatpush1.bf16.msra.mxu0 %v10404
    %10584 = vmatprep.subr.bf16.mxu0 0
    %10585 = vmatpush1.bf16.msra.mxu0 %v10405
    %10586 = vmatprep.subr.bf16.mxu0 0
    %10587 = vmatpush1.bf16.msra.mxu0 %v10406
    %10588 = vmatprep.subr.bf16.mxu0 0
    %10589 = vmatpush1.bf16.msra.mxu0 %v10407
    %10590 = vmatprep.subr.bf16.mxu0 0
    %10591 = vmatpush1.bf16.msra.mxu0 %v10408
    %10592 = vmatprep.subr.bf16.mxu0 0
    %10593 = vmatpush1.bf16.msra.mxu0 %v10409
    %10594 = vmatprep.subr.bf16.mxu0 0
    %10595 = vmatpush1.bf16.msra.mxu0 %v10410
    %10596 = vmatprep.subr.bf16.mxu0 0
    %10597 = vmatpush1.bf16.msra.mxu0 %v10411
    %10598 = vmatprep.subr.bf16.mxu0 0
    %10599 = vmatpush1.bf16.msra.mxu0 %v10412
    %10600 = vmatprep.subr.bf16.mxu0 0
    %10601 = vmatpush1.bf16.msra.mxu0 %v10413
    %10602 = vmatprep.subr.bf16.mxu0 0
    %10603 = vmatpush1.bf16.msra.mxu0 %v10414
    %10604 = vmatprep.subr.bf16.mxu0 0
    %10605 = vmatpush1.bf16.msra.mxu0 %v10415
    %10606 = vmatprep.subr.bf16.mxu0 0
    %10607 = vmatpush1.bf16.msra.mxu0 %v10416
    %10608 = vmatprep.subr.bf16.mxu0 0
    %10609 = vmatpush1.bf16.msra.mxu0 %v10417
    %10610 = vmatprep.mubr.bf16.mxu0 %v9976
    %10611 = vmatmul.mubr.bf16.gmra.mrb[0].mxu0 %v9975
    %v10612 = vpop.f32.mrb[0].mxu0
    %v10613 = vadd.f32 %v10573, %v10612
    %v10614 = vpop.f32.mrb[0].mxu0
    %v10615 = vpop.f32.mrb[0].mxu0
    %v10616 = vpop.f32.mrb[0].mxu0
    %10617 = vdwg.mxu0
    %10618 = vmatprep.subr.bf16.mxu0 0
    %10619 = vmatpush1.bf16.msra.mxu0 %v10418
    %10620 = vmatprep.subr.bf16.mxu0 0
    %10621 = vmatpush1.bf16.msra.mxu0 %v10419
    %10622 = vmatprep.subr.bf16.mxu0 0
    %10623 = vmatpush1.bf16.msra.mxu0 %v10420
    %10624 = vmatprep.subr.bf16.mxu0 0
    %10625 = vmatpush1.bf16.msra.mxu0 %v10421
    %10626 = vmatprep.subr.bf16.mxu0 0
    %10627 = vmatpush1.bf16.msra.mxu0 %v10422
    %10628 = vmatprep.subr.bf16.mxu0 0
    %10629 = vmatpush1.bf16.msra.mxu0 %v10423
    %10630 = vmatprep.subr.bf16.mxu0 0
    %10631 = vmatpush1.bf16.msra.mxu0 %v10424
    %10632 = vmatprep.subr.bf16.mxu0 0
    %10633 = vmatpush1.bf16.msra.mxu0 %v10425
    %10634 = vmatprep.subr.bf16.mxu0 0
    %10635 = vmatpush1.bf16.msra.mxu0 %v10426
    %10636 = vmatprep.subr.bf16.mxu0 0
    %10637 = vmatpush1.bf16.msra.mxu0 %v10427
    %10638 = vmatprep.subr.bf16.mxu0 0
    %10639 = vmatpush1.bf16.msra.mxu0 %v10428
    %10640 = vmatprep.subr.bf16.mxu0 0
    %10641 = vmatpush1.bf16.msra.mxu0 %v10429
    %10642 = vmatprep.subr.bf16.mxu0 0
    %10643 = vmatpush1.bf16.msra.mxu0 %v10430
    %10644 = vmatprep.subr.bf16.mxu0 0
    %10645 = vmatpush1.bf16.msra.mxu0 %v10431
    %10646 = vmatprep.subr.bf16.mxu0 0
    %10647 = vmatpush1.bf16.msra.mxu0 %v10432
    %10648 = vmatprep.subr.bf16.mxu0 0
    %10649 = vmatpush1.bf16.msra.mxu0 %v10433
    %10650 = vmatprep.mubr.bf16.mxu0 %v9978
    %10651 = vmatmul.mubr.bf16.gmra.mrb[0].mxu0 %v9977
    %v10652 = vpop.f32.mrb[0].mxu0
    %v10653 = vadd.f32 %v10613, %v10652
    %v10654 = vpop.f32.mrb[0].mxu0
    %v10655 = vpop.f32.mrb[0].mxu0
    %v10656 = vpop.f32.mrb[0].mxu0
    %10657 = vdwg.mxu0
    %10658 = vst [vmem:[#allocation16] sm:$0xff] %v10653
    // Predicated region
    $region66: #{tpu_custom_call.1} parent=1 // pred_check
      _
    $region67: #{tpu_custom_call.1} parent=1 // pred_check_branch
      %10660 = sbr.rel (0) target = $region69
    $region68: #{tpu_custom_call.1} parent=1 // pred_region
      %s10662 = ssub.s32 128, 128
      %10663 = vsyncadd [#allocation4], %s10662
      %s10665 = sshll.u32 [#allocation16], 4
      %s10666 = int_to_ptr.vmem [resolvable:$true] %s10665
      %10668 = dma.vmem_to_hbm [thread:$0]  %s10666, 128, %s8, [#allocation4]
    $region69: #{tpu_custom_call.1} parent=1 // pred_fallthru
      _
    // Predicated region
    $region70: #{tpu_custom_call.1} parent=1 // pred_check
      _
    $region71: #{tpu_custom_call.1} parent=1 // pred_check_branch
      %10670 = sbr.rel (0) target = $region73
    $region72: #{tpu_custom_call.1} parent=1 // pred_region
      %10671 = dma.done [#allocation4], 128
    $region73: #{tpu_custom_call.1} parent=1 // pred_fallthru
      _
    %10672 = vsyncpa [#allocation3], 1
    %10673 = vsyncpa [#allocation6], 1
    %10674 = vsyncpa [#allocation9], 1
    %10675 = vsyncpa [#allocation12], 1
    %10676 = vsyncpa [#allocation15], 1
    %10677 = vsyncpa [#allocation4], 1

</llo_original>
